<compile_context>
chip_gen: v7x
topology: tpu7x:2x2x1
jax: 0.10.0
libtpu: 0.0.40
codegen_flags: <defaults>
</compile_context>

<pallas_src>
import jax
import jax.numpy as jnp
from jax.experimental import pallas as pl
from jax.experimental.pallas import tpu as pltpu


# --------------------------------------------------------------------------- #
# Fused kernel: one program per batch tile of TB images (grid=(B/TB,), parallel)
# --------------------------------------------------------------------------- #
def _fused_med_vqa_kernel(slab_ref, pool_ref, wtxt_ref,        # (TB*HW,Kp) bf16, (TB,TB*HW) bf16, (TB,Vp) bf16
                          cw_ref, cb_ref,                      # conv: (Kp,Cp) bf16, (1,Cp) f32
                          iw_ref, ib_ref,                      # img fc: (Cp,F) bf16, (1,F) f32
                          emb_ref,                             # (Vp,D) bf16 (VMEM resident)
                          tw_ref, tb_ref,                      # txt fc: (D,F) bf16, (1,F) f32
                          fwi_ref, fwt_ref, fb_ref,            # fusion weights / bias
                          clsw_ref, clsb_ref,                  # classifier (padded to C_pad)
                          o_ref):                              # (TB, C_pad) f32
    # ---- Image encoder: im2col conv as one matmul, bias+ReLU, GAP via MXU,
    #      then the image FC.  All activations have M = TB (or TB*HW).
    conv = jnp.dot(slab_ref[...], cw_ref[...],
                   preferred_element_type=jnp.float32)          # (TB*HW, Cp)
    conv = jnp.maximum(conv + cb_ref[...], 0.0)                 # bias + ReLU
    pooled_img = jnp.dot(pool_ref[...], conv.astype(jnp.bfloat16),
                         preferred_element_type=jnp.float32)    # (TB, Cp) block-diag mean
    img_feat = jnp.dot(pooled_img.astype(jnp.bfloat16), iw_ref[...],
                       preferred_element_type=jnp.float32) + ib_ref[...]   # (TB, F)

    # ---- Text encoder: embedding lookup + masked-mean pooling fused as one
    #      matmul against the sparse-to-dense pooling matrix, then FC + ReLU.
    pooled_txt = jnp.dot(wtxt_ref[...], emb_ref[...],
                         preferred_element_type=jnp.float32)    # (TB, D)
    txt_feat = jnp.maximum(
        jnp.dot(pooled_txt.astype(jnp.bfloat16), tw_ref[...],
                preferred_element_type=jnp.float32) + tb_ref[...], 0.0)

    # ---- Fusion (Linear over concat == split-weight sum) + ReLU, classifier.
    fused = jnp.maximum(
        jnp.dot(img_feat.astype(jnp.bfloat16), fwi_ref[...],
                preferred_element_type=jnp.float32)
        + jnp.dot(txt_feat.astype(jnp.bfloat16), fwt_ref[...],
                  preferred_element_type=jnp.float32)
        + fb_ref[...], 0.0)
    o_ref[...] = (jnp.dot(fused.astype(jnp.bfloat16), clsw_ref[...],
                          preferred_element_type=jnp.float32) + clsb_ref[...])


# --------------------------------------------------------------------------- #
# Wrapper: im2col + padding + pooling-matrix construction + bf16 casts,
# then one batch-tiled pallas_call for the whole forward pass.
# --------------------------------------------------------------------------- #
def med_vqa_forward(params, images_nchw, input_ids, attention_mask, *, batch_tile=8):
    B, Cin, H, W = images_nchw.shape
    HW = H * W
    conv_w = params["conv_w"]                      # (3, 3, Cin, Cout)
    Cout = conv_w.shape[-1]
    F_img = params["img_fc_w"].shape[-1]
    V, D = params["emb"].shape
    F_txt = params["txt_fc_w"].shape[-1]
    F_fuse = params["fuse_w_img"].shape[-1]
    C = params["cls_w"].shape[-1]
    S = input_ids.shape[1]

    TB = batch_tile
    B_pad = ((B + TB - 1) // TB) * TB              # pad batch to a whole tile
    K9 = 9 * Cin
    K_pad = ((K9 + 127) // 128) * 128              # lane-dense im2col contraction
    Cout_pad = ((Cout + 127) // 128) * 128         # lane-dense conv output channels
    C_pad = ((C + 127) // 128) * 128               # lane-dense classifier output
    V_pad = ((V + 127) // 128) * 128               # lane-dense embedding rows

    if B_pad != B:
        images_nchw = jnp.pad(images_nchw, ((0, B_pad - B), (0, 0), (0, 0), (0, 0)))
        input_ids = jnp.pad(input_ids, ((0, B_pad - B), (0, 0)))
        attention_mask = jnp.pad(attention_mask, ((0, B_pad - B), (0, 0)))

    # im2col in the wrapper (layout plumbing): (B*H*W, K_pad) bf16, zero-padded lanes.
    x = jnp.transpose(images_nchw, (0, 2, 3, 1))                      # NCHW -> NHWC
    xp = jnp.pad(x, ((0, 0), (1, 1), (1, 1), (0, 0)))                 # 'same' pad
    patches = [xp[:, dh:dh + H, dw:dw + W, :] for dh in range(3) for dw in range(3)]
    slab = jnp.concatenate(patches, axis=-1).reshape(B_pad * HW, K9)
    slab = jnp.pad(slab, ((0, 0), (0, K_pad - K9))).astype(jnp.bfloat16)

    # Global-average-pool as a constant block-diagonal (TB, TB*HW) matrix of 1/HW.
    pool_mat = (jnp.repeat(jnp.eye(TB, dtype=jnp.float32), HW, axis=1) / HW
                ).astype(jnp.bfloat16)

    # Text path: embedding lookup + masked-mean pooling folded into one
    # sparse-to-dense pooling matrix  wtxt[b, ids[b,s]] += maskw[b,s].
    m = attention_mask.astype(jnp.float32)
    maskw = m / jnp.maximum(jnp.sum(m, axis=1, keepdims=True), 1e-6)
    ids = jnp.clip(input_ids.astype(jnp.int32), 0, V - 1)
    wtxt = jnp.zeros((B_pad, V_pad), jnp.float32)
    wtxt = wtxt.at[jnp.arange(B_pad)[:, None], ids].add(maskw).astype(jnp.bfloat16)

    # bf16 weights (halves HBM->VMEM weight traffic); zero-padding keeps math exact.
    cw2d = jnp.pad(conv_w.reshape(K9, Cout),
                   ((0, K_pad - K9), (0, Cout_pad - Cout))).astype(jnp.bfloat16)
    cb = jnp.pad(params["conv_b"], ((0, 0), (0, Cout_pad - Cout)))
    iw = jnp.pad(params["img_fc_w"], ((0, Cout_pad - Cout), (0, 0))).astype(jnp.bfloat16)
    emb = jnp.pad(params["emb"], ((0, V_pad - V), (0, 0))).astype(jnp.bfloat16)
    tw = params["txt_fc_w"].astype(jnp.bfloat16)
    fwi = params["fuse_w_img"].astype(jnp.bfloat16)
    fwt = params["fuse_w_txt"].astype(jnp.bfloat16)
    clsw = jnp.pad(params["cls_w"], ((0, 0), (0, C_pad - C))).astype(jnp.bfloat16)
    clsb = jnp.pad(params["cls_b"], ((0, 0), (0, C_pad - C)))

    const = lambda i: (0, 0)                       # grid-invariant weights

    logits_pad = pl.pallas_call(
        _fused_med_vqa_kernel,
        out_shape=jax.ShapeDtypeStruct((B_pad, C_pad), jnp.float32),
        grid_spec=pltpu.PrefetchScalarGridSpec(
            num_scalar_prefetch=0,
            grid=(B_pad // TB,),
            in_specs=[
                pl.BlockSpec((TB * HW, K_pad), lambda i: (i, 0)),      # im2col slab
                pl.BlockSpec((TB, TB * HW), const),                    # GAP pooling matrix
                pl.BlockSpec((TB, V_pad), lambda i: (i, 0)),           # text pooling matrix
                pl.BlockSpec((K_pad, Cout_pad), const),                # conv w
                pl.BlockSpec((1, Cout_pad), const),                    # conv b
                pl.BlockSpec((Cout_pad, F_img), const),                # img fc w
                pl.BlockSpec((1, F_img), const),                       # img fc b
                pl.BlockSpec((V_pad, D), const),                       # embedding table (VMEM)
                pl.BlockSpec((D, F_txt), const),                       # txt fc w
                pl.BlockSpec((1, F_txt), const),                       # txt fc b
                pl.BlockSpec((F_img, F_fuse), const),                  # fuse w (img half)
                pl.BlockSpec((F_txt, F_fuse), const),                  # fuse w (txt half)
                pl.BlockSpec((1, F_fuse), const),                      # fuse b
                pl.BlockSpec((F_fuse, C_pad), const),                  # cls w (padded)
                pl.BlockSpec((1, C_pad), const),                       # cls b (padded)
            ],
            out_specs=pl.BlockSpec((TB, C_pad), lambda i: (i, 0)),
        ),
        compiler_params=pltpu.CompilerParams(
            dimension_semantics=("parallel",)),    # v7x: 2 TCs split the batch tiles
    )(slab, pool_mat, wtxt, cw2d, cb, iw, params["img_fc_b"],
      emb, tw, params["txt_fc_b"], fwi, fwt, params["fuse_b"], clsw, clsb)

    return logits_pad[:B, :C]


# --------------------------------------------------------------------------- #
# Parameter init (deterministic, synthetic).  Weights stored (in, out); a
# transpose (and kh/kw/cin reorder for the conv) would be required if loading
# real PyTorch (out, in, kh, kw) checkpoints.
# --------------------------------------------------------------------------- #
def init_params(key, *, image_feat_dim=512, text_feat_dim=512,
                fusion_hidden_dim=512, num_classes=557,
                conv_channels=16, vocab_size=1000):
    ks = jax.random.split(key, 8)
    s = 0.02
    return dict(
        conv_w=jax.random.normal(ks[0], (3, 3, 3, conv_channels), jnp.float32) * s,
        conv_b=jnp.zeros((1, conv_channels), jnp.float32),
        img_fc_w=jax.random.normal(ks[1], (conv_channels, image_feat_dim), jnp.float32) * s,
        img_fc_b=jnp.zeros((1, image_feat_dim), jnp.float32),
        emb=jax.random.normal(ks[2], (vocab_size, text_feat_dim), jnp.float32) * s,
        txt_fc_w=jax.random.normal(ks[3], (text_feat_dim, text_feat_dim), jnp.float32) * s,
        txt_fc_b=jnp.zeros((1, text_feat_dim), jnp.float32),
        fuse_w_img=jax.random.normal(ks[4], (image_feat_dim, fusion_hidden_dim), jnp.float32) * s,
        fuse_w_txt=jax.random.normal(ks[5], (text_feat_dim, fusion_hidden_dim), jnp.float32) * s,
        fuse_b=jnp.zeros((1, fusion_hidden_dim), jnp.float32),
        cls_w=jax.random.normal(ks[6], (fusion_hidden_dim, num_classes), jnp.float32) * s,
        cls_b=jnp.zeros((1, num_classes), jnp.float32),
    )


if __name__ == "__main__":
    key = jax.random.PRNGKey(0)
    k_img, k_ids, k_msk, k_par = jax.random.split(key, 4)

    # Small shapes; B=16 with TB=8 gives a 2-step grid so v7x's two TCs split it.
    B, H, W, S, V = 16, 16, 16, 8, 1000
    NUM_CLASSES = 557

    images = jax.random.normal(k_img, (B, 3, H, W), jnp.float32)        # NCHW (PyTorch)
    input_ids = jax.random.randint(k_ids, (B, S), 0, V, dtype=jnp.int32)
    attention_mask = (jax.random.uniform(k_msk, (B, S)) > 0.25).astype(jnp.float32)
    attention_mask = attention_mask.at[:, 0].set(1.0)                   # >=1 valid token

    params = init_params(k_par, vocab_size=V, num_classes=NUM_CLASSES)

    logits = med_vqa_forward(params, images, input_ids, attention_mask, batch_tile=8)
    jax.block_until_ready(logits)
    assert logits.shape == (B, NUM_CLASSES)
    assert bool(jnp.all(jnp.isfinite(logits)))
    print("KERNEL_OK")
</pallas_src>

<mosaic_0001>
module attributes {stable_mosaic.version = 11 : i64} {
  func.func @_fused_med_vqa_kernel(%arg0: i32, %arg1: memref<2048x128xbf16, #tpu.memory_space<vmem>>, %arg2: memref<8x2048xbf16, #tpu.memory_space<vmem>>, %arg3: memref<8x1024xbf16, #tpu.memory_space<vmem>>, %arg4: memref<128x128xbf16, #tpu.memory_space<vmem>>, %arg5: memref<1x128xf32, #tpu.memory_space<vmem>>, %arg6: memref<128x512xbf16, #tpu.memory_space<vmem>>, %arg7: memref<1x512xf32, #tpu.memory_space<vmem>>, %arg8: memref<1024x512xbf16, #tpu.memory_space<vmem>>, %arg9: memref<512x512xbf16, #tpu.memory_space<vmem>>, %arg10: memref<1x512xf32, #tpu.memory_space<vmem>>, %arg11: memref<512x512xbf16, #tpu.memory_space<vmem>>, %arg12: memref<512x512xbf16, #tpu.memory_space<vmem>>, %arg13: memref<1x512xf32, #tpu.memory_space<vmem>>, %arg14: memref<512x640xbf16, #tpu.memory_space<vmem>>, %arg15: memref<1x640xf32, #tpu.memory_space<vmem>>, %arg16: memref<8x640xf32, #tpu.memory_space<vmem>>) attributes {dimension_semantics = [#tpu.dimension_semantics<parallel>], iteration_bounds = array<i64: 2>, scalar_prefetch = 0 : i64, scratch_operands = 0 : i64, tpu.core_type = #tpu.core_type<tc>, window_params = [{transform_indices = @transform_0, window_bounds = array<i64: 2048, 128>}, {pipeline_mode = #tpu.pipeline_mode<synchronous>, transform_indices = @transform_1, window_bounds = array<i64: 8, 2048>}, {transform_indices = @transform_2, window_bounds = array<i64: 8, 1024>}, {pipeline_mode = #tpu.pipeline_mode<synchronous>, transform_indices = @transform_3, window_bounds = array<i64: 128, 128>}, {pipeline_mode = #tpu.pipeline_mode<synchronous>, transform_indices = @transform_4, window_bounds = array<i64: 1, 128>}, {pipeline_mode = #tpu.pipeline_mode<synchronous>, transform_indices = @transform_5, window_bounds = array<i64: 128, 512>}, {pipeline_mode = #tpu.pipeline_mode<synchronous>, transform_indices = @transform_6, window_bounds = array<i64: 1, 512>}, {pipeline_mode = #tpu.pipeline_mode<synchronous>, transform_indices = @transform_7, window_bounds = array<i64: 1024, 512>}, {pipeline_mode = #tpu.pipeline_mode<synchronous>, transform_indices = @transform_8, window_bounds = array<i64: 512, 512>}, {pipeline_mode = #tpu.pipeline_mode<synchronous>, transform_indices = @transform_9, window_bounds = array<i64: 1, 512>}, {pipeline_mode = #tpu.pipeline_mode<synchronous>, transform_indices = @transform_10, window_bounds = array<i64: 512, 512>}, {pipeline_mode = #tpu.pipeline_mode<synchronous>, transform_indices = @transform_11, window_bounds = array<i64: 512, 512>}, {pipeline_mode = #tpu.pipeline_mode<synchronous>, transform_indices = @transform_12, window_bounds = array<i64: 1, 512>}, {pipeline_mode = #tpu.pipeline_mode<synchronous>, transform_indices = @transform_13, window_bounds = array<i64: 512, 640>}, {pipeline_mode = #tpu.pipeline_mode<synchronous>, transform_indices = @transform_14, window_bounds = array<i64: 1, 640>}, {transform_indices = @transform_15, window_bounds = array<i64: 8, 640>}]} {
    %c0 = arith.constant 0 : index
    %c0_0 = arith.constant 0 : index
    %0 = vector.load %arg1[%c0, %c0_0] : memref<2048x128xbf16, #tpu.memory_space<vmem>>, vector<2048x128xbf16>
    %c0_1 = arith.constant 0 : index
    %c0_2 = arith.constant 0 : index
    %1 = vector.load %arg4[%c0_1, %c0_2] : memref<128x128xbf16, #tpu.memory_space<vmem>>, vector<128x128xbf16>
    %cst = arith.constant dense<0.000000e+00> : vector<2048x128xf32>
    %2 = tpu.matmul %0, %1, %cst {dimension_numbers = #tpu.dot_dimension_numbers<[1], [0], [0], [1], [0, 0, 1, 1], [], []>} : vector<2048x128xbf16>, vector<128x128xbf16>, vector<2048x128xf32> -> vector<2048x128xf32>
    %c0_3 = arith.constant 0 : index
    %c0_4 = arith.constant 0 : index
    %3 = vector.load %arg5[%c0_3, %c0_4] : memref<1x128xf32, #tpu.memory_space<vmem>>, vector<1x128xf32>
    %4 = vector.broadcast %3 : vector<1x128xf32> to vector<2048x128xf32>
    %5 = arith.addf %2, %4 : vector<2048x128xf32>
    %cst_5 = arith.constant 0.000000e+00 : f32
    %6 = vector.broadcast %cst_5 : f32 to vector<2048x128xf32>
    %7 = arith.maximumf %5, %6 : vector<2048x128xf32>
    %c0_6 = arith.constant 0 : index
    %c0_7 = arith.constant 0 : index
    %8 = vector.load %arg2[%c0_6, %c0_7] : memref<8x2048xbf16, #tpu.memory_space<vmem>>, vector<8x2048xbf16>
    %9 = arith.truncf %7 : vector<2048x128xf32> to vector<2048x128xbf16>
    %cst_8 = arith.constant dense<0.000000e+00> : vector<8x128xf32>
    %10 = tpu.matmul %8, %9, %cst_8 {dimension_numbers = #tpu.dot_dimension_numbers<[1], [0], [0], [1], [0, 0, 1, 1], [], []>} : vector<8x2048xbf16>, vector<2048x128xbf16>, vector<8x128xf32> -> vector<8x128xf32>
    %11 = arith.truncf %10 : vector<8x128xf32> to vector<8x128xbf16>
    %c0_9 = arith.constant 0 : index
    %c0_10 = arith.constant 0 : index
    %12 = vector.load %arg6[%c0_9, %c0_10] : memref<128x512xbf16, #tpu.memory_space<vmem>>, vector<128x512xbf16>
    %cst_11 = arith.constant dense<0.000000e+00> : vector<8x512xf32>
    %13 = tpu.matmul %11, %12, %cst_11 {dimension_numbers = #tpu.dot_dimension_numbers<[1], [0], [0], [1], [0, 0, 1, 1], [], []>} : vector<8x128xbf16>, vector<128x512xbf16>, vector<8x512xf32> -> vector<8x512xf32>
    %c0_12 = arith.constant 0 : index
    %c0_13 = arith.constant 0 : index
    %14 = vector.load %arg7[%c0_12, %c0_13] : memref<1x512xf32, #tpu.memory_space<vmem>>, vector<1x512xf32>
    %15 = vector.broadcast %14 : vector<1x512xf32> to vector<8x512xf32>
    %16 = arith.addf %13, %15 : vector<8x512xf32>
    %c0_14 = arith.constant 0 : index
    %c0_15 = arith.constant 0 : index
    %17 = vector.load %arg3[%c0_14, %c0_15] : memref<8x1024xbf16, #tpu.memory_space<vmem>>, vector<8x1024xbf16>
    %c0_16 = arith.constant 0 : index
    %c0_17 = arith.constant 0 : index
    %18 = vector.load %arg8[%c0_16, %c0_17] : memref<1024x512xbf16, #tpu.memory_space<vmem>>, vector<1024x512xbf16>
    %cst_18 = arith.constant dense<0.000000e+00> : vector<8x512xf32>
    %19 = tpu.matmul %17, %18, %cst_18 {dimension_numbers = #tpu.dot_dimension_numbers<[1], [0], [0], [1], [0, 0, 1, 1], [], []>} : vector<8x1024xbf16>, vector<1024x512xbf16>, vector<8x512xf32> -> vector<8x512xf32>
    %20 = arith.truncf %19 : vector<8x512xf32> to vector<8x512xbf16>
    %c0_19 = arith.constant 0 : index
    %c0_20 = arith.constant 0 : index
    %21 = vector.load %arg9[%c0_19, %c0_20] : memref<512x512xbf16, #tpu.memory_space<vmem>>, vector<512x512xbf16>
    %cst_21 = arith.constant dense<0.000000e+00> : vector<8x512xf32>
    %22 = tpu.matmul %20, %21, %cst_21 {dimension_numbers = #tpu.dot_dimension_numbers<[1], [0], [0], [1], [0, 0, 1, 1], [], []>} : vector<8x512xbf16>, vector<512x512xbf16>, vector<8x512xf32> -> vector<8x512xf32>
    %c0_22 = arith.constant 0 : index
    %c0_23 = arith.constant 0 : index
    %23 = vector.load %arg10[%c0_22, %c0_23] : memref<1x512xf32, #tpu.memory_space<vmem>>, vector<1x512xf32>
    %24 = vector.broadcast %23 : vector<1x512xf32> to vector<8x512xf32>
    %25 = arith.addf %22, %24 : vector<8x512xf32>
    %cst_24 = arith.constant 0.000000e+00 : f32
    %26 = vector.broadcast %cst_24 : f32 to vector<8x512xf32>
    %27 = arith.maximumf %25, %26 : vector<8x512xf32>
    %28 = arith.truncf %16 : vector<8x512xf32> to vector<8x512xbf16>
    %c0_25 = arith.constant 0 : index
    %c0_26 = arith.constant 0 : index
    %29 = vector.load %arg11[%c0_25, %c0_26] : memref<512x512xbf16, #tpu.memory_space<vmem>>, vector<512x512xbf16>
    %cst_27 = arith.constant dense<0.000000e+00> : vector<8x512xf32>
    %30 = tpu.matmul %28, %29, %cst_27 {dimension_numbers = #tpu.dot_dimension_numbers<[1], [0], [0], [1], [0, 0, 1, 1], [], []>} : vector<8x512xbf16>, vector<512x512xbf16>, vector<8x512xf32> -> vector<8x512xf32>
    %31 = arith.truncf %27 : vector<8x512xf32> to vector<8x512xbf16>
    %c0_28 = arith.constant 0 : index
    %c0_29 = arith.constant 0 : index
    %32 = vector.load %arg12[%c0_28, %c0_29] : memref<512x512xbf16, #tpu.memory_space<vmem>>, vector<512x512xbf16>
    %cst_30 = arith.constant dense<0.000000e+00> : vector<8x512xf32>
    %33 = tpu.matmul %31, %32, %cst_30 {dimension_numbers = #tpu.dot_dimension_numbers<[1], [0], [0], [1], [0, 0, 1, 1], [], []>} : vector<8x512xbf16>, vector<512x512xbf16>, vector<8x512xf32> -> vector<8x512xf32>
    %34 = arith.addf %30, %33 : vector<8x512xf32>
    %c0_31 = arith.constant 0 : index
    %c0_32 = arith.constant 0 : index
    %35 = vector.load %arg13[%c0_31, %c0_32] : memref<1x512xf32, #tpu.memory_space<vmem>>, vector<1x512xf32>
    %36 = vector.broadcast %35 : vector<1x512xf32> to vector<8x512xf32>
    %37 = arith.addf %34, %36 : vector<8x512xf32>
    %cst_33 = arith.constant 0.000000e+00 : f32
    %38 = vector.broadcast %cst_33 : f32 to vector<8x512xf32>
    %39 = arith.maximumf %37, %38 : vector<8x512xf32>
    %40 = arith.truncf %39 : vector<8x512xf32> to vector<8x512xbf16>
    %c0_34 = arith.constant 0 : index
    %c0_35 = arith.constant 0 : index
    %41 = vector.load %arg14[%c0_34, %c0_35] : memref<512x640xbf16, #tpu.memory_space<vmem>>, vector<512x640xbf16>
    %cst_36 = arith.constant dense<0.000000e+00> : vector<8x640xf32>
    %42 = tpu.matmul %40, %41, %cst_36 {dimension_numbers = #tpu.dot_dimension_numbers<[1], [0], [0], [1], [0, 0, 1, 1], [], []>} : vector<8x512xbf16>, vector<512x640xbf16>, vector<8x640xf32> -> vector<8x640xf32>
    %c0_37 = arith.constant 0 : index
    %c0_38 = arith.constant 0 : index
    %43 = vector.load %arg15[%c0_37, %c0_38] : memref<1x640xf32, #tpu.memory_space<vmem>>, vector<1x640xf32>
    %44 = vector.broadcast %43 : vector<1x640xf32> to vector<8x640xf32>
    %45 = arith.addf %42, %44 : vector<8x640xf32>
    %c0_39 = arith.constant 0 : index
    %c0_40 = arith.constant 0 : index
    %46 = vector.load %arg16[%c0_39, %c0_40] : memref<8x640xf32, #tpu.memory_space<vmem>>, vector<8x640xf32>
    tpu.vector_store %arg16[%c0_39, %c0_40], %45 {strides = array<i32>} : memref<8x640xf32, #tpu.memory_space<vmem>>, vector<8x640xf32>,
    return
  }
  func.func @transform_0(%arg0: i32) -> (i32, i32) {
    %c0_i32 = arith.constant 0 : i32
    %c0_i32_0 = arith.constant 0 : i32
    return %arg0, %c0_i32 : i32, i32
  }
  func.func @transform_1(%arg0: i32) -> (i32, i32) {
    %c0_i32 = arith.constant 0 : i32
    %c0_i32_0 = arith.constant 0 : i32
    %c0_i32_1 = arith.constant 0 : i32
    return %c0_i32, %c0_i32_0 : i32, i32
  }
  func.func @transform_2(%arg0: i32) -> (i32, i32) {
    %c0_i32 = arith.constant 0 : i32
    %c0_i32_0 = arith.constant 0 : i32
    return %arg0, %c0_i32 : i32, i32
  }
  func.func @transform_3(%arg0: i32) -> (i32, i32) {
    %c0_i32 = arith.constant 0 : i32
    %c0_i32_0 = arith.constant 0 : i32
    %c0_i32_1 = arith.constant 0 : i32
    return %c0_i32, %c0_i32_0 : i32, i32
  }
  func.func @transform_4(%arg0: i32) -> (i32, i32) {
    %c0_i32 = arith.constant 0 : i32
    %c0_i32_0 = arith.constant 0 : i32
    %c0_i32_1 = arith.constant 0 : i32
    return %c0_i32, %c0_i32_0 : i32, i32
  }
  func.func @transform_5(%arg0: i32) -> (i32, i32) {
    %c0_i32 = arith.constant 0 : i32
    %c0_i32_0 = arith.constant 0 : i32
    %c0_i32_1 = arith.constant 0 : i32
    return %c0_i32, %c0_i32_0 : i32, i32
  }
  func.func @transform_6(%arg0: i32) -> (i32, i32) {
    %c0_i32 = arith.constant 0 : i32
    %c0_i32_0 = arith.constant 0 : i32
    %c0_i32_1 = arith.constant 0 : i32
    return %c0_i32, %c0_i32_0 : i32, i32
  }
  func.func @transform_7(%arg0: i32) -> (i32, i32) {
    %c0_i32 = arith.constant 0 : i32
    %c0_i32_0 = arith.constant 0 : i32
    %c0_i32_1 = arith.constant 0 : i32
    return %c0_i32, %c0_i32_0 : i32, i32
  }
  func.func @transform_8(%arg0: i32) -> (i32, i32) {
    %c0_i32 = arith.constant 0 : i32
    %c0_i32_0 = arith.constant 0 : i32
    %c0_i32_1 = arith.constant 0 : i32
    return %c0_i32, %c0_i32_0 : i32, i32
  }
  func.func @transform_9(%arg0: i32) -> (i32, i32) {
    %c0_i32 = arith.constant 0 : i32
    %c0_i32_0 = arith.constant 0 : i32
    %c0_i32_1 = arith.constant 0 : i32
    return %c0_i32, %c0_i32_0 : i32, i32
  }
  func.func @transform_10(%arg0: i32) -> (i32, i32) {
    %c0_i32 = arith.constant 0 : i32
    %c0_i32_0 = arith.constant 0 : i32
    %c0_i32_1 = arith.constant 0 : i32
    return %c0_i32, %c0_i32_0 : i32, i32
  }
  func.func @transform_11(%arg0: i32) -> (i32, i32) {
    %c0_i32 = arith.constant 0 : i32
    %c0_i32_0 = arith.constant 0 : i32
    %c0_i32_1 = arith.constant 0 : i32
    return %c0_i32, %c0_i32_0 : i32, i32
  }
  func.func @transform_12(%arg0: i32) -> (i32, i32) {
    %c0_i32 = arith.constant 0 : i32
    %c0_i32_0 = arith.constant 0 : i32
    %c0_i32_1 = arith.constant 0 : i32
    return %c0_i32, %c0_i32_0 : i32, i32
  }
  func.func @transform_13(%arg0: i32) -> (i32, i32) {
    %c0_i32 = arith.constant 0 : i32
    %c0_i32_0 = arith.constant 0 : i32
    %c0_i32_1 = arith.constant 0 : i32
    return %c0_i32, %c0_i32_0 : i32, i32
  }
  func.func @transform_14(%arg0: i32) -> (i32, i32) {
    %c0_i32 = arith.constant 0 : i32
    %c0_i32_0 = arith.constant 0 : i32
    %c0_i32_1 = arith.constant 0 : i32
    return %c0_i32, %c0_i32_0 : i32, i32
  }
  func.func @transform_15(%arg0: i32) -> (i32, i32) {
    %c0_i32 = arith.constant 0 : i32
    %c0_i32_0 = arith.constant 0 : i32
    return %arg0, %c0_i32 : i32, i32
  }
}

</mosaic_0001>

<llo_original>
// kernel: tpu_custom_call.1
$region0: #{tpu_custom_call.1}
  #allocation0 [shape = 'u32[]', space=smem, size = 0x4, offset = 0x4, fixed_abs, tag = 'smem constant byte address 0x4 - core index']
  #allocation1 [shape = 'u32[144,128]{1,0:T(1,128)}', space=vmem, size = 0x12000, scoped, tag = 'internal scratch']
  %s0 = inlined_call_operand.hbm [shape: bf16[4096,128], index: 0, kind: input, shape index: {}]
  %s1 = inlined_call_operand.hbm [shape: bf16[8,2048], index: 1, kind: input, shape index: {}]
  %s2 = inlined_call_operand.hbm [shape: bf16[16,1024], index: 2, kind: input, shape index: {}]
  %s3 = inlined_call_operand.hbm [shape: bf16[128,128], index: 3, kind: input, shape index: {}]
  %s4 = inlined_call_operand.vmem [shape: f32[1,128], index: 4, kind: input, shape index: {}]
  %s5 = inlined_call_operand.hbm [shape: bf16[128,512], index: 5, kind: input, shape index: {}]
  %s6 = inlined_call_operand.vmem [shape: f32[1,512], index: 6, kind: input, shape index: {}]
  %s7 = inlined_call_operand.hbm [shape: bf16[1024,512], index: 7, kind: input, shape index: {}]
  %s8 = inlined_call_operand.hbm [shape: bf16[512,512], index: 8, kind: input, shape index: {}]
  %s9 = inlined_call_operand.vmem [shape: f32[1,512], index: 9, kind: input, shape index: {}]
  %s10 = inlined_call_operand.hbm [shape: bf16[512,512], index: 10, kind: input, shape index: {}]
  %s11 = inlined_call_operand.hbm [shape: bf16[512,512], index: 11, kind: input, shape index: {}]
  %s12 = inlined_call_operand.vmem [shape: f32[1,512], index: 12, kind: input, shape index: {}]
  %s13 = inlined_call_operand.hbm [shape: bf16[512,640], index: 13, kind: input, shape index: {}]
  %s14 = inlined_call_operand.vmem [shape: f32[1,640], index: 14, kind: input, shape index: {}]
  %s15 = inlined_call_operand.hbm [shape: f32[16,640], index: 15, kind: output, shape index: {}]
  %s16 = sld [smem:[#allocation0]]
  $region133: #{tpu_custom_call.1} parent=0
    _
  %s18 = ssub.s32 1, %s16
  %s19 = scalar_select 0, %s18, %s16
  $region1: #{tpu_custom_call.1} parent=0
    #allocation2 [shape = 'u8[1048576]{0}', space=vmem, size = 0x100000, scoped, tag = 'input window, operand 0']
    #allocation3 [shape = 's32[2]{0}', space=sflag, size = 0x8, scoped, tag = 'scoped memory for tpu_custom_call.1']
    #allocation4 [shape = 's32[2]{0}', space=sflag, size = 0x8, scoped, tag = 'scoped memory for tpu_custom_call.1']
    #allocation5 [shape = 'u8[32768]{0}', space=vmem, size = 0x8000, scoped, tag = 'input window, operand 1, single buffered']
    #allocation6 [shape = 's32[1]{0}', space=sflag, size = 0x4, scoped, tag = 'scoped memory for tpu_custom_call.1']
    #allocation7 [shape = 'u8[32768]{0}', space=vmem, size = 0x8000, scoped, tag = 'input window, operand 2']
    #allocation8 [shape = 'u8[32768]{0}', space=vmem, size = 0x8000, scoped, tag = 'input window, operand 3, single buffered']
    #allocation9 [shape = 'u8[131072]{0}', space=vmem, size = 0x20000, scoped, tag = 'input window, operand 5, single buffered']
    #allocation10 [shape = 's32[1]{0}', space=sflag, size = 0x4, scoped, tag = 'scoped memory for tpu_custom_call.1']
    #allocation11 [shape = 'u8[1048576]{0}', space=vmem, size = 0x100000, scoped, tag = 'input window, operand 7, single buffered']
    #allocation12 [shape = 'u8[524288]{0}', space=vmem, size = 0x80000, scoped, tag = 'input window, operand 8, single buffered']
    #allocation13 [shape = 's32[1]{0}', space=sflag, size = 0x4, scoped, tag = 'scoped memory for tpu_custom_call.1']
    #allocation14 [shape = 'u8[524288]{0}', space=vmem, size = 0x80000, scoped, tag = 'input window, operand 10, single buffered']
    #allocation15 [shape = 'u8[524288]{0}', space=vmem, size = 0x80000, scoped, tag = 'input window, operand 11, single buffered']
    #allocation16 [shape = 's32[1]{0}', space=sflag, size = 0x4, scoped, tag = 'scoped memory for tpu_custom_call.1']
    #allocation17 [shape = 'u8[655360]{0}', space=vmem, size = 0xa0000, scoped, tag = 'input window, operand 13, single buffered']
    #allocation18 [shape = 'u8[40960]{0}', space=vmem, size = 0xa000, scoped, tag = 'output window, operand 0']
    %20 = vsyncpa [#allocation3], 0
    %s21 = scalar_lea.sflag [#allocation3], 1
    %22 = vsyncpa %s21, 0
    %23 = vsyncpa [#allocation6], 0
    %24 = vsyncpa [#allocation10], 0
    %25 = vsyncpa [#allocation13], 0
    %26 = vsyncpa [#allocation16], 0
    %27 = vsyncpa [#allocation4], 0
    %s28 = scalar_lea.sflag [#allocation4], 1
    %29 = vsyncpa %s28, 0
    loop: start=0, step=1, limit=4
    $region2: #{tpu_custom_call.1} parent=1 // loop_pre_header
      _
    $region3: #{tpu_custom_call.1} parent=1 // loop_header
      %s31 = sphi 0, %s35
      %p32 = scmp.ge.s32.totalorder %s31, 4
      %s41 = sphi 0, %s43
      %s44 = sphi 0, %s41
      %s45 = sphi 0, %s44
      %s61 = sphi 0, %s45
      %s65 = sphi 0, %s65
      %s67 = sphi 0, %s65
      %s68 = sphi 0, %s67
      %s82 = sphi 0, %s68
      %s88 = sphi 0, %s90
      %s91 = sphi 0, %s88
      %s92 = sphi 0, %s91
      %s108 = sphi 0, %s92
      %s112 = sphi 0, %s112
      %s114 = sphi 0, %s112
      %s115 = sphi 0, %s114
      %s129 = sphi 0, %s115
      %s133 = sphi 0, %s133
      %s135 = sphi 0, %s133
      %s136 = sphi 0, %s135
      %s150 = sphi 0, %s136
      %s154 = sphi 0, %s154
      %s156 = sphi 0, %s154
      %s157 = sphi 0, %s156
      %s171 = sphi 0, %s157
      %s175 = sphi 0, %s175
      %s177 = sphi 0, %s175
      %s178 = sphi 0, %s177
      %s192 = sphi 0, %s178
      %s196 = sphi 0, %s196
      %s198 = sphi 0, %s196
      %s199 = sphi 0, %s198
      %s213 = sphi 0, %s199
      %s217 = sphi 0, %s217
      %s219 = sphi 0, %s217
      %s220 = sphi 0, %s219
      %s234 = sphi 0, %s220
      %s238 = sphi 0, %s238
      %s240 = sphi 0, %s238
      %s241 = sphi 0, %s240
      %s255 = sphi 0, %s241
      %s259 = sphi 0, %s259
      %s261 = sphi 0, %s259
      %s262 = sphi 0, %s261
      %s276 = sphi 0, %s262
      %s280 = sphi 0, %s280
      %s282 = sphi 0, %s280
      %s283 = sphi 0, %s282
      %s297 = sphi 0, %s283
      %s301 = sphi 0, %s301
      %s303 = sphi 0, %s301
      %s304 = sphi 0, %s303
      %s318 = sphi 0, %s304
      %s322 = sphi 0, %s322
      %s324 = sphi 0, %s322
      %s325 = sphi 0, %s324
      %s339 = sphi 0, %s325
      %s343 = sphi 0, %s343
      %s345 = sphi 0, %s343
      %s346 = sphi 0, %s345
      %s360 = sphi 0, %s346
      %s366 = sphi 0, %s368
      %s369 = sphi 0, %s366
      %s370 = sphi 0, %s369
      %s386 = sphi 0, %s370
    $region4: #{tpu_custom_call.1} parent=1 // loop_header_branch
      %34 = sbr.rel (%p32) target = $region8
    $region5: #{tpu_custom_call.1} parent=1 // loop_body
      %s36 = ssub.s32 %s31, 1
      %s37 = ssub.s32 %s31, 2
      %s38 = sadd.s32 %s31, 1
      %s39 = ssub.s32 %s31, %s38
      %p40 = scmp.eq.s32.totalorder %s39, 0
      %s42 = sadd.s32 %s41, 1
      %s43 = scalar_select %p40, %s41, %s42
      %p46 = pneg %p40
      %p47 = scmp.eq.s32.totalorder %s31, 1
      %p48 = por %p46, %p47
      %p49 = scmp.ne.s32.totalorder %s41, %s44
      %p50 = scmp.eq.s32.totalorder %s31, 0
      %p51 = por %p49, %p50
      %p52 = scmp.ne.s32.totalorder %s41, %s44
      %p53 = scmp.eq.s32.totalorder %s36, 1
      %p54 = por %p52, %p53
      %p55 = scmp.ne.s32.totalorder %s44, %s45
      %p56 = scmp.eq.s32.totalorder %s36, 0
      %p57 = por %p55, %p56
      %p58 = scmp.ne.s32.totalorder %s44, %s45
      %p59 = scmp.eq.s32.totalorder %s37, 1
      %p60 = por %p58, %p59
      %p62 = scmp.ne.s32.totalorder %s45, %s61
      %p63 = scmp.eq.s32.totalorder %s37, 0
      %p64 = por %p62, %p63
      %s66 = sadd.s32 %s65, 1
      %p69 = scmp.eq.s32.totalorder %s31, 1
      %p70 = scmp.ne.s32.totalorder %s65, %s67
      %p71 = scmp.eq.s32.totalorder %s31, 0
      %p72 = por %p70, %p71
      %p73 = scmp.ne.s32.totalorder %s65, %s67
      %p74 = scmp.eq.s32.totalorder %s36, 1
      %p75 = por %p73, %p74
      %p76 = scmp.ne.s32.totalorder %s67, %s68
      %p77 = scmp.eq.s32.totalorder %s36, 0
      %p78 = por %p76, %p77
      %p79 = scmp.ne.s32.totalorder %s67, %s68
      %p80 = scmp.eq.s32.totalorder %s37, 1
      %p81 = por %p79, %p80
      %p83 = scmp.ne.s32.totalorder %s68, %s82
      %p84 = scmp.eq.s32.totalorder %s37, 0
      %p85 = por %p83, %p84
      %s86 = ssub.s32 %s31, %s38
      %p87 = scmp.eq.s32.totalorder %s86, 0
      %s89 = sadd.s32 %s88, 1
      %s90 = scalar_select %p87, %s88, %s89
      %p93 = pneg %p87
      %p94 = scmp.eq.s32.totalorder %s31, 1
      %p95 = por %p93, %p94
      %p96 = scmp.ne.s32.totalorder %s88, %s91
      %p97 = scmp.eq.s32.totalorder %s31, 0
      %p98 = por %p96, %p97
      %p99 = scmp.ne.s32.totalorder %s88, %s91
      %p100 = scmp.eq.s32.totalorder %s36, 1
      %p101 = por %p99, %p100
      %p102 = scmp.ne.s32.totalorder %s91, %s92
      %p103 = scmp.eq.s32.totalorder %s36, 0
      %p104 = por %p102, %p103
      %p105 = scmp.ne.s32.totalorder %s91, %s92
      %p106 = scmp.eq.s32.totalorder %s37, 1
      %p107 = por %p105, %p106
      %p109 = scmp.ne.s32.totalorder %s92, %s108
      %p110 = scmp.eq.s32.totalorder %s37, 0
      %p111 = por %p109, %p110
      %s113 = sadd.s32 %s112, 1
      %p116 = scmp.eq.s32.totalorder %s31, 1
      %p117 = scmp.ne.s32.totalorder %s112, %s114
      %p118 = scmp.eq.s32.totalorder %s31, 0
      %p119 = por %p117, %p118
      %p120 = scmp.ne.s32.totalorder %s112, %s114
      %p121 = scmp.eq.s32.totalorder %s36, 1
      %p122 = por %p120, %p121
      %p123 = scmp.ne.s32.totalorder %s114, %s115
      %p124 = scmp.eq.s32.totalorder %s36, 0
      %p125 = por %p123, %p124
      %p126 = scmp.ne.s32.totalorder %s114, %s115
      %p127 = scmp.eq.s32.totalorder %s37, 1
      %p128 = por %p126, %p127
      %p130 = scmp.ne.s32.totalorder %s115, %s129
      %p131 = scmp.eq.s32.totalorder %s37, 0
      %p132 = por %p130, %p131
      %s134 = sadd.s32 %s133, 1
      %p137 = scmp.eq.s32.totalorder %s31, 1
      %p138 = scmp.ne.s32.totalorder %s133, %s135
      %p139 = scmp.eq.s32.totalorder %s31, 0
      %p140 = por %p138, %p139
      %p141 = scmp.ne.s32.totalorder %s133, %s135
      %p142 = scmp.eq.s32.totalorder %s36, 1
      %p143 = por %p141, %p142
      %p144 = scmp.ne.s32.totalorder %s135, %s136
      %p145 = scmp.eq.s32.totalorder %s36, 0
      %p146 = por %p144, %p145
      %p147 = scmp.ne.s32.totalorder %s135, %s136
      %p148 = scmp.eq.s32.totalorder %s37, 1
      %p149 = por %p147, %p148
      %p151 = scmp.ne.s32.totalorder %s136, %s150
      %p152 = scmp.eq.s32.totalorder %s37, 0
      %p153 = por %p151, %p152
      %s155 = sadd.s32 %s154, 1
      %p158 = scmp.eq.s32.totalorder %s31, 1
      %p159 = scmp.ne.s32.totalorder %s154, %s156
      %p160 = scmp.eq.s32.totalorder %s31, 0
      %p161 = por %p159, %p160
      %p162 = scmp.ne.s32.totalorder %s154, %s156
      %p163 = scmp.eq.s32.totalorder %s36, 1
      %p164 = por %p162, %p163
      %p165 = scmp.ne.s32.totalorder %s156, %s157
      %p166 = scmp.eq.s32.totalorder %s36, 0
      %p167 = por %p165, %p166
      %p168 = scmp.ne.s32.totalorder %s156, %s157
      %p169 = scmp.eq.s32.totalorder %s37, 1
      %p170 = por %p168, %p169
      %p172 = scmp.ne.s32.totalorder %s157, %s171
      %p173 = scmp.eq.s32.totalorder %s37, 0
      %p174 = por %p172, %p173
      %s176 = sadd.s32 %s175, 1
      %p179 = scmp.eq.s32.totalorder %s31, 1
      %p180 = scmp.ne.s32.totalorder %s175, %s177
      %p181 = scmp.eq.s32.totalorder %s31, 0
      %p182 = por %p180, %p181
      %p183 = scmp.ne.s32.totalorder %s175, %s177
      %p184 = scmp.eq.s32.totalorder %s36, 1
      %p185 = por %p183, %p184
      %p186 = scmp.ne.s32.totalorder %s177, %s178
      %p187 = scmp.eq.s32.totalorder %s36, 0
      %p188 = por %p186, %p187
      %p189 = scmp.ne.s32.totalorder %s177, %s178
      %p190 = scmp.eq.s32.totalorder %s37, 1
      %p191 = por %p189, %p190
      %p193 = scmp.ne.s32.totalorder %s178, %s192
      %p194 = scmp.eq.s32.totalorder %s37, 0
      %p195 = por %p193, %p194
      %s197 = sadd.s32 %s196, 1
      %p200 = scmp.eq.s32.totalorder %s31, 1
      %p201 = scmp.ne.s32.totalorder %s196, %s198
      %p202 = scmp.eq.s32.totalorder %s31, 0
      %p203 = por %p201, %p202
      %p204 = scmp.ne.s32.totalorder %s196, %s198
      %p205 = scmp.eq.s32.totalorder %s36, 1
      %p206 = por %p204, %p205
      %p207 = scmp.ne.s32.totalorder %s198, %s199
      %p208 = scmp.eq.s32.totalorder %s36, 0
      %p209 = por %p207, %p208
      %p210 = scmp.ne.s32.totalorder %s198, %s199
      %p211 = scmp.eq.s32.totalorder %s37, 1
      %p212 = por %p210, %p211
      %p214 = scmp.ne.s32.totalorder %s199, %s213
      %p215 = scmp.eq.s32.totalorder %s37, 0
      %p216 = por %p214, %p215
      %s218 = sadd.s32 %s217, 1
      %p221 = scmp.eq.s32.totalorder %s31, 1
      %p222 = scmp.ne.s32.totalorder %s217, %s219
      %p223 = scmp.eq.s32.totalorder %s31, 0
      %p224 = por %p222, %p223
      %p225 = scmp.ne.s32.totalorder %s217, %s219
      %p226 = scmp.eq.s32.totalorder %s36, 1
      %p227 = por %p225, %p226
      %p228 = scmp.ne.s32.totalorder %s219, %s220
      %p229 = scmp.eq.s32.totalorder %s36, 0
      %p230 = por %p228, %p229
      %p231 = scmp.ne.s32.totalorder %s219, %s220
      %p232 = scmp.eq.s32.totalorder %s37, 1
      %p233 = por %p231, %p232
      %p235 = scmp.ne.s32.totalorder %s220, %s234
      %p236 = scmp.eq.s32.totalorder %s37, 0
      %p237 = por %p235, %p236
      %s239 = sadd.s32 %s238, 1
      %p242 = scmp.eq.s32.totalorder %s31, 1
      %p243 = scmp.ne.s32.totalorder %s238, %s240
      %p244 = scmp.eq.s32.totalorder %s31, 0
      %p245 = por %p243, %p244
      %p246 = scmp.ne.s32.totalorder %s238, %s240
      %p247 = scmp.eq.s32.totalorder %s36, 1
      %p248 = por %p246, %p247
      %p249 = scmp.ne.s32.totalorder %s240, %s241
      %p250 = scmp.eq.s32.totalorder %s36, 0
      %p251 = por %p249, %p250
      %p252 = scmp.ne.s32.totalorder %s240, %s241
      %p253 = scmp.eq.s32.totalorder %s37, 1
      %p254 = por %p252, %p253
      %p256 = scmp.ne.s32.totalorder %s241, %s255
      %p257 = scmp.eq.s32.totalorder %s37, 0
      %p258 = por %p256, %p257
      %s260 = sadd.s32 %s259, 1
      %p263 = scmp.eq.s32.totalorder %s31, 1
      %p264 = scmp.ne.s32.totalorder %s259, %s261
      %p265 = scmp.eq.s32.totalorder %s31, 0
      %p266 = por %p264, %p265
      %p267 = scmp.ne.s32.totalorder %s259, %s261
      %p268 = scmp.eq.s32.totalorder %s36, 1
      %p269 = por %p267, %p268
      %p270 = scmp.ne.s32.totalorder %s261, %s262
      %p271 = scmp.eq.s32.totalorder %s36, 0
      %p272 = por %p270, %p271
      %p273 = scmp.ne.s32.totalorder %s261, %s262
      %p274 = scmp.eq.s32.totalorder %s37, 1
      %p275 = por %p273, %p274
      %p277 = scmp.ne.s32.totalorder %s262, %s276
      %p278 = scmp.eq.s32.totalorder %s37, 0
      %p279 = por %p277, %p278
      %s281 = sadd.s32 %s280, 1
      %p284 = scmp.eq.s32.totalorder %s31, 1
      %p285 = scmp.ne.s32.totalorder %s280, %s282
      %p286 = scmp.eq.s32.totalorder %s31, 0
      %p287 = por %p285, %p286
      %p288 = scmp.ne.s32.totalorder %s280, %s282
      %p289 = scmp.eq.s32.totalorder %s36, 1
      %p290 = por %p288, %p289
      %p291 = scmp.ne.s32.totalorder %s282, %s283
      %p292 = scmp.eq.s32.totalorder %s36, 0
      %p293 = por %p291, %p292
      %p294 = scmp.ne.s32.totalorder %s282, %s283
      %p295 = scmp.eq.s32.totalorder %s37, 1
      %p296 = por %p294, %p295
      %p298 = scmp.ne.s32.totalorder %s283, %s297
      %p299 = scmp.eq.s32.totalorder %s37, 0
      %p300 = por %p298, %p299
      %s302 = sadd.s32 %s301, 1
      %p305 = scmp.eq.s32.totalorder %s31, 1
      %p306 = scmp.ne.s32.totalorder %s301, %s303
      %p307 = scmp.eq.s32.totalorder %s31, 0
      %p308 = por %p306, %p307
      %p309 = scmp.ne.s32.totalorder %s301, %s303
      %p310 = scmp.eq.s32.totalorder %s36, 1
      %p311 = por %p309, %p310
      %p312 = scmp.ne.s32.totalorder %s303, %s304
      %p313 = scmp.eq.s32.totalorder %s36, 0
      %p314 = por %p312, %p313
      %p315 = scmp.ne.s32.totalorder %s303, %s304
      %p316 = scmp.eq.s32.totalorder %s37, 1
      %p317 = por %p315, %p316
      %p319 = scmp.ne.s32.totalorder %s304, %s318
      %p320 = scmp.eq.s32.totalorder %s37, 0
      %p321 = por %p319, %p320
      %s323 = sadd.s32 %s322, 1
      %p326 = scmp.eq.s32.totalorder %s31, 1
      %p327 = scmp.ne.s32.totalorder %s322, %s324
      %p328 = scmp.eq.s32.totalorder %s31, 0
      %p329 = por %p327, %p328
      %p330 = scmp.ne.s32.totalorder %s322, %s324
      %p331 = scmp.eq.s32.totalorder %s36, 1
      %p332 = por %p330, %p331
      %p333 = scmp.ne.s32.totalorder %s324, %s325
      %p334 = scmp.eq.s32.totalorder %s36, 0
      %p335 = por %p333, %p334
      %p336 = scmp.ne.s32.totalorder %s324, %s325
      %p337 = scmp.eq.s32.totalorder %s37, 1
      %p338 = por %p336, %p337
      %p340 = scmp.ne.s32.totalorder %s325, %s339
      %p341 = scmp.eq.s32.totalorder %s37, 0
      %p342 = por %p340, %p341
      %s344 = sadd.s32 %s343, 1
      %p347 = scmp.eq.s32.totalorder %s31, 1
      %p348 = scmp.ne.s32.totalorder %s343, %s345
      %p349 = scmp.eq.s32.totalorder %s31, 0
      %p350 = por %p348, %p349
      %p351 = scmp.ne.s32.totalorder %s343, %s345
      %p352 = scmp.eq.s32.totalorder %s36, 1
      %p353 = por %p351, %p352
      %p354 = scmp.ne.s32.totalorder %s345, %s346
      %p355 = scmp.eq.s32.totalorder %s36, 0
      %p356 = por %p354, %p355
      %p357 = scmp.ne.s32.totalorder %s345, %s346
      %p358 = scmp.eq.s32.totalorder %s37, 1
      %p359 = por %p357, %p358
      %p361 = scmp.ne.s32.totalorder %s346, %s360
      %p362 = scmp.eq.s32.totalorder %s37, 0
      %p363 = por %p361, %p362
      %s364 = ssub.s32 %s31, %s38
      %p365 = scmp.eq.s32.totalorder %s364, 0
      %s367 = sadd.s32 %s366, 1
      %s368 = scalar_select %p365, %s366, %s367
      %p371 = pneg %p365
      %p372 = scmp.eq.s32.totalorder %s31, 1
      %p373 = por %p371, %p372
      %p374 = scmp.ne.s32.totalorder %s366, %s369
      %p375 = scmp.eq.s32.totalorder %s31, 0
      %p376 = por %p374, %p375
      %p377 = scmp.ne.s32.totalorder %s366, %s369
      %p378 = scmp.eq.s32.totalorder %s36, 1
      %p379 = por %p377, %p378
      %p380 = scmp.ne.s32.totalorder %s369, %s370
      %p381 = scmp.eq.s32.totalorder %s36, 0
      %p382 = por %p380, %p381
      %p383 = scmp.ne.s32.totalorder %s369, %s370
      %p384 = scmp.eq.s32.totalorder %s37, 1
      %p385 = por %p383, %p384
      %p387 = scmp.ne.s32.totalorder %s370, %s386
      %p388 = scmp.eq.s32.totalorder %s37, 0
      %p389 = por %p387, %p388
      %p390 = scmp.le.s32.totalorder 1, %s31
      %p391 = scmp.lt.s32.totalorder %s31, 3
      %p392 = pnand %p390, %p391
      %p393 = pneg %p392
      // Predicated region
      $region9: #{tpu_custom_call.1} parent=5 // pred_check
        _
      $region10: #{tpu_custom_call.1} parent=5 // pred_check_branch
        %395 = sbr.rel (%p392) target = $region12
      $region11: #{tpu_custom_call.1} parent=5 // pred_region
        %s396 = ssub.s32 %s31, 1
        // Predicated region
        $region13: #{tpu_custom_call.1} parent=11 // pred_check
          %p397 = pneg %p78
        $region14: #{tpu_custom_call.1} parent=11 // pred_check_branch
          %399 = sbr.rel (%p397) target = $region16
        $region15: #{tpu_custom_call.1} parent=11 // pred_region
          %s401 = ssub.s32 1024, 1024
          %402 = vsyncadd [#allocation6], %s401
          %s404 = sshll.u32 [#allocation5], 4
          %s405 = int_to_ptr.vmem [resolvable:$true] %s404
          %407 = dma.hbm_to_vmem [thread:$0]  %s1, 1024, %s405, [#allocation6]
        $region16: #{tpu_custom_call.1} parent=11 // pred_fallthru
          _
        // Predicated region
        $region17: #{tpu_custom_call.1} parent=11 // pred_check
          %p408 = pneg %p125
        $region18: #{tpu_custom_call.1} parent=11 // pred_check_branch
          %410 = sbr.rel (%p408) target = $region20
        $region19: #{tpu_custom_call.1} parent=11 // pred_region
          %s412 = ssub.s32 1024, 1024
          %413 = vsyncadd [#allocation6], %s412
          %s414 = sshll.u32 [#allocation8], 4
          %s415 = int_to_ptr.vmem [resolvable:$true] %s414
          %420 = dma.hbm_to_vmem [thread:$0]  %s3, 1024, %s415, [#allocation6], 64, 64, 4
        $region20: #{tpu_custom_call.1} parent=11 // pred_fallthru
          _
        // Predicated region
        $region21: #{tpu_custom_call.1} parent=11 // pred_check
          %p421 = pneg %p146
        $region22: #{tpu_custom_call.1} parent=11 // pred_check_branch
          %423 = sbr.rel (%p421) target = $region24
        $region23: #{tpu_custom_call.1} parent=11 // pred_region
          _
        $region24: #{tpu_custom_call.1} parent=11 // pred_fallthru
          _
        // Predicated region
        $region25: #{tpu_custom_call.1} parent=11 // pred_check
          %p424 = pneg %p167
        $region26: #{tpu_custom_call.1} parent=11 // pred_check_branch
          %426 = sbr.rel (%p424) target = $region28
        $region27: #{tpu_custom_call.1} parent=11 // pred_region
          %s428 = ssub.s32 4096, 4096
          %429 = vsyncadd [#allocation10], %s428
          %s430 = sshll.u32 [#allocation9], 4
          %s431 = int_to_ptr.vmem [resolvable:$true] %s430
          %436 = dma.hbm_to_vmem [thread:$0]  %s5, 4096, %s431, [#allocation10], 256, 256, 16
        $region28: #{tpu_custom_call.1} parent=11 // pred_fallthru
          _
        // Predicated region
        $region29: #{tpu_custom_call.1} parent=11 // pred_check
          %p437 = pneg %p188
        $region30: #{tpu_custom_call.1} parent=11 // pred_check_branch
          %439 = sbr.rel (%p437) target = $region32
        $region31: #{tpu_custom_call.1} parent=11 // pred_region
          _
        $region32: #{tpu_custom_call.1} parent=11 // pred_fallthru
          _
        // Predicated region
        $region33: #{tpu_custom_call.1} parent=11 // pred_check
          %p440 = pneg %p209
        $region34: #{tpu_custom_call.1} parent=11 // pred_check_branch
          %442 = sbr.rel (%p440) target = $region36
        $region35: #{tpu_custom_call.1} parent=11 // pred_region
          %s444 = ssub.s32 32768, 32768
          %445 = vsyncadd [#allocation10], %s444
          %s446 = sshll.u32 [#allocation11], 4
          %s447 = int_to_ptr.vmem [resolvable:$true] %s446
          %452 = dma.hbm_to_vmem [thread:$0]  %s7, 32768, %s447, [#allocation10], 256, 256, 16
        $region36: #{tpu_custom_call.1} parent=11 // pred_fallthru
          _
        // Predicated region
        $region37: #{tpu_custom_call.1} parent=11 // pred_check
          %p453 = pneg %p230
        $region38: #{tpu_custom_call.1} parent=11 // pred_check_branch
          %455 = sbr.rel (%p453) target = $region40
        $region39: #{tpu_custom_call.1} parent=11 // pred_region
          %s457 = ssub.s32 16384, 16384
          %458 = vsyncadd [#allocation13], %s457
          %s459 = sshll.u32 [#allocation12], 4
          %s460 = int_to_ptr.vmem [resolvable:$true] %s459
          %465 = dma.hbm_to_vmem [thread:$0]  %s8, 16384, %s460, [#allocation13], 256, 256, 16
        $region40: #{tpu_custom_call.1} parent=11 // pred_fallthru
          _
        // Predicated region
        $region41: #{tpu_custom_call.1} parent=11 // pred_check
          %p466 = pneg %p251
        $region42: #{tpu_custom_call.1} parent=11 // pred_check_branch
          %468 = sbr.rel (%p466) target = $region44
        $region43: #{tpu_custom_call.1} parent=11 // pred_region
          _
        $region44: #{tpu_custom_call.1} parent=11 // pred_fallthru
          _
        // Predicated region
        $region45: #{tpu_custom_call.1} parent=11 // pred_check
          %p469 = pneg %p272
        $region46: #{tpu_custom_call.1} parent=11 // pred_check_branch
          %471 = sbr.rel (%p469) target = $region48
        $region47: #{tpu_custom_call.1} parent=11 // pred_region
          %s473 = ssub.s32 16384, 16384
          %474 = vsyncadd [#allocation13], %s473
          %s475 = sshll.u32 [#allocation14], 4
          %s476 = int_to_ptr.vmem [resolvable:$true] %s475
          %481 = dma.hbm_to_vmem [thread:$0]  %s10, 16384, %s476, [#allocation13], 256, 256, 16
        $region48: #{tpu_custom_call.1} parent=11 // pred_fallthru
          _
        // Predicated region
        $region49: #{tpu_custom_call.1} parent=11 // pred_check
          %p482 = pneg %p293
        $region50: #{tpu_custom_call.1} parent=11 // pred_check_branch
          %484 = sbr.rel (%p482) target = $region52
        $region51: #{tpu_custom_call.1} parent=11 // pred_region
          %s486 = ssub.s32 16384, 16384
          %487 = vsyncadd [#allocation16], %s486
          %s488 = sshll.u32 [#allocation15], 4
          %s489 = int_to_ptr.vmem [resolvable:$true] %s488
          %494 = dma.hbm_to_vmem [thread:$0]  %s11, 16384, %s489, [#allocation16], 256, 256, 16
        $region52: #{tpu_custom_call.1} parent=11 // pred_fallthru
          _
        // Predicated region
        $region53: #{tpu_custom_call.1} parent=11 // pred_check
          %p495 = pneg %p314
        $region54: #{tpu_custom_call.1} parent=11 // pred_check_branch
          %497 = sbr.rel (%p495) target = $region56
        $region55: #{tpu_custom_call.1} parent=11 // pred_region
          _
        $region56: #{tpu_custom_call.1} parent=11 // pred_fallthru
          _
        // Predicated region
        $region57: #{tpu_custom_call.1} parent=11 // pred_check
          %p498 = pneg %p335
        $region58: #{tpu_custom_call.1} parent=11 // pred_check_branch
          %500 = sbr.rel (%p498) target = $region60
        $region59: #{tpu_custom_call.1} parent=11 // pred_region
          %s502 = ssub.s32 20480, 20480
          %503 = vsyncadd [#allocation16], %s502
          %s504 = sshll.u32 [#allocation17], 4
          %s505 = int_to_ptr.vmem [resolvable:$true] %s504
          %510 = dma.hbm_to_vmem [thread:$0]  %s13, 20480, %s505, [#allocation16], 320, 320, 20
        $region60: #{tpu_custom_call.1} parent=11 // pred_fallthru
          _
        // Predicated region
        $region61: #{tpu_custom_call.1} parent=11 // pred_check
          %p511 = pneg %p356
        $region62: #{tpu_custom_call.1} parent=11 // pred_check_branch
          %513 = sbr.rel (%p511) target = $region64
        $region63: #{tpu_custom_call.1} parent=11 // pred_region
          _
        $region64: #{tpu_custom_call.1} parent=11 // pred_fallthru
          _
      $region12: #{tpu_custom_call.1} parent=5 // pred_fallthru
        _
      %p514 = scmp.lt.s32.totalorder %s31, 2
      // Predicated region
      $region65: #{tpu_custom_call.1} parent=5 // pred_check
        %p515 = pneg %p514
      $region66: #{tpu_custom_call.1} parent=5 // pred_check_branch
        %517 = sbr.rel (%p515) target = $region68
      $region67: #{tpu_custom_call.1} parent=5 // pred_region
        // Predicated region
        $region69: #{tpu_custom_call.1} parent=67 // pred_check
          %p518 = pneg %p51
        $region70: #{tpu_custom_call.1} parent=67 // pred_check_branch
          %520 = sbr.rel (%p518) target = $region72
        $region71: #{tpu_custom_call.1} parent=67 // pred_region
          %s521 = sand.u32 %s31, 1
          %s522 = scalar_lea.sflag [#allocation3], %s521
          %s523 = sand.u32 %s41, 1
          %s524 = smul.addr %s523, 1024
          %s525 = scalar_lea.vmem [#allocation2], %s524
          %s526 = smul.u32 256, %s31
          %s528 = ssub.s32 16384, 16384
          %529 = vsyncadd %s522, %s528
          %s530 = smul.addr %s526, 64
          %s531 = scalar_lea.hbm %s0, %s530
          %s532 = sshll.u32 %s525, 4
          %s533 = int_to_ptr.vmem [resolvable:$true] %s532
          %538 = dma.hbm_to_vmem [thread:$0]  %s531, 16384, %s533, %s522, 64, 64, 4
        $region72: #{tpu_custom_call.1} parent=67 // pred_fallthru
          _
        // Predicated region
        $region73: #{tpu_custom_call.1} parent=67 // pred_check
          %p539 = pneg %p98
        $region74: #{tpu_custom_call.1} parent=67 // pred_check_branch
          %541 = sbr.rel (%p539) target = $region76
        $region75: #{tpu_custom_call.1} parent=67 // pred_region
          %s542 = sand.u32 %s31, 1
          %s543 = scalar_lea.sflag [#allocation3], %s542
          %s544 = sand.u32 %s88, 1
          %s545 = smul.addr %s544, 32
          %s546 = scalar_lea.vmem [#allocation7], %s545
          %s548 = ssub.s32 512, 512
          %549 = vsyncadd %s543, %s548
          %s550 = smul.addr %s31, 8
          %s551 = smul.addr %s550, 64
          %s552 = scalar_lea.hbm %s2, %s551
          %s554 = sshll.u32 %s546, 4
          %s555 = int_to_ptr.vmem [resolvable:$true] %s554
          %557 = dma.hbm_to_vmem [thread:$0]  %s552, 512, %s555, %s543
        $region76: #{tpu_custom_call.1} parent=67 // pred_fallthru
          _
      $region68: #{tpu_custom_call.1} parent=5 // pred_fallthru
        _
      %p558 = scmp.le.s32.totalorder 1, %s31
      %p559 = scmp.lt.s32.totalorder %s31, 3
      %p560 = pnand %p558, %p559
      %p561 = pneg %p560
      // Predicated region
      $region77: #{tpu_custom_call.1} parent=5 // pred_check
        _
      $region78: #{tpu_custom_call.1} parent=5 // pred_check_branch
        %563 = sbr.rel (%p560) target = $region80
      $region79: #{tpu_custom_call.1} parent=5 // pred_region
        %s564 = ssub.s32 %s31, 1
        %s565 = sand.u32 %s36, 1
        %s566 = scalar_lea.sflag [#allocation3], %s565
        %s567 = sand.u32 %s44, 1
        %s568 = smul.addr %s567, 1024
        %s569 = scalar_lea.vmem [#allocation2], %s568
        // Predicated region
        $region81: #{tpu_custom_call.1} parent=79 // pred_check
          %p570 = pneg %p57
        $region82: #{tpu_custom_call.1} parent=79 // pred_check_branch
          %572 = sbr.rel (%p570) target = $region84
        $region83: #{tpu_custom_call.1} parent=79 // pred_region
          %573 = dma.done %s566, 16384
        $region84: #{tpu_custom_call.1} parent=79 // pred_fallthru
          _
        // Predicated region
        $region85: #{tpu_custom_call.1} parent=79 // pred_check
          %p574 = pneg %p78
        $region86: #{tpu_custom_call.1} parent=79 // pred_check_branch
          %576 = sbr.rel (%p574) target = $region88
        $region87: #{tpu_custom_call.1} parent=79 // pred_region
          %577 = dma.done [#allocation6], 1024
        $region88: #{tpu_custom_call.1} parent=79 // pred_fallthru
          _
        %s578 = sand.u32 %s36, 1
        %s579 = scalar_lea.sflag [#allocation3], %s578
        %s580 = sand.u32 %s91, 1
        %s581 = smul.addr %s580, 32
        %s582 = scalar_lea.vmem [#allocation7], %s581
        // Predicated region
        $region89: #{tpu_custom_call.1} parent=79 // pred_check
          %p583 = pneg %p104
        $region90: #{tpu_custom_call.1} parent=79 // pred_check_branch
          %585 = sbr.rel (%p583) target = $region92
        $region91: #{tpu_custom_call.1} parent=79 // pred_region
          %586 = dma.done %s579, 512
        $region92: #{tpu_custom_call.1} parent=79 // pred_fallthru
          _
        // Predicated region
        $region93: #{tpu_custom_call.1} parent=79 // pred_check
          %p587 = pneg %p125
        $region94: #{tpu_custom_call.1} parent=79 // pred_check_branch
          %589 = sbr.rel (%p587) target = $region96
        $region95: #{tpu_custom_call.1} parent=79 // pred_region
          %590 = dma.done [#allocation6], 1024
        $region96: #{tpu_custom_call.1} parent=79 // pred_fallthru
          _
        // Predicated region
        $region97: #{tpu_custom_call.1} parent=79 // pred_check
          %p591 = pneg %p167
        $region98: #{tpu_custom_call.1} parent=79 // pred_check_branch
          %593 = sbr.rel (%p591) target = $region100
        $region99: #{tpu_custom_call.1} parent=79 // pred_region
          %594 = dma.done [#allocation10], 4096
        $region100: #{tpu_custom_call.1} parent=79 // pred_fallthru
          _
        // Predicated region
        $region101: #{tpu_custom_call.1} parent=79 // pred_check
          %p595 = pneg %p209
        $region102: #{tpu_custom_call.1} parent=79 // pred_check_branch
          %597 = sbr.rel (%p595) target = $region104
        $region103: #{tpu_custom_call.1} parent=79 // pred_region
          %598 = dma.done [#allocation10], 32768
        $region104: #{tpu_custom_call.1} parent=79 // pred_fallthru
          _
        // Predicated region
        $region105: #{tpu_custom_call.1} parent=79 // pred_check
          %p599 = pneg %p230
        $region106: #{tpu_custom_call.1} parent=79 // pred_check_branch
          %601 = sbr.rel (%p599) target = $region108
        $region107: #{tpu_custom_call.1} parent=79 // pred_region
          %602 = dma.done [#allocation13], 16384
        $region108: #{tpu_custom_call.1} parent=79 // pred_fallthru
          _
        // Predicated region
        $region109: #{tpu_custom_call.1} parent=79 // pred_check
          %p603 = pneg %p272
        $region110: #{tpu_custom_call.1} parent=79 // pred_check_branch
          %605 = sbr.rel (%p603) target = $region112
        $region111: #{tpu_custom_call.1} parent=79 // pred_region
          %606 = dma.done [#allocation13], 16384
        $region112: #{tpu_custom_call.1} parent=79 // pred_fallthru
          _
        // Predicated region
        $region113: #{tpu_custom_call.1} parent=79 // pred_check
          %p607 = pneg %p293
        $region114: #{tpu_custom_call.1} parent=79 // pred_check_branch
          %609 = sbr.rel (%p607) target = $region116
        $region115: #{tpu_custom_call.1} parent=79 // pred_region
          %610 = dma.done [#allocation16], 16384
        $region116: #{tpu_custom_call.1} parent=79 // pred_fallthru
          _
        // Predicated region
        $region117: #{tpu_custom_call.1} parent=79 // pred_check
          %p611 = pneg %p335
        $region118: #{tpu_custom_call.1} parent=79 // pred_check_branch
          %613 = sbr.rel (%p611) target = $region120
        $region119: #{tpu_custom_call.1} parent=79 // pred_region
          %614 = dma.done [#allocation16], 20480
        $region120: #{tpu_custom_call.1} parent=79 // pred_fallthru
          _
        %s615 = sand.u32 %s36, 1
        %s616 = scalar_lea.sflag [#allocation3], %s615
        %s617 = sand.u32 %s44, 1
        %s618 = smul.addr %s617, 1024
        %s619 = scalar_lea.vmem [#allocation2], %s618
        %p620 = pneg %p57
        %p621 = pneg %p54
        %p622 = pneg %p78
        %p623 = pneg %p75
        %s624 = sand.u32 %s36, 1
        %s625 = scalar_lea.sflag [#allocation3], %s624
        %s626 = sand.u32 %s91, 1
        %s627 = smul.addr %s626, 32
        %s628 = scalar_lea.vmem [#allocation7], %s627
        %p629 = pneg %p104
        %p630 = pneg %p101
        %p631 = pneg %p125
        %p632 = pneg %p122
        %p633 = pneg %p146
        %p634 = pneg %p143
        %p635 = pneg %p167
        %p636 = pneg %p164
        %p637 = pneg %p188
        %p638 = pneg %p185
        %p639 = pneg %p209
        %p640 = pneg %p206
        %p641 = pneg %p230
        %p642 = pneg %p227
        %p643 = pneg %p251
        %p644 = pneg %p248
        %p645 = pneg %p272
        %p646 = pneg %p269
        %p647 = pneg %p293
        %p648 = pneg %p290
        %p649 = pneg %p314
        %p650 = pneg %p311
        %p651 = pneg %p335
        %p652 = pneg %p332
        %p653 = pneg %p356
        %p654 = pneg %p353
        %p655 = pneg %p382
        %p656 = pneg %p379
        %s657 = sand.u32 %s369, 1
        %s658 = scalar_lea.sflag [#allocation4], %s657
        %s659 = sand.u32 %s369, 1
        %s660 = smul.addr %s659, 40
        %s661 = scalar_lea.vmem [#allocation18], %s660
        %s662 = smul.u32 256, %s36
        %v664 = vld [vmem:[%s569] sm:$0xf]
        %v665 = vld [vmem:[%s569 + $0x4] sm:$0xf]
        %v666 = vld [vmem:[%s569 + $0x8] sm:$0xf]
        %v667 = vld [vmem:[%s569 + $0xc] sm:$0xf]
        %v668 = vld [vmem:[%s569 + $0x10] sm:$0xf]
        %v669 = vld [vmem:[%s569 + $0x14] sm:$0xf]
        %v670 = vld [vmem:[%s569 + $0x18] sm:$0xf]
        %v671 = vld [vmem:[%s569 + $0x1c] sm:$0xf]
        %v672 = vld [vmem:[%s569 + $0x20] sm:$0xf]
        %v673 = vld [vmem:[%s569 + $0x24] sm:$0xf]
        %v674 = vld [vmem:[%s569 + $0x28] sm:$0xf]
        %v675 = vld [vmem:[%s569 + $0x2c] sm:$0xf]
        %v676 = vld [vmem:[%s569 + $0x30] sm:$0xf]
        %v677 = vld [vmem:[%s569 + $0x34] sm:$0xf]
        %v678 = vld [vmem:[%s569 + $0x38] sm:$0xf]
        %v679 = vld [vmem:[%s569 + $0x3c] sm:$0xf]
        %v680 = vld [vmem:[%s569 + $0x40] sm:$0xf]
        %v681 = vld [vmem:[%s569 + $0x44] sm:$0xf]
        %v682 = vld [vmem:[%s569 + $0x48] sm:$0xf]
        %v683 = vld [vmem:[%s569 + $0x4c] sm:$0xf]
        %v684 = vld [vmem:[%s569 + $0x50] sm:$0xf]
        %v685 = vld [vmem:[%s569 + $0x54] sm:$0xf]
        %v686 = vld [vmem:[%s569 + $0x58] sm:$0xf]
        %v687 = vld [vmem:[%s569 + $0x5c] sm:$0xf]
        %v688 = vld [vmem:[%s569 + $0x60] sm:$0xf]
        %v689 = vld [vmem:[%s569 + $0x64] sm:$0xf]
        %v690 = vld [vmem:[%s569 + $0x68] sm:$0xf]
        %v691 = vld [vmem:[%s569 + $0x6c] sm:$0xf]
        %v692 = vld [vmem:[%s569 + $0x70] sm:$0xf]
        %v693 = vld [vmem:[%s569 + $0x74] sm:$0xf]
        %v694 = vld [vmem:[%s569 + $0x78] sm:$0xf]
        %v695 = vld [vmem:[%s569 + $0x7c] sm:$0xf]
        %v696 = vld [vmem:[%s569 + $0x80] sm:$0xf]
        %v697 = vld [vmem:[%s569 + $0x84] sm:$0xf]
        %v698 = vld [vmem:[%s569 + $0x88] sm:$0xf]
        %v699 = vld [vmem:[%s569 + $0x8c] sm:$0xf]
        %v700 = vld [vmem:[%s569 + $0x90] sm:$0xf]
        %v701 = vld [vmem:[%s569 + $0x94] sm:$0xf]
        %v702 = vld [vmem:[%s569 + $0x98] sm:$0xf]
        %v703 = vld [vmem:[%s569 + $0x9c] sm:$0xf]
        %v704 = vld [vmem:[%s569 + $0xa0] sm:$0xf]
        %v705 = vld [vmem:[%s569 + $0xa4] sm:$0xf]
        %v706 = vld [vmem:[%s569 + $0xa8] sm:$0xf]
        %v707 = vld [vmem:[%s569 + $0xac] sm:$0xf]
        %v708 = vld [vmem:[%s569 + $0xb0] sm:$0xf]
        %v709 = vld [vmem:[%s569 + $0xb4] sm:$0xf]
        %v710 = vld [vmem:[%s569 + $0xb8] sm:$0xf]
        %v711 = vld [vmem:[%s569 + $0xbc] sm:$0xf]
        %v712 = vld [vmem:[%s569 + $0xc0] sm:$0xf]
        %v713 = vld [vmem:[%s569 + $0xc4] sm:$0xf]
        %v714 = vld [vmem:[%s569 + $0xc8] sm:$0xf]
        %v715 = vld [vmem:[%s569 + $0xcc] sm:$0xf]
        %v716 = vld [vmem:[%s569 + $0xd0] sm:$0xf]
        %v717 = vld [vmem:[%s569 + $0xd4] sm:$0xf]
        %v718 = vld [vmem:[%s569 + $0xd8] sm:$0xf]
        %v719 = vld [vmem:[%s569 + $0xdc] sm:$0xf]
        %v720 = vld [vmem:[%s569 + $0xe0] sm:$0xf]
        %v721 = vld [vmem:[%s569 + $0xe4] sm:$0xf]
        %v722 = vld [vmem:[%s569 + $0xe8] sm:$0xf]
        %v723 = vld [vmem:[%s569 + $0xec] sm:$0xf]
        %v724 = vld [vmem:[%s569 + $0xf0] sm:$0xf]
        %v725 = vld [vmem:[%s569 + $0xf4] sm:$0xf]
        %v726 = vld [vmem:[%s569 + $0xf8] sm:$0xf]
        %v727 = vld [vmem:[%s569 + $0xfc] sm:$0xf]
        %v728 = vld [vmem:[%s569 + $0x100] sm:$0xf]
        %v729 = vld [vmem:[%s569 + $0x104] sm:$0xf]
        %v730 = vld [vmem:[%s569 + $0x108] sm:$0xf]
        %v731 = vld [vmem:[%s569 + $0x10c] sm:$0xf]
        %v732 = vld [vmem:[%s569 + $0x110] sm:$0xf]
        %v733 = vld [vmem:[%s569 + $0x114] sm:$0xf]
        %v734 = vld [vmem:[%s569 + $0x118] sm:$0xf]
        %v735 = vld [vmem:[%s569 + $0x11c] sm:$0xf]
        %v736 = vld [vmem:[%s569 + $0x120] sm:$0xf]
        %v737 = vld [vmem:[%s569 + $0x124] sm:$0xf]
        %v738 = vld [vmem:[%s569 + $0x128] sm:$0xf]
        %v739 = vld [vmem:[%s569 + $0x12c] sm:$0xf]
        %v740 = vld [vmem:[%s569 + $0x130] sm:$0xf]
        %v741 = vld [vmem:[%s569 + $0x134] sm:$0xf]
        %v742 = vld [vmem:[%s569 + $0x138] sm:$0xf]
        %v743 = vld [vmem:[%s569 + $0x13c] sm:$0xf]
        %v744 = vld [vmem:[%s569 + $0x140] sm:$0xf]
        %v745 = vld [vmem:[%s569 + $0x144] sm:$0xf]
        %v746 = vld [vmem:[%s569 + $0x148] sm:$0xf]
        %v747 = vld [vmem:[%s569 + $0x14c] sm:$0xf]
        %v748 = vld [vmem:[%s569 + $0x150] sm:$0xf]
        %v749 = vld [vmem:[%s569 + $0x154] sm:$0xf]
        %v750 = vld [vmem:[%s569 + $0x158] sm:$0xf]
        %v751 = vld [vmem:[%s569 + $0x15c] sm:$0xf]
        %v752 = vld [vmem:[%s569 + $0x160] sm:$0xf]
        %v753 = vld [vmem:[%s569 + $0x164] sm:$0xf]
        %v754 = vld [vmem:[%s569 + $0x168] sm:$0xf]
        %v755 = vld [vmem:[%s569 + $0x16c] sm:$0xf]
        %v756 = vld [vmem:[%s569 + $0x170] sm:$0xf]
        %v757 = vld [vmem:[%s569 + $0x174] sm:$0xf]
        %v758 = vld [vmem:[%s569 + $0x178] sm:$0xf]
        %v759 = vld [vmem:[%s569 + $0x17c] sm:$0xf]
        %v760 = vld [vmem:[%s569 + $0x180] sm:$0xf]
        %v761 = vld [vmem:[%s569 + $0x184] sm:$0xf]
        %v762 = vld [vmem:[%s569 + $0x188] sm:$0xf]
        %v763 = vld [vmem:[%s569 + $0x18c] sm:$0xf]
        %v764 = vld [vmem:[%s569 + $0x190] sm:$0xf]
        %v765 = vld [vmem:[%s569 + $0x194] sm:$0xf]
        %v766 = vld [vmem:[%s569 + $0x198] sm:$0xf]
        %v767 = vld [vmem:[%s569 + $0x19c] sm:$0xf]
        %v768 = vld [vmem:[%s569 + $0x1a0] sm:$0xf]
        %v769 = vld [vmem:[%s569 + $0x1a4] sm:$0xf]
        %v770 = vld [vmem:[%s569 + $0x1a8] sm:$0xf]
        %v771 = vld [vmem:[%s569 + $0x1ac] sm:$0xf]
        %v772 = vld [vmem:[%s569 + $0x1b0] sm:$0xf]
        %v773 = vld [vmem:[%s569 + $0x1b4] sm:$0xf]
        %v774 = vld [vmem:[%s569 + $0x1b8] sm:$0xf]
        %v775 = vld [vmem:[%s569 + $0x1bc] sm:$0xf]
        %v776 = vld [vmem:[%s569 + $0x1c0] sm:$0xf]
        %v777 = vld [vmem:[%s569 + $0x1c4] sm:$0xf]
        %v778 = vld [vmem:[%s569 + $0x1c8] sm:$0xf]
        %v779 = vld [vmem:[%s569 + $0x1cc] sm:$0xf]
        %v780 = vld [vmem:[%s569 + $0x1d0] sm:$0xf]
        %v781 = vld [vmem:[%s569 + $0x1d4] sm:$0xf]
        %v782 = vld [vmem:[%s569 + $0x1d8] sm:$0xf]
        %v783 = vld [vmem:[%s569 + $0x1dc] sm:$0xf]
        %v784 = vld [vmem:[%s569 + $0x1e0] sm:$0xf]
        %v785 = vld [vmem:[%s569 + $0x1e4] sm:$0xf]
        %v786 = vld [vmem:[%s569 + $0x1e8] sm:$0xf]
        %v787 = vld [vmem:[%s569 + $0x1ec] sm:$0xf]
        %v788 = vld [vmem:[%s569 + $0x1f0] sm:$0xf]
        %v789 = vld [vmem:[%s569 + $0x1f4] sm:$0xf]
        %v790 = vld [vmem:[%s569 + $0x1f8] sm:$0xf]
        %v791 = vld [vmem:[%s569 + $0x1fc] sm:$0xf]
        %v792 = vld [vmem:[%s569 + $0x200] sm:$0xf]
        %v793 = vld [vmem:[%s569 + $0x204] sm:$0xf]
        %v794 = vld [vmem:[%s569 + $0x208] sm:$0xf]
        %v795 = vld [vmem:[%s569 + $0x20c] sm:$0xf]
        %v796 = vld [vmem:[%s569 + $0x210] sm:$0xf]
        %v797 = vld [vmem:[%s569 + $0x214] sm:$0xf]
        %v798 = vld [vmem:[%s569 + $0x218] sm:$0xf]
        %v799 = vld [vmem:[%s569 + $0x21c] sm:$0xf]
        %v800 = vld [vmem:[%s569 + $0x220] sm:$0xf]
        %v801 = vld [vmem:[%s569 + $0x224] sm:$0xf]
        %v802 = vld [vmem:[%s569 + $0x228] sm:$0xf]
        %v803 = vld [vmem:[%s569 + $0x22c] sm:$0xf]
        %v804 = vld [vmem:[%s569 + $0x230] sm:$0xf]
        %v805 = vld [vmem:[%s569 + $0x234] sm:$0xf]
        %v806 = vld [vmem:[%s569 + $0x238] sm:$0xf]
        %v807 = vld [vmem:[%s569 + $0x23c] sm:$0xf]
        %v808 = vld [vmem:[%s569 + $0x240] sm:$0xf]
        %v809 = vld [vmem:[%s569 + $0x244] sm:$0xf]
        %v810 = vld [vmem:[%s569 + $0x248] sm:$0xf]
        %v811 = vld [vmem:[%s569 + $0x24c] sm:$0xf]
        %v812 = vld [vmem:[%s569 + $0x250] sm:$0xf]
        %v813 = vld [vmem:[%s569 + $0x254] sm:$0xf]
        %v814 = vld [vmem:[%s569 + $0x258] sm:$0xf]
        %v815 = vld [vmem:[%s569 + $0x25c] sm:$0xf]
        %v816 = vld [vmem:[%s569 + $0x260] sm:$0xf]
        %v817 = vld [vmem:[%s569 + $0x264] sm:$0xf]
        %v818 = vld [vmem:[%s569 + $0x268] sm:$0xf]
        %v819 = vld [vmem:[%s569 + $0x26c] sm:$0xf]
        %v820 = vld [vmem:[%s569 + $0x270] sm:$0xf]
        %v821 = vld [vmem:[%s569 + $0x274] sm:$0xf]
        %v822 = vld [vmem:[%s569 + $0x278] sm:$0xf]
        %v823 = vld [vmem:[%s569 + $0x27c] sm:$0xf]
        %v824 = vld [vmem:[%s569 + $0x280] sm:$0xf]
        %v825 = vld [vmem:[%s569 + $0x284] sm:$0xf]
        %v826 = vld [vmem:[%s569 + $0x288] sm:$0xf]
        %v827 = vld [vmem:[%s569 + $0x28c] sm:$0xf]
        %v828 = vld [vmem:[%s569 + $0x290] sm:$0xf]
        %v829 = vld [vmem:[%s569 + $0x294] sm:$0xf]
        %v830 = vld [vmem:[%s569 + $0x298] sm:$0xf]
        %v831 = vld [vmem:[%s569 + $0x29c] sm:$0xf]
        %v832 = vld [vmem:[%s569 + $0x2a0] sm:$0xf]
        %v833 = vld [vmem:[%s569 + $0x2a4] sm:$0xf]
        %v834 = vld [vmem:[%s569 + $0x2a8] sm:$0xf]
        %v835 = vld [vmem:[%s569 + $0x2ac] sm:$0xf]
        %v836 = vld [vmem:[%s569 + $0x2b0] sm:$0xf]
        %v837 = vld [vmem:[%s569 + $0x2b4] sm:$0xf]
        %v838 = vld [vmem:[%s569 + $0x2b8] sm:$0xf]
        %v839 = vld [vmem:[%s569 + $0x2bc] sm:$0xf]
        %v840 = vld [vmem:[%s569 + $0x2c0] sm:$0xf]
        %v841 = vld [vmem:[%s569 + $0x2c4] sm:$0xf]
        %v842 = vld [vmem:[%s569 + $0x2c8] sm:$0xf]
        %v843 = vld [vmem:[%s569 + $0x2cc] sm:$0xf]
        %v844 = vld [vmem:[%s569 + $0x2d0] sm:$0xf]
        %v845 = vld [vmem:[%s569 + $0x2d4] sm:$0xf]
        %v846 = vld [vmem:[%s569 + $0x2d8] sm:$0xf]
        %v847 = vld [vmem:[%s569 + $0x2dc] sm:$0xf]
        %v848 = vld [vmem:[%s569 + $0x2e0] sm:$0xf]
        %v849 = vld [vmem:[%s569 + $0x2e4] sm:$0xf]
        %v850 = vld [vmem:[%s569 + $0x2e8] sm:$0xf]
        %v851 = vld [vmem:[%s569 + $0x2ec] sm:$0xf]
        %v852 = vld [vmem:[%s569 + $0x2f0] sm:$0xf]
        %v853 = vld [vmem:[%s569 + $0x2f4] sm:$0xf]
        %v854 = vld [vmem:[%s569 + $0x2f8] sm:$0xf]
        %v855 = vld [vmem:[%s569 + $0x2fc] sm:$0xf]
        %v856 = vld [vmem:[%s569 + $0x300] sm:$0xf]
        %v857 = vld [vmem:[%s569 + $0x304] sm:$0xf]
        %v858 = vld [vmem:[%s569 + $0x308] sm:$0xf]
        %v859 = vld [vmem:[%s569 + $0x30c] sm:$0xf]
        %v860 = vld [vmem:[%s569 + $0x310] sm:$0xf]
        %v861 = vld [vmem:[%s569 + $0x314] sm:$0xf]
        %v862 = vld [vmem:[%s569 + $0x318] sm:$0xf]
        %v863 = vld [vmem:[%s569 + $0x31c] sm:$0xf]
        %v864 = vld [vmem:[%s569 + $0x320] sm:$0xf]
        %v865 = vld [vmem:[%s569 + $0x324] sm:$0xf]
        %v866 = vld [vmem:[%s569 + $0x328] sm:$0xf]
        %v867 = vld [vmem:[%s569 + $0x32c] sm:$0xf]
        %v868 = vld [vmem:[%s569 + $0x330] sm:$0xf]
        %v869 = vld [vmem:[%s569 + $0x334] sm:$0xf]
        %v870 = vld [vmem:[%s569 + $0x338] sm:$0xf]
        %v871 = vld [vmem:[%s569 + $0x33c] sm:$0xf]
        %v872 = vld [vmem:[%s569 + $0x340] sm:$0xf]
        %v873 = vld [vmem:[%s569 + $0x344] sm:$0xf]
        %v874 = vld [vmem:[%s569 + $0x348] sm:$0xf]
        %v875 = vld [vmem:[%s569 + $0x34c] sm:$0xf]
        %v876 = vld [vmem:[%s569 + $0x350] sm:$0xf]
        %v877 = vld [vmem:[%s569 + $0x354] sm:$0xf]
        %v878 = vld [vmem:[%s569 + $0x358] sm:$0xf]
        %v879 = vld [vmem:[%s569 + $0x35c] sm:$0xf]
        %v880 = vld [vmem:[%s569 + $0x360] sm:$0xf]
        %v881 = vld [vmem:[%s569 + $0x364] sm:$0xf]
        %v882 = vld [vmem:[%s569 + $0x368] sm:$0xf]
        %v883 = vld [vmem:[%s569 + $0x36c] sm:$0xf]
        %v884 = vld [vmem:[%s569 + $0x370] sm:$0xf]
        %v885 = vld [vmem:[%s569 + $0x374] sm:$0xf]
        %v886 = vld [vmem:[%s569 + $0x378] sm:$0xf]
        %v887 = vld [vmem:[%s569 + $0x37c] sm:$0xf]
        %v888 = vld [vmem:[%s569 + $0x380] sm:$0xf]
        %v889 = vld [vmem:[%s569 + $0x384] sm:$0xf]
        %v890 = vld [vmem:[%s569 + $0x388] sm:$0xf]
        %v891 = vld [vmem:[%s569 + $0x38c] sm:$0xf]
        %v892 = vld [vmem:[%s569 + $0x390] sm:$0xf]
        %v893 = vld [vmem:[%s569 + $0x394] sm:$0xf]
        %v894 = vld [vmem:[%s569 + $0x398] sm:$0xf]
        %v895 = vld [vmem:[%s569 + $0x39c] sm:$0xf]
        %v896 = vld [vmem:[%s569 + $0x3a0] sm:$0xf]
        %v897 = vld [vmem:[%s569 + $0x3a4] sm:$0xf]
        %v898 = vld [vmem:[%s569 + $0x3a8] sm:$0xf]
        %v899 = vld [vmem:[%s569 + $0x3ac] sm:$0xf]
        %v900 = vld [vmem:[%s569 + $0x3b0] sm:$0xf]
        %v901 = vld [vmem:[%s569 + $0x3b4] sm:$0xf]
        %v902 = vld [vmem:[%s569 + $0x3b8] sm:$0xf]
        %v903 = vld [vmem:[%s569 + $0x3bc] sm:$0xf]
        %v904 = vld [vmem:[%s569 + $0x3c0] sm:$0xf]
        %v905 = vld [vmem:[%s569 + $0x3c4] sm:$0xf]
        %v906 = vld [vmem:[%s569 + $0x3c8] sm:$0xf]
        %v907 = vld [vmem:[%s569 + $0x3cc] sm:$0xf]
        %v908 = vld [vmem:[%s569 + $0x3d0] sm:$0xf]
        %v909 = vld [vmem:[%s569 + $0x3d4] sm:$0xf]
        %v910 = vld [vmem:[%s569 + $0x3d8] sm:$0xf]
        %v911 = vld [vmem:[%s569 + $0x3dc] sm:$0xf]
        %v912 = vld [vmem:[%s569 + $0x3e0] sm:$0xf]
        %v913 = vld [vmem:[%s569 + $0x3e4] sm:$0xf]
        %v914 = vld [vmem:[%s569 + $0x3e8] sm:$0xf]
        %v915 = vld [vmem:[%s569 + $0x3ec] sm:$0xf]
        %v916 = vld [vmem:[%s569 + $0x3f0] sm:$0xf]
        %v917 = vld [vmem:[%s569 + $0x3f4] sm:$0xf]
        %v918 = vld [vmem:[%s569 + $0x3f8] sm:$0xf]
        %v919 = vld [vmem:[%s569 + $0x3fc] sm:$0xf]
        %v920 = vld [vmem:[#allocation8] sm:$0xf]
        %v921 = vld [vmem:[#allocation8 + $0x4] sm:$0xf]
        %v922 = vld [vmem:[#allocation8 + $0x8] sm:$0xf]
        %v923 = vld [vmem:[#allocation8 + $0xc] sm:$0xf]
        %v924 = vld [vmem:[#allocation8 + $0x10] sm:$0xf]
        %v925 = vld [vmem:[#allocation8 + $0x14] sm:$0xf]
        %v926 = vld [vmem:[#allocation8 + $0x18] sm:$0xf]
        %v927 = vld [vmem:[#allocation8 + $0x1c] sm:$0xf]
        %v928 = vld [vmem:[#allocation8 + $0x20] sm:$0xf]
        %v929 = vld [vmem:[#allocation8 + $0x24] sm:$0xf]
        %v930 = vld [vmem:[#allocation8 + $0x28] sm:$0xf]
        %v931 = vld [vmem:[#allocation8 + $0x2c] sm:$0xf]
        %v932 = vld [vmem:[#allocation8 + $0x30] sm:$0xf]
        %v933 = vld [vmem:[#allocation8 + $0x34] sm:$0xf]
        %v934 = vld [vmem:[#allocation8 + $0x38] sm:$0xf]
        %v935 = vld [vmem:[#allocation8 + $0x3c] sm:$0xf]
        %v936 = vld [vmem:[%s4] sm:$0x1]
        %v938 = vlaneseq
        %v939 = vshrl.u32 %v938, 7
        %v940 = vsub.s32 0, %v939
        %v941 = vrot.slane %v936, %v940
        %v1199 = vunpack.c.l.b16 %v664
        %v1200 = vunpack.c.l.b16 %v665
        %v1201 = vunpack.c.l.b16 %v666
        %v1202 = vunpack.c.l.b16 %v667
        %v1203 = vunpack.c.l.b16 %v668
        %v1204 = vunpack.c.l.b16 %v669
        %v1205 = vunpack.c.l.b16 %v670
        %v1206 = vunpack.c.l.b16 %v671
        %v1207 = vunpack.c.l.b16 %v672
        %v1208 = vunpack.c.l.b16 %v673
        %v1209 = vunpack.c.l.b16 %v674
        %v1210 = vunpack.c.l.b16 %v675
        %v1211 = vunpack.c.l.b16 %v676
        %v1212 = vunpack.c.l.b16 %v677
        %v1213 = vunpack.c.l.b16 %v678
        %v1214 = vunpack.c.l.b16 %v679
        %v1215 = vunpack.c.l.b16 %v680
        %v1216 = vunpack.c.l.b16 %v681
        %v1217 = vunpack.c.l.b16 %v682
        %v1218 = vunpack.c.l.b16 %v683
        %v1219 = vunpack.c.l.b16 %v684
        %v1220 = vunpack.c.l.b16 %v685
        %v1221 = vunpack.c.l.b16 %v686
        %v1222 = vunpack.c.l.b16 %v687
        %v1223 = vunpack.c.l.b16 %v688
        %v1224 = vunpack.c.l.b16 %v689
        %v1225 = vunpack.c.l.b16 %v690
        %v1226 = vunpack.c.l.b16 %v691
        %v1227 = vunpack.c.l.b16 %v692
        %v1228 = vunpack.c.l.b16 %v693
        %v1229 = vunpack.c.l.b16 %v694
        %v1230 = vunpack.c.l.b16 %v695
        %v1231 = vunpack.c.l.b16 %v696
        %v1232 = vunpack.c.l.b16 %v697
        %v1233 = vunpack.c.l.b16 %v698
        %v1234 = vunpack.c.l.b16 %v699
        %v1235 = vunpack.c.l.b16 %v700
        %v1236 = vunpack.c.l.b16 %v701
        %v1237 = vunpack.c.l.b16 %v702
        %v1238 = vunpack.c.l.b16 %v703
        %v1239 = vunpack.c.l.b16 %v704
        %v1240 = vunpack.c.l.b16 %v705
        %v1241 = vunpack.c.l.b16 %v706
        %v1242 = vunpack.c.l.b16 %v707
        %v1243 = vunpack.c.l.b16 %v708
        %v1244 = vunpack.c.l.b16 %v709
        %v1245 = vunpack.c.l.b16 %v710
        %v1246 = vunpack.c.l.b16 %v711
        %v1247 = vunpack.c.l.b16 %v712
        %v1248 = vunpack.c.l.b16 %v713
        %v1249 = vunpack.c.l.b16 %v714
        %v1250 = vunpack.c.l.b16 %v715
        %v1251 = vunpack.c.l.b16 %v716
        %v1252 = vunpack.c.l.b16 %v717
        %v1253 = vunpack.c.l.b16 %v718
        %v1254 = vunpack.c.l.b16 %v719
        %v1255 = vunpack.c.l.b16 %v720
        %v1256 = vunpack.c.l.b16 %v721
        %v1257 = vunpack.c.l.b16 %v722
        %v1258 = vunpack.c.l.b16 %v723
        %v1259 = vunpack.c.l.b16 %v724
        %v1260 = vunpack.c.l.b16 %v725
        %v1261 = vunpack.c.l.b16 %v726
        %v1262 = vunpack.c.l.b16 %v727
        %v1263 = vunpack.c.l.b16 %v728
        %v1264 = vunpack.c.l.b16 %v729
        %v1265 = vunpack.c.l.b16 %v730
        %v1266 = vunpack.c.l.b16 %v731
        %v1267 = vunpack.c.l.b16 %v732
        %v1268 = vunpack.c.l.b16 %v733
        %v1269 = vunpack.c.l.b16 %v734
        %v1270 = vunpack.c.l.b16 %v735
        %v1271 = vunpack.c.l.b16 %v736
        %v1272 = vunpack.c.l.b16 %v737
        %v1273 = vunpack.c.l.b16 %v738
        %v1274 = vunpack.c.l.b16 %v739
        %v1275 = vunpack.c.l.b16 %v740
        %v1276 = vunpack.c.l.b16 %v741
        %v1277 = vunpack.c.l.b16 %v742
        %v1278 = vunpack.c.l.b16 %v743
        %v1279 = vunpack.c.l.b16 %v744
        %v1280 = vunpack.c.l.b16 %v745
        %v1281 = vunpack.c.l.b16 %v746
        %v1282 = vunpack.c.l.b16 %v747
        %v1283 = vunpack.c.l.b16 %v748
        %v1284 = vunpack.c.l.b16 %v749
        %v1285 = vunpack.c.l.b16 %v750
        %v1286 = vunpack.c.l.b16 %v751
        %v1287 = vunpack.c.l.b16 %v752
        %v1288 = vunpack.c.l.b16 %v753
        %v1289 = vunpack.c.l.b16 %v754
        %v1290 = vunpack.c.l.b16 %v755
        %v1291 = vunpack.c.l.b16 %v756
        %v1292 = vunpack.c.l.b16 %v757
        %v1293 = vunpack.c.l.b16 %v758
        %v1294 = vunpack.c.l.b16 %v759
        %v1295 = vunpack.c.l.b16 %v760
        %v1296 = vunpack.c.l.b16 %v761
        %v1297 = vunpack.c.l.b16 %v762
        %v1298 = vunpack.c.l.b16 %v763
        %v1299 = vunpack.c.l.b16 %v764
        %v1300 = vunpack.c.l.b16 %v765
        %v1301 = vunpack.c.l.b16 %v766
        %v1302 = vunpack.c.l.b16 %v767
        %v1303 = vunpack.c.l.b16 %v768
        %v1304 = vunpack.c.l.b16 %v769
        %v1305 = vunpack.c.l.b16 %v770
        %v1306 = vunpack.c.l.b16 %v771
        %v1307 = vunpack.c.l.b16 %v772
        %v1308 = vunpack.c.l.b16 %v773
        %v1309 = vunpack.c.l.b16 %v774
        %v1310 = vunpack.c.l.b16 %v775
        %v1311 = vunpack.c.l.b16 %v776
        %v1312 = vunpack.c.l.b16 %v777
        %v1313 = vunpack.c.l.b16 %v778
        %v1314 = vunpack.c.l.b16 %v779
        %v1315 = vunpack.c.l.b16 %v780
        %v1316 = vunpack.c.l.b16 %v781
        %v1317 = vunpack.c.l.b16 %v782
        %v1318 = vunpack.c.l.b16 %v783
        %v1319 = vunpack.c.l.b16 %v784
        %v1320 = vunpack.c.l.b16 %v785
        %v1321 = vunpack.c.l.b16 %v786
        %v1322 = vunpack.c.l.b16 %v787
        %v1323 = vunpack.c.l.b16 %v788
        %v1324 = vunpack.c.l.b16 %v789
        %v1325 = vunpack.c.l.b16 %v790
        %v1326 = vunpack.c.l.b16 %v791
        %v1327 = vunpack.c.l.b16 %v792
        %v1328 = vunpack.c.l.b16 %v793
        %v1329 = vunpack.c.l.b16 %v794
        %v1330 = vunpack.c.l.b16 %v795
        %v1331 = vunpack.c.l.b16 %v796
        %v1332 = vunpack.c.l.b16 %v797
        %v1333 = vunpack.c.l.b16 %v798
        %v1334 = vunpack.c.l.b16 %v799
        %v1335 = vunpack.c.l.b16 %v800
        %v1336 = vunpack.c.l.b16 %v801
        %v1337 = vunpack.c.l.b16 %v802
        %v1338 = vunpack.c.l.b16 %v803
        %v1339 = vunpack.c.l.b16 %v804
        %v1340 = vunpack.c.l.b16 %v805
        %v1341 = vunpack.c.l.b16 %v806
        %v1342 = vunpack.c.l.b16 %v807
        %v1343 = vunpack.c.l.b16 %v808
        %v1344 = vunpack.c.l.b16 %v809
        %v1345 = vunpack.c.l.b16 %v810
        %v1346 = vunpack.c.l.b16 %v811
        %v1347 = vunpack.c.l.b16 %v812
        %v1348 = vunpack.c.l.b16 %v813
        %v1349 = vunpack.c.l.b16 %v814
        %v1350 = vunpack.c.l.b16 %v815
        %v1351 = vunpack.c.l.b16 %v816
        %v1352 = vunpack.c.l.b16 %v817
        %v1353 = vunpack.c.l.b16 %v818
        %v1354 = vunpack.c.l.b16 %v819
        %v1355 = vunpack.c.l.b16 %v820
        %v1356 = vunpack.c.l.b16 %v821
        %v1357 = vunpack.c.l.b16 %v822
        %v1358 = vunpack.c.l.b16 %v823
        %v1359 = vunpack.c.l.b16 %v824
        %v1360 = vunpack.c.l.b16 %v825
        %v1361 = vunpack.c.l.b16 %v826
        %v1362 = vunpack.c.l.b16 %v827
        %v1363 = vunpack.c.l.b16 %v828
        %v1364 = vunpack.c.l.b16 %v829
        %v1365 = vunpack.c.l.b16 %v830
        %v1366 = vunpack.c.l.b16 %v831
        %v1367 = vunpack.c.l.b16 %v832
        %v1368 = vunpack.c.l.b16 %v833
        %v1369 = vunpack.c.l.b16 %v834
        %v1370 = vunpack.c.l.b16 %v835
        %v1371 = vunpack.c.l.b16 %v836
        %v1372 = vunpack.c.l.b16 %v837
        %v1373 = vunpack.c.l.b16 %v838
        %v1374 = vunpack.c.l.b16 %v839
        %v1375 = vunpack.c.l.b16 %v840
        %v1376 = vunpack.c.l.b16 %v841
        %v1377 = vunpack.c.l.b16 %v842
        %v1378 = vunpack.c.l.b16 %v843
        %v1379 = vunpack.c.l.b16 %v844
        %v1380 = vunpack.c.l.b16 %v845
        %v1381 = vunpack.c.l.b16 %v846
        %v1382 = vunpack.c.l.b16 %v847
        %v1383 = vunpack.c.l.b16 %v848
        %v1384 = vunpack.c.l.b16 %v849
        %v1385 = vunpack.c.l.b16 %v850
        %v1386 = vunpack.c.l.b16 %v851
        %v1387 = vunpack.c.l.b16 %v852
        %v1388 = vunpack.c.l.b16 %v853
        %v1389 = vunpack.c.l.b16 %v854
        %v1390 = vunpack.c.l.b16 %v855
        %v1391 = vunpack.c.l.b16 %v856
        %v1392 = vunpack.c.l.b16 %v857
        %v1393 = vunpack.c.l.b16 %v858
        %v1394 = vunpack.c.l.b16 %v859
        %v1395 = vunpack.c.l.b16 %v860
        %v1396 = vunpack.c.l.b16 %v861
        %v1397 = vunpack.c.l.b16 %v862
        %v1398 = vunpack.c.l.b16 %v863
        %v1399 = vunpack.c.l.b16 %v864
        %v1400 = vunpack.c.l.b16 %v865
        %v1401 = vunpack.c.l.b16 %v866
        %v1402 = vunpack.c.l.b16 %v867
        %v1403 = vunpack.c.l.b16 %v868
        %v1404 = vunpack.c.l.b16 %v869
        %v1405 = vunpack.c.l.b16 %v870
        %v1406 = vunpack.c.l.b16 %v871
        %v1407 = vunpack.c.l.b16 %v872
        %v1408 = vunpack.c.l.b16 %v873
        %v1409 = vunpack.c.l.b16 %v874
        %v1410 = vunpack.c.l.b16 %v875
        %v1411 = vunpack.c.l.b16 %v876
        %v1412 = vunpack.c.l.b16 %v877
        %v1413 = vunpack.c.l.b16 %v878
        %v1414 = vunpack.c.l.b16 %v879
        %v1415 = vunpack.c.l.b16 %v880
        %v1416 = vunpack.c.l.b16 %v881
        %v1417 = vunpack.c.l.b16 %v882
        %v1418 = vunpack.c.l.b16 %v883
        %v1419 = vunpack.c.l.b16 %v884
        %v1420 = vunpack.c.l.b16 %v885
        %v1421 = vunpack.c.l.b16 %v886
        %v1422 = vunpack.c.l.b16 %v887
        %v1423 = vunpack.c.l.b16 %v888
        %v1424 = vunpack.c.l.b16 %v889
        %v1425 = vunpack.c.l.b16 %v890
        %v1426 = vunpack.c.l.b16 %v891
        %v1427 = vunpack.c.l.b16 %v892
        %v1428 = vunpack.c.l.b16 %v893
        %v1429 = vunpack.c.l.b16 %v894
        %v1430 = vunpack.c.l.b16 %v895
        %v1431 = vunpack.c.l.b16 %v896
        %v1432 = vunpack.c.l.b16 %v897
        %v1433 = vunpack.c.l.b16 %v898
        %v1434 = vunpack.c.l.b16 %v899
        %v1435 = vunpack.c.l.b16 %v900
        %v1436 = vunpack.c.l.b16 %v901
        %v1437 = vunpack.c.l.b16 %v902
        %v1438 = vunpack.c.l.b16 %v903
        %v1439 = vunpack.c.l.b16 %v904
        %v1440 = vunpack.c.l.b16 %v905
        %v1441 = vunpack.c.l.b16 %v906
        %v1442 = vunpack.c.l.b16 %v907
        %v1443 = vunpack.c.l.b16 %v908
        %v1444 = vunpack.c.l.b16 %v909
        %v1445 = vunpack.c.l.b16 %v910
        %v1446 = vunpack.c.l.b16 %v911
        %v1447 = vunpack.c.l.b16 %v912
        %v1448 = vunpack.c.l.b16 %v913
        %v1449 = vunpack.c.l.b16 %v914
        %v1450 = vunpack.c.l.b16 %v915
        %v1451 = vunpack.c.l.b16 %v916
        %v1452 = vunpack.c.l.b16 %v917
        %v1453 = vunpack.c.l.b16 %v918
        %v1454 = vunpack.c.l.b16 %v919
        %v1455 = vpack.c.b16 %v1200, %v1199
        %v1456 = vpack.c.b16 %v1202, %v1201
        %v1457 = vpack.c.b16 %v1204, %v1203
        %v1458 = vpack.c.b16 %v1206, %v1205
        %v1459 = vpack.c.b16 %v1208, %v1207
        %v1460 = vpack.c.b16 %v1210, %v1209
        %v1461 = vpack.c.b16 %v1212, %v1211
        %v1462 = vpack.c.b16 %v1214, %v1213
        %v1463 = vpack.c.b16 %v1216, %v1215
        %v1464 = vpack.c.b16 %v1218, %v1217
        %v1465 = vpack.c.b16 %v1220, %v1219
        %v1466 = vpack.c.b16 %v1222, %v1221
        %v1467 = vpack.c.b16 %v1224, %v1223
        %v1468 = vpack.c.b16 %v1226, %v1225
        %v1469 = vpack.c.b16 %v1228, %v1227
        %v1470 = vpack.c.b16 %v1230, %v1229
        %v1471 = vpack.c.b16 %v1232, %v1231
        %v1472 = vpack.c.b16 %v1234, %v1233
        %v1473 = vpack.c.b16 %v1236, %v1235
        %v1474 = vpack.c.b16 %v1238, %v1237
        %v1475 = vpack.c.b16 %v1240, %v1239
        %v1476 = vpack.c.b16 %v1242, %v1241
        %v1477 = vpack.c.b16 %v1244, %v1243
        %v1478 = vpack.c.b16 %v1246, %v1245
        %v1479 = vpack.c.b16 %v1248, %v1247
        %v1480 = vpack.c.b16 %v1250, %v1249
        %v1481 = vpack.c.b16 %v1252, %v1251
        %v1482 = vpack.c.b16 %v1254, %v1253
        %v1483 = vpack.c.b16 %v1256, %v1255
        %v1484 = vpack.c.b16 %v1258, %v1257
        %v1485 = vpack.c.b16 %v1260, %v1259
        %v1486 = vpack.c.b16 %v1262, %v1261
        %v1487 = vpack.c.b16 %v1264, %v1263
        %v1488 = vpack.c.b16 %v1266, %v1265
        %v1489 = vpack.c.b16 %v1268, %v1267
        %v1490 = vpack.c.b16 %v1270, %v1269
        %v1491 = vpack.c.b16 %v1272, %v1271
        %v1492 = vpack.c.b16 %v1274, %v1273
        %v1493 = vpack.c.b16 %v1276, %v1275
        %v1494 = vpack.c.b16 %v1278, %v1277
        %v1495 = vpack.c.b16 %v1280, %v1279
        %v1496 = vpack.c.b16 %v1282, %v1281
        %v1497 = vpack.c.b16 %v1284, %v1283
        %v1498 = vpack.c.b16 %v1286, %v1285
        %v1499 = vpack.c.b16 %v1288, %v1287
        %v1500 = vpack.c.b16 %v1290, %v1289
        %v1501 = vpack.c.b16 %v1292, %v1291
        %v1502 = vpack.c.b16 %v1294, %v1293
        %v1503 = vpack.c.b16 %v1296, %v1295
        %v1504 = vpack.c.b16 %v1298, %v1297
        %v1505 = vpack.c.b16 %v1300, %v1299
        %v1506 = vpack.c.b16 %v1302, %v1301
        %v1507 = vpack.c.b16 %v1304, %v1303
        %v1508 = vpack.c.b16 %v1306, %v1305
        %v1509 = vpack.c.b16 %v1308, %v1307
        %v1510 = vpack.c.b16 %v1310, %v1309
        %v1511 = vpack.c.b16 %v1312, %v1311
        %v1512 = vpack.c.b16 %v1314, %v1313
        %v1513 = vpack.c.b16 %v1316, %v1315
        %v1514 = vpack.c.b16 %v1318, %v1317
        %v1515 = vpack.c.b16 %v1320, %v1319
        %v1516 = vpack.c.b16 %v1322, %v1321
        %v1517 = vpack.c.b16 %v1324, %v1323
        %v1518 = vpack.c.b16 %v1326, %v1325
        %v1519 = vpack.c.b16 %v1328, %v1327
        %v1520 = vpack.c.b16 %v1330, %v1329
        %v1521 = vpack.c.b16 %v1332, %v1331
        %v1522 = vpack.c.b16 %v1334, %v1333
        %v1523 = vpack.c.b16 %v1336, %v1335
        %v1524 = vpack.c.b16 %v1338, %v1337
        %v1525 = vpack.c.b16 %v1340, %v1339
        %v1526 = vpack.c.b16 %v1342, %v1341
        %v1527 = vpack.c.b16 %v1344, %v1343
        %v1528 = vpack.c.b16 %v1346, %v1345
        %v1529 = vpack.c.b16 %v1348, %v1347
        %v1530 = vpack.c.b16 %v1350, %v1349
        %v1531 = vpack.c.b16 %v1352, %v1351
        %v1532 = vpack.c.b16 %v1354, %v1353
        %v1533 = vpack.c.b16 %v1356, %v1355
        %v1534 = vpack.c.b16 %v1358, %v1357
        %v1535 = vpack.c.b16 %v1360, %v1359
        %v1536 = vpack.c.b16 %v1362, %v1361
        %v1537 = vpack.c.b16 %v1364, %v1363
        %v1538 = vpack.c.b16 %v1366, %v1365
        %v1539 = vpack.c.b16 %v1368, %v1367
        %v1540 = vpack.c.b16 %v1370, %v1369
        %v1541 = vpack.c.b16 %v1372, %v1371
        %v1542 = vpack.c.b16 %v1374, %v1373
        %v1543 = vpack.c.b16 %v1376, %v1375
        %v1544 = vpack.c.b16 %v1378, %v1377
        %v1545 = vpack.c.b16 %v1380, %v1379
        %v1546 = vpack.c.b16 %v1382, %v1381
        %v1547 = vpack.c.b16 %v1384, %v1383
        %v1548 = vpack.c.b16 %v1386, %v1385
        %v1549 = vpack.c.b16 %v1388, %v1387
        %v1550 = vpack.c.b16 %v1390, %v1389
        %v1551 = vpack.c.b16 %v1392, %v1391
        %v1552 = vpack.c.b16 %v1394, %v1393
        %v1553 = vpack.c.b16 %v1396, %v1395
        %v1554 = vpack.c.b16 %v1398, %v1397
        %v1555 = vpack.c.b16 %v1400, %v1399
        %v1556 = vpack.c.b16 %v1402, %v1401
        %v1557 = vpack.c.b16 %v1404, %v1403
        %v1558 = vpack.c.b16 %v1406, %v1405
        %v1559 = vpack.c.b16 %v1408, %v1407
        %v1560 = vpack.c.b16 %v1410, %v1409
        %v1561 = vpack.c.b16 %v1412, %v1411
        %v1562 = vpack.c.b16 %v1414, %v1413
        %v1563 = vpack.c.b16 %v1416, %v1415
        %v1564 = vpack.c.b16 %v1418, %v1417
        %v1565 = vpack.c.b16 %v1420, %v1419
        %v1566 = vpack.c.b16 %v1422, %v1421
        %v1567 = vpack.c.b16 %v1424, %v1423
        %v1568 = vpack.c.b16 %v1426, %v1425
        %v1569 = vpack.c.b16 %v1428, %v1427
        %v1570 = vpack.c.b16 %v1430, %v1429
        %v1571 = vpack.c.b16 %v1432, %v1431
        %v1572 = vpack.c.b16 %v1434, %v1433
        %v1573 = vpack.c.b16 %v1436, %v1435
        %v1574 = vpack.c.b16 %v1438, %v1437
        %v1575 = vpack.c.b16 %v1440, %v1439
        %v1576 = vpack.c.b16 %v1442, %v1441
        %v1577 = vpack.c.b16 %v1444, %v1443
        %v1578 = vpack.c.b16 %v1446, %v1445
        %v1579 = vpack.c.b16 %v1448, %v1447
        %v1580 = vpack.c.b16 %v1450, %v1449
        %v1581 = vpack.c.b16 %v1452, %v1451
        %v1582 = vpack.c.b16 %v1454, %v1453
        %v1727 = vunpack.c.l.b16 %v920
        %v1728 = vunpack.c.l.b16 %v921
        %v1729 = vunpack.c.l.b16 %v922
        %v1730 = vunpack.c.l.b16 %v923
        %v1731 = vunpack.c.l.b16 %v924
        %v1732 = vunpack.c.l.b16 %v925
        %v1733 = vunpack.c.l.b16 %v926
        %v1734 = vunpack.c.l.b16 %v927
        %v1735 = vunpack.c.l.b16 %v928
        %v1736 = vunpack.c.l.b16 %v929
        %v1737 = vunpack.c.l.b16 %v930
        %v1738 = vunpack.c.l.b16 %v931
        %v1739 = vunpack.c.l.b16 %v932
        %v1740 = vunpack.c.l.b16 %v933
        %v1741 = vunpack.c.l.b16 %v934
        %v1742 = vunpack.c.l.b16 %v935
        %v1743 = vpack.c.b16 %v1728, %v1727
        %v1744 = vpack.c.b16 %v1730, %v1729
        %v1745 = vpack.c.b16 %v1732, %v1731
        %v1746 = vpack.c.b16 %v1734, %v1733
        %v1747 = vpack.c.b16 %v1736, %v1735
        %v1748 = vpack.c.b16 %v1738, %v1737
        %v1749 = vpack.c.b16 %v1740, %v1739
        %v1750 = vpack.c.b16 %v1742, %v1741
        %1759 = vmatprep.subr.bf16.mxu0 0
        %1760 = vmatpush1.bf16.msra.mxu0 %v1743
        %1761 = vmatprep.subr.bf16.mxu0 0
        %1762 = vmatpush1.bf16.msra.mxu0 %v1744
        %1763 = vmatprep.subr.bf16.mxu0 0
        %1764 = vmatpush1.bf16.msra.mxu0 %v1745
        %1765 = vmatprep.subr.bf16.mxu0 0
        %1766 = vmatpush1.bf16.msra.mxu0 %v1746
        %1767 = vmatprep.subr.bf16.mxu0 0
        %1768 = vmatpush1.bf16.msra.mxu0 %v1747
        %1769 = vmatprep.subr.bf16.mxu0 0
        %1770 = vmatpush1.bf16.msra.mxu0 %v1748
        %1771 = vmatprep.subr.bf16.mxu0 0
        %1772 = vmatpush1.bf16.msra.mxu0 %v1749
        %1773 = vmatprep.subr.bf16.mxu0 0
        %1774 = vmatpush1.bf16.msra.mxu0 %v1750
        %1775 = vmatprep.subr.bf16.mxu0 0
        %1776 = vmatpush1.bf16.msra.mxu0 0
        %1777 = vmatprep.subr.bf16.mxu0 0
        %1778 = vmatpush1.bf16.msra.mxu0 0
        %1779 = vmatprep.subr.bf16.mxu0 0
        %1780 = vmatpush1.bf16.msra.mxu0 0
        %1781 = vmatprep.subr.bf16.mxu0 0
        %1782 = vmatpush1.bf16.msra.mxu0 0
        %1783 = vmatprep.subr.bf16.mxu0 0
        %1784 = vmatpush1.bf16.msra.mxu0 0
        %1785 = vmatprep.subr.bf16.mxu0 0
        %1786 = vmatpush1.bf16.msra.mxu0 0
        %1787 = vmatprep.subr.bf16.mxu0 0
        %1788 = vmatpush1.bf16.msra.mxu0 0
        %1789 = vmatprep.subr.bf16.mxu0 0
        %1790 = vmatpush1.bf16.msra.mxu0 0
        %1791 = vmatprep.mubr.bf16.mxu0 0
        %1792 = vmatmul.mubr.bf16.gmra.mrb[0].mxu0 %v1455
        %v1793 = vpop.f32.mrb[0].mxu0
        %v1794 = vadd.f32 %v941, %v1793
        %v1795 = vpop.f32.mrb[0].mxu0
        %v1796 = vpop.f32.mrb[0].mxu0
        %v1797 = vadd.f32 %v941, %v1796
        %v1798 = vpop.f32.mrb[0].mxu0
        %1799 = vmatprep.mubr.bf16.mxu0 0
        %1800 = vmatmul.mubr.bf16.gmra.mrb[0].mxu0 %v1456
        %v1801 = vpop.f32.mrb[0].mxu0
        %v1802 = vadd.f32 %v941, %v1801
        %v1803 = vpop.f32.mrb[0].mxu0
        %v1804 = vpop.f32.mrb[0].mxu0
        %v1805 = vadd.f32 %v941, %v1804
        %v1806 = vpop.f32.mrb[0].mxu0
        %1807 = vmatprep.mubr.bf16.mxu0 0
        %1808 = vmatmul.mubr.bf16.gmra.mrb[0].mxu0 %v1457
        %v1809 = vpop.f32.mrb[0].mxu0
        %v1810 = vadd.f32 %v941, %v1809
        %v1811 = vpop.f32.mrb[0].mxu0
        %v1812 = vpop.f32.mrb[0].mxu0
        %v1813 = vadd.f32 %v941, %v1812
        %v1814 = vpop.f32.mrb[0].mxu0
        %1815 = vmatprep.mubr.bf16.mxu0 0
        %1816 = vmatmul.mubr.bf16.gmra.mrb[0].mxu0 %v1458
        %v1817 = vpop.f32.mrb[0].mxu0
        %v1818 = vadd.f32 %v941, %v1817
        %v1819 = vpop.f32.mrb[0].mxu0
        %v1820 = vpop.f32.mrb[0].mxu0
        %v1821 = vadd.f32 %v941, %v1820
        %v1822 = vpop.f32.mrb[0].mxu0
        %1823 = vmatprep.mubr.bf16.mxu0 0
        %1824 = vmatmul.mubr.bf16.gmra.mrb[0].mxu0 %v1459
        %v1825 = vpop.f32.mrb[0].mxu0
        %v1826 = vadd.f32 %v941, %v1825
        %v1827 = vpop.f32.mrb[0].mxu0
        %v1828 = vpop.f32.mrb[0].mxu0
        %v1829 = vadd.f32 %v941, %v1828
        %v1830 = vpop.f32.mrb[0].mxu0
        %1831 = vmatprep.mubr.bf16.mxu0 0
        %1832 = vmatmul.mubr.bf16.gmra.mrb[0].mxu0 %v1460
        %v1833 = vpop.f32.mrb[0].mxu0
        %v1834 = vadd.f32 %v941, %v1833
        %v1835 = vpop.f32.mrb[0].mxu0
        %v1836 = vpop.f32.mrb[0].mxu0
        %v1837 = vadd.f32 %v941, %v1836
        %v1838 = vpop.f32.mrb[0].mxu0
        %1839 = vmatprep.mubr.bf16.mxu0 0
        %1840 = vmatmul.mubr.bf16.gmra.mrb[0].mxu0 %v1461
        %v1841 = vpop.f32.mrb[0].mxu0
        %v1842 = vadd.f32 %v941, %v1841
        %v1843 = vpop.f32.mrb[0].mxu0
        %v1844 = vpop.f32.mrb[0].mxu0
        %v1845 = vadd.f32 %v941, %v1844
        %v1846 = vpop.f32.mrb[0].mxu0
        %1847 = vmatprep.mubr.bf16.mxu0 0
        %1848 = vmatmul.mubr.bf16.gmra.mrb[0].mxu0 %v1462
        %v1849 = vpop.f32.mrb[0].mxu0
        %v1850 = vadd.f32 %v941, %v1849
        %v1851 = vpop.f32.mrb[0].mxu0
        %v1852 = vpop.f32.mrb[0].mxu0
        %v1853 = vadd.f32 %v941, %v1852
        %v1854 = vpop.f32.mrb[0].mxu0
        %1855 = vmatprep.mubr.bf16.mxu0 0
        %1856 = vmatmul.mubr.bf16.gmra.mrb[0].mxu0 %v1463
        %v1857 = vpop.f32.mrb[0].mxu0
        %v1858 = vadd.f32 %v941, %v1857
        %v1859 = vpop.f32.mrb[0].mxu0
        %v1860 = vpop.f32.mrb[0].mxu0
        %v1861 = vadd.f32 %v941, %v1860
        %v1862 = vpop.f32.mrb[0].mxu0
        %1863 = vmatprep.mubr.bf16.mxu0 0
        %1864 = vmatmul.mubr.bf16.gmra.mrb[0].mxu0 %v1464
        %v1865 = vpop.f32.mrb[0].mxu0
        %v1866 = vadd.f32 %v941, %v1865
        %v1867 = vpop.f32.mrb[0].mxu0
        %v1868 = vpop.f32.mrb[0].mxu0
        %v1869 = vadd.f32 %v941, %v1868
        %v1870 = vpop.f32.mrb[0].mxu0
        %1871 = vmatprep.mubr.bf16.mxu0 0
        %1872 = vmatmul.mubr.bf16.gmra.mrb[0].mxu0 %v1465
        %v1873 = vpop.f32.mrb[0].mxu0
        %v1874 = vadd.f32 %v941, %v1873
        %v1875 = vpop.f32.mrb[0].mxu0
        %v1876 = vpop.f32.mrb[0].mxu0
        %v1877 = vadd.f32 %v941, %v1876
        %v1878 = vpop.f32.mrb[0].mxu0
        %1879 = vmatprep.mubr.bf16.mxu0 0
        %1880 = vmatmul.mubr.bf16.gmra.mrb[0].mxu0 %v1466
        %v1881 = vpop.f32.mrb[0].mxu0
        %v1882 = vadd.f32 %v941, %v1881
        %v1883 = vpop.f32.mrb[0].mxu0
        %v1884 = vpop.f32.mrb[0].mxu0
        %v1885 = vadd.f32 %v941, %v1884
        %v1886 = vpop.f32.mrb[0].mxu0
        %1887 = vmatprep.mubr.bf16.mxu0 0
        %1888 = vmatmul.mubr.bf16.gmra.mrb[0].mxu0 %v1467
        %v1889 = vpop.f32.mrb[0].mxu0
        %v1890 = vadd.f32 %v941, %v1889
        %v1891 = vpop.f32.mrb[0].mxu0
        %v1892 = vpop.f32.mrb[0].mxu0
        %v1893 = vadd.f32 %v941, %v1892
        %v1894 = vpop.f32.mrb[0].mxu0
        %1895 = vmatprep.mubr.bf16.mxu0 0
        %1896 = vmatmul.mubr.bf16.gmra.mrb[0].mxu0 %v1468
        %v1897 = vpop.f32.mrb[0].mxu0
        %v1898 = vadd.f32 %v941, %v1897
        %v1899 = vpop.f32.mrb[0].mxu0
        %v1900 = vpop.f32.mrb[0].mxu0
        %v1901 = vadd.f32 %v941, %v1900
        %v1902 = vpop.f32.mrb[0].mxu0
        %1903 = vmatprep.mubr.bf16.mxu0 0
        %1904 = vmatmul.mubr.bf16.gmra.mrb[0].mxu0 %v1469
        %v1905 = vpop.f32.mrb[0].mxu0
        %v1906 = vadd.f32 %v941, %v1905
        %v1907 = vpop.f32.mrb[0].mxu0
        %v1908 = vpop.f32.mrb[0].mxu0
        %v1909 = vadd.f32 %v941, %v1908
        %v1910 = vpop.f32.mrb[0].mxu0
        %1911 = vmatprep.mubr.bf16.mxu0 0
        %1912 = vmatmul.mubr.bf16.gmra.mrb[0].mxu0 %v1470
        %v1913 = vpop.f32.mrb[0].mxu0
        %v1914 = vadd.f32 %v941, %v1913
        %v1915 = vpop.f32.mrb[0].mxu0
        %v1916 = vpop.f32.mrb[0].mxu0
        %v1917 = vadd.f32 %v941, %v1916
        %v1918 = vpop.f32.mrb[0].mxu0
        %1919 = vmatprep.mubr.bf16.mxu0 0
        %1920 = vmatmul.mubr.bf16.gmra.mrb[0].mxu0 %v1471
        %v1921 = vpop.f32.mrb[0].mxu0
        %v1922 = vadd.f32 %v941, %v1921
        %v1923 = vpop.f32.mrb[0].mxu0
        %v1924 = vpop.f32.mrb[0].mxu0
        %v1925 = vadd.f32 %v941, %v1924
        %v1926 = vpop.f32.mrb[0].mxu0
        %1927 = vmatprep.mubr.bf16.mxu0 0
        %1928 = vmatmul.mubr.bf16.gmra.mrb[0].mxu0 %v1472
        %v1929 = vpop.f32.mrb[0].mxu0
        %v1930 = vadd.f32 %v941, %v1929
        %v1931 = vpop.f32.mrb[0].mxu0
        %v1932 = vpop.f32.mrb[0].mxu0
        %v1933 = vadd.f32 %v941, %v1932
        %v1934 = vpop.f32.mrb[0].mxu0
        %1935 = vmatprep.mubr.bf16.mxu0 0
        %1936 = vmatmul.mubr.bf16.gmra.mrb[0].mxu0 %v1473
        %v1937 = vpop.f32.mrb[0].mxu0
        %v1938 = vadd.f32 %v941, %v1937
        %v1939 = vpop.f32.mrb[0].mxu0
        %v1940 = vpop.f32.mrb[0].mxu0
        %v1941 = vadd.f32 %v941, %v1940
        %v1942 = vpop.f32.mrb[0].mxu0
        %1943 = vmatprep.mubr.bf16.mxu0 0
        %1944 = vmatmul.mubr.bf16.gmra.mrb[0].mxu0 %v1474
        %v1945 = vpop.f32.mrb[0].mxu0
        %v1946 = vadd.f32 %v941, %v1945
        %v1947 = vpop.f32.mrb[0].mxu0
        %v1948 = vpop.f32.mrb[0].mxu0
        %v1949 = vadd.f32 %v941, %v1948
        %v1950 = vpop.f32.mrb[0].mxu0
        %1951 = vmatprep.mubr.bf16.mxu0 0
        %1952 = vmatmul.mubr.bf16.gmra.mrb[0].mxu0 %v1475
        %v1953 = vpop.f32.mrb[0].mxu0
        %v1954 = vadd.f32 %v941, %v1953
        %v1955 = vpop.f32.mrb[0].mxu0
        %v1956 = vpop.f32.mrb[0].mxu0
        %v1957 = vadd.f32 %v941, %v1956
        %v1958 = vpop.f32.mrb[0].mxu0
        %1959 = vmatprep.mubr.bf16.mxu0 0
        %1960 = vmatmul.mubr.bf16.gmra.mrb[0].mxu0 %v1476
        %v1961 = vpop.f32.mrb[0].mxu0
        %v1962 = vadd.f32 %v941, %v1961
        %v1963 = vpop.f32.mrb[0].mxu0
        %v1964 = vpop.f32.mrb[0].mxu0
        %v1965 = vadd.f32 %v941, %v1964
        %v1966 = vpop.f32.mrb[0].mxu0
        %1967 = vmatprep.mubr.bf16.mxu0 0
        %1968 = vmatmul.mubr.bf16.gmra.mrb[0].mxu0 %v1477
        %v1969 = vpop.f32.mrb[0].mxu0
        %v1970 = vadd.f32 %v941, %v1969
        %v1971 = vpop.f32.mrb[0].mxu0
        %v1972 = vpop.f32.mrb[0].mxu0
        %v1973 = vadd.f32 %v941, %v1972
        %v1974 = vpop.f32.mrb[0].mxu0
        %1975 = vmatprep.mubr.bf16.mxu0 0
        %1976 = vmatmul.mubr.bf16.gmra.mrb[0].mxu0 %v1478
        %v1977 = vpop.f32.mrb[0].mxu0
        %v1978 = vadd.f32 %v941, %v1977
        %v1979 = vpop.f32.mrb[0].mxu0
        %v1980 = vpop.f32.mrb[0].mxu0
        %v1981 = vadd.f32 %v941, %v1980
        %v1982 = vpop.f32.mrb[0].mxu0
        %1983 = vmatprep.mubr.bf16.mxu0 0
        %1984 = vmatmul.mubr.bf16.gmra.mrb[0].mxu0 %v1479
        %v1985 = vpop.f32.mrb[0].mxu0
        %v1986 = vadd.f32 %v941, %v1985
        %v1987 = vpop.f32.mrb[0].mxu0
        %v1988 = vpop.f32.mrb[0].mxu0
        %v1989 = vadd.f32 %v941, %v1988
        %v1990 = vpop.f32.mrb[0].mxu0
        %1991 = vmatprep.mubr.bf16.mxu0 0
        %1992 = vmatmul.mubr.bf16.gmra.mrb[0].mxu0 %v1480
        %v1993 = vpop.f32.mrb[0].mxu0
        %v1994 = vadd.f32 %v941, %v1993
        %v1995 = vpop.f32.mrb[0].mxu0
        %v1996 = vpop.f32.mrb[0].mxu0
        %v1997 = vadd.f32 %v941, %v1996
        %v1998 = vpop.f32.mrb[0].mxu0
        %1999 = vmatprep.mubr.bf16.mxu0 0
        %2000 = vmatmul.mubr.bf16.gmra.mrb[0].mxu0 %v1481
        %v2001 = vpop.f32.mrb[0].mxu0
        %v2002 = vadd.f32 %v941, %v2001
        %v2003 = vpop.f32.mrb[0].mxu0
        %v2004 = vpop.f32.mrb[0].mxu0
        %v2005 = vadd.f32 %v941, %v2004
        %v2006 = vpop.f32.mrb[0].mxu0
        %2007 = vmatprep.mubr.bf16.mxu0 0
        %2008 = vmatmul.mubr.bf16.gmra.mrb[0].mxu0 %v1482
        %v2009 = vpop.f32.mrb[0].mxu0
        %v2010 = vadd.f32 %v941, %v2009
        %v2011 = vpop.f32.mrb[0].mxu0
        %v2012 = vpop.f32.mrb[0].mxu0
        %v2013 = vadd.f32 %v941, %v2012
        %v2014 = vpop.f32.mrb[0].mxu0
        %2015 = vmatprep.mubr.bf16.mxu0 0
        %2016 = vmatmul.mubr.bf16.gmra.mrb[0].mxu0 %v1483
        %v2017 = vpop.f32.mrb[0].mxu0
        %v2018 = vadd.f32 %v941, %v2017
        %v2019 = vpop.f32.mrb[0].mxu0
        %v2020 = vpop.f32.mrb[0].mxu0
        %v2021 = vadd.f32 %v941, %v2020
        %v2022 = vpop.f32.mrb[0].mxu0
        %2023 = vmatprep.mubr.bf16.mxu0 0
        %2024 = vmatmul.mubr.bf16.gmra.mrb[0].mxu0 %v1484
        %v2025 = vpop.f32.mrb[0].mxu0
        %v2026 = vadd.f32 %v941, %v2025
        %v2027 = vpop.f32.mrb[0].mxu0
        %v2028 = vpop.f32.mrb[0].mxu0
        %v2029 = vadd.f32 %v941, %v2028
        %v2030 = vpop.f32.mrb[0].mxu0
        %2031 = vmatprep.mubr.bf16.mxu0 0
        %2032 = vmatmul.mubr.bf16.gmra.mrb[0].mxu0 %v1485
        %v2033 = vpop.f32.mrb[0].mxu0
        %v2034 = vadd.f32 %v941, %v2033
        %v2035 = vpop.f32.mrb[0].mxu0
        %v2036 = vpop.f32.mrb[0].mxu0
        %v2037 = vadd.f32 %v941, %v2036
        %v2038 = vpop.f32.mrb[0].mxu0
        %2039 = vmatprep.mubr.bf16.mxu0 0
        %2040 = vmatmul.mubr.bf16.gmra.mrb[0].mxu0 %v1486
        %v2041 = vpop.f32.mrb[0].mxu0
        %v2042 = vadd.f32 %v941, %v2041
        %v2043 = vpop.f32.mrb[0].mxu0
        %v2044 = vpop.f32.mrb[0].mxu0
        %v2045 = vadd.f32 %v941, %v2044
        %v2046 = vpop.f32.mrb[0].mxu0
        %2047 = vmatprep.mubr.bf16.mxu0 0
        %2048 = vmatmul.mubr.bf16.gmra.mrb[0].mxu0 %v1487
        %v2049 = vpop.f32.mrb[0].mxu0
        %v2050 = vadd.f32 %v941, %v2049
        %v2051 = vpop.f32.mrb[0].mxu0
        %v2052 = vpop.f32.mrb[0].mxu0
        %v2053 = vadd.f32 %v941, %v2052
        %v2054 = vpop.f32.mrb[0].mxu0
        %2055 = vmatprep.mubr.bf16.mxu0 0
        %2056 = vmatmul.mubr.bf16.gmra.mrb[0].mxu0 %v1488
        %v2057 = vpop.f32.mrb[0].mxu0
        %v2058 = vadd.f32 %v941, %v2057
        %v2059 = vpop.f32.mrb[0].mxu0
        %v2060 = vpop.f32.mrb[0].mxu0
        %v2061 = vadd.f32 %v941, %v2060
        %v2062 = vpop.f32.mrb[0].mxu0
        %2063 = vmatprep.mubr.bf16.mxu0 0
        %2064 = vmatmul.mubr.bf16.gmra.mrb[0].mxu0 %v1489
        %v2065 = vpop.f32.mrb[0].mxu0
        %v2066 = vadd.f32 %v941, %v2065
        %v2067 = vpop.f32.mrb[0].mxu0
        %v2068 = vpop.f32.mrb[0].mxu0
        %v2069 = vadd.f32 %v941, %v2068
        %v2070 = vpop.f32.mrb[0].mxu0
        %2071 = vmatprep.mubr.bf16.mxu0 0
        %2072 = vmatmul.mubr.bf16.gmra.mrb[0].mxu0 %v1490
        %v2073 = vpop.f32.mrb[0].mxu0
        %v2074 = vadd.f32 %v941, %v2073
        %v2075 = vpop.f32.mrb[0].mxu0
        %v2076 = vpop.f32.mrb[0].mxu0
        %v2077 = vadd.f32 %v941, %v2076
        %v2078 = vpop.f32.mrb[0].mxu0
        %2079 = vmatprep.mubr.bf16.mxu0 0
        %2080 = vmatmul.mubr.bf16.gmra.mrb[0].mxu0 %v1491
        %v2081 = vpop.f32.mrb[0].mxu0
        %v2082 = vadd.f32 %v941, %v2081
        %v2083 = vpop.f32.mrb[0].mxu0
        %v2084 = vpop.f32.mrb[0].mxu0
        %v2085 = vadd.f32 %v941, %v2084
        %v2086 = vpop.f32.mrb[0].mxu0
        %2087 = vmatprep.mubr.bf16.mxu0 0
        %2088 = vmatmul.mubr.bf16.gmra.mrb[0].mxu0 %v1492
        %v2089 = vpop.f32.mrb[0].mxu0
        %v2090 = vadd.f32 %v941, %v2089
        %v2091 = vpop.f32.mrb[0].mxu0
        %v2092 = vpop.f32.mrb[0].mxu0
        %v2093 = vadd.f32 %v941, %v2092
        %v2094 = vpop.f32.mrb[0].mxu0
        %2095 = vmatprep.mubr.bf16.mxu0 0
        %2096 = vmatmul.mubr.bf16.gmra.mrb[0].mxu0 %v1493
        %v2097 = vpop.f32.mrb[0].mxu0
        %v2098 = vadd.f32 %v941, %v2097
        %v2099 = vpop.f32.mrb[0].mxu0
        %v2100 = vpop.f32.mrb[0].mxu0
        %v2101 = vadd.f32 %v941, %v2100
        %v2102 = vpop.f32.mrb[0].mxu0
        %2103 = vmatprep.mubr.bf16.mxu0 0
        %2104 = vmatmul.mubr.bf16.gmra.mrb[0].mxu0 %v1494
        %v2105 = vpop.f32.mrb[0].mxu0
        %v2106 = vadd.f32 %v941, %v2105
        %v2107 = vpop.f32.mrb[0].mxu0
        %v2108 = vpop.f32.mrb[0].mxu0
        %v2109 = vadd.f32 %v941, %v2108
        %v2110 = vpop.f32.mrb[0].mxu0
        %2111 = vmatprep.mubr.bf16.mxu0 0
        %2112 = vmatmul.mubr.bf16.gmra.mrb[0].mxu0 %v1495
        %v2113 = vpop.f32.mrb[0].mxu0
        %v2114 = vadd.f32 %v941, %v2113
        %v2115 = vpop.f32.mrb[0].mxu0
        %v2116 = vpop.f32.mrb[0].mxu0
        %v2117 = vadd.f32 %v941, %v2116
        %v2118 = vpop.f32.mrb[0].mxu0
        %2119 = vmatprep.mubr.bf16.mxu0 0
        %2120 = vmatmul.mubr.bf16.gmra.mrb[0].mxu0 %v1496
        %v2121 = vpop.f32.mrb[0].mxu0
        %v2122 = vadd.f32 %v941, %v2121
        %v2123 = vpop.f32.mrb[0].mxu0
        %v2124 = vpop.f32.mrb[0].mxu0
        %v2125 = vadd.f32 %v941, %v2124
        %v2126 = vpop.f32.mrb[0].mxu0
        %2127 = vmatprep.mubr.bf16.mxu0 0
        %2128 = vmatmul.mubr.bf16.gmra.mrb[0].mxu0 %v1497
        %v2129 = vpop.f32.mrb[0].mxu0
        %v2130 = vadd.f32 %v941, %v2129
        %v2131 = vpop.f32.mrb[0].mxu0
        %v2132 = vpop.f32.mrb[0].mxu0
        %v2133 = vadd.f32 %v941, %v2132
        %v2134 = vpop.f32.mrb[0].mxu0
        %2135 = vmatprep.mubr.bf16.mxu0 0
        %2136 = vmatmul.mubr.bf16.gmra.mrb[0].mxu0 %v1498
        %v2137 = vpop.f32.mrb[0].mxu0
        %v2138 = vadd.f32 %v941, %v2137
        %v2139 = vpop.f32.mrb[0].mxu0
        %v2140 = vpop.f32.mrb[0].mxu0
        %v2141 = vadd.f32 %v941, %v2140
        %v2142 = vpop.f32.mrb[0].mxu0
        %2143 = vmatprep.mubr.bf16.mxu0 0
        %2144 = vmatmul.mubr.bf16.gmra.mrb[0].mxu0 %v1499
        %v2145 = vpop.f32.mrb[0].mxu0
        %v2146 = vadd.f32 %v941, %v2145
        %v2147 = vpop.f32.mrb[0].mxu0
        %v2148 = vpop.f32.mrb[0].mxu0
        %v2149 = vadd.f32 %v941, %v2148
        %v2150 = vpop.f32.mrb[0].mxu0
        %2151 = vmatprep.mubr.bf16.mxu0 0
        %2152 = vmatmul.mubr.bf16.gmra.mrb[0].mxu0 %v1500
        %v2153 = vpop.f32.mrb[0].mxu0
        %v2154 = vadd.f32 %v941, %v2153
        %v2155 = vpop.f32.mrb[0].mxu0
        %v2156 = vpop.f32.mrb[0].mxu0
        %v2157 = vadd.f32 %v941, %v2156
        %v2158 = vpop.f32.mrb[0].mxu0
        %2159 = vmatprep.mubr.bf16.mxu0 0
        %2160 = vmatmul.mubr.bf16.gmra.mrb[0].mxu0 %v1501
        %v2161 = vpop.f32.mrb[0].mxu0
        %v2162 = vadd.f32 %v941, %v2161
        %v2163 = vpop.f32.mrb[0].mxu0
        %v2164 = vpop.f32.mrb[0].mxu0
        %v2165 = vadd.f32 %v941, %v2164
        %v2166 = vpop.f32.mrb[0].mxu0
        %2167 = vmatprep.mubr.bf16.mxu0 0
        %2168 = vmatmul.mubr.bf16.gmra.mrb[0].mxu0 %v1502
        %v2169 = vpop.f32.mrb[0].mxu0
        %v2170 = vadd.f32 %v941, %v2169
        %v2171 = vpop.f32.mrb[0].mxu0
        %v2172 = vpop.f32.mrb[0].mxu0
        %v2173 = vadd.f32 %v941, %v2172
        %v2174 = vpop.f32.mrb[0].mxu0
        %2175 = vmatprep.mubr.bf16.mxu0 0
        %2176 = vmatmul.mubr.bf16.gmra.mrb[0].mxu0 %v1503
        %v2177 = vpop.f32.mrb[0].mxu0
        %v2178 = vadd.f32 %v941, %v2177
        %v2179 = vpop.f32.mrb[0].mxu0
        %v2180 = vpop.f32.mrb[0].mxu0
        %v2181 = vadd.f32 %v941, %v2180
        %v2182 = vpop.f32.mrb[0].mxu0
        %2183 = vmatprep.mubr.bf16.mxu0 0
        %2184 = vmatmul.mubr.bf16.gmra.mrb[0].mxu0 %v1504
        %v2185 = vpop.f32.mrb[0].mxu0
        %v2186 = vadd.f32 %v941, %v2185
        %v2187 = vpop.f32.mrb[0].mxu0
        %v2188 = vpop.f32.mrb[0].mxu0
        %v2189 = vadd.f32 %v941, %v2188
        %v2190 = vpop.f32.mrb[0].mxu0
        %2191 = vmatprep.mubr.bf16.mxu0 0
        %2192 = vmatmul.mubr.bf16.gmra.mrb[0].mxu0 %v1505
        %v2193 = vpop.f32.mrb[0].mxu0
        %v2194 = vadd.f32 %v941, %v2193
        %v2195 = vpop.f32.mrb[0].mxu0
        %v2196 = vpop.f32.mrb[0].mxu0
        %v2197 = vadd.f32 %v941, %v2196
        %v2198 = vpop.f32.mrb[0].mxu0
        %2199 = vmatprep.mubr.bf16.mxu0 0
        %2200 = vmatmul.mubr.bf16.gmra.mrb[0].mxu0 %v1506
        %v2201 = vpop.f32.mrb[0].mxu0
        %v2202 = vadd.f32 %v941, %v2201
        %v2203 = vpop.f32.mrb[0].mxu0
        %v2204 = vpop.f32.mrb[0].mxu0
        %v2205 = vadd.f32 %v941, %v2204
        %v2206 = vpop.f32.mrb[0].mxu0
        %2207 = vmatprep.mubr.bf16.mxu0 0
        %2208 = vmatmul.mubr.bf16.gmra.mrb[0].mxu0 %v1507
        %v2209 = vpop.f32.mrb[0].mxu0
        %v2210 = vadd.f32 %v941, %v2209
        %v2211 = vpop.f32.mrb[0].mxu0
        %v2212 = vpop.f32.mrb[0].mxu0
        %v2213 = vadd.f32 %v941, %v2212
        %v2214 = vpop.f32.mrb[0].mxu0
        %2215 = vmatprep.mubr.bf16.mxu0 0
        %2216 = vmatmul.mubr.bf16.gmra.mrb[0].mxu0 %v1508
        %v2217 = vpop.f32.mrb[0].mxu0
        %v2218 = vadd.f32 %v941, %v2217
        %v2219 = vpop.f32.mrb[0].mxu0
        %v2220 = vpop.f32.mrb[0].mxu0
        %v2221 = vadd.f32 %v941, %v2220
        %v2222 = vpop.f32.mrb[0].mxu0
        %2223 = vmatprep.mubr.bf16.mxu0 0
        %2224 = vmatmul.mubr.bf16.gmra.mrb[0].mxu0 %v1509
        %v2225 = vpop.f32.mrb[0].mxu0
        %v2226 = vadd.f32 %v941, %v2225
        %v2227 = vpop.f32.mrb[0].mxu0
        %v2228 = vpop.f32.mrb[0].mxu0
        %v2229 = vadd.f32 %v941, %v2228
        %v2230 = vpop.f32.mrb[0].mxu0
        %2231 = vmatprep.mubr.bf16.mxu0 0
        %2232 = vmatmul.mubr.bf16.gmra.mrb[0].mxu0 %v1510
        %v2233 = vpop.f32.mrb[0].mxu0
        %v2234 = vadd.f32 %v941, %v2233
        %v2235 = vpop.f32.mrb[0].mxu0
        %v2236 = vpop.f32.mrb[0].mxu0
        %v2237 = vadd.f32 %v941, %v2236
        %v2238 = vpop.f32.mrb[0].mxu0
        %2239 = vmatprep.mubr.bf16.mxu0 0
        %2240 = vmatmul.mubr.bf16.gmra.mrb[0].mxu0 %v1511
        %v2241 = vpop.f32.mrb[0].mxu0
        %v2242 = vadd.f32 %v941, %v2241
        %v2243 = vpop.f32.mrb[0].mxu0
        %v2244 = vpop.f32.mrb[0].mxu0
        %v2245 = vadd.f32 %v941, %v2244
        %v2246 = vpop.f32.mrb[0].mxu0
        %2247 = vmatprep.mubr.bf16.mxu0 0
        %2248 = vmatmul.mubr.bf16.gmra.mrb[0].mxu0 %v1512
        %v2249 = vpop.f32.mrb[0].mxu0
        %v2250 = vadd.f32 %v941, %v2249
        %v2251 = vpop.f32.mrb[0].mxu0
        %v2252 = vpop.f32.mrb[0].mxu0
        %v2253 = vadd.f32 %v941, %v2252
        %v2254 = vpop.f32.mrb[0].mxu0
        %2255 = vmatprep.mubr.bf16.mxu0 0
        %2256 = vmatmul.mubr.bf16.gmra.mrb[0].mxu0 %v1513
        %v2257 = vpop.f32.mrb[0].mxu0
        %v2258 = vadd.f32 %v941, %v2257
        %v2259 = vpop.f32.mrb[0].mxu0
        %v2260 = vpop.f32.mrb[0].mxu0
        %v2261 = vadd.f32 %v941, %v2260
        %v2262 = vpop.f32.mrb[0].mxu0
        %2263 = vmatprep.mubr.bf16.mxu0 0
        %2264 = vmatmul.mubr.bf16.gmra.mrb[0].mxu0 %v1514
        %v2265 = vpop.f32.mrb[0].mxu0
        %v2266 = vadd.f32 %v941, %v2265
        %v2267 = vpop.f32.mrb[0].mxu0
        %v2268 = vpop.f32.mrb[0].mxu0
        %v2269 = vadd.f32 %v941, %v2268
        %v2270 = vpop.f32.mrb[0].mxu0
        %2271 = vmatprep.mubr.bf16.mxu0 0
        %2272 = vmatmul.mubr.bf16.gmra.mrb[0].mxu0 %v1515
        %v2273 = vpop.f32.mrb[0].mxu0
        %v2274 = vadd.f32 %v941, %v2273
        %v2275 = vpop.f32.mrb[0].mxu0
        %v2276 = vpop.f32.mrb[0].mxu0
        %v2277 = vadd.f32 %v941, %v2276
        %v2278 = vpop.f32.mrb[0].mxu0
        %2279 = vmatprep.mubr.bf16.mxu0 0
        %2280 = vmatmul.mubr.bf16.gmra.mrb[0].mxu0 %v1516
        %v2281 = vpop.f32.mrb[0].mxu0
        %v2282 = vadd.f32 %v941, %v2281
        %v2283 = vpop.f32.mrb[0].mxu0
        %v2284 = vpop.f32.mrb[0].mxu0
        %v2285 = vadd.f32 %v941, %v2284
        %v2286 = vpop.f32.mrb[0].mxu0
        %2287 = vmatprep.mubr.bf16.mxu0 0
        %2288 = vmatmul.mubr.bf16.gmra.mrb[0].mxu0 %v1517
        %v2289 = vpop.f32.mrb[0].mxu0
        %v2290 = vadd.f32 %v941, %v2289
        %v2291 = vpop.f32.mrb[0].mxu0
        %v2292 = vpop.f32.mrb[0].mxu0
        %v2293 = vadd.f32 %v941, %v2292
        %v2294 = vpop.f32.mrb[0].mxu0
        %2295 = vmatprep.mubr.bf16.mxu0 0
        %2296 = vmatmul.mubr.bf16.gmra.mrb[0].mxu0 %v1518
        %v2297 = vpop.f32.mrb[0].mxu0
        %v2298 = vadd.f32 %v941, %v2297
        %v2299 = vpop.f32.mrb[0].mxu0
        %v2300 = vpop.f32.mrb[0].mxu0
        %v2301 = vadd.f32 %v941, %v2300
        %v2302 = vpop.f32.mrb[0].mxu0
        %2303 = vmatprep.mubr.bf16.mxu0 0
        %2304 = vmatmul.mubr.bf16.gmra.mrb[0].mxu0 %v1519
        %v2305 = vpop.f32.mrb[0].mxu0
        %v2306 = vadd.f32 %v941, %v2305
        %v2307 = vpop.f32.mrb[0].mxu0
        %v2308 = vpop.f32.mrb[0].mxu0
        %v2309 = vadd.f32 %v941, %v2308
        %v2310 = vpop.f32.mrb[0].mxu0
        %2311 = vmatprep.mubr.bf16.mxu0 0
        %2312 = vmatmul.mubr.bf16.gmra.mrb[0].mxu0 %v1520
        %v2313 = vpop.f32.mrb[0].mxu0
        %v2314 = vadd.f32 %v941, %v2313
        %v2315 = vpop.f32.mrb[0].mxu0
        %v2316 = vpop.f32.mrb[0].mxu0
        %v2317 = vadd.f32 %v941, %v2316
        %v2318 = vpop.f32.mrb[0].mxu0
        %2319 = vmatprep.mubr.bf16.mxu0 0
        %2320 = vmatmul.mubr.bf16.gmra.mrb[0].mxu0 %v1521
        %v2321 = vpop.f32.mrb[0].mxu0
        %v2322 = vadd.f32 %v941, %v2321
        %v2323 = vpop.f32.mrb[0].mxu0
        %v2324 = vpop.f32.mrb[0].mxu0
        %v2325 = vadd.f32 %v941, %v2324
        %v2326 = vpop.f32.mrb[0].mxu0
        %2327 = vmatprep.mubr.bf16.mxu0 0
        %2328 = vmatmul.mubr.bf16.gmra.mrb[0].mxu0 %v1522
        %v2329 = vpop.f32.mrb[0].mxu0
        %v2330 = vadd.f32 %v941, %v2329
        %v2331 = vpop.f32.mrb[0].mxu0
        %v2332 = vpop.f32.mrb[0].mxu0
        %v2333 = vadd.f32 %v941, %v2332
        %v2334 = vpop.f32.mrb[0].mxu0
        %2335 = vmatprep.mubr.bf16.mxu0 0
        %2336 = vmatmul.mubr.bf16.gmra.mrb[0].mxu0 %v1523
        %v2337 = vpop.f32.mrb[0].mxu0
        %v2338 = vadd.f32 %v941, %v2337
        %v2339 = vpop.f32.mrb[0].mxu0
        %v2340 = vpop.f32.mrb[0].mxu0
        %v2341 = vadd.f32 %v941, %v2340
        %v2342 = vpop.f32.mrb[0].mxu0
        %2343 = vmatprep.mubr.bf16.mxu0 0
        %2344 = vmatmul.mubr.bf16.gmra.mrb[0].mxu0 %v1524
        %v2345 = vpop.f32.mrb[0].mxu0
        %v2346 = vadd.f32 %v941, %v2345
        %v2347 = vpop.f32.mrb[0].mxu0
        %v2348 = vpop.f32.mrb[0].mxu0
        %v2349 = vadd.f32 %v941, %v2348
        %v2350 = vpop.f32.mrb[0].mxu0
        %2351 = vmatprep.mubr.bf16.mxu0 0
        %2352 = vmatmul.mubr.bf16.gmra.mrb[0].mxu0 %v1525
        %v2353 = vpop.f32.mrb[0].mxu0
        %v2354 = vadd.f32 %v941, %v2353
        %v2355 = vpop.f32.mrb[0].mxu0
        %v2356 = vpop.f32.mrb[0].mxu0
        %v2357 = vadd.f32 %v941, %v2356
        %v2358 = vpop.f32.mrb[0].mxu0
        %2359 = vmatprep.mubr.bf16.mxu0 0
        %2360 = vmatmul.mubr.bf16.gmra.mrb[0].mxu0 %v1526
        %v2361 = vpop.f32.mrb[0].mxu0
        %v2362 = vadd.f32 %v941, %v2361
        %v2363 = vpop.f32.mrb[0].mxu0
        %v2364 = vpop.f32.mrb[0].mxu0
        %v2365 = vadd.f32 %v941, %v2364
        %v2366 = vpop.f32.mrb[0].mxu0
        %2367 = vmatprep.mubr.bf16.mxu0 0
        %2368 = vmatmul.mubr.bf16.gmra.mrb[0].mxu0 %v1527
        %v2369 = vpop.f32.mrb[0].mxu0
        %v2370 = vadd.f32 %v941, %v2369
        %v2371 = vpop.f32.mrb[0].mxu0
        %v2372 = vpop.f32.mrb[0].mxu0
        %v2373 = vadd.f32 %v941, %v2372
        %v2374 = vpop.f32.mrb[0].mxu0
        %2375 = vmatprep.mubr.bf16.mxu0 0
        %2376 = vmatmul.mubr.bf16.gmra.mrb[0].mxu0 %v1528
        %v2377 = vpop.f32.mrb[0].mxu0
        %v2378 = vadd.f32 %v941, %v2377
        %v2379 = vpop.f32.mrb[0].mxu0
        %v2380 = vpop.f32.mrb[0].mxu0
        %v2381 = vadd.f32 %v941, %v2380
        %v2382 = vpop.f32.mrb[0].mxu0
        %2383 = vmatprep.mubr.bf16.mxu0 0
        %2384 = vmatmul.mubr.bf16.gmra.mrb[0].mxu0 %v1529
        %v2385 = vpop.f32.mrb[0].mxu0
        %v2386 = vadd.f32 %v941, %v2385
        %v2387 = vpop.f32.mrb[0].mxu0
        %v2388 = vpop.f32.mrb[0].mxu0
        %v2389 = vadd.f32 %v941, %v2388
        %v2390 = vpop.f32.mrb[0].mxu0
        %2391 = vmatprep.mubr.bf16.mxu0 0
        %2392 = vmatmul.mubr.bf16.gmra.mrb[0].mxu0 %v1530
        %v2393 = vpop.f32.mrb[0].mxu0
        %v2394 = vadd.f32 %v941, %v2393
        %v2395 = vpop.f32.mrb[0].mxu0
        %v2396 = vpop.f32.mrb[0].mxu0
        %v2397 = vadd.f32 %v941, %v2396
        %v2398 = vpop.f32.mrb[0].mxu0
        %2399 = vmatprep.mubr.bf16.mxu0 0
        %2400 = vmatmul.mubr.bf16.gmra.mrb[0].mxu0 %v1531
        %v2401 = vpop.f32.mrb[0].mxu0
        %v2402 = vadd.f32 %v941, %v2401
        %v2403 = vpop.f32.mrb[0].mxu0
        %v2404 = vpop.f32.mrb[0].mxu0
        %v2405 = vadd.f32 %v941, %v2404
        %v2406 = vpop.f32.mrb[0].mxu0
        %2407 = vmatprep.mubr.bf16.mxu0 0
        %2408 = vmatmul.mubr.bf16.gmra.mrb[0].mxu0 %v1532
        %v2409 = vpop.f32.mrb[0].mxu0
        %v2410 = vadd.f32 %v941, %v2409
        %v2411 = vpop.f32.mrb[0].mxu0
        %v2412 = vpop.f32.mrb[0].mxu0
        %v2413 = vadd.f32 %v941, %v2412
        %v2414 = vpop.f32.mrb[0].mxu0
        %2415 = vmatprep.mubr.bf16.mxu0 0
        %2416 = vmatmul.mubr.bf16.gmra.mrb[0].mxu0 %v1533
        %v2417 = vpop.f32.mrb[0].mxu0
        %v2418 = vadd.f32 %v941, %v2417
        %v2419 = vpop.f32.mrb[0].mxu0
        %v2420 = vpop.f32.mrb[0].mxu0
        %v2421 = vadd.f32 %v941, %v2420
        %v2422 = vpop.f32.mrb[0].mxu0
        %2423 = vmatprep.mubr.bf16.mxu0 0
        %2424 = vmatmul.mubr.bf16.gmra.mrb[0].mxu0 %v1534
        %v2425 = vpop.f32.mrb[0].mxu0
        %v2426 = vadd.f32 %v941, %v2425
        %v2427 = vpop.f32.mrb[0].mxu0
        %v2428 = vpop.f32.mrb[0].mxu0
        %v2429 = vadd.f32 %v941, %v2428
        %v2430 = vpop.f32.mrb[0].mxu0
        %2431 = vmatprep.mubr.bf16.mxu0 0
        %2432 = vmatmul.mubr.bf16.gmra.mrb[0].mxu0 %v1535
        %v2433 = vpop.f32.mrb[0].mxu0
        %v2434 = vadd.f32 %v941, %v2433
        %v2435 = vpop.f32.mrb[0].mxu0
        %v2436 = vpop.f32.mrb[0].mxu0
        %v2437 = vadd.f32 %v941, %v2436
        %v2438 = vpop.f32.mrb[0].mxu0
        %2439 = vmatprep.mubr.bf16.mxu0 0
        %2440 = vmatmul.mubr.bf16.gmra.mrb[0].mxu0 %v1536
        %v2441 = vpop.f32.mrb[0].mxu0
        %v2442 = vadd.f32 %v941, %v2441
        %v2443 = vpop.f32.mrb[0].mxu0
        %v2444 = vpop.f32.mrb[0].mxu0
        %v2445 = vadd.f32 %v941, %v2444
        %v2446 = vpop.f32.mrb[0].mxu0
        %2447 = vmatprep.mubr.bf16.mxu0 0
        %2448 = vmatmul.mubr.bf16.gmra.mrb[0].mxu0 %v1537
        %v2449 = vpop.f32.mrb[0].mxu0
        %v2450 = vadd.f32 %v941, %v2449
        %v2451 = vpop.f32.mrb[0].mxu0
        %v2452 = vpop.f32.mrb[0].mxu0
        %v2453 = vadd.f32 %v941, %v2452
        %v2454 = vpop.f32.mrb[0].mxu0
        %2455 = vmatprep.mubr.bf16.mxu0 0
        %2456 = vmatmul.mubr.bf16.gmra.mrb[0].mxu0 %v1538
        %v2457 = vpop.f32.mrb[0].mxu0
        %v2458 = vadd.f32 %v941, %v2457
        %v2459 = vpop.f32.mrb[0].mxu0
        %v2460 = vpop.f32.mrb[0].mxu0
        %v2461 = vadd.f32 %v941, %v2460
        %v2462 = vpop.f32.mrb[0].mxu0
        %2463 = vmatprep.mubr.bf16.mxu0 0
        %2464 = vmatmul.mubr.bf16.gmra.mrb[0].mxu0 %v1539
        %v2465 = vpop.f32.mrb[0].mxu0
        %v2466 = vadd.f32 %v941, %v2465
        %v2467 = vpop.f32.mrb[0].mxu0
        %v2468 = vpop.f32.mrb[0].mxu0
        %v2469 = vadd.f32 %v941, %v2468
        %v2470 = vpop.f32.mrb[0].mxu0
        %2471 = vmatprep.mubr.bf16.mxu0 0
        %2472 = vmatmul.mubr.bf16.gmra.mrb[0].mxu0 %v1540
        %v2473 = vpop.f32.mrb[0].mxu0
        %v2474 = vadd.f32 %v941, %v2473
        %v2475 = vpop.f32.mrb[0].mxu0
        %v2476 = vpop.f32.mrb[0].mxu0
        %v2477 = vadd.f32 %v941, %v2476
        %v2478 = vpop.f32.mrb[0].mxu0
        %2479 = vmatprep.mubr.bf16.mxu0 0
        %2480 = vmatmul.mubr.bf16.gmra.mrb[0].mxu0 %v1541
        %v2481 = vpop.f32.mrb[0].mxu0
        %v2482 = vadd.f32 %v941, %v2481
        %v2483 = vpop.f32.mrb[0].mxu0
        %v2484 = vpop.f32.mrb[0].mxu0
        %v2485 = vadd.f32 %v941, %v2484
        %v2486 = vpop.f32.mrb[0].mxu0
        %2487 = vmatprep.mubr.bf16.mxu0 0
        %2488 = vmatmul.mubr.bf16.gmra.mrb[0].mxu0 %v1542
        %v2489 = vpop.f32.mrb[0].mxu0
        %v2490 = vadd.f32 %v941, %v2489
        %v2491 = vpop.f32.mrb[0].mxu0
        %v2492 = vpop.f32.mrb[0].mxu0
        %v2493 = vadd.f32 %v941, %v2492
        %v2494 = vpop.f32.mrb[0].mxu0
        %2495 = vmatprep.mubr.bf16.mxu0 0
        %2496 = vmatmul.mubr.bf16.gmra.mrb[0].mxu0 %v1543
        %v2497 = vpop.f32.mrb[0].mxu0
        %v2498 = vadd.f32 %v941, %v2497
        %v2499 = vpop.f32.mrb[0].mxu0
        %v2500 = vpop.f32.mrb[0].mxu0
        %v2501 = vadd.f32 %v941, %v2500
        %v2502 = vpop.f32.mrb[0].mxu0
        %2503 = vmatprep.mubr.bf16.mxu0 0
        %2504 = vmatmul.mubr.bf16.gmra.mrb[0].mxu0 %v1544
        %v2505 = vpop.f32.mrb[0].mxu0
        %v2506 = vadd.f32 %v941, %v2505
        %v2507 = vpop.f32.mrb[0].mxu0
        %v2508 = vpop.f32.mrb[0].mxu0
        %v2509 = vadd.f32 %v941, %v2508
        %v2510 = vpop.f32.mrb[0].mxu0
        %2511 = vmatprep.mubr.bf16.mxu0 0
        %2512 = vmatmul.mubr.bf16.gmra.mrb[0].mxu0 %v1545
        %v2513 = vpop.f32.mrb[0].mxu0
        %v2514 = vadd.f32 %v941, %v2513
        %v2515 = vpop.f32.mrb[0].mxu0
        %v2516 = vpop.f32.mrb[0].mxu0
        %v2517 = vadd.f32 %v941, %v2516
        %v2518 = vpop.f32.mrb[0].mxu0
        %2519 = vmatprep.mubr.bf16.mxu0 0
        %2520 = vmatmul.mubr.bf16.gmra.mrb[0].mxu0 %v1546
        %v2521 = vpop.f32.mrb[0].mxu0
        %v2522 = vadd.f32 %v941, %v2521
        %v2523 = vpop.f32.mrb[0].mxu0
        %v2524 = vpop.f32.mrb[0].mxu0
        %v2525 = vadd.f32 %v941, %v2524
        %v2526 = vpop.f32.mrb[0].mxu0
        %2527 = vmatprep.mubr.bf16.mxu0 0
        %2528 = vmatmul.mubr.bf16.gmra.mrb[0].mxu0 %v1547
        %v2529 = vpop.f32.mrb[0].mxu0
        %v2530 = vadd.f32 %v941, %v2529
        %v2531 = vpop.f32.mrb[0].mxu0
        %v2532 = vpop.f32.mrb[0].mxu0
        %v2533 = vadd.f32 %v941, %v2532
        %v2534 = vpop.f32.mrb[0].mxu0
        %2535 = vmatprep.mubr.bf16.mxu0 0
        %2536 = vmatmul.mubr.bf16.gmra.mrb[0].mxu0 %v1548
        %v2537 = vpop.f32.mrb[0].mxu0
        %v2538 = vadd.f32 %v941, %v2537
        %v2539 = vpop.f32.mrb[0].mxu0
        %v2540 = vpop.f32.mrb[0].mxu0
        %v2541 = vadd.f32 %v941, %v2540
        %v2542 = vpop.f32.mrb[0].mxu0
        %2543 = vmatprep.mubr.bf16.mxu0 0
        %2544 = vmatmul.mubr.bf16.gmra.mrb[0].mxu0 %v1549
        %v2545 = vpop.f32.mrb[0].mxu0
        %v2546 = vadd.f32 %v941, %v2545
        %v2547 = vpop.f32.mrb[0].mxu0
        %v2548 = vpop.f32.mrb[0].mxu0
        %v2549 = vadd.f32 %v941, %v2548
        %v2550 = vpop.f32.mrb[0].mxu0
        %2551 = vmatprep.mubr.bf16.mxu0 0
        %2552 = vmatmul.mubr.bf16.gmra.mrb[0].mxu0 %v1550
        %v2553 = vpop.f32.mrb[0].mxu0
        %v2554 = vadd.f32 %v941, %v2553
        %v2555 = vpop.f32.mrb[0].mxu0
        %v2556 = vpop.f32.mrb[0].mxu0
        %v2557 = vadd.f32 %v941, %v2556
        %v2558 = vpop.f32.mrb[0].mxu0
        %2559 = vmatprep.mubr.bf16.mxu0 0
        %2560 = vmatmul.mubr.bf16.gmra.mrb[0].mxu0 %v1551
        %v2561 = vpop.f32.mrb[0].mxu0
        %v2562 = vadd.f32 %v941, %v2561
        %v2563 = vpop.f32.mrb[0].mxu0
        %v2564 = vpop.f32.mrb[0].mxu0
        %v2565 = vadd.f32 %v941, %v2564
        %v2566 = vpop.f32.mrb[0].mxu0
        %2567 = vmatprep.mubr.bf16.mxu0 0
        %2568 = vmatmul.mubr.bf16.gmra.mrb[0].mxu0 %v1552
        %v2569 = vpop.f32.mrb[0].mxu0
        %v2570 = vadd.f32 %v941, %v2569
        %v2571 = vpop.f32.mrb[0].mxu0
        %v2572 = vpop.f32.mrb[0].mxu0
        %v2573 = vadd.f32 %v941, %v2572
        %v2574 = vpop.f32.mrb[0].mxu0
        %2575 = vmatprep.mubr.bf16.mxu0 0
        %2576 = vmatmul.mubr.bf16.gmra.mrb[0].mxu0 %v1553
        %v2577 = vpop.f32.mrb[0].mxu0
        %v2578 = vadd.f32 %v941, %v2577
        %v2579 = vpop.f32.mrb[0].mxu0
        %v2580 = vpop.f32.mrb[0].mxu0
        %v2581 = vadd.f32 %v941, %v2580
        %v2582 = vpop.f32.mrb[0].mxu0
        %2583 = vmatprep.mubr.bf16.mxu0 0
        %2584 = vmatmul.mubr.bf16.gmra.mrb[0].mxu0 %v1554
        %v2585 = vpop.f32.mrb[0].mxu0
        %v2586 = vadd.f32 %v941, %v2585
        %v2587 = vpop.f32.mrb[0].mxu0
        %v2588 = vpop.f32.mrb[0].mxu0
        %v2589 = vadd.f32 %v941, %v2588
        %v2590 = vpop.f32.mrb[0].mxu0
        %2591 = vmatprep.mubr.bf16.mxu0 0
        %2592 = vmatmul.mubr.bf16.gmra.mrb[0].mxu0 %v1555
        %v2593 = vpop.f32.mrb[0].mxu0
        %v2594 = vadd.f32 %v941, %v2593
        %v2595 = vpop.f32.mrb[0].mxu0
        %v2596 = vpop.f32.mrb[0].mxu0
        %v2597 = vadd.f32 %v941, %v2596
        %v2598 = vpop.f32.mrb[0].mxu0
        %2599 = vmatprep.mubr.bf16.mxu0 0
        %2600 = vmatmul.mubr.bf16.gmra.mrb[0].mxu0 %v1556
        %v2601 = vpop.f32.mrb[0].mxu0
        %v2602 = vadd.f32 %v941, %v2601
        %v2603 = vpop.f32.mrb[0].mxu0
        %v2604 = vpop.f32.mrb[0].mxu0
        %v2605 = vadd.f32 %v941, %v2604
        %v2606 = vpop.f32.mrb[0].mxu0
        %2607 = vmatprep.mubr.bf16.mxu0 0
        %2608 = vmatmul.mubr.bf16.gmra.mrb[0].mxu0 %v1557
        %v2609 = vpop.f32.mrb[0].mxu0
        %v2610 = vadd.f32 %v941, %v2609
        %v2611 = vpop.f32.mrb[0].mxu0
        %v2612 = vpop.f32.mrb[0].mxu0
        %v2613 = vadd.f32 %v941, %v2612
        %v2614 = vpop.f32.mrb[0].mxu0
        %2615 = vmatprep.mubr.bf16.mxu0 0
        %2616 = vmatmul.mubr.bf16.gmra.mrb[0].mxu0 %v1558
        %v2617 = vpop.f32.mrb[0].mxu0
        %v2618 = vadd.f32 %v941, %v2617
        %v2619 = vpop.f32.mrb[0].mxu0
        %v2620 = vpop.f32.mrb[0].mxu0
        %v2621 = vadd.f32 %v941, %v2620
        %v2622 = vpop.f32.mrb[0].mxu0
        %2623 = vmatprep.mubr.bf16.mxu0 0
        %2624 = vmatmul.mubr.bf16.gmra.mrb[0].mxu0 %v1559
        %v2625 = vpop.f32.mrb[0].mxu0
        %v2626 = vadd.f32 %v941, %v2625
        %v2627 = vpop.f32.mrb[0].mxu0
        %v2628 = vpop.f32.mrb[0].mxu0
        %v2629 = vadd.f32 %v941, %v2628
        %v2630 = vpop.f32.mrb[0].mxu0
        %2631 = vmatprep.mubr.bf16.mxu0 0
        %2632 = vmatmul.mubr.bf16.gmra.mrb[0].mxu0 %v1560
        %v2633 = vpop.f32.mrb[0].mxu0
        %v2634 = vadd.f32 %v941, %v2633
        %v2635 = vpop.f32.mrb[0].mxu0
        %v2636 = vpop.f32.mrb[0].mxu0
        %v2637 = vadd.f32 %v941, %v2636
        %v2638 = vpop.f32.mrb[0].mxu0
        %2639 = vmatprep.mubr.bf16.mxu0 0
        %2640 = vmatmul.mubr.bf16.gmra.mrb[0].mxu0 %v1561
        %v2641 = vpop.f32.mrb[0].mxu0
        %v2642 = vadd.f32 %v941, %v2641
        %v2643 = vpop.f32.mrb[0].mxu0
        %v2644 = vpop.f32.mrb[0].mxu0
        %v2645 = vadd.f32 %v941, %v2644
        %v2646 = vpop.f32.mrb[0].mxu0
        %2647 = vmatprep.mubr.bf16.mxu0 0
        %2648 = vmatmul.mubr.bf16.gmra.mrb[0].mxu0 %v1562
        %v2649 = vpop.f32.mrb[0].mxu0
        %v2650 = vadd.f32 %v941, %v2649
        %v2651 = vpop.f32.mrb[0].mxu0
        %v2652 = vpop.f32.mrb[0].mxu0
        %v2653 = vadd.f32 %v941, %v2652
        %v2654 = vpop.f32.mrb[0].mxu0
        %2655 = vmatprep.mubr.bf16.mxu0 0
        %2656 = vmatmul.mubr.bf16.gmra.mrb[0].mxu0 %v1563
        %v2657 = vpop.f32.mrb[0].mxu0
        %v2658 = vadd.f32 %v941, %v2657
        %v2659 = vpop.f32.mrb[0].mxu0
        %v2660 = vpop.f32.mrb[0].mxu0
        %v2661 = vadd.f32 %v941, %v2660
        %v2662 = vpop.f32.mrb[0].mxu0
        %2663 = vmatprep.mubr.bf16.mxu0 0
        %2664 = vmatmul.mubr.bf16.gmra.mrb[0].mxu0 %v1564
        %v2665 = vpop.f32.mrb[0].mxu0
        %v2666 = vadd.f32 %v941, %v2665
        %v2667 = vpop.f32.mrb[0].mxu0
        %v2668 = vpop.f32.mrb[0].mxu0
        %v2669 = vadd.f32 %v941, %v2668
        %v2670 = vpop.f32.mrb[0].mxu0
        %2671 = vmatprep.mubr.bf16.mxu0 0
        %2672 = vmatmul.mubr.bf16.gmra.mrb[0].mxu0 %v1565
        %v2673 = vpop.f32.mrb[0].mxu0
        %v2674 = vadd.f32 %v941, %v2673
        %v2675 = vpop.f32.mrb[0].mxu0
        %v2676 = vpop.f32.mrb[0].mxu0
        %v2677 = vadd.f32 %v941, %v2676
        %v2678 = vpop.f32.mrb[0].mxu0
        %2679 = vmatprep.mubr.bf16.mxu0 0
        %2680 = vmatmul.mubr.bf16.gmra.mrb[0].mxu0 %v1566
        %v2681 = vpop.f32.mrb[0].mxu0
        %v2682 = vadd.f32 %v941, %v2681
        %v2683 = vpop.f32.mrb[0].mxu0
        %v2684 = vpop.f32.mrb[0].mxu0
        %v2685 = vadd.f32 %v941, %v2684
        %v2686 = vpop.f32.mrb[0].mxu0
        %2687 = vmatprep.mubr.bf16.mxu0 0
        %2688 = vmatmul.mubr.bf16.gmra.mrb[0].mxu0 %v1567
        %v2689 = vpop.f32.mrb[0].mxu0
        %v2690 = vadd.f32 %v941, %v2689
        %v2691 = vpop.f32.mrb[0].mxu0
        %v2692 = vpop.f32.mrb[0].mxu0
        %v2693 = vadd.f32 %v941, %v2692
        %v2694 = vpop.f32.mrb[0].mxu0
        %2695 = vmatprep.mubr.bf16.mxu0 0
        %2696 = vmatmul.mubr.bf16.gmra.mrb[0].mxu0 %v1568
        %v2697 = vpop.f32.mrb[0].mxu0
        %v2698 = vadd.f32 %v941, %v2697
        %v2699 = vpop.f32.mrb[0].mxu0
        %v2700 = vpop.f32.mrb[0].mxu0
        %v2701 = vadd.f32 %v941, %v2700
        %v2702 = vpop.f32.mrb[0].mxu0
        %2703 = vmatprep.mubr.bf16.mxu0 0
        %2704 = vmatmul.mubr.bf16.gmra.mrb[0].mxu0 %v1569
        %v2705 = vpop.f32.mrb[0].mxu0
        %v2706 = vadd.f32 %v941, %v2705
        %v2707 = vpop.f32.mrb[0].mxu0
        %v2708 = vpop.f32.mrb[0].mxu0
        %v2709 = vadd.f32 %v941, %v2708
        %v2710 = vpop.f32.mrb[0].mxu0
        %2711 = vmatprep.mubr.bf16.mxu0 0
        %2712 = vmatmul.mubr.bf16.gmra.mrb[0].mxu0 %v1570
        %v2713 = vpop.f32.mrb[0].mxu0
        %v2714 = vadd.f32 %v941, %v2713
        %v2715 = vpop.f32.mrb[0].mxu0
        %v2716 = vpop.f32.mrb[0].mxu0
        %v2717 = vadd.f32 %v941, %v2716
        %v2718 = vpop.f32.mrb[0].mxu0
        %2719 = vmatprep.mubr.bf16.mxu0 0
        %2720 = vmatmul.mubr.bf16.gmra.mrb[0].mxu0 %v1571
        %v2721 = vpop.f32.mrb[0].mxu0
        %v2722 = vadd.f32 %v941, %v2721
        %v2723 = vpop.f32.mrb[0].mxu0
        %v2724 = vpop.f32.mrb[0].mxu0
        %v2725 = vadd.f32 %v941, %v2724
        %v2726 = vpop.f32.mrb[0].mxu0
        %2727 = vmatprep.mubr.bf16.mxu0 0
        %2728 = vmatmul.mubr.bf16.gmra.mrb[0].mxu0 %v1572
        %v2729 = vpop.f32.mrb[0].mxu0
        %v2730 = vadd.f32 %v941, %v2729
        %v2731 = vpop.f32.mrb[0].mxu0
        %v2732 = vpop.f32.mrb[0].mxu0
        %v2733 = vadd.f32 %v941, %v2732
        %v2734 = vpop.f32.mrb[0].mxu0
        %2735 = vmatprep.mubr.bf16.mxu0 0
        %2736 = vmatmul.mubr.bf16.gmra.mrb[0].mxu0 %v1573
        %v2737 = vpop.f32.mrb[0].mxu0
        %v2738 = vadd.f32 %v941, %v2737
        %v2739 = vpop.f32.mrb[0].mxu0
        %v2740 = vpop.f32.mrb[0].mxu0
        %v2741 = vadd.f32 %v941, %v2740
        %v2742 = vpop.f32.mrb[0].mxu0
        %2743 = vmatprep.mubr.bf16.mxu0 0
        %2744 = vmatmul.mubr.bf16.gmra.mrb[0].mxu0 %v1574
        %v2745 = vpop.f32.mrb[0].mxu0
        %v2746 = vadd.f32 %v941, %v2745
        %v2747 = vpop.f32.mrb[0].mxu0
        %v2748 = vpop.f32.mrb[0].mxu0
        %v2749 = vadd.f32 %v941, %v2748
        %v2750 = vpop.f32.mrb[0].mxu0
        %2751 = vmatprep.mubr.bf16.mxu0 0
        %2752 = vmatmul.mubr.bf16.gmra.mrb[0].mxu0 %v1575
        %v2753 = vpop.f32.mrb[0].mxu0
        %v2754 = vadd.f32 %v941, %v2753
        %v2755 = vpop.f32.mrb[0].mxu0
        %v2756 = vpop.f32.mrb[0].mxu0
        %v2757 = vadd.f32 %v941, %v2756
        %v2758 = vpop.f32.mrb[0].mxu0
        %2759 = vmatprep.mubr.bf16.mxu0 0
        %2760 = vmatmul.mubr.bf16.gmra.mrb[0].mxu0 %v1576
        %v2761 = vpop.f32.mrb[0].mxu0
        %v2762 = vadd.f32 %v941, %v2761
        %v2763 = vpop.f32.mrb[0].mxu0
        %v2764 = vpop.f32.mrb[0].mxu0
        %v2765 = vadd.f32 %v941, %v2764
        %v2766 = vpop.f32.mrb[0].mxu0
        %2767 = vmatprep.mubr.bf16.mxu0 0
        %2768 = vmatmul.mubr.bf16.gmra.mrb[0].mxu0 %v1577
        %v2769 = vpop.f32.mrb[0].mxu0
        %v2770 = vadd.f32 %v941, %v2769
        %v2771 = vpop.f32.mrb[0].mxu0
        %v2772 = vpop.f32.mrb[0].mxu0
        %v2773 = vadd.f32 %v941, %v2772
        %v2774 = vpop.f32.mrb[0].mxu0
        %2775 = vmatprep.mubr.bf16.mxu0 0
        %2776 = vmatmul.mubr.bf16.gmra.mrb[0].mxu0 %v1578
        %v2777 = vpop.f32.mrb[0].mxu0
        %v2778 = vadd.f32 %v941, %v2777
        %v2779 = vpop.f32.mrb[0].mxu0
        %v2780 = vpop.f32.mrb[0].mxu0
        %v2781 = vadd.f32 %v941, %v2780
        %v2782 = vpop.f32.mrb[0].mxu0
        %2783 = vmatprep.mubr.bf16.mxu0 0
        %2784 = vmatmul.mubr.bf16.gmra.mrb[0].mxu0 %v1579
        %v2785 = vpop.f32.mrb[0].mxu0
        %v2786 = vadd.f32 %v941, %v2785
        %v2787 = vpop.f32.mrb[0].mxu0
        %v2788 = vpop.f32.mrb[0].mxu0
        %v2789 = vadd.f32 %v941, %v2788
        %v2790 = vpop.f32.mrb[0].mxu0
        %2791 = vmatprep.mubr.bf16.mxu0 0
        %2792 = vmatmul.mubr.bf16.gmra.mrb[0].mxu0 %v1580
        %v2793 = vpop.f32.mrb[0].mxu0
        %v2794 = vadd.f32 %v941, %v2793
        %v2795 = vpop.f32.mrb[0].mxu0
        %v2796 = vpop.f32.mrb[0].mxu0
        %v2797 = vadd.f32 %v941, %v2796
        %v2798 = vpop.f32.mrb[0].mxu0
        %2799 = vmatprep.mubr.bf16.mxu0 0
        %2800 = vmatmul.mubr.bf16.gmra.mrb[0].mxu0 %v1581
        %v2801 = vpop.f32.mrb[0].mxu0
        %v2802 = vadd.f32 %v941, %v2801
        %v2803 = vpop.f32.mrb[0].mxu0
        %v2804 = vpop.f32.mrb[0].mxu0
        %v2805 = vadd.f32 %v941, %v2804
        %v2806 = vpop.f32.mrb[0].mxu0
        %2807 = vmatprep.mubr.bf16.mxu0 0
        %2808 = vmatmul.mubr.bf16.gmra.mrb[0].mxu0 %v1582
        %v2809 = vpop.f32.mrb[0].mxu0
        %v2810 = vadd.f32 %v941, %v2809
        %v2811 = vpop.f32.mrb[0].mxu0
        %v2812 = vpop.f32.mrb[0].mxu0
        %v2813 = vadd.f32 %v941, %v2812
        %v2814 = vpop.f32.mrb[0].mxu0
        %2815 = vdwg.mxu0
        %v2816 = vmax.f32 %v1794, 0.0
        %v2817 = vmax.f32 %v1797, 0.0
        %v2818 = vmax.f32 %v1802, 0.0
        %v2819 = vmax.f32 %v1805, 0.0
        %v2820 = vmax.f32 %v1810, 0.0
        %v2821 = vmax.f32 %v1813, 0.0
        %v2822 = vmax.f32 %v1818, 0.0
        %v2823 = vmax.f32 %v1821, 0.0
        %v2824 = vmax.f32 %v1826, 0.0
        %v2825 = vmax.f32 %v1829, 0.0
        %v2826 = vmax.f32 %v1834, 0.0
        %v2827 = vmax.f32 %v1837, 0.0
        %v2828 = vmax.f32 %v1842, 0.0
        %v2829 = vmax.f32 %v1845, 0.0
        %v2830 = vmax.f32 %v1850, 0.0
        %v2831 = vmax.f32 %v1853, 0.0
        %v2832 = vmax.f32 %v1858, 0.0
        %v2833 = vmax.f32 %v1861, 0.0
        %v2834 = vmax.f32 %v1866, 0.0
        %v2835 = vmax.f32 %v1869, 0.0
        %v2836 = vmax.f32 %v1874, 0.0
        %v2837 = vmax.f32 %v1877, 0.0
        %v2838 = vmax.f32 %v1882, 0.0
        %v2839 = vmax.f32 %v1885, 0.0
        %v2840 = vmax.f32 %v1890, 0.0
        %v2841 = vmax.f32 %v1893, 0.0
        %v2842 = vmax.f32 %v1898, 0.0
        %v2843 = vmax.f32 %v1901, 0.0
        %v2844 = vmax.f32 %v1906, 0.0
        %v2845 = vmax.f32 %v1909, 0.0
        %v2846 = vmax.f32 %v1914, 0.0
        %v2847 = vmax.f32 %v1917, 0.0
        %v2848 = vmax.f32 %v1922, 0.0
        %v2849 = vmax.f32 %v1925, 0.0
        %v2850 = vmax.f32 %v1930, 0.0
        %v2851 = vmax.f32 %v1933, 0.0
        %v2852 = vmax.f32 %v1938, 0.0
        %v2853 = vmax.f32 %v1941, 0.0
        %v2854 = vmax.f32 %v1946, 0.0
        %v2855 = vmax.f32 %v1949, 0.0
        %v2856 = vmax.f32 %v1954, 0.0
        %v2857 = vmax.f32 %v1957, 0.0
        %v2858 = vmax.f32 %v1962, 0.0
        %v2859 = vmax.f32 %v1965, 0.0
        %v2860 = vmax.f32 %v1970, 0.0
        %v2861 = vmax.f32 %v1973, 0.0
        %v2862 = vmax.f32 %v1978, 0.0
        %v2863 = vmax.f32 %v1981, 0.0
        %v2864 = vmax.f32 %v1986, 0.0
        %v2865 = vmax.f32 %v1989, 0.0
        %v2866 = vmax.f32 %v1994, 0.0
        %v2867 = vmax.f32 %v1997, 0.0
        %v2868 = vmax.f32 %v2002, 0.0
        %v2869 = vmax.f32 %v2005, 0.0
        %v2870 = vmax.f32 %v2010, 0.0
        %v2871 = vmax.f32 %v2013, 0.0
        %v2872 = vmax.f32 %v2018, 0.0
        %v2873 = vmax.f32 %v2021, 0.0
        %v2874 = vmax.f32 %v2026, 0.0
        %v2875 = vmax.f32 %v2029, 0.0
        %v2876 = vmax.f32 %v2034, 0.0
        %v2877 = vmax.f32 %v2037, 0.0
        %v2878 = vmax.f32 %v2042, 0.0
        %v2879 = vmax.f32 %v2045, 0.0
        %v2880 = vmax.f32 %v2050, 0.0
        %v2881 = vmax.f32 %v2053, 0.0
        %v2882 = vmax.f32 %v2058, 0.0
        %v2883 = vmax.f32 %v2061, 0.0
        %v2884 = vmax.f32 %v2066, 0.0
        %v2885 = vmax.f32 %v2069, 0.0
        %v2886 = vmax.f32 %v2074, 0.0
        %v2887 = vmax.f32 %v2077, 0.0
        %v2888 = vmax.f32 %v2082, 0.0
        %v2889 = vmax.f32 %v2085, 0.0
        %v2890 = vmax.f32 %v2090, 0.0
        %v2891 = vmax.f32 %v2093, 0.0
        %v2892 = vmax.f32 %v2098, 0.0
        %v2893 = vmax.f32 %v2101, 0.0
        %v2894 = vmax.f32 %v2106, 0.0
        %v2895 = vmax.f32 %v2109, 0.0
        %v2896 = vmax.f32 %v2114, 0.0
        %v2897 = vmax.f32 %v2117, 0.0
        %v2898 = vmax.f32 %v2122, 0.0
        %v2899 = vmax.f32 %v2125, 0.0
        %v2900 = vmax.f32 %v2130, 0.0
        %v2901 = vmax.f32 %v2133, 0.0
        %v2902 = vmax.f32 %v2138, 0.0
        %v2903 = vmax.f32 %v2141, 0.0
        %v2904 = vmax.f32 %v2146, 0.0
        %v2905 = vmax.f32 %v2149, 0.0
        %v2906 = vmax.f32 %v2154, 0.0
        %v2907 = vmax.f32 %v2157, 0.0
        %v2908 = vmax.f32 %v2162, 0.0
        %v2909 = vmax.f32 %v2165, 0.0
        %v2910 = vmax.f32 %v2170, 0.0
        %v2911 = vmax.f32 %v2173, 0.0
        %v2912 = vmax.f32 %v2178, 0.0
        %v2913 = vmax.f32 %v2181, 0.0
        %v2914 = vmax.f32 %v2186, 0.0
        %v2915 = vmax.f32 %v2189, 0.0
        %v2916 = vmax.f32 %v2194, 0.0
        %v2917 = vmax.f32 %v2197, 0.0
        %v2918 = vmax.f32 %v2202, 0.0
        %v2919 = vmax.f32 %v2205, 0.0
        %v2920 = vmax.f32 %v2210, 0.0
        %v2921 = vmax.f32 %v2213, 0.0
        %v2922 = vmax.f32 %v2218, 0.0
        %v2923 = vmax.f32 %v2221, 0.0
        %v2924 = vmax.f32 %v2226, 0.0
        %v2925 = vmax.f32 %v2229, 0.0
        %v2926 = vmax.f32 %v2234, 0.0
        %v2927 = vmax.f32 %v2237, 0.0
        %v2928 = vmax.f32 %v2242, 0.0
        %v2929 = vmax.f32 %v2245, 0.0
        %v2930 = vmax.f32 %v2250, 0.0
        %v2931 = vmax.f32 %v2253, 0.0
        %v2932 = vmax.f32 %v2258, 0.0
        %v2933 = vmax.f32 %v2261, 0.0
        %v2934 = vmax.f32 %v2266, 0.0
        %v2935 = vmax.f32 %v2269, 0.0
        %v2936 = vmax.f32 %v2274, 0.0
        %v2937 = vmax.f32 %v2277, 0.0
        %v2938 = vmax.f32 %v2282, 0.0
        %v2939 = vmax.f32 %v2285, 0.0
        %v2940 = vmax.f32 %v2290, 0.0
        %v2941 = vmax.f32 %v2293, 0.0
        %v2942 = vmax.f32 %v2298, 0.0
        %v2943 = vmax.f32 %v2301, 0.0
        %v2944 = vmax.f32 %v2306, 0.0
        %v2945 = vmax.f32 %v2309, 0.0
        %v2946 = vmax.f32 %v2314, 0.0
        %v2947 = vmax.f32 %v2317, 0.0
        %v2948 = vmax.f32 %v2322, 0.0
        %v2949 = vmax.f32 %v2325, 0.0
        %v2950 = vmax.f32 %v2330, 0.0
        %v2951 = vmax.f32 %v2333, 0.0
        %v2952 = vmax.f32 %v2338, 0.0
        %v2953 = vmax.f32 %v2341, 0.0
        %v2954 = vmax.f32 %v2346, 0.0
        %v2955 = vmax.f32 %v2349, 0.0
        %v2956 = vmax.f32 %v2354, 0.0
        %v2957 = vmax.f32 %v2357, 0.0
        %v2958 = vmax.f32 %v2362, 0.0
        %v2959 = vmax.f32 %v2365, 0.0
        %v2960 = vmax.f32 %v2370, 0.0
        %v2961 = vmax.f32 %v2373, 0.0
        %v2962 = vmax.f32 %v2378, 0.0
        %v2963 = vmax.f32 %v2381, 0.0
        %v2964 = vmax.f32 %v2386, 0.0
        %v2965 = vmax.f32 %v2389, 0.0
        %v2966 = vmax.f32 %v2394, 0.0
        %v2967 = vmax.f32 %v2397, 0.0
        %v2968 = vmax.f32 %v2402, 0.0
        %v2969 = vmax.f32 %v2405, 0.0
        %v2970 = vmax.f32 %v2410, 0.0
        %v2971 = vmax.f32 %v2413, 0.0
        %v2972 = vmax.f32 %v2418, 0.0
        %v2973 = vmax.f32 %v2421, 0.0
        %v2974 = vmax.f32 %v2426, 0.0
        %v2975 = vmax.f32 %v2429, 0.0
        %v2976 = vmax.f32 %v2434, 0.0
        %v2977 = vmax.f32 %v2437, 0.0
        %v2978 = vmax.f32 %v2442, 0.0
        %v2979 = vmax.f32 %v2445, 0.0
        %v2980 = vmax.f32 %v2450, 0.0
        %v2981 = vmax.f32 %v2453, 0.0
        %v2982 = vmax.f32 %v2458, 0.0
        %v2983 = vmax.f32 %v2461, 0.0
        %v2984 = vmax.f32 %v2466, 0.0
        %v2985 = vmax.f32 %v2469, 0.0
        %v2986 = vmax.f32 %v2474, 0.0
        %v2987 = vmax.f32 %v2477, 0.0
        %v2988 = vmax.f32 %v2482, 0.0
        %v2989 = vmax.f32 %v2485, 0.0
        %v2990 = vmax.f32 %v2490, 0.0
        %v2991 = vmax.f32 %v2493, 0.0
        %v2992 = vmax.f32 %v2498, 0.0
        %v2993 = vmax.f32 %v2501, 0.0
        %v2994 = vmax.f32 %v2506, 0.0
        %v2995 = vmax.f32 %v2509, 0.0
        %v2996 = vmax.f32 %v2514, 0.0
        %v2997 = vmax.f32 %v2517, 0.0
        %v2998 = vmax.f32 %v2522, 0.0
        %v2999 = vmax.f32 %v2525, 0.0
        %v3000 = vmax.f32 %v2530, 0.0
        %v3001 = vmax.f32 %v2533, 0.0
        %v3002 = vmax.f32 %v2538, 0.0
        %v3003 = vmax.f32 %v2541, 0.0
        %v3004 = vmax.f32 %v2546, 0.0
        %v3005 = vmax.f32 %v2549, 0.0
        %v3006 = vmax.f32 %v2554, 0.0
        %v3007 = vmax.f32 %v2557, 0.0
        %v3008 = vmax.f32 %v2562, 0.0
        %v3009 = vmax.f32 %v2565, 0.0
        %v3010 = vmax.f32 %v2570, 0.0
        %v3011 = vmax.f32 %v2573, 0.0
        %v3012 = vmax.f32 %v2578, 0.0
        %v3013 = vmax.f32 %v2581, 0.0
        %v3014 = vmax.f32 %v2586, 0.0
        %v3015 = vmax.f32 %v2589, 0.0
        %v3016 = vmax.f32 %v2594, 0.0
        %v3017 = vmax.f32 %v2597, 0.0
        %v3018 = vmax.f32 %v2602, 0.0
        %v3019 = vmax.f32 %v2605, 0.0
        %v3020 = vmax.f32 %v2610, 0.0
        %v3021 = vmax.f32 %v2613, 0.0
        %v3022 = vmax.f32 %v2618, 0.0
        %v3023 = vmax.f32 %v2621, 0.0
        %v3024 = vmax.f32 %v2626, 0.0
        %v3025 = vmax.f32 %v2629, 0.0
        %v3026 = vmax.f32 %v2634, 0.0
        %v3027 = vmax.f32 %v2637, 0.0
        %v3028 = vmax.f32 %v2642, 0.0
        %v3029 = vmax.f32 %v2645, 0.0
        %v3030 = vmax.f32 %v2650, 0.0
        %v3031 = vmax.f32 %v2653, 0.0
        %v3032 = vmax.f32 %v2658, 0.0
        %v3033 = vmax.f32 %v2661, 0.0
        %v3034 = vmax.f32 %v2666, 0.0
        %v3035 = vmax.f32 %v2669, 0.0
        %v3036 = vmax.f32 %v2674, 0.0
        %v3037 = vmax.f32 %v2677, 0.0
        %v3038 = vmax.f32 %v2682, 0.0
        %v3039 = vmax.f32 %v2685, 0.0
        %v3040 = vmax.f32 %v2690, 0.0
        %v3041 = vmax.f32 %v2693, 0.0
        %v3042 = vmax.f32 %v2698, 0.0
        %v3043 = vmax.f32 %v2701, 0.0
        %v3044 = vmax.f32 %v2706, 0.0
        %v3045 = vmax.f32 %v2709, 0.0
        %v3046 = vmax.f32 %v2714, 0.0
        %v3047 = vmax.f32 %v2717, 0.0
        %v3048 = vmax.f32 %v2722, 0.0
        %v3049 = vmax.f32 %v2725, 0.0
        %v3050 = vmax.f32 %v2730, 0.0
        %v3051 = vmax.f32 %v2733, 0.0
        %v3052 = vmax.f32 %v2738, 0.0
        %v3053 = vmax.f32 %v2741, 0.0
        %v3054 = vmax.f32 %v2746, 0.0
        %v3055 = vmax.f32 %v2749, 0.0
        %v3056 = vmax.f32 %v2754, 0.0
        %v3057 = vmax.f32 %v2757, 0.0
        %v3058 = vmax.f32 %v2762, 0.0
        %v3059 = vmax.f32 %v2765, 0.0
        %v3060 = vmax.f32 %v2770, 0.0
        %v3061 = vmax.f32 %v2773, 0.0
        %v3062 = vmax.f32 %v2778, 0.0
        %v3063 = vmax.f32 %v2781, 0.0
        %v3064 = vmax.f32 %v2786, 0.0
        %v3065 = vmax.f32 %v2789, 0.0
        %v3066 = vmax.f32 %v2794, 0.0
        %v3067 = vmax.f32 %v2797, 0.0
        %v3068 = vmax.f32 %v2802, 0.0
        %v3069 = vmax.f32 %v2805, 0.0
        %v3070 = vmax.f32 %v2810, 0.0
        %v3071 = vmax.f32 %v2813, 0.0
        %v3072 = vld [vmem:[#allocation5] sm:$0xff]
        %v3073 = vld [vmem:[#allocation5 + $0x8] sm:$0xff]
        %v3074 = vld [vmem:[#allocation5 + $0x10] sm:$0xff]
        %v3075 = vld [vmem:[#allocation5 + $0x18] sm:$0xff]
        %v3076 = vld [vmem:[#allocation5 + $0x20] sm:$0xff]
        %v3077 = vld [vmem:[#allocation5 + $0x28] sm:$0xff]
        %v3078 = vld [vmem:[#allocation5 + $0x30] sm:$0xff]
        %v3079 = vld [vmem:[#allocation5 + $0x38] sm:$0xff]
        %v3080 = vpack.c.bf16 %v2817, %v2816
        %v3081 = vpack.c.bf16 %v2819, %v2818
        %v3082 = vpack.c.bf16 %v2821, %v2820
        %v3083 = vpack.c.bf16 %v2823, %v2822
        %v3084 = vpack.c.bf16 %v2825, %v2824
        %v3085 = vpack.c.bf16 %v2827, %v2826
        %v3086 = vpack.c.bf16 %v2829, %v2828
        %v3087 = vpack.c.bf16 %v2831, %v2830
        %v3088 = vpack.c.bf16 %v2833, %v2832
        %v3089 = vpack.c.bf16 %v2835, %v2834
        %v3090 = vpack.c.bf16 %v2837, %v2836
        %v3091 = vpack.c.bf16 %v2839, %v2838
        %v3092 = vpack.c.bf16 %v2841, %v2840
        %v3093 = vpack.c.bf16 %v2843, %v2842
        %v3094 = vpack.c.bf16 %v2845, %v2844
        %v3095 = vpack.c.bf16 %v2847, %v2846
        %v3096 = vpack.c.bf16 %v2849, %v2848
        %v3097 = vpack.c.bf16 %v2851, %v2850
        %v3098 = vpack.c.bf16 %v2853, %v2852
        %v3099 = vpack.c.bf16 %v2855, %v2854
        %v3100 = vpack.c.bf16 %v2857, %v2856
        %v3101 = vpack.c.bf16 %v2859, %v2858
        %v3102 = vpack.c.bf16 %v2861, %v2860
        %v3103 = vpack.c.bf16 %v2863, %v2862
        %v3104 = vpack.c.bf16 %v2865, %v2864
        %v3105 = vpack.c.bf16 %v2867, %v2866
        %v3106 = vpack.c.bf16 %v2869, %v2868
        %v3107 = vpack.c.bf16 %v2871, %v2870
        %v3108 = vpack.c.bf16 %v2873, %v2872
        %v3109 = vpack.c.bf16 %v2875, %v2874
        %v3110 = vpack.c.bf16 %v2877, %v2876
        %v3111 = vpack.c.bf16 %v2879, %v2878
        %v3112 = vpack.c.bf16 %v2881, %v2880
        %v3113 = vpack.c.bf16 %v2883, %v2882
        %v3114 = vpack.c.bf16 %v2885, %v2884
        %v3115 = vpack.c.bf16 %v2887, %v2886
        %v3116 = vpack.c.bf16 %v2889, %v2888
        %v3117 = vpack.c.bf16 %v2891, %v2890
        %v3118 = vpack.c.bf16 %v2893, %v2892
        %v3119 = vpack.c.bf16 %v2895, %v2894
        %v3120 = vpack.c.bf16 %v2897, %v2896
        %v3121 = vpack.c.bf16 %v2899, %v2898
        %v3122 = vpack.c.bf16 %v2901, %v2900
        %v3123 = vpack.c.bf16 %v2903, %v2902
        %v3124 = vpack.c.bf16 %v2905, %v2904
        %v3125 = vpack.c.bf16 %v2907, %v2906
        %v3126 = vpack.c.bf16 %v2909, %v2908
        %v3127 = vpack.c.bf16 %v2911, %v2910
        %v3128 = vpack.c.bf16 %v2913, %v2912
        %v3129 = vpack.c.bf16 %v2915, %v2914
        %v3130 = vpack.c.bf16 %v2917, %v2916
        %v3131 = vpack.c.bf16 %v2919, %v2918
        %v3132 = vpack.c.bf16 %v2921, %v2920
        %v3133 = vpack.c.bf16 %v2923, %v2922
        %v3134 = vpack.c.bf16 %v2925, %v2924
        %v3135 = vpack.c.bf16 %v2927, %v2926
        %v3136 = vpack.c.bf16 %v2929, %v2928
        %v3137 = vpack.c.bf16 %v2931, %v2930
        %v3138 = vpack.c.bf16 %v2933, %v2932
        %v3139 = vpack.c.bf16 %v2935, %v2934
        %v3140 = vpack.c.bf16 %v2937, %v2936
        %v3141 = vpack.c.bf16 %v2939, %v2938
        %v3142 = vpack.c.bf16 %v2941, %v2940
        %v3143 = vpack.c.bf16 %v2943, %v2942
        %v3144 = vpack.c.bf16 %v2945, %v2944
        %v3145 = vpack.c.bf16 %v2947, %v2946
        %v3146 = vpack.c.bf16 %v2949, %v2948
        %v3147 = vpack.c.bf16 %v2951, %v2950
        %v3148 = vpack.c.bf16 %v2953, %v2952
        %v3149 = vpack.c.bf16 %v2955, %v2954
        %v3150 = vpack.c.bf16 %v2957, %v2956
        %v3151 = vpack.c.bf16 %v2959, %v2958
        %v3152 = vpack.c.bf16 %v2961, %v2960
        %v3153 = vpack.c.bf16 %v2963, %v2962
        %v3154 = vpack.c.bf16 %v2965, %v2964
        %v3155 = vpack.c.bf16 %v2967, %v2966
        %v3156 = vpack.c.bf16 %v2969, %v2968
        %v3157 = vpack.c.bf16 %v2971, %v2970
        %v3158 = vpack.c.bf16 %v2973, %v2972
        %v3159 = vpack.c.bf16 %v2975, %v2974
        %v3160 = vpack.c.bf16 %v2977, %v2976
        %v3161 = vpack.c.bf16 %v2979, %v2978
        %v3162 = vpack.c.bf16 %v2981, %v2980
        %v3163 = vpack.c.bf16 %v2983, %v2982
        %v3164 = vpack.c.bf16 %v2985, %v2984
        %v3165 = vpack.c.bf16 %v2987, %v2986
        %v3166 = vpack.c.bf16 %v2989, %v2988
        %v3167 = vpack.c.bf16 %v2991, %v2990
        %v3168 = vpack.c.bf16 %v2993, %v2992
        %v3169 = vpack.c.bf16 %v2995, %v2994
        %v3170 = vpack.c.bf16 %v2997, %v2996
        %v3171 = vpack.c.bf16 %v2999, %v2998
        %v3172 = vpack.c.bf16 %v3001, %v3000
        %v3173 = vpack.c.bf16 %v3003, %v3002
        %v3174 = vpack.c.bf16 %v3005, %v3004
        %v3175 = vpack.c.bf16 %v3007, %v3006
        %v3176 = vpack.c.bf16 %v3009, %v3008
        %v3177 = vpack.c.bf16 %v3011, %v3010
        %v3178 = vpack.c.bf16 %v3013, %v3012
        %v3179 = vpack.c.bf16 %v3015, %v3014
        %v3180 = vpack.c.bf16 %v3017, %v3016
        %v3181 = vpack.c.bf16 %v3019, %v3018
        %v3182 = vpack.c.bf16 %v3021, %v3020
        %v3183 = vpack.c.bf16 %v3023, %v3022
        %v3184 = vpack.c.bf16 %v3025, %v3024
        %v3185 = vpack.c.bf16 %v3027, %v3026
        %v3186 = vpack.c.bf16 %v3029, %v3028
        %v3187 = vpack.c.bf16 %v3031, %v3030
        %v3188 = vpack.c.bf16 %v3033, %v3032
        %v3189 = vpack.c.bf16 %v3035, %v3034
        %v3190 = vpack.c.bf16 %v3037, %v3036
        %v3191 = vpack.c.bf16 %v3039, %v3038
        %v3192 = vpack.c.bf16 %v3041, %v3040
        %v3193 = vpack.c.bf16 %v3043, %v3042
        %v3194 = vpack.c.bf16 %v3045, %v3044
        %v3195 = vpack.c.bf16 %v3047, %v3046
        %v3196 = vpack.c.bf16 %v3049, %v3048
        %v3197 = vpack.c.bf16 %v3051, %v3050
        %v3198 = vpack.c.bf16 %v3053, %v3052
        %v3199 = vpack.c.bf16 %v3055, %v3054
        %v3200 = vpack.c.bf16 %v3057, %v3056
        %v3201 = vpack.c.bf16 %v3059, %v3058
        %v3202 = vpack.c.bf16 %v3061, %v3060
        %v3203 = vpack.c.bf16 %v3063, %v3062
        %v3204 = vpack.c.bf16 %v3065, %v3064
        %v3205 = vpack.c.bf16 %v3067, %v3066
        %v3206 = vpack.c.bf16 %v3069, %v3068
        %v3207 = vpack.c.bf16 %v3071, %v3070
        %v3216 = vunpack.c.l.b16 %v3072
        %v3217 = vunpack.c.h.b16 %v3072
        %v3218 = vunpack.c.l.b16 %v3073
        %v3219 = vunpack.c.h.b16 %v3073
        %v3220 = vunpack.c.l.b16 %v3074
        %v3221 = vunpack.c.h.b16 %v3074
        %v3222 = vunpack.c.l.b16 %v3075
        %v3223 = vunpack.c.h.b16 %v3075
        %v3224 = vunpack.c.l.b16 %v3076
        %v3225 = vunpack.c.h.b16 %v3076
        %v3226 = vunpack.c.l.b16 %v3077
        %v3227 = vunpack.c.h.b16 %v3077
        %v3228 = vunpack.c.l.b16 %v3078
        %v3229 = vunpack.c.h.b16 %v3078
        %v3230 = vunpack.c.l.b16 %v3079
        %v3231 = vunpack.c.h.b16 %v3079
        %v3232 = vpack.c.b16 %v3216, %v3216
        %v3233 = vpack.c.b16 %v3217, %v3217
        %v3234 = vpack.c.b16 %v3218, %v3218
        %v3235 = vpack.c.b16 %v3219, %v3219
        %v3236 = vpack.c.b16 %v3220, %v3220
        %v3237 = vpack.c.b16 %v3221, %v3221
        %v3238 = vpack.c.b16 %v3222, %v3222
        %v3239 = vpack.c.b16 %v3223, %v3223
        %v3240 = vpack.c.b16 %v3224, %v3224
        %v3241 = vpack.c.b16 %v3225, %v3225
        %v3242 = vpack.c.b16 %v3226, %v3226
        %v3243 = vpack.c.b16 %v3227, %v3227
        %v3244 = vpack.c.b16 %v3228, %v3228
        %v3245 = vpack.c.b16 %v3229, %v3229
        %v3246 = vpack.c.b16 %v3230, %v3230
        %v3247 = vpack.c.b16 %v3231, %v3231
        %3264 = vmatprep.subr.bf16.mxu0 0
        %3265 = vmatpush1.bf16.msra.mxu0 %v3080
        %3266 = vmatprep.subr.bf16.mxu0 0
        %3267 = vmatpush1.bf16.msra.mxu0 %v3081
        %3268 = vmatprep.subr.bf16.mxu0 0
        %3269 = vmatpush1.bf16.msra.mxu0 %v3082
        %3270 = vmatprep.subr.bf16.mxu0 0
        %3271 = vmatpush1.bf16.msra.mxu0 %v3083
        %3272 = vmatprep.subr.bf16.mxu0 0
        %3273 = vmatpush1.bf16.msra.mxu0 %v3084
        %3274 = vmatprep.subr.bf16.mxu0 0
        %3275 = vmatpush1.bf16.msra.mxu0 %v3085
        %3276 = vmatprep.subr.bf16.mxu0 0
        %3277 = vmatpush1.bf16.msra.mxu0 %v3086
        %3278 = vmatprep.subr.bf16.mxu0 0
        %3279 = vmatpush1.bf16.msra.mxu0 %v3087
        %3280 = vmatprep.subr.bf16.mxu0 0
        %3281 = vmatpush1.bf16.msra.mxu0 %v3088
        %3282 = vmatprep.subr.bf16.mxu0 0
        %3283 = vmatpush1.bf16.msra.mxu0 %v3089
        %3284 = vmatprep.subr.bf16.mxu0 0
        %3285 = vmatpush1.bf16.msra.mxu0 %v3090
        %3286 = vmatprep.subr.bf16.mxu0 0
        %3287 = vmatpush1.bf16.msra.mxu0 %v3091
        %3288 = vmatprep.subr.bf16.mxu0 0
        %3289 = vmatpush1.bf16.msra.mxu0 %v3092
        %3290 = vmatprep.subr.bf16.mxu0 0
        %3291 = vmatpush1.bf16.msra.mxu0 %v3093
        %3292 = vmatprep.subr.bf16.mxu0 0
        %3293 = vmatpush1.bf16.msra.mxu0 %v3094
        %3294 = vmatprep.subr.bf16.mxu0 0
        %3295 = vmatpush1.bf16.msra.mxu0 %v3095
        %3296 = vmatprep.mubr.bf16.mxu0 %v3233
        %3297 = vmatmul.mubr.bf16.gmra.mrb[0].mxu0 %v3232
        %v3298 = vpop.f32.mrb[0].mxu0
        %v3299 = vadd.f32 0.0, %v3298
        %v3300 = vpop.f32.mrb[0].mxu0
        %v3301 = vpop.f32.mrb[0].mxu0
        %v3302 = vpop.f32.mrb[0].mxu0
        %3303 = vdwg.mxu0
        %3304 = vmatprep.subr.bf16.mxu0 0
        %3305 = vmatpush1.bf16.msra.mxu0 %v3096
        %3306 = vmatprep.subr.bf16.mxu0 0
        %3307 = vmatpush1.bf16.msra.mxu0 %v3097
        %3308 = vmatprep.subr.bf16.mxu0 0
        %3309 = vmatpush1.bf16.msra.mxu0 %v3098
        %3310 = vmatprep.subr.bf16.mxu0 0
        %3311 = vmatpush1.bf16.msra.mxu0 %v3099
        %3312 = vmatprep.subr.bf16.mxu0 0
        %3313 = vmatpush1.bf16.msra.mxu0 %v3100
        %3314 = vmatprep.subr.bf16.mxu0 0
        %3315 = vmatpush1.bf16.msra.mxu0 %v3101
        %3316 = vmatprep.subr.bf16.mxu0 0
        %3317 = vmatpush1.bf16.msra.mxu0 %v3102
        %3318 = vmatprep.subr.bf16.mxu0 0
        %3319 = vmatpush1.bf16.msra.mxu0 %v3103
        %3320 = vmatprep.subr.bf16.mxu0 0
        %3321 = vmatpush1.bf16.msra.mxu0 %v3104
        %3322 = vmatprep.subr.bf16.mxu0 0
        %3323 = vmatpush1.bf16.msra.mxu0 %v3105
        %3324 = vmatprep.subr.bf16.mxu0 0
        %3325 = vmatpush1.bf16.msra.mxu0 %v3106
        %3326 = vmatprep.subr.bf16.mxu0 0
        %3327 = vmatpush1.bf16.msra.mxu0 %v3107
        %3328 = vmatprep.subr.bf16.mxu0 0
        %3329 = vmatpush1.bf16.msra.mxu0 %v3108
        %3330 = vmatprep.subr.bf16.mxu0 0
        %3331 = vmatpush1.bf16.msra.mxu0 %v3109
        %3332 = vmatprep.subr.bf16.mxu0 0
        %3333 = vmatpush1.bf16.msra.mxu0 %v3110
        %3334 = vmatprep.subr.bf16.mxu0 0
        %3335 = vmatpush1.bf16.msra.mxu0 %v3111
        %3336 = vmatprep.mubr.bf16.mxu0 %v3235
        %3337 = vmatmul.mubr.bf16.gmra.mrb[0].mxu0 %v3234
        %v3338 = vpop.f32.mrb[0].mxu0
        %v3339 = vadd.f32 %v3299, %v3338
        %v3340 = vpop.f32.mrb[0].mxu0
        %v3341 = vpop.f32.mrb[0].mxu0
        %v3342 = vpop.f32.mrb[0].mxu0
        %3343 = vdwg.mxu0
        %3344 = vmatprep.subr.bf16.mxu0 0
        %3345 = vmatpush1.bf16.msra.mxu0 %v3112
        %3346 = vmatprep.subr.bf16.mxu0 0
        %3347 = vmatpush1.bf16.msra.mxu0 %v3113
        %3348 = vmatprep.subr.bf16.mxu0 0
        %3349 = vmatpush1.bf16.msra.mxu0 %v3114
        %3350 = vmatprep.subr.bf16.mxu0 0
        %3351 = vmatpush1.bf16.msra.mxu0 %v3115
        %3352 = vmatprep.subr.bf16.mxu0 0
        %3353 = vmatpush1.bf16.msra.mxu0 %v3116
        %3354 = vmatprep.subr.bf16.mxu0 0
        %3355 = vmatpush1.bf16.msra.mxu0 %v3117
        %3356 = vmatprep.subr.bf16.mxu0 0
        %3357 = vmatpush1.bf16.msra.mxu0 %v3118
        %3358 = vmatprep.subr.bf16.mxu0 0
        %3359 = vmatpush1.bf16.msra.mxu0 %v3119
        %3360 = vmatprep.subr.bf16.mxu0 0
        %3361 = vmatpush1.bf16.msra.mxu0 %v3120
        %3362 = vmatprep.subr.bf16.mxu0 0
        %3363 = vmatpush1.bf16.msra.mxu0 %v3121
        %3364 = vmatprep.subr.bf16.mxu0 0
        %3365 = vmatpush1.bf16.msra.mxu0 %v3122
        %3366 = vmatprep.subr.bf16.mxu0 0
        %3367 = vmatpush1.bf16.msra.mxu0 %v3123
        %3368 = vmatprep.subr.bf16.mxu0 0
        %3369 = vmatpush1.bf16.msra.mxu0 %v3124
        %3370 = vmatprep.subr.bf16.mxu0 0
        %3371 = vmatpush1.bf16.msra.mxu0 %v3125
        %3372 = vmatprep.subr.bf16.mxu0 0
        %3373 = vmatpush1.bf16.msra.mxu0 %v3126
        %3374 = vmatprep.subr.bf16.mxu0 0
        %3375 = vmatpush1.bf16.msra.mxu0 %v3127
        %3376 = vmatprep.mubr.bf16.mxu0 %v3237
        %3377 = vmatmul.mubr.bf16.gmra.mrb[0].mxu0 %v3236
        %v3378 = vpop.f32.mrb[0].mxu0
        %v3379 = vadd.f32 %v3339, %v3378
        %v3380 = vpop.f32.mrb[0].mxu0
        %v3381 = vpop.f32.mrb[0].mxu0
        %v3382 = vpop.f32.mrb[0].mxu0
        %3383 = vdwg.mxu0
        %3384 = vmatprep.subr.bf16.mxu0 0
        %3385 = vmatpush1.bf16.msra.mxu0 %v3128
        %3386 = vmatprep.subr.bf16.mxu0 0
        %3387 = vmatpush1.bf16.msra.mxu0 %v3129
        %3388 = vmatprep.subr.bf16.mxu0 0
        %3389 = vmatpush1.bf16.msra.mxu0 %v3130
        %3390 = vmatprep.subr.bf16.mxu0 0
        %3391 = vmatpush1.bf16.msra.mxu0 %v3131
        %3392 = vmatprep.subr.bf16.mxu0 0
        %3393 = vmatpush1.bf16.msra.mxu0 %v3132
        %3394 = vmatprep.subr.bf16.mxu0 0
        %3395 = vmatpush1.bf16.msra.mxu0 %v3133
        %3396 = vmatprep.subr.bf16.mxu0 0
        %3397 = vmatpush1.bf16.msra.mxu0 %v3134
        %3398 = vmatprep.subr.bf16.mxu0 0
        %3399 = vmatpush1.bf16.msra.mxu0 %v3135
        %3400 = vmatprep.subr.bf16.mxu0 0
        %3401 = vmatpush1.bf16.msra.mxu0 %v3136
        %3402 = vmatprep.subr.bf16.mxu0 0
        %3403 = vmatpush1.bf16.msra.mxu0 %v3137
        %3404 = vmatprep.subr.bf16.mxu0 0
        %3405 = vmatpush1.bf16.msra.mxu0 %v3138
        %3406 = vmatprep.subr.bf16.mxu0 0
        %3407 = vmatpush1.bf16.msra.mxu0 %v3139
        %3408 = vmatprep.subr.bf16.mxu0 0
        %3409 = vmatpush1.bf16.msra.mxu0 %v3140
        %3410 = vmatprep.subr.bf16.mxu0 0
        %3411 = vmatpush1.bf16.msra.mxu0 %v3141
        %3412 = vmatprep.subr.bf16.mxu0 0
        %3413 = vmatpush1.bf16.msra.mxu0 %v3142
        %3414 = vmatprep.subr.bf16.mxu0 0
        %3415 = vmatpush1.bf16.msra.mxu0 %v3143
        %3416 = vmatprep.mubr.bf16.mxu0 %v3239
        %3417 = vmatmul.mubr.bf16.gmra.mrb[0].mxu0 %v3238
        %v3418 = vpop.f32.mrb[0].mxu0
        %v3419 = vadd.f32 %v3379, %v3418
        %v3420 = vpop.f32.mrb[0].mxu0
        %v3421 = vpop.f32.mrb[0].mxu0
        %v3422 = vpop.f32.mrb[0].mxu0
        %3423 = vdwg.mxu0
        %3424 = vmatprep.subr.bf16.mxu0 0
        %3425 = vmatpush1.bf16.msra.mxu0 %v3144
        %3426 = vmatprep.subr.bf16.mxu0 0
        %3427 = vmatpush1.bf16.msra.mxu0 %v3145
        %3428 = vmatprep.subr.bf16.mxu0 0
        %3429 = vmatpush1.bf16.msra.mxu0 %v3146
        %3430 = vmatprep.subr.bf16.mxu0 0
        %3431 = vmatpush1.bf16.msra.mxu0 %v3147
        %3432 = vmatprep.subr.bf16.mxu0 0
        %3433 = vmatpush1.bf16.msra.mxu0 %v3148
        %3434 = vmatprep.subr.bf16.mxu0 0
        %3435 = vmatpush1.bf16.msra.mxu0 %v3149
        %3436 = vmatprep.subr.bf16.mxu0 0
        %3437 = vmatpush1.bf16.msra.mxu0 %v3150
        %3438 = vmatprep.subr.bf16.mxu0 0
        %3439 = vmatpush1.bf16.msra.mxu0 %v3151
        %3440 = vmatprep.subr.bf16.mxu0 0
        %3441 = vmatpush1.bf16.msra.mxu0 %v3152
        %3442 = vmatprep.subr.bf16.mxu0 0
        %3443 = vmatpush1.bf16.msra.mxu0 %v3153
        %3444 = vmatprep.subr.bf16.mxu0 0
        %3445 = vmatpush1.bf16.msra.mxu0 %v3154
        %3446 = vmatprep.subr.bf16.mxu0 0
        %3447 = vmatpush1.bf16.msra.mxu0 %v3155
        %3448 = vmatprep.subr.bf16.mxu0 0
        %3449 = vmatpush1.bf16.msra.mxu0 %v3156
        %3450 = vmatprep.subr.bf16.mxu0 0
        %3451 = vmatpush1.bf16.msra.mxu0 %v3157
        %3452 = vmatprep.subr.bf16.mxu0 0
        %3453 = vmatpush1.bf16.msra.mxu0 %v3158
        %3454 = vmatprep.subr.bf16.mxu0 0
        %3455 = vmatpush1.bf16.msra.mxu0 %v3159
        %3456 = vmatprep.mubr.bf16.mxu0 %v3241
        %3457 = vmatmul.mubr.bf16.gmra.mrb[0].mxu0 %v3240
        %v3458 = vpop.f32.mrb[0].mxu0
        %v3459 = vadd.f32 %v3419, %v3458
        %v3460 = vpop.f32.mrb[0].mxu0
        %v3461 = vpop.f32.mrb[0].mxu0
        %v3462 = vpop.f32.mrb[0].mxu0
        %3463 = vdwg.mxu0
        %3464 = vmatprep.subr.bf16.mxu0 0
        %3465 = vmatpush1.bf16.msra.mxu0 %v3160
        %3466 = vmatprep.subr.bf16.mxu0 0
        %3467 = vmatpush1.bf16.msra.mxu0 %v3161
        %3468 = vmatprep.subr.bf16.mxu0 0
        %3469 = vmatpush1.bf16.msra.mxu0 %v3162
        %3470 = vmatprep.subr.bf16.mxu0 0
        %3471 = vmatpush1.bf16.msra.mxu0 %v3163
        %3472 = vmatprep.subr.bf16.mxu0 0
        %3473 = vmatpush1.bf16.msra.mxu0 %v3164
        %3474 = vmatprep.subr.bf16.mxu0 0
        %3475 = vmatpush1.bf16.msra.mxu0 %v3165
        %3476 = vmatprep.subr.bf16.mxu0 0
        %3477 = vmatpush1.bf16.msra.mxu0 %v3166
        %3478 = vmatprep.subr.bf16.mxu0 0
        %3479 = vmatpush1.bf16.msra.mxu0 %v3167
        %3480 = vmatprep.subr.bf16.mxu0 0
        %3481 = vmatpush1.bf16.msra.mxu0 %v3168
        %3482 = vmatprep.subr.bf16.mxu0 0
        %3483 = vmatpush1.bf16.msra.mxu0 %v3169
        %3484 = vmatprep.subr.bf16.mxu0 0
        %3485 = vmatpush1.bf16.msra.mxu0 %v3170
        %3486 = vmatprep.subr.bf16.mxu0 0
        %3487 = vmatpush1.bf16.msra.mxu0 %v3171
        %3488 = vmatprep.subr.bf16.mxu0 0
        %3489 = vmatpush1.bf16.msra.mxu0 %v3172
        %3490 = vmatprep.subr.bf16.mxu0 0
        %3491 = vmatpush1.bf16.msra.mxu0 %v3173
        %3492 = vmatprep.subr.bf16.mxu0 0
        %3493 = vmatpush1.bf16.msra.mxu0 %v3174
        %3494 = vmatprep.subr.bf16.mxu0 0
        %3495 = vmatpush1.bf16.msra.mxu0 %v3175
        %3496 = vmatprep.mubr.bf16.mxu0 %v3243
        %3497 = vmatmul.mubr.bf16.gmra.mrb[0].mxu0 %v3242
        %v3498 = vpop.f32.mrb[0].mxu0
        %v3499 = vadd.f32 %v3459, %v3498
        %v3500 = vpop.f32.mrb[0].mxu0
        %v3501 = vpop.f32.mrb[0].mxu0
        %v3502 = vpop.f32.mrb[0].mxu0
        %3503 = vdwg.mxu0
        %3504 = vmatprep.subr.bf16.mxu0 0
        %3505 = vmatpush1.bf16.msra.mxu0 %v3176
        %3506 = vmatprep.subr.bf16.mxu0 0
        %3507 = vmatpush1.bf16.msra.mxu0 %v3177
        %3508 = vmatprep.subr.bf16.mxu0 0
        %3509 = vmatpush1.bf16.msra.mxu0 %v3178
        %3510 = vmatprep.subr.bf16.mxu0 0
        %3511 = vmatpush1.bf16.msra.mxu0 %v3179
        %3512 = vmatprep.subr.bf16.mxu0 0
        %3513 = vmatpush1.bf16.msra.mxu0 %v3180
        %3514 = vmatprep.subr.bf16.mxu0 0
        %3515 = vmatpush1.bf16.msra.mxu0 %v3181
        %3516 = vmatprep.subr.bf16.mxu0 0
        %3517 = vmatpush1.bf16.msra.mxu0 %v3182
        %3518 = vmatprep.subr.bf16.mxu0 0
        %3519 = vmatpush1.bf16.msra.mxu0 %v3183
        %3520 = vmatprep.subr.bf16.mxu0 0
        %3521 = vmatpush1.bf16.msra.mxu0 %v3184
        %3522 = vmatprep.subr.bf16.mxu0 0
        %3523 = vmatpush1.bf16.msra.mxu0 %v3185
        %3524 = vmatprep.subr.bf16.mxu0 0
        %3525 = vmatpush1.bf16.msra.mxu0 %v3186
        %3526 = vmatprep.subr.bf16.mxu0 0
        %3527 = vmatpush1.bf16.msra.mxu0 %v3187
        %3528 = vmatprep.subr.bf16.mxu0 0
        %3529 = vmatpush1.bf16.msra.mxu0 %v3188
        %3530 = vmatprep.subr.bf16.mxu0 0
        %3531 = vmatpush1.bf16.msra.mxu0 %v3189
        %3532 = vmatprep.subr.bf16.mxu0 0
        %3533 = vmatpush1.bf16.msra.mxu0 %v3190
        %3534 = vmatprep.subr.bf16.mxu0 0
        %3535 = vmatpush1.bf16.msra.mxu0 %v3191
        %3536 = vmatprep.mubr.bf16.mxu0 %v3245
        %3537 = vmatmul.mubr.bf16.gmra.mrb[0].mxu0 %v3244
        %v3538 = vpop.f32.mrb[0].mxu0
        %v3539 = vadd.f32 %v3499, %v3538
        %v3540 = vpop.f32.mrb[0].mxu0
        %v3541 = vpop.f32.mrb[0].mxu0
        %v3542 = vpop.f32.mrb[0].mxu0
        %3543 = vdwg.mxu0
        %3544 = vmatprep.subr.bf16.mxu0 0
        %3545 = vmatpush1.bf16.msra.mxu0 %v3192
        %3546 = vmatprep.subr.bf16.mxu0 0
        %3547 = vmatpush1.bf16.msra.mxu0 %v3193
        %3548 = vmatprep.subr.bf16.mxu0 0
        %3549 = vmatpush1.bf16.msra.mxu0 %v3194
        %3550 = vmatprep.subr.bf16.mxu0 0
        %3551 = vmatpush1.bf16.msra.mxu0 %v3195
        %3552 = vmatprep.subr.bf16.mxu0 0
        %3553 = vmatpush1.bf16.msra.mxu0 %v3196
        %3554 = vmatprep.subr.bf16.mxu0 0
        %3555 = vmatpush1.bf16.msra.mxu0 %v3197
        %3556 = vmatprep.subr.bf16.mxu0 0
        %3557 = vmatpush1.bf16.msra.mxu0 %v3198
        %3558 = vmatprep.subr.bf16.mxu0 0
        %3559 = vmatpush1.bf16.msra.mxu0 %v3199
        %3560 = vmatprep.subr.bf16.mxu0 0
        %3561 = vmatpush1.bf16.msra.mxu0 %v3200
        %3562 = vmatprep.subr.bf16.mxu0 0
        %3563 = vmatpush1.bf16.msra.mxu0 %v3201
        %3564 = vmatprep.subr.bf16.mxu0 0
        %3565 = vmatpush1.bf16.msra.mxu0 %v3202
        %3566 = vmatprep.subr.bf16.mxu0 0
        %3567 = vmatpush1.bf16.msra.mxu0 %v3203
        %3568 = vmatprep.subr.bf16.mxu0 0
        %3569 = vmatpush1.bf16.msra.mxu0 %v3204
        %3570 = vmatprep.subr.bf16.mxu0 0
        %3571 = vmatpush1.bf16.msra.mxu0 %v3205
        %3572 = vmatprep.subr.bf16.mxu0 0
        %3573 = vmatpush1.bf16.msra.mxu0 %v3206
        %3574 = vmatprep.subr.bf16.mxu0 0
        %3575 = vmatpush1.bf16.msra.mxu0 %v3207
        %3576 = vmatprep.mubr.bf16.mxu0 %v3247
        %3577 = vmatmul.mubr.bf16.gmra.mrb[0].mxu0 %v3246
        %v3578 = vpop.f32.mrb[0].mxu0
        %v3579 = vadd.f32 %v3539, %v3578
        %v3580 = vpop.f32.mrb[0].mxu0
        %v3581 = vpop.f32.mrb[0].mxu0
        %v3582 = vpop.f32.mrb[0].mxu0
        %3583 = vdwg.mxu0
        %v3584 = vpack.c.bf16 %v3579, %v3579
        %v3585 = vld [vmem:[#allocation9] sm:$0xff]
        %v3586 = vld [vmem:[#allocation9 + $0x8] sm:$0xff]
        %v3587 = vld [vmem:[#allocation9 + $0x10] sm:$0xff]
        %v3588 = vld [vmem:[#allocation9 + $0x18] sm:$0xff]
        %v3589 = vld [vmem:[#allocation9 + $0x20] sm:$0xff]
        %v3590 = vld [vmem:[#allocation9 + $0x28] sm:$0xff]
        %v3591 = vld [vmem:[#allocation9 + $0x30] sm:$0xff]
        %v3592 = vld [vmem:[#allocation9 + $0x38] sm:$0xff]
        %v3593 = vld [vmem:[#allocation9 + $0x40] sm:$0xff]
        %v3594 = vld [vmem:[#allocation9 + $0x48] sm:$0xff]
        %v3595 = vld [vmem:[#allocation9 + $0x50] sm:$0xff]
        %v3596 = vld [vmem:[#allocation9 + $0x58] sm:$0xff]
        %v3597 = vld [vmem:[#allocation9 + $0x60] sm:$0xff]
        %v3598 = vld [vmem:[#allocation9 + $0x68] sm:$0xff]
        %v3599 = vld [vmem:[#allocation9 + $0x70] sm:$0xff]
        %v3600 = vld [vmem:[#allocation9 + $0x78] sm:$0xff]
        %v3601 = vld [vmem:[#allocation9 + $0x80] sm:$0xff]
        %v3602 = vld [vmem:[#allocation9 + $0x88] sm:$0xff]
        %v3603 = vld [vmem:[#allocation9 + $0x90] sm:$0xff]
        %v3604 = vld [vmem:[#allocation9 + $0x98] sm:$0xff]
        %v3605 = vld [vmem:[#allocation9 + $0xa0] sm:$0xff]
        %v3606 = vld [vmem:[#allocation9 + $0xa8] sm:$0xff]
        %v3607 = vld [vmem:[#allocation9 + $0xb0] sm:$0xff]
        %v3608 = vld [vmem:[#allocation9 + $0xb8] sm:$0xff]
        %v3609 = vld [vmem:[#allocation9 + $0xc0] sm:$0xff]
        %v3610 = vld [vmem:[#allocation9 + $0xc8] sm:$0xff]
        %v3611 = vld [vmem:[#allocation9 + $0xd0] sm:$0xff]
        %v3612 = vld [vmem:[#allocation9 + $0xd8] sm:$0xff]
        %v3613 = vld [vmem:[#allocation9 + $0xe0] sm:$0xff]
        %v3614 = vld [vmem:[#allocation9 + $0xe8] sm:$0xff]
        %v3615 = vld [vmem:[#allocation9 + $0xf0] sm:$0xff]
        %v3616 = vld [vmem:[#allocation9 + $0xf8] sm:$0xff]
        %v3617 = vld [vmem:[%s6] sm:$0xf]
        %v3619 = vlaneseq
        %v3620 = vshrl.u32 %v3619, 7
        %v3621 = vsub.s32 0, %v3620
        %v3622 = vrot.slane %v3617, %v3621
        %v3623 = vlaneseq
        %v3624 = vshrl.u32 %v3623, 7
        %v3625 = vsub.s32 1, %v3624
        %v3626 = vrot.slane %v3617, %v3625
        %v3627 = vlaneseq
        %v3628 = vshrl.u32 %v3627, 7
        %v3629 = vsub.s32 2, %v3628
        %v3630 = vrot.slane %v3617, %v3629
        %v3631 = vlaneseq
        %v3632 = vshrl.u32 %v3631, 7
        %v3633 = vsub.s32 3, %v3632
        %v3634 = vrot.slane %v3617, %v3633
        %v3671 = vunpack.c.l.b16 %v3585
        %v3672 = vunpack.c.h.b16 %v3585
        %v3673 = vunpack.c.l.b16 %v3586
        %v3674 = vunpack.c.h.b16 %v3586
        %v3675 = vunpack.c.l.b16 %v3587
        %v3676 = vunpack.c.h.b16 %v3587
        %v3677 = vunpack.c.l.b16 %v3588
        %v3678 = vunpack.c.h.b16 %v3588
        %v3679 = vunpack.c.l.b16 %v3589
        %v3680 = vunpack.c.h.b16 %v3589
        %v3681 = vunpack.c.l.b16 %v3590
        %v3682 = vunpack.c.h.b16 %v3590
        %v3683 = vunpack.c.l.b16 %v3591
        %v3684 = vunpack.c.h.b16 %v3591
        %v3685 = vunpack.c.l.b16 %v3592
        %v3686 = vunpack.c.h.b16 %v3592
        %v3687 = vunpack.c.l.b16 %v3593
        %v3688 = vunpack.c.h.b16 %v3593
        %v3689 = vunpack.c.l.b16 %v3594
        %v3690 = vunpack.c.h.b16 %v3594
        %v3691 = vunpack.c.l.b16 %v3595
        %v3692 = vunpack.c.h.b16 %v3595
        %v3693 = vunpack.c.l.b16 %v3596
        %v3694 = vunpack.c.h.b16 %v3596
        %v3695 = vunpack.c.l.b16 %v3597
        %v3696 = vunpack.c.h.b16 %v3597
        %v3697 = vunpack.c.l.b16 %v3598
        %v3698 = vunpack.c.h.b16 %v3598
        %v3699 = vunpack.c.l.b16 %v3599
        %v3700 = vunpack.c.h.b16 %v3599
        %v3701 = vunpack.c.l.b16 %v3600
        %v3702 = vunpack.c.h.b16 %v3600
        %v3703 = vunpack.c.l.b16 %v3601
        %v3704 = vunpack.c.h.b16 %v3601
        %v3705 = vunpack.c.l.b16 %v3602
        %v3706 = vunpack.c.h.b16 %v3602
        %v3707 = vunpack.c.l.b16 %v3603
        %v3708 = vunpack.c.h.b16 %v3603
        %v3709 = vunpack.c.l.b16 %v3604
        %v3710 = vunpack.c.h.b16 %v3604
        %v3711 = vunpack.c.l.b16 %v3605
        %v3712 = vunpack.c.h.b16 %v3605
        %v3713 = vunpack.c.l.b16 %v3606
        %v3714 = vunpack.c.h.b16 %v3606
        %v3715 = vunpack.c.l.b16 %v3607
        %v3716 = vunpack.c.h.b16 %v3607
        %v3717 = vunpack.c.l.b16 %v3608
        %v3718 = vunpack.c.h.b16 %v3608
        %v3719 = vunpack.c.l.b16 %v3609
        %v3720 = vunpack.c.h.b16 %v3609
        %v3721 = vunpack.c.l.b16 %v3610
        %v3722 = vunpack.c.h.b16 %v3610
        %v3723 = vunpack.c.l.b16 %v3611
        %v3724 = vunpack.c.h.b16 %v3611
        %v3725 = vunpack.c.l.b16 %v3612
        %v3726 = vunpack.c.h.b16 %v3612
        %v3727 = vunpack.c.l.b16 %v3613
        %v3728 = vunpack.c.h.b16 %v3613
        %v3729 = vunpack.c.l.b16 %v3614
        %v3730 = vunpack.c.h.b16 %v3614
        %v3731 = vunpack.c.l.b16 %v3615
        %v3732 = vunpack.c.h.b16 %v3615
        %v3733 = vunpack.c.l.b16 %v3616
        %v3734 = vunpack.c.h.b16 %v3616
        %v3735 = vpack.c.b16 %v3675, %v3671
        %v3736 = vpack.c.b16 %v3676, %v3672
        %v3737 = vpack.c.b16 %v3677, %v3673
        %v3738 = vpack.c.b16 %v3678, %v3674
        %v3739 = vpack.c.b16 %v3683, %v3679
        %v3740 = vpack.c.b16 %v3684, %v3680
        %v3741 = vpack.c.b16 %v3685, %v3681
        %v3742 = vpack.c.b16 %v3686, %v3682
        %v3743 = vpack.c.b16 %v3691, %v3687
        %v3744 = vpack.c.b16 %v3692, %v3688
        %v3745 = vpack.c.b16 %v3693, %v3689
        %v3746 = vpack.c.b16 %v3694, %v3690
        %v3747 = vpack.c.b16 %v3699, %v3695
        %v3748 = vpack.c.b16 %v3700, %v3696
        %v3749 = vpack.c.b16 %v3701, %v3697
        %v3750 = vpack.c.b16 %v3702, %v3698
        %v3751 = vpack.c.b16 %v3707, %v3703
        %v3752 = vpack.c.b16 %v3708, %v3704
        %v3753 = vpack.c.b16 %v3709, %v3705
        %v3754 = vpack.c.b16 %v3710, %v3706
        %v3755 = vpack.c.b16 %v3715, %v3711
        %v3756 = vpack.c.b16 %v3716, %v3712
        %v3757 = vpack.c.b16 %v3717, %v3713
        %v3758 = vpack.c.b16 %v3718, %v3714
        %v3759 = vpack.c.b16 %v3723, %v3719
        %v3760 = vpack.c.b16 %v3724, %v3720
        %v3761 = vpack.c.b16 %v3725, %v3721
        %v3762 = vpack.c.b16 %v3726, %v3722
        %v3763 = vpack.c.b16 %v3731, %v3727
        %v3764 = vpack.c.b16 %v3732, %v3728
        %v3765 = vpack.c.b16 %v3733, %v3729
        %v3766 = vpack.c.b16 %v3734, %v3730
        %3799 = vmatprep.subr.bf16.mxu0 %v3736
        %3800 = vmatpush1.bf16.msra.mxu0 %v3735
        %3801 = vmatprep.subr.bf16.mxu0 %v3740
        %3802 = vmatpush1.bf16.msra.mxu0 %v3739
        %3803 = vmatprep.subr.bf16.mxu0 %v3744
        %3804 = vmatpush1.bf16.msra.mxu0 %v3743
        %3805 = vmatprep.subr.bf16.mxu0 %v3748
        %3806 = vmatpush1.bf16.msra.mxu0 %v3747
        %3807 = vmatprep.subr.bf16.mxu0 %v3752
        %3808 = vmatpush1.bf16.msra.mxu0 %v3751
        %3809 = vmatprep.subr.bf16.mxu0 %v3756
        %3810 = vmatpush1.bf16.msra.mxu0 %v3755
        %3811 = vmatprep.subr.bf16.mxu0 %v3760
        %3812 = vmatpush1.bf16.msra.mxu0 %v3759
        %3813 = vmatprep.subr.bf16.mxu0 %v3764
        %3814 = vmatpush1.bf16.msra.mxu0 %v3763
        %3815 = vmatprep.subr.bf16.mxu0 0
        %3816 = vmatpush1.bf16.msra.mxu0 0
        %3817 = vmatprep.subr.bf16.mxu0 0
        %3818 = vmatpush1.bf16.msra.mxu0 0
        %3819 = vmatprep.subr.bf16.mxu0 0
        %3820 = vmatpush1.bf16.msra.mxu0 0
        %3821 = vmatprep.subr.bf16.mxu0 0
        %3822 = vmatpush1.bf16.msra.mxu0 0
        %3823 = vmatprep.subr.bf16.mxu0 0
        %3824 = vmatpush1.bf16.msra.mxu0 0
        %3825 = vmatprep.subr.bf16.mxu0 0
        %3826 = vmatpush1.bf16.msra.mxu0 0
        %3827 = vmatprep.subr.bf16.mxu0 0
        %3828 = vmatpush1.bf16.msra.mxu0 0
        %3829 = vmatprep.subr.bf16.mxu0 0
        %3830 = vmatpush1.bf16.msra.mxu0 0
        %3831 = vmatprep.mubr.bf16.mxu0 0
        %3832 = vmatmul.mubr.bf16.gmra.mrb[0].mxu0 %v3584
        %v3833 = vpop.f32.mrb[0].mxu0
        %v3834 = vadd.f32 %v3622, %v3833
        %v3835 = vpop.f32.mrb[0].mxu0
        %v3836 = vadd.f32 %v3626, %v3835
        %v3837 = vpop.f32.mrb[0].mxu0
        %v3838 = vpop.f32.mrb[0].mxu0
        %3839 = vdwg.mxu0
        %3840 = vmatprep.subr.bf16.mxu0 %v3738
        %3841 = vmatpush1.bf16.msra.mxu0 %v3737
        %3842 = vmatprep.subr.bf16.mxu0 %v3742
        %3843 = vmatpush1.bf16.msra.mxu0 %v3741
        %3844 = vmatprep.subr.bf16.mxu0 %v3746
        %3845 = vmatpush1.bf16.msra.mxu0 %v3745
        %3846 = vmatprep.subr.bf16.mxu0 %v3750
        %3847 = vmatpush1.bf16.msra.mxu0 %v3749
        %3848 = vmatprep.subr.bf16.mxu0 %v3754
        %3849 = vmatpush1.bf16.msra.mxu0 %v3753
        %3850 = vmatprep.subr.bf16.mxu0 %v3758
        %3851 = vmatpush1.bf16.msra.mxu0 %v3757
        %3852 = vmatprep.subr.bf16.mxu0 %v3762
        %3853 = vmatpush1.bf16.msra.mxu0 %v3761
        %3854 = vmatprep.subr.bf16.mxu0 %v3766
        %3855 = vmatpush1.bf16.msra.mxu0 %v3765
        %3856 = vmatprep.subr.bf16.mxu0 0
        %3857 = vmatpush1.bf16.msra.mxu0 0
        %3858 = vmatprep.subr.bf16.mxu0 0
        %3859 = vmatpush1.bf16.msra.mxu0 0
        %3860 = vmatprep.subr.bf16.mxu0 0
        %3861 = vmatpush1.bf16.msra.mxu0 0
        %3862 = vmatprep.subr.bf16.mxu0 0
        %3863 = vmatpush1.bf16.msra.mxu0 0
        %3864 = vmatprep.subr.bf16.mxu0 0
        %3865 = vmatpush1.bf16.msra.mxu0 0
        %3866 = vmatprep.subr.bf16.mxu0 0
        %3867 = vmatpush1.bf16.msra.mxu0 0
        %3868 = vmatprep.subr.bf16.mxu0 0
        %3869 = vmatpush1.bf16.msra.mxu0 0
        %3870 = vmatprep.subr.bf16.mxu0 0
        %3871 = vmatpush1.bf16.msra.mxu0 0
        %3872 = vmatprep.mubr.bf16.mxu0 0
        %3873 = vmatmul.mubr.bf16.gmra.mrb[0].mxu0 %v3584
        %v3874 = vpop.f32.mrb[0].mxu0
        %v3875 = vadd.f32 %v3630, %v3874
        %v3876 = vpop.f32.mrb[0].mxu0
        %v3877 = vadd.f32 %v3634, %v3876
        %v3878 = vpop.f32.mrb[0].mxu0
        %v3879 = vpop.f32.mrb[0].mxu0
        %3880 = vdwg.mxu0
        %v3881 = vld [vmem:[%s582] sm:$0xff]
        %v3882 = vld [vmem:[%s582 + $0x8] sm:$0xff]
        %v3883 = vld [vmem:[%s582 + $0x10] sm:$0xff]
        %v3884 = vld [vmem:[%s582 + $0x18] sm:$0xff]
        %v3885 = vld [vmem:[#allocation11] sm:$0xff]
        %v3886 = vld [vmem:[#allocation11 + $0x8] sm:$0xff]
        %v3887 = vld [vmem:[#allocation11 + $0x10] sm:$0xff]
        %v3888 = vld [vmem:[#allocation11 + $0x18] sm:$0xff]
        %v3889 = vld [vmem:[#allocation11 + $0x20] sm:$0xff]
        %v3890 = vld [vmem:[#allocation11 + $0x28] sm:$0xff]
        %v3891 = vld [vmem:[#allocation11 + $0x30] sm:$0xff]
        %v3892 = vld [vmem:[#allocation11 + $0x38] sm:$0xff]
        %v3893 = vld [vmem:[#allocation11 + $0x40] sm:$0xff]
        %v3894 = vld [vmem:[#allocation11 + $0x48] sm:$0xff]
        %v3895 = vld [vmem:[#allocation11 + $0x50] sm:$0xff]
        %v3896 = vld [vmem:[#allocation11 + $0x58] sm:$0xff]
        %v3897 = vld [vmem:[#allocation11 + $0x60] sm:$0xff]
        %v3898 = vld [vmem:[#allocation11 + $0x68] sm:$0xff]
        %v3899 = vld [vmem:[#allocation11 + $0x70] sm:$0xff]
        %v3900 = vld [vmem:[#allocation11 + $0x78] sm:$0xff]
        %v3901 = vld [vmem:[#allocation11 + $0x80] sm:$0xff]
        %v3902 = vld [vmem:[#allocation11 + $0x88] sm:$0xff]
        %v3903 = vld [vmem:[#allocation11 + $0x90] sm:$0xff]
        %v3904 = vld [vmem:[#allocation11 + $0x98] sm:$0xff]
        %v3905 = vld [vmem:[#allocation11 + $0xa0] sm:$0xff]
        %v3906 = vld [vmem:[#allocation11 + $0xa8] sm:$0xff]
        %v3907 = vld [vmem:[#allocation11 + $0xb0] sm:$0xff]
        %v3908 = vld [vmem:[#allocation11 + $0xb8] sm:$0xff]
        %v3909 = vld [vmem:[#allocation11 + $0xc0] sm:$0xff]
        %v3910 = vld [vmem:[#allocation11 + $0xc8] sm:$0xff]
        %v3911 = vld [vmem:[#allocation11 + $0xd0] sm:$0xff]
        %v3912 = vld [vmem:[#allocation11 + $0xd8] sm:$0xff]
        %v3913 = vld [vmem:[#allocation11 + $0xe0] sm:$0xff]
        %v3914 = vld [vmem:[#allocation11 + $0xe8] sm:$0xff]
        %v3915 = vld [vmem:[#allocation11 + $0xf0] sm:$0xff]
        %v3916 = vld [vmem:[#allocation11 + $0xf8] sm:$0xff]
        %v3917 = vld [vmem:[#allocation11 + $0x100] sm:$0xff]
        %v3918 = vld [vmem:[#allocation11 + $0x108] sm:$0xff]
        %v3919 = vld [vmem:[#allocation11 + $0x110] sm:$0xff]
        %v3920 = vld [vmem:[#allocation11 + $0x118] sm:$0xff]
        %v3921 = vld [vmem:[#allocation11 + $0x120] sm:$0xff]
        %v3922 = vld [vmem:[#allocation11 + $0x128] sm:$0xff]
        %v3923 = vld [vmem:[#allocation11 + $0x130] sm:$0xff]
        %v3924 = vld [vmem:[#allocation11 + $0x138] sm:$0xff]
        %v3925 = vld [vmem:[#allocation11 + $0x140] sm:$0xff]
        %v3926 = vld [vmem:[#allocation11 + $0x148] sm:$0xff]
        %v3927 = vld [vmem:[#allocation11 + $0x150] sm:$0xff]
        %v3928 = vld [vmem:[#allocation11 + $0x158] sm:$0xff]
        %v3929 = vld [vmem:[#allocation11 + $0x160] sm:$0xff]
        %v3930 = vld [vmem:[#allocation11 + $0x168] sm:$0xff]
        %v3931 = vld [vmem:[#allocation11 + $0x170] sm:$0xff]
        %v3932 = vld [vmem:[#allocation11 + $0x178] sm:$0xff]
        %v3933 = vld [vmem:[#allocation11 + $0x180] sm:$0xff]
        %v3934 = vld [vmem:[#allocation11 + $0x188] sm:$0xff]
        %v3935 = vld [vmem:[#allocation11 + $0x190] sm:$0xff]
        %v3936 = vld [vmem:[#allocation11 + $0x198] sm:$0xff]
        %v3937 = vld [vmem:[#allocation11 + $0x1a0] sm:$0xff]
        %v3938 = vld [vmem:[#allocation11 + $0x1a8] sm:$0xff]
        %v3939 = vld [vmem:[#allocation11 + $0x1b0] sm:$0xff]
        %v3940 = vld [vmem:[#allocation11 + $0x1b8] sm:$0xff]
        %v3941 = vld [vmem:[#allocation11 + $0x1c0] sm:$0xff]
        %v3942 = vld [vmem:[#allocation11 + $0x1c8] sm:$0xff]
        %v3943 = vld [vmem:[#allocation11 + $0x1d0] sm:$0xff]
        %v3944 = vld [vmem:[#allocation11 + $0x1d8] sm:$0xff]
        %v3945 = vld [vmem:[#allocation11 + $0x1e0] sm:$0xff]
        %v3946 = vld [vmem:[#allocation11 + $0x1e8] sm:$0xff]
        %v3947 = vld [vmem:[#allocation11 + $0x1f0] sm:$0xff]
        %v3948 = vld [vmem:[#allocation11 + $0x1f8] sm:$0xff]
        %v3949 = vld [vmem:[#allocation11 + $0x200] sm:$0xff]
        %v3950 = vld [vmem:[#allocation11 + $0x208] sm:$0xff]
        %v3951 = vld [vmem:[#allocation11 + $0x210] sm:$0xff]
        %v3952 = vld [vmem:[#allocation11 + $0x218] sm:$0xff]
        %v3953 = vld [vmem:[#allocation11 + $0x220] sm:$0xff]
        %v3954 = vld [vmem:[#allocation11 + $0x228] sm:$0xff]
        %v3955 = vld [vmem:[#allocation11 + $0x230] sm:$0xff]
        %v3956 = vld [vmem:[#allocation11 + $0x238] sm:$0xff]
        %v3957 = vld [vmem:[#allocation11 + $0x240] sm:$0xff]
        %v3958 = vld [vmem:[#allocation11 + $0x248] sm:$0xff]
        %v3959 = vld [vmem:[#allocation11 + $0x250] sm:$0xff]
        %v3960 = vld [vmem:[#allocation11 + $0x258] sm:$0xff]
        %v3961 = vld [vmem:[#allocation11 + $0x260] sm:$0xff]
        %v3962 = vld [vmem:[#allocation11 + $0x268] sm:$0xff]
        %v3963 = vld [vmem:[#allocation11 + $0x270] sm:$0xff]
        %v3964 = vld [vmem:[#allocation11 + $0x278] sm:$0xff]
        %v3965 = vld [vmem:[#allocation11 + $0x280] sm:$0xff]
        %v3966 = vld [vmem:[#allocation11 + $0x288] sm:$0xff]
        %v3967 = vld [vmem:[#allocation11 + $0x290] sm:$0xff]
        %v3968 = vld [vmem:[#allocation11 + $0x298] sm:$0xff]
        %v3969 = vld [vmem:[#allocation11 + $0x2a0] sm:$0xff]
        %v3970 = vld [vmem:[#allocation11 + $0x2a8] sm:$0xff]
        %v3971 = vld [vmem:[#allocation11 + $0x2b0] sm:$0xff]
        %v3972 = vld [vmem:[#allocation11 + $0x2b8] sm:$0xff]
        %v3973 = vld [vmem:[#allocation11 + $0x2c0] sm:$0xff]
        %v3974 = vld [vmem:[#allocation11 + $0x2c8] sm:$0xff]
        %v3975 = vld [vmem:[#allocation11 + $0x2d0] sm:$0xff]
        %v3976 = vld [vmem:[#allocation11 + $0x2d8] sm:$0xff]
        %v3977 = vld [vmem:[#allocation11 + $0x2e0] sm:$0xff]
        %v3978 = vld [vmem:[#allocation11 + $0x2e8] sm:$0xff]
        %v3979 = vld [vmem:[#allocation11 + $0x2f0] sm:$0xff]
        %v3980 = vld [vmem:[#allocation11 + $0x2f8] sm:$0xff]
        %v3981 = vld [vmem:[#allocation11 + $0x300] sm:$0xff]
        %v3982 = vld [vmem:[#allocation11 + $0x308] sm:$0xff]
        %v3983 = vld [vmem:[#allocation11 + $0x310] sm:$0xff]
        %v3984 = vld [vmem:[#allocation11 + $0x318] sm:$0xff]
        %v3985 = vld [vmem:[#allocation11 + $0x320] sm:$0xff]
        %v3986 = vld [vmem:[#allocation11 + $0x328] sm:$0xff]
        %v3987 = vld [vmem:[#allocation11 + $0x330] sm:$0xff]
        %v3988 = vld [vmem:[#allocation11 + $0x338] sm:$0xff]
        %v3989 = vld [vmem:[#allocation11 + $0x340] sm:$0xff]
        %v3990 = vld [vmem:[#allocation11 + $0x348] sm:$0xff]
        %v3991 = vld [vmem:[#allocation11 + $0x350] sm:$0xff]
        %v3992 = vld [vmem:[#allocation11 + $0x358] sm:$0xff]
        %v3993 = vld [vmem:[#allocation11 + $0x360] sm:$0xff]
        %v3994 = vld [vmem:[#allocation11 + $0x368] sm:$0xff]
        %v3995 = vld [vmem:[#allocation11 + $0x370] sm:$0xff]
        %v3996 = vld [vmem:[#allocation11 + $0x378] sm:$0xff]
        %v3997 = vld [vmem:[#allocation11 + $0x380] sm:$0xff]
        %v3998 = vld [vmem:[#allocation11 + $0x388] sm:$0xff]
        %v3999 = vld [vmem:[#allocation11 + $0x390] sm:$0xff]
        %v4000 = vld [vmem:[#allocation11 + $0x398] sm:$0xff]
        %v4001 = vld [vmem:[#allocation11 + $0x3a0] sm:$0xff]
        %v4002 = vld [vmem:[#allocation11 + $0x3a8] sm:$0xff]
        %v4003 = vld [vmem:[#allocation11 + $0x3b0] sm:$0xff]
        %v4004 = vld [vmem:[#allocation11 + $0x3b8] sm:$0xff]
        %v4005 = vld [vmem:[#allocation11 + $0x3c0] sm:$0xff]
        %v4006 = vld [vmem:[#allocation11 + $0x3c8] sm:$0xff]
        %v4007 = vld [vmem:[#allocation11 + $0x3d0] sm:$0xff]
        %v4008 = vld [vmem:[#allocation11 + $0x3d8] sm:$0xff]
        %v4009 = vld [vmem:[#allocation11 + $0x3e0] sm:$0xff]
        %v4010 = vld [vmem:[#allocation11 + $0x3e8] sm:$0xff]
        %v4011 = vld [vmem:[#allocation11 + $0x3f0] sm:$0xff]
        %v4012 = vld [vmem:[#allocation11 + $0x3f8] sm:$0xff]
        %v4013 = vld [vmem:[#allocation11 + $0x400] sm:$0xff]
        %v4014 = vld [vmem:[#allocation11 + $0x408] sm:$0xff]
        %v4015 = vld [vmem:[#allocation11 + $0x410] sm:$0xff]
        %v4016 = vld [vmem:[#allocation11 + $0x418] sm:$0xff]
        %v4017 = vld [vmem:[#allocation11 + $0x420] sm:$0xff]
        %v4018 = vld [vmem:[#allocation11 + $0x428] sm:$0xff]
        %v4019 = vld [vmem:[#allocation11 + $0x430] sm:$0xff]
        %v4020 = vld [vmem:[#allocation11 + $0x438] sm:$0xff]
        %v4021 = vld [vmem:[#allocation11 + $0x440] sm:$0xff]
        %v4022 = vld [vmem:[#allocation11 + $0x448] sm:$0xff]
        %v4023 = vld [vmem:[#allocation11 + $0x450] sm:$0xff]
        %v4024 = vld [vmem:[#allocation11 + $0x458] sm:$0xff]
        %v4025 = vld [vmem:[#allocation11 + $0x460] sm:$0xff]
        %v4026 = vld [vmem:[#allocation11 + $0x468] sm:$0xff]
        %v4027 = vld [vmem:[#allocation11 + $0x470] sm:$0xff]
        %v4028 = vld [vmem:[#allocation11 + $0x478] sm:$0xff]
        %v4029 = vld [vmem:[#allocation11 + $0x480] sm:$0xff]
        %v4030 = vld [vmem:[#allocation11 + $0x488] sm:$0xff]
        %v4031 = vld [vmem:[#allocation11 + $0x490] sm:$0xff]
        %v4032 = vld [vmem:[#allocation11 + $0x498] sm:$0xff]
        %v4033 = vld [vmem:[#allocation11 + $0x4a0] sm:$0xff]
        %v4034 = vld [vmem:[#allocation11 + $0x4a8] sm:$0xff]
        %v4035 = vld [vmem:[#allocation11 + $0x4b0] sm:$0xff]
        %v4036 = vld [vmem:[#allocation11 + $0x4b8] sm:$0xff]
        %v4037 = vld [vmem:[#allocation11 + $0x4c0] sm:$0xff]
        %v4038 = vld [vmem:[#allocation11 + $0x4c8] sm:$0xff]
        %v4039 = vld [vmem:[#allocation11 + $0x4d0] sm:$0xff]
        %v4040 = vld [vmem:[#allocation11 + $0x4d8] sm:$0xff]
        %v4041 = vld [vmem:[#allocation11 + $0x4e0] sm:$0xff]
        %v4042 = vld [vmem:[#allocation11 + $0x4e8] sm:$0xff]
        %v4043 = vld [vmem:[#allocation11 + $0x4f0] sm:$0xff]
        %v4044 = vld [vmem:[#allocation11 + $0x4f8] sm:$0xff]
        %v4045 = vld [vmem:[#allocation11 + $0x500] sm:$0xff]
        %v4046 = vld [vmem:[#allocation11 + $0x508] sm:$0xff]
        %v4047 = vld [vmem:[#allocation11 + $0x510] sm:$0xff]
        %v4048 = vld [vmem:[#allocation11 + $0x518] sm:$0xff]
        %v4049 = vld [vmem:[#allocation11 + $0x520] sm:$0xff]
        %v4050 = vld [vmem:[#allocation11 + $0x528] sm:$0xff]
        %v4051 = vld [vmem:[#allocation11 + $0x530] sm:$0xff]
        %v4052 = vld [vmem:[#allocation11 + $0x538] sm:$0xff]
        %v4053 = vld [vmem:[#allocation11 + $0x540] sm:$0xff]
        %v4054 = vld [vmem:[#allocation11 + $0x548] sm:$0xff]
        %v4055 = vld [vmem:[#allocation11 + $0x550] sm:$0xff]
        %v4056 = vld [vmem:[#allocation11 + $0x558] sm:$0xff]
        %v4057 = vld [vmem:[#allocation11 + $0x560] sm:$0xff]
        %v4058 = vld [vmem:[#allocation11 + $0x568] sm:$0xff]
        %v4059 = vld [vmem:[#allocation11 + $0x570] sm:$0xff]
        %v4060 = vld [vmem:[#allocation11 + $0x578] sm:$0xff]
        %v4061 = vld [vmem:[#allocation11 + $0x580] sm:$0xff]
        %v4062 = vld [vmem:[#allocation11 + $0x588] sm:$0xff]
        %v4063 = vld [vmem:[#allocation11 + $0x590] sm:$0xff]
        %v4064 = vld [vmem:[#allocation11 + $0x598] sm:$0xff]
        %v4065 = vld [vmem:[#allocation11 + $0x5a0] sm:$0xff]
        %v4066 = vld [vmem:[#allocation11 + $0x5a8] sm:$0xff]
        %v4067 = vld [vmem:[#allocation11 + $0x5b0] sm:$0xff]
        %v4068 = vld [vmem:[#allocation11 + $0x5b8] sm:$0xff]
        %v4069 = vld [vmem:[#allocation11 + $0x5c0] sm:$0xff]
        %v4070 = vld [vmem:[#allocation11 + $0x5c8] sm:$0xff]
        %v4071 = vld [vmem:[#allocation11 + $0x5d0] sm:$0xff]
        %v4072 = vld [vmem:[#allocation11 + $0x5d8] sm:$0xff]
        %v4073 = vld [vmem:[#allocation11 + $0x5e0] sm:$0xff]
        %v4074 = vld [vmem:[#allocation11 + $0x5e8] sm:$0xff]
        %v4075 = vld [vmem:[#allocation11 + $0x5f0] sm:$0xff]
        %v4076 = vld [vmem:[#allocation11 + $0x5f8] sm:$0xff]
        %v4077 = vld [vmem:[#allocation11 + $0x600] sm:$0xff]
        %v4078 = vld [vmem:[#allocation11 + $0x608] sm:$0xff]
        %v4079 = vld [vmem:[#allocation11 + $0x610] sm:$0xff]
        %v4080 = vld [vmem:[#allocation11 + $0x618] sm:$0xff]
        %v4081 = vld [vmem:[#allocation11 + $0x620] sm:$0xff]
        %v4082 = vld [vmem:[#allocation11 + $0x628] sm:$0xff]
        %v4083 = vld [vmem:[#allocation11 + $0x630] sm:$0xff]
        %v4084 = vld [vmem:[#allocation11 + $0x638] sm:$0xff]
        %v4085 = vld [vmem:[#allocation11 + $0x640] sm:$0xff]
        %v4086 = vld [vmem:[#allocation11 + $0x648] sm:$0xff]
        %v4087 = vld [vmem:[#allocation11 + $0x650] sm:$0xff]
        %v4088 = vld [vmem:[#allocation11 + $0x658] sm:$0xff]
        %v4089 = vld [vmem:[#allocation11 + $0x660] sm:$0xff]
        %v4090 = vld [vmem:[#allocation11 + $0x668] sm:$0xff]
        %v4091 = vld [vmem:[#allocation11 + $0x670] sm:$0xff]
        %v4092 = vld [vmem:[#allocation11 + $0x678] sm:$0xff]
        %v4093 = vld [vmem:[#allocation11 + $0x680] sm:$0xff]
        %v4094 = vld [vmem:[#allocation11 + $0x688] sm:$0xff]
        %v4095 = vld [vmem:[#allocation11 + $0x690] sm:$0xff]
        %v4096 = vld [vmem:[#allocation11 + $0x698] sm:$0xff]
        %v4097 = vld [vmem:[#allocation11 + $0x6a0] sm:$0xff]
        %v4098 = vld [vmem:[#allocation11 + $0x6a8] sm:$0xff]
        %v4099 = vld [vmem:[#allocation11 + $0x6b0] sm:$0xff]
        %v4100 = vld [vmem:[#allocation11 + $0x6b8] sm:$0xff]
        %v4101 = vld [vmem:[#allocation11 + $0x6c0] sm:$0xff]
        %v4102 = vld [vmem:[#allocation11 + $0x6c8] sm:$0xff]
        %v4103 = vld [vmem:[#allocation11 + $0x6d0] sm:$0xff]
        %v4104 = vld [vmem:[#allocation11 + $0x6d8] sm:$0xff]
        %v4105 = vld [vmem:[#allocation11 + $0x6e0] sm:$0xff]
        %v4106 = vld [vmem:[#allocation11 + $0x6e8] sm:$0xff]
        %v4107 = vld [vmem:[#allocation11 + $0x6f0] sm:$0xff]
        %v4108 = vld [vmem:[#allocation11 + $0x6f8] sm:$0xff]
        %v4109 = vld [vmem:[#allocation11 + $0x700] sm:$0xff]
        %v4110 = vld [vmem:[#allocation11 + $0x708] sm:$0xff]
        %v4111 = vld [vmem:[#allocation11 + $0x710] sm:$0xff]
        %v4112 = vld [vmem:[#allocation11 + $0x718] sm:$0xff]
        %v4113 = vld [vmem:[#allocation11 + $0x720] sm:$0xff]
        %v4114 = vld [vmem:[#allocation11 + $0x728] sm:$0xff]
        %v4115 = vld [vmem:[#allocation11 + $0x730] sm:$0xff]
        %v4116 = vld [vmem:[#allocation11 + $0x738] sm:$0xff]
        %v4117 = vld [vmem:[#allocation11 + $0x740] sm:$0xff]
        %v4118 = vld [vmem:[#allocation11 + $0x748] sm:$0xff]
        %v4119 = vld [vmem:[#allocation11 + $0x750] sm:$0xff]
        %v4120 = vld [vmem:[#allocation11 + $0x758] sm:$0xff]
        %v4121 = vld [vmem:[#allocation11 + $0x760] sm:$0xff]
        %v4122 = vld [vmem:[#allocation11 + $0x768] sm:$0xff]
        %v4123 = vld [vmem:[#allocation11 + $0x770] sm:$0xff]
        %v4124 = vld [vmem:[#allocation11 + $0x778] sm:$0xff]
        %v4125 = vld [vmem:[#allocation11 + $0x780] sm:$0xff]
        %v4126 = vld [vmem:[#allocation11 + $0x788] sm:$0xff]
        %v4127 = vld [vmem:[#allocation11 + $0x790] sm:$0xff]
        %v4128 = vld [vmem:[#allocation11 + $0x798] sm:$0xff]
        %v4129 = vld [vmem:[#allocation11 + $0x7a0] sm:$0xff]
        %v4130 = vld [vmem:[#allocation11 + $0x7a8] sm:$0xff]
        %v4131 = vld [vmem:[#allocation11 + $0x7b0] sm:$0xff]
        %v4132 = vld [vmem:[#allocation11 + $0x7b8] sm:$0xff]
        %v4133 = vld [vmem:[#allocation11 + $0x7c0] sm:$0xff]
        %v4134 = vld [vmem:[#allocation11 + $0x7c8] sm:$0xff]
        %v4135 = vld [vmem:[#allocation11 + $0x7d0] sm:$0xff]
        %v4136 = vld [vmem:[#allocation11 + $0x7d8] sm:$0xff]
        %v4137 = vld [vmem:[#allocation11 + $0x7e0] sm:$0xff]
        %v4138 = vld [vmem:[#allocation11 + $0x7e8] sm:$0xff]
        %v4139 = vld [vmem:[#allocation11 + $0x7f0] sm:$0xff]
        %v4140 = vld [vmem:[#allocation11 + $0x7f8] sm:$0xff]
        %v4145 = vunpack.c.l.b16 %v3881
        %v4146 = vunpack.c.h.b16 %v3881
        %v4147 = vunpack.c.l.b16 %v3882
        %v4148 = vunpack.c.h.b16 %v3882
        %v4149 = vunpack.c.l.b16 %v3883
        %v4150 = vunpack.c.h.b16 %v3883
        %v4151 = vunpack.c.l.b16 %v3884
        %v4152 = vunpack.c.h.b16 %v3884
        %v4153 = vpack.c.b16 %v4145, %v4145
        %v4154 = vpack.c.b16 %v4146, %v4146
        %v4155 = vpack.c.b16 %v4147, %v4147
        %v4156 = vpack.c.b16 %v4148, %v4148
        %v4157 = vpack.c.b16 %v4149, %v4149
        %v4158 = vpack.c.b16 %v4150, %v4150
        %v4159 = vpack.c.b16 %v4151, %v4151
        %v4160 = vpack.c.b16 %v4152, %v4152
        %v4425 = vunpack.c.l.b16 %v3885
        %v4426 = vunpack.c.h.b16 %v3885
        %v4427 = vunpack.c.l.b16 %v3886
        %v4428 = vunpack.c.h.b16 %v3886
        %v4429 = vunpack.c.l.b16 %v3887
        %v4430 = vunpack.c.h.b16 %v3887
        %v4431 = vunpack.c.l.b16 %v3888
        %v4432 = vunpack.c.h.b16 %v3888
        %v4433 = vunpack.c.l.b16 %v3889
        %v4434 = vunpack.c.h.b16 %v3889
        %v4435 = vunpack.c.l.b16 %v3890
        %v4436 = vunpack.c.h.b16 %v3890
        %v4437 = vunpack.c.l.b16 %v3891
        %v4438 = vunpack.c.h.b16 %v3891
        %v4439 = vunpack.c.l.b16 %v3892
        %v4440 = vunpack.c.h.b16 %v3892
        %v4441 = vunpack.c.l.b16 %v3893
        %v4442 = vunpack.c.h.b16 %v3893
        %v4443 = vunpack.c.l.b16 %v3894
        %v4444 = vunpack.c.h.b16 %v3894
        %v4445 = vunpack.c.l.b16 %v3895
        %v4446 = vunpack.c.h.b16 %v3895
        %v4447 = vunpack.c.l.b16 %v3896
        %v4448 = vunpack.c.h.b16 %v3896
        %v4449 = vunpack.c.l.b16 %v3897
        %v4450 = vunpack.c.h.b16 %v3897
        %v4451 = vunpack.c.l.b16 %v3898
        %v4452 = vunpack.c.h.b16 %v3898
        %v4453 = vunpack.c.l.b16 %v3899
        %v4454 = vunpack.c.h.b16 %v3899
        %v4455 = vunpack.c.l.b16 %v3900
        %v4456 = vunpack.c.h.b16 %v3900
        %v4457 = vunpack.c.l.b16 %v3901
        %v4458 = vunpack.c.h.b16 %v3901
        %v4459 = vunpack.c.l.b16 %v3902
        %v4460 = vunpack.c.h.b16 %v3902
        %v4461 = vunpack.c.l.b16 %v3903
        %v4462 = vunpack.c.h.b16 %v3903
        %v4463 = vunpack.c.l.b16 %v3904
        %v4464 = vunpack.c.h.b16 %v3904
        %v4465 = vunpack.c.l.b16 %v3905
        %v4466 = vunpack.c.h.b16 %v3905
        %v4467 = vunpack.c.l.b16 %v3906
        %v4468 = vunpack.c.h.b16 %v3906
        %v4469 = vunpack.c.l.b16 %v3907
        %v4470 = vunpack.c.h.b16 %v3907
        %v4471 = vunpack.c.l.b16 %v3908
        %v4472 = vunpack.c.h.b16 %v3908
        %v4473 = vunpack.c.l.b16 %v3909
        %v4474 = vunpack.c.h.b16 %v3909
        %v4475 = vunpack.c.l.b16 %v3910
        %v4476 = vunpack.c.h.b16 %v3910
        %v4477 = vunpack.c.l.b16 %v3911
        %v4478 = vunpack.c.h.b16 %v3911
        %v4479 = vunpack.c.l.b16 %v3912
        %v4480 = vunpack.c.h.b16 %v3912
        %v4481 = vunpack.c.l.b16 %v3913
        %v4482 = vunpack.c.h.b16 %v3913
        %v4483 = vunpack.c.l.b16 %v3914
        %v4484 = vunpack.c.h.b16 %v3914
        %v4485 = vunpack.c.l.b16 %v3915
        %v4486 = vunpack.c.h.b16 %v3915
        %v4487 = vunpack.c.l.b16 %v3916
        %v4488 = vunpack.c.h.b16 %v3916
        %v4489 = vunpack.c.l.b16 %v3917
        %v4490 = vunpack.c.h.b16 %v3917
        %v4491 = vunpack.c.l.b16 %v3918
        %v4492 = vunpack.c.h.b16 %v3918
        %v4493 = vunpack.c.l.b16 %v3919
        %v4494 = vunpack.c.h.b16 %v3919
        %v4495 = vunpack.c.l.b16 %v3920
        %v4496 = vunpack.c.h.b16 %v3920
        %v4497 = vunpack.c.l.b16 %v3921
        %v4498 = vunpack.c.h.b16 %v3921
        %v4499 = vunpack.c.l.b16 %v3922
        %v4500 = vunpack.c.h.b16 %v3922
        %v4501 = vunpack.c.l.b16 %v3923
        %v4502 = vunpack.c.h.b16 %v3923
        %v4503 = vunpack.c.l.b16 %v3924
        %v4504 = vunpack.c.h.b16 %v3924
        %v4505 = vunpack.c.l.b16 %v3925
        %v4506 = vunpack.c.h.b16 %v3925
        %v4507 = vunpack.c.l.b16 %v3926
        %v4508 = vunpack.c.h.b16 %v3926
        %v4509 = vunpack.c.l.b16 %v3927
        %v4510 = vunpack.c.h.b16 %v3927
        %v4511 = vunpack.c.l.b16 %v3928
        %v4512 = vunpack.c.h.b16 %v3928
        %v4513 = vunpack.c.l.b16 %v3929
        %v4514 = vunpack.c.h.b16 %v3929
        %v4515 = vunpack.c.l.b16 %v3930
        %v4516 = vunpack.c.h.b16 %v3930
        %v4517 = vunpack.c.l.b16 %v3931
        %v4518 = vunpack.c.h.b16 %v3931
        %v4519 = vunpack.c.l.b16 %v3932
        %v4520 = vunpack.c.h.b16 %v3932
        %v4521 = vunpack.c.l.b16 %v3933
        %v4522 = vunpack.c.h.b16 %v3933
        %v4523 = vunpack.c.l.b16 %v3934
        %v4524 = vunpack.c.h.b16 %v3934
        %v4525 = vunpack.c.l.b16 %v3935
        %v4526 = vunpack.c.h.b16 %v3935
        %v4527 = vunpack.c.l.b16 %v3936
        %v4528 = vunpack.c.h.b16 %v3936
        %v4529 = vunpack.c.l.b16 %v3937
        %v4530 = vunpack.c.h.b16 %v3937
        %v4531 = vunpack.c.l.b16 %v3938
        %v4532 = vunpack.c.h.b16 %v3938
        %v4533 = vunpack.c.l.b16 %v3939
        %v4534 = vunpack.c.h.b16 %v3939
        %v4535 = vunpack.c.l.b16 %v3940
        %v4536 = vunpack.c.h.b16 %v3940
        %v4537 = vunpack.c.l.b16 %v3941
        %v4538 = vunpack.c.h.b16 %v3941
        %v4539 = vunpack.c.l.b16 %v3942
        %v4540 = vunpack.c.h.b16 %v3942
        %v4541 = vunpack.c.l.b16 %v3943
        %v4542 = vunpack.c.h.b16 %v3943
        %v4543 = vunpack.c.l.b16 %v3944
        %v4544 = vunpack.c.h.b16 %v3944
        %v4545 = vunpack.c.l.b16 %v3945
        %v4546 = vunpack.c.h.b16 %v3945
        %v4547 = vunpack.c.l.b16 %v3946
        %v4548 = vunpack.c.h.b16 %v3946
        %v4549 = vunpack.c.l.b16 %v3947
        %v4550 = vunpack.c.h.b16 %v3947
        %v4551 = vunpack.c.l.b16 %v3948
        %v4552 = vunpack.c.h.b16 %v3948
        %v4553 = vunpack.c.l.b16 %v3949
        %v4554 = vunpack.c.h.b16 %v3949
        %v4555 = vunpack.c.l.b16 %v3950
        %v4556 = vunpack.c.h.b16 %v3950
        %v4557 = vunpack.c.l.b16 %v3951
        %v4558 = vunpack.c.h.b16 %v3951
        %v4559 = vunpack.c.l.b16 %v3952
        %v4560 = vunpack.c.h.b16 %v3952
        %v4561 = vunpack.c.l.b16 %v3953
        %v4562 = vunpack.c.h.b16 %v3953
        %v4563 = vunpack.c.l.b16 %v3954
        %v4564 = vunpack.c.h.b16 %v3954
        %v4565 = vunpack.c.l.b16 %v3955
        %v4566 = vunpack.c.h.b16 %v3955
        %v4567 = vunpack.c.l.b16 %v3956
        %v4568 = vunpack.c.h.b16 %v3956
        %v4569 = vunpack.c.l.b16 %v3957
        %v4570 = vunpack.c.h.b16 %v3957
        %v4571 = vunpack.c.l.b16 %v3958
        %v4572 = vunpack.c.h.b16 %v3958
        %v4573 = vunpack.c.l.b16 %v3959
        %v4574 = vunpack.c.h.b16 %v3959
        %v4575 = vunpack.c.l.b16 %v3960
        %v4576 = vunpack.c.h.b16 %v3960
        %v4577 = vunpack.c.l.b16 %v3961
        %v4578 = vunpack.c.h.b16 %v3961
        %v4579 = vunpack.c.l.b16 %v3962
        %v4580 = vunpack.c.h.b16 %v3962
        %v4581 = vunpack.c.l.b16 %v3963
        %v4582 = vunpack.c.h.b16 %v3963
        %v4583 = vunpack.c.l.b16 %v3964
        %v4584 = vunpack.c.h.b16 %v3964
        %v4585 = vunpack.c.l.b16 %v3965
        %v4586 = vunpack.c.h.b16 %v3965
        %v4587 = vunpack.c.l.b16 %v3966
        %v4588 = vunpack.c.h.b16 %v3966
        %v4589 = vunpack.c.l.b16 %v3967
        %v4590 = vunpack.c.h.b16 %v3967
        %v4591 = vunpack.c.l.b16 %v3968
        %v4592 = vunpack.c.h.b16 %v3968
        %v4593 = vunpack.c.l.b16 %v3969
        %v4594 = vunpack.c.h.b16 %v3969
        %v4595 = vunpack.c.l.b16 %v3970
        %v4596 = vunpack.c.h.b16 %v3970
        %v4597 = vunpack.c.l.b16 %v3971
        %v4598 = vunpack.c.h.b16 %v3971
        %v4599 = vunpack.c.l.b16 %v3972
        %v4600 = vunpack.c.h.b16 %v3972
        %v4601 = vunpack.c.l.b16 %v3973
        %v4602 = vunpack.c.h.b16 %v3973
        %v4603 = vunpack.c.l.b16 %v3974
        %v4604 = vunpack.c.h.b16 %v3974
        %v4605 = vunpack.c.l.b16 %v3975
        %v4606 = vunpack.c.h.b16 %v3975
        %v4607 = vunpack.c.l.b16 %v3976
        %v4608 = vunpack.c.h.b16 %v3976
        %v4609 = vunpack.c.l.b16 %v3977
        %v4610 = vunpack.c.h.b16 %v3977
        %v4611 = vunpack.c.l.b16 %v3978
        %v4612 = vunpack.c.h.b16 %v3978
        %v4613 = vunpack.c.l.b16 %v3979
        %v4614 = vunpack.c.h.b16 %v3979
        %v4615 = vunpack.c.l.b16 %v3980
        %v4616 = vunpack.c.h.b16 %v3980
        %v4617 = vunpack.c.l.b16 %v3981
        %v4618 = vunpack.c.h.b16 %v3981
        %v4619 = vunpack.c.l.b16 %v3982
        %v4620 = vunpack.c.h.b16 %v3982
        %v4621 = vunpack.c.l.b16 %v3983
        %v4622 = vunpack.c.h.b16 %v3983
        %v4623 = vunpack.c.l.b16 %v3984
        %v4624 = vunpack.c.h.b16 %v3984
        %v4625 = vunpack.c.l.b16 %v3985
        %v4626 = vunpack.c.h.b16 %v3985
        %v4627 = vunpack.c.l.b16 %v3986
        %v4628 = vunpack.c.h.b16 %v3986
        %v4629 = vunpack.c.l.b16 %v3987
        %v4630 = vunpack.c.h.b16 %v3987
        %v4631 = vunpack.c.l.b16 %v3988
        %v4632 = vunpack.c.h.b16 %v3988
        %v4633 = vunpack.c.l.b16 %v3989
        %v4634 = vunpack.c.h.b16 %v3989
        %v4635 = vunpack.c.l.b16 %v3990
        %v4636 = vunpack.c.h.b16 %v3990
        %v4637 = vunpack.c.l.b16 %v3991
        %v4638 = vunpack.c.h.b16 %v3991
        %v4639 = vunpack.c.l.b16 %v3992
        %v4640 = vunpack.c.h.b16 %v3992
        %v4641 = vunpack.c.l.b16 %v3993
        %v4642 = vunpack.c.h.b16 %v3993
        %v4643 = vunpack.c.l.b16 %v3994
        %v4644 = vunpack.c.h.b16 %v3994
        %v4645 = vunpack.c.l.b16 %v3995
        %v4646 = vunpack.c.h.b16 %v3995
        %v4647 = vunpack.c.l.b16 %v3996
        %v4648 = vunpack.c.h.b16 %v3996
        %v4649 = vunpack.c.l.b16 %v3997
        %v4650 = vunpack.c.h.b16 %v3997
        %v4651 = vunpack.c.l.b16 %v3998
        %v4652 = vunpack.c.h.b16 %v3998
        %v4653 = vunpack.c.l.b16 %v3999
        %v4654 = vunpack.c.h.b16 %v3999
        %v4655 = vunpack.c.l.b16 %v4000
        %v4656 = vunpack.c.h.b16 %v4000
        %v4657 = vunpack.c.l.b16 %v4001
        %v4658 = vunpack.c.h.b16 %v4001
        %v4659 = vunpack.c.l.b16 %v4002
        %v4660 = vunpack.c.h.b16 %v4002
        %v4661 = vunpack.c.l.b16 %v4003
        %v4662 = vunpack.c.h.b16 %v4003
        %v4663 = vunpack.c.l.b16 %v4004
        %v4664 = vunpack.c.h.b16 %v4004
        %v4665 = vunpack.c.l.b16 %v4005
        %v4666 = vunpack.c.h.b16 %v4005
        %v4667 = vunpack.c.l.b16 %v4006
        %v4668 = vunpack.c.h.b16 %v4006
        %v4669 = vunpack.c.l.b16 %v4007
        %v4670 = vunpack.c.h.b16 %v4007
        %v4671 = vunpack.c.l.b16 %v4008
        %v4672 = vunpack.c.h.b16 %v4008
        %v4673 = vunpack.c.l.b16 %v4009
        %v4674 = vunpack.c.h.b16 %v4009
        %v4675 = vunpack.c.l.b16 %v4010
        %v4676 = vunpack.c.h.b16 %v4010
        %v4677 = vunpack.c.l.b16 %v4011
        %v4678 = vunpack.c.h.b16 %v4011
        %v4679 = vunpack.c.l.b16 %v4012
        %v4680 = vunpack.c.h.b16 %v4012
        %v4681 = vunpack.c.l.b16 %v4013
        %v4682 = vunpack.c.h.b16 %v4013
        %v4683 = vunpack.c.l.b16 %v4014
        %v4684 = vunpack.c.h.b16 %v4014
        %v4685 = vunpack.c.l.b16 %v4015
        %v4686 = vunpack.c.h.b16 %v4015
        %v4687 = vunpack.c.l.b16 %v4016
        %v4688 = vunpack.c.h.b16 %v4016
        %v4689 = vunpack.c.l.b16 %v4017
        %v4690 = vunpack.c.h.b16 %v4017
        %v4691 = vunpack.c.l.b16 %v4018
        %v4692 = vunpack.c.h.b16 %v4018
        %v4693 = vunpack.c.l.b16 %v4019
        %v4694 = vunpack.c.h.b16 %v4019
        %v4695 = vunpack.c.l.b16 %v4020
        %v4696 = vunpack.c.h.b16 %v4020
        %v4697 = vunpack.c.l.b16 %v4021
        %v4698 = vunpack.c.h.b16 %v4021
        %v4699 = vunpack.c.l.b16 %v4022
        %v4700 = vunpack.c.h.b16 %v4022
        %v4701 = vunpack.c.l.b16 %v4023
        %v4702 = vunpack.c.h.b16 %v4023
        %v4703 = vunpack.c.l.b16 %v4024
        %v4704 = vunpack.c.h.b16 %v4024
        %v4705 = vunpack.c.l.b16 %v4025
        %v4706 = vunpack.c.h.b16 %v4025
        %v4707 = vunpack.c.l.b16 %v4026
        %v4708 = vunpack.c.h.b16 %v4026
        %v4709 = vunpack.c.l.b16 %v4027
        %v4710 = vunpack.c.h.b16 %v4027
        %v4711 = vunpack.c.l.b16 %v4028
        %v4712 = vunpack.c.h.b16 %v4028
        %v4713 = vunpack.c.l.b16 %v4029
        %v4714 = vunpack.c.h.b16 %v4029
        %v4715 = vunpack.c.l.b16 %v4030
        %v4716 = vunpack.c.h.b16 %v4030
        %v4717 = vunpack.c.l.b16 %v4031
        %v4718 = vunpack.c.h.b16 %v4031
        %v4719 = vunpack.c.l.b16 %v4032
        %v4720 = vunpack.c.h.b16 %v4032
        %v4721 = vunpack.c.l.b16 %v4033
        %v4722 = vunpack.c.h.b16 %v4033
        %v4723 = vunpack.c.l.b16 %v4034
        %v4724 = vunpack.c.h.b16 %v4034
        %v4725 = vunpack.c.l.b16 %v4035
        %v4726 = vunpack.c.h.b16 %v4035
        %v4727 = vunpack.c.l.b16 %v4036
        %v4728 = vunpack.c.h.b16 %v4036
        %v4729 = vunpack.c.l.b16 %v4037
        %v4730 = vunpack.c.h.b16 %v4037
        %v4731 = vunpack.c.l.b16 %v4038
        %v4732 = vunpack.c.h.b16 %v4038
        %v4733 = vunpack.c.l.b16 %v4039
        %v4734 = vunpack.c.h.b16 %v4039
        %v4735 = vunpack.c.l.b16 %v4040
        %v4736 = vunpack.c.h.b16 %v4040
        %v4737 = vunpack.c.l.b16 %v4041
        %v4738 = vunpack.c.h.b16 %v4041
        %v4739 = vunpack.c.l.b16 %v4042
        %v4740 = vunpack.c.h.b16 %v4042
        %v4741 = vunpack.c.l.b16 %v4043
        %v4742 = vunpack.c.h.b16 %v4043
        %v4743 = vunpack.c.l.b16 %v4044
        %v4744 = vunpack.c.h.b16 %v4044
        %v4745 = vunpack.c.l.b16 %v4045
        %v4746 = vunpack.c.h.b16 %v4045
        %v4747 = vunpack.c.l.b16 %v4046
        %v4748 = vunpack.c.h.b16 %v4046
        %v4749 = vunpack.c.l.b16 %v4047
        %v4750 = vunpack.c.h.b16 %v4047
        %v4751 = vunpack.c.l.b16 %v4048
        %v4752 = vunpack.c.h.b16 %v4048
        %v4753 = vunpack.c.l.b16 %v4049
        %v4754 = vunpack.c.h.b16 %v4049
        %v4755 = vunpack.c.l.b16 %v4050
        %v4756 = vunpack.c.h.b16 %v4050
        %v4757 = vunpack.c.l.b16 %v4051
        %v4758 = vunpack.c.h.b16 %v4051
        %v4759 = vunpack.c.l.b16 %v4052
        %v4760 = vunpack.c.h.b16 %v4052
        %v4761 = vunpack.c.l.b16 %v4053
        %v4762 = vunpack.c.h.b16 %v4053
        %v4763 = vunpack.c.l.b16 %v4054
        %v4764 = vunpack.c.h.b16 %v4054
        %v4765 = vunpack.c.l.b16 %v4055
        %v4766 = vunpack.c.h.b16 %v4055
        %v4767 = vunpack.c.l.b16 %v4056
        %v4768 = vunpack.c.h.b16 %v4056
        %v4769 = vunpack.c.l.b16 %v4057
        %v4770 = vunpack.c.h.b16 %v4057
        %v4771 = vunpack.c.l.b16 %v4058
        %v4772 = vunpack.c.h.b16 %v4058
        %v4773 = vunpack.c.l.b16 %v4059
        %v4774 = vunpack.c.h.b16 %v4059
        %v4775 = vunpack.c.l.b16 %v4060
        %v4776 = vunpack.c.h.b16 %v4060
        %v4777 = vunpack.c.l.b16 %v4061
        %v4778 = vunpack.c.h.b16 %v4061
        %v4779 = vunpack.c.l.b16 %v4062
        %v4780 = vunpack.c.h.b16 %v4062
        %v4781 = vunpack.c.l.b16 %v4063
        %v4782 = vunpack.c.h.b16 %v4063
        %v4783 = vunpack.c.l.b16 %v4064
        %v4784 = vunpack.c.h.b16 %v4064
        %v4785 = vunpack.c.l.b16 %v4065
        %v4786 = vunpack.c.h.b16 %v4065
        %v4787 = vunpack.c.l.b16 %v4066
        %v4788 = vunpack.c.h.b16 %v4066
        %v4789 = vunpack.c.l.b16 %v4067
        %v4790 = vunpack.c.h.b16 %v4067
        %v4791 = vunpack.c.l.b16 %v4068
        %v4792 = vunpack.c.h.b16 %v4068
        %v4793 = vunpack.c.l.b16 %v4069
        %v4794 = vunpack.c.h.b16 %v4069
        %v4795 = vunpack.c.l.b16 %v4070
        %v4796 = vunpack.c.h.b16 %v4070
        %v4797 = vunpack.c.l.b16 %v4071
        %v4798 = vunpack.c.h.b16 %v4071
        %v4799 = vunpack.c.l.b16 %v4072
        %v4800 = vunpack.c.h.b16 %v4072
        %v4801 = vunpack.c.l.b16 %v4073
        %v4802 = vunpack.c.h.b16 %v4073
        %v4803 = vunpack.c.l.b16 %v4074
        %v4804 = vunpack.c.h.b16 %v4074
        %v4805 = vunpack.c.l.b16 %v4075
        %v4806 = vunpack.c.h.b16 %v4075
        %v4807 = vunpack.c.l.b16 %v4076
        %v4808 = vunpack.c.h.b16 %v4076
        %v4809 = vunpack.c.l.b16 %v4077
        %v4810 = vunpack.c.h.b16 %v4077
        %v4811 = vunpack.c.l.b16 %v4078
        %v4812 = vunpack.c.h.b16 %v4078
        %v4813 = vunpack.c.l.b16 %v4079
        %v4814 = vunpack.c.h.b16 %v4079
        %v4815 = vunpack.c.l.b16 %v4080
        %v4816 = vunpack.c.h.b16 %v4080
        %v4817 = vunpack.c.l.b16 %v4081
        %v4818 = vunpack.c.h.b16 %v4081
        %v4819 = vunpack.c.l.b16 %v4082
        %v4820 = vunpack.c.h.b16 %v4082
        %v4821 = vunpack.c.l.b16 %v4083
        %v4822 = vunpack.c.h.b16 %v4083
        %v4823 = vunpack.c.l.b16 %v4084
        %v4824 = vunpack.c.h.b16 %v4084
        %v4825 = vunpack.c.l.b16 %v4085
        %v4826 = vunpack.c.h.b16 %v4085
        %v4827 = vunpack.c.l.b16 %v4086
        %v4828 = vunpack.c.h.b16 %v4086
        %v4829 = vunpack.c.l.b16 %v4087
        %v4830 = vunpack.c.h.b16 %v4087
        %v4831 = vunpack.c.l.b16 %v4088
        %v4832 = vunpack.c.h.b16 %v4088
        %v4833 = vunpack.c.l.b16 %v4089
        %v4834 = vunpack.c.h.b16 %v4089
        %v4835 = vunpack.c.l.b16 %v4090
        %v4836 = vunpack.c.h.b16 %v4090
        %v4837 = vunpack.c.l.b16 %v4091
        %v4838 = vunpack.c.h.b16 %v4091
        %v4839 = vunpack.c.l.b16 %v4092
        %v4840 = vunpack.c.h.b16 %v4092
        %v4841 = vunpack.c.l.b16 %v4093
        %v4842 = vunpack.c.h.b16 %v4093
        %v4843 = vunpack.c.l.b16 %v4094
        %v4844 = vunpack.c.h.b16 %v4094
        %v4845 = vunpack.c.l.b16 %v4095
        %v4846 = vunpack.c.h.b16 %v4095
        %v4847 = vunpack.c.l.b16 %v4096
        %v4848 = vunpack.c.h.b16 %v4096
        %v4849 = vunpack.c.l.b16 %v4097
        %v4850 = vunpack.c.h.b16 %v4097
        %v4851 = vunpack.c.l.b16 %v4098
        %v4852 = vunpack.c.h.b16 %v4098
        %v4853 = vunpack.c.l.b16 %v4099
        %v4854 = vunpack.c.h.b16 %v4099
        %v4855 = vunpack.c.l.b16 %v4100
        %v4856 = vunpack.c.h.b16 %v4100
        %v4857 = vunpack.c.l.b16 %v4101
        %v4858 = vunpack.c.h.b16 %v4101
        %v4859 = vunpack.c.l.b16 %v4102
        %v4860 = vunpack.c.h.b16 %v4102
        %v4861 = vunpack.c.l.b16 %v4103
        %v4862 = vunpack.c.h.b16 %v4103
        %v4863 = vunpack.c.l.b16 %v4104
        %v4864 = vunpack.c.h.b16 %v4104
        %v4865 = vunpack.c.l.b16 %v4105
        %v4866 = vunpack.c.h.b16 %v4105
        %v4867 = vunpack.c.l.b16 %v4106
        %v4868 = vunpack.c.h.b16 %v4106
        %v4869 = vunpack.c.l.b16 %v4107
        %v4870 = vunpack.c.h.b16 %v4107
        %v4871 = vunpack.c.l.b16 %v4108
        %v4872 = vunpack.c.h.b16 %v4108
        %v4873 = vunpack.c.l.b16 %v4109
        %v4874 = vunpack.c.h.b16 %v4109
        %v4875 = vunpack.c.l.b16 %v4110
        %v4876 = vunpack.c.h.b16 %v4110
        %v4877 = vunpack.c.l.b16 %v4111
        %v4878 = vunpack.c.h.b16 %v4111
        %v4879 = vunpack.c.l.b16 %v4112
        %v4880 = vunpack.c.h.b16 %v4112
        %v4881 = vunpack.c.l.b16 %v4113
        %v4882 = vunpack.c.h.b16 %v4113
        %v4883 = vunpack.c.l.b16 %v4114
        %v4884 = vunpack.c.h.b16 %v4114
        %v4885 = vunpack.c.l.b16 %v4115
        %v4886 = vunpack.c.h.b16 %v4115
        %v4887 = vunpack.c.l.b16 %v4116
        %v4888 = vunpack.c.h.b16 %v4116
        %v4889 = vunpack.c.l.b16 %v4117
        %v4890 = vunpack.c.h.b16 %v4117
        %v4891 = vunpack.c.l.b16 %v4118
        %v4892 = vunpack.c.h.b16 %v4118
        %v4893 = vunpack.c.l.b16 %v4119
        %v4894 = vunpack.c.h.b16 %v4119
        %v4895 = vunpack.c.l.b16 %v4120
        %v4896 = vunpack.c.h.b16 %v4120
        %v4897 = vunpack.c.l.b16 %v4121
        %v4898 = vunpack.c.h.b16 %v4121
        %v4899 = vunpack.c.l.b16 %v4122
        %v4900 = vunpack.c.h.b16 %v4122
        %v4901 = vunpack.c.l.b16 %v4123
        %v4902 = vunpack.c.h.b16 %v4123
        %v4903 = vunpack.c.l.b16 %v4124
        %v4904 = vunpack.c.h.b16 %v4124
        %v4905 = vunpack.c.l.b16 %v4125
        %v4906 = vunpack.c.h.b16 %v4125
        %v4907 = vunpack.c.l.b16 %v4126
        %v4908 = vunpack.c.h.b16 %v4126
        %v4909 = vunpack.c.l.b16 %v4127
        %v4910 = vunpack.c.h.b16 %v4127
        %v4911 = vunpack.c.l.b16 %v4128
        %v4912 = vunpack.c.h.b16 %v4128
        %v4913 = vunpack.c.l.b16 %v4129
        %v4914 = vunpack.c.h.b16 %v4129
        %v4915 = vunpack.c.l.b16 %v4130
        %v4916 = vunpack.c.h.b16 %v4130
        %v4917 = vunpack.c.l.b16 %v4131
        %v4918 = vunpack.c.h.b16 %v4131
        %v4919 = vunpack.c.l.b16 %v4132
        %v4920 = vunpack.c.h.b16 %v4132
        %v4921 = vunpack.c.l.b16 %v4133
        %v4922 = vunpack.c.h.b16 %v4133
        %v4923 = vunpack.c.l.b16 %v4134
        %v4924 = vunpack.c.h.b16 %v4134
        %v4925 = vunpack.c.l.b16 %v4135
        %v4926 = vunpack.c.h.b16 %v4135
        %v4927 = vunpack.c.l.b16 %v4136
        %v4928 = vunpack.c.h.b16 %v4136
        %v4929 = vunpack.c.l.b16 %v4137
        %v4930 = vunpack.c.h.b16 %v4137
        %v4931 = vunpack.c.l.b16 %v4138
        %v4932 = vunpack.c.h.b16 %v4138
        %v4933 = vunpack.c.l.b16 %v4139
        %v4934 = vunpack.c.h.b16 %v4139
        %v4935 = vunpack.c.l.b16 %v4140
        %v4936 = vunpack.c.h.b16 %v4140
        %v4937 = vpack.c.b16 %v4429, %v4425
        %v4938 = vpack.c.b16 %v4430, %v4426
        %v4939 = vpack.c.b16 %v4431, %v4427
        %v4940 = vpack.c.b16 %v4432, %v4428
        %v4941 = vpack.c.b16 %v4437, %v4433
        %v4942 = vpack.c.b16 %v4438, %v4434
        %v4943 = vpack.c.b16 %v4439, %v4435
        %v4944 = vpack.c.b16 %v4440, %v4436
        %v4945 = vpack.c.b16 %v4445, %v4441
        %v4946 = vpack.c.b16 %v4446, %v4442
        %v4947 = vpack.c.b16 %v4447, %v4443
        %v4948 = vpack.c.b16 %v4448, %v4444
        %v4949 = vpack.c.b16 %v4453, %v4449
        %v4950 = vpack.c.b16 %v4454, %v4450
        %v4951 = vpack.c.b16 %v4455, %v4451
        %v4952 = vpack.c.b16 %v4456, %v4452
        %v4953 = vpack.c.b16 %v4461, %v4457
        %v4954 = vpack.c.b16 %v4462, %v4458
        %v4955 = vpack.c.b16 %v4463, %v4459
        %v4956 = vpack.c.b16 %v4464, %v4460
        %v4957 = vpack.c.b16 %v4469, %v4465
        %v4958 = vpack.c.b16 %v4470, %v4466
        %v4959 = vpack.c.b16 %v4471, %v4467
        %v4960 = vpack.c.b16 %v4472, %v4468
        %v4961 = vpack.c.b16 %v4477, %v4473
        %v4962 = vpack.c.b16 %v4478, %v4474
        %v4963 = vpack.c.b16 %v4479, %v4475
        %v4964 = vpack.c.b16 %v4480, %v4476
        %v4965 = vpack.c.b16 %v4485, %v4481
        %v4966 = vpack.c.b16 %v4486, %v4482
        %v4967 = vpack.c.b16 %v4487, %v4483
        %v4968 = vpack.c.b16 %v4488, %v4484
        %v4969 = vpack.c.b16 %v4493, %v4489
        %v4970 = vpack.c.b16 %v4494, %v4490
        %v4971 = vpack.c.b16 %v4495, %v4491
        %v4972 = vpack.c.b16 %v4496, %v4492
        %v4973 = vpack.c.b16 %v4501, %v4497
        %v4974 = vpack.c.b16 %v4502, %v4498
        %v4975 = vpack.c.b16 %v4503, %v4499
        %v4976 = vpack.c.b16 %v4504, %v4500
        %v4977 = vpack.c.b16 %v4509, %v4505
        %v4978 = vpack.c.b16 %v4510, %v4506
        %v4979 = vpack.c.b16 %v4511, %v4507
        %v4980 = vpack.c.b16 %v4512, %v4508
        %v4981 = vpack.c.b16 %v4517, %v4513
        %v4982 = vpack.c.b16 %v4518, %v4514
        %v4983 = vpack.c.b16 %v4519, %v4515
        %v4984 = vpack.c.b16 %v4520, %v4516
        %v4985 = vpack.c.b16 %v4525, %v4521
        %v4986 = vpack.c.b16 %v4526, %v4522
        %v4987 = vpack.c.b16 %v4527, %v4523
        %v4988 = vpack.c.b16 %v4528, %v4524
        %v4989 = vpack.c.b16 %v4533, %v4529
        %v4990 = vpack.c.b16 %v4534, %v4530
        %v4991 = vpack.c.b16 %v4535, %v4531
        %v4992 = vpack.c.b16 %v4536, %v4532
        %v4993 = vpack.c.b16 %v4541, %v4537
        %v4994 = vpack.c.b16 %v4542, %v4538
        %v4995 = vpack.c.b16 %v4543, %v4539
        %v4996 = vpack.c.b16 %v4544, %v4540
        %v4997 = vpack.c.b16 %v4549, %v4545
        %v4998 = vpack.c.b16 %v4550, %v4546
        %v4999 = vpack.c.b16 %v4551, %v4547
        %v5000 = vpack.c.b16 %v4552, %v4548
        %v5001 = vpack.c.b16 %v4557, %v4553
        %v5002 = vpack.c.b16 %v4558, %v4554
        %v5003 = vpack.c.b16 %v4559, %v4555
        %v5004 = vpack.c.b16 %v4560, %v4556
        %v5005 = vpack.c.b16 %v4565, %v4561
        %v5006 = vpack.c.b16 %v4566, %v4562
        %v5007 = vpack.c.b16 %v4567, %v4563
        %v5008 = vpack.c.b16 %v4568, %v4564
        %v5009 = vpack.c.b16 %v4573, %v4569
        %v5010 = vpack.c.b16 %v4574, %v4570
        %v5011 = vpack.c.b16 %v4575, %v4571
        %v5012 = vpack.c.b16 %v4576, %v4572
        %v5013 = vpack.c.b16 %v4581, %v4577
        %v5014 = vpack.c.b16 %v4582, %v4578
        %v5015 = vpack.c.b16 %v4583, %v4579
        %v5016 = vpack.c.b16 %v4584, %v4580
        %v5017 = vpack.c.b16 %v4589, %v4585
        %v5018 = vpack.c.b16 %v4590, %v4586
        %v5019 = vpack.c.b16 %v4591, %v4587
        %v5020 = vpack.c.b16 %v4592, %v4588
        %v5021 = vpack.c.b16 %v4597, %v4593
        %v5022 = vpack.c.b16 %v4598, %v4594
        %v5023 = vpack.c.b16 %v4599, %v4595
        %v5024 = vpack.c.b16 %v4600, %v4596
        %v5025 = vpack.c.b16 %v4605, %v4601
        %v5026 = vpack.c.b16 %v4606, %v4602
        %v5027 = vpack.c.b16 %v4607, %v4603
        %v5028 = vpack.c.b16 %v4608, %v4604
        %v5029 = vpack.c.b16 %v4613, %v4609
        %v5030 = vpack.c.b16 %v4614, %v4610
        %v5031 = vpack.c.b16 %v4615, %v4611
        %v5032 = vpack.c.b16 %v4616, %v4612
        %v5033 = vpack.c.b16 %v4621, %v4617
        %v5034 = vpack.c.b16 %v4622, %v4618
        %v5035 = vpack.c.b16 %v4623, %v4619
        %v5036 = vpack.c.b16 %v4624, %v4620
        %v5037 = vpack.c.b16 %v4629, %v4625
        %v5038 = vpack.c.b16 %v4630, %v4626
        %v5039 = vpack.c.b16 %v4631, %v4627
        %v5040 = vpack.c.b16 %v4632, %v4628
        %v5041 = vpack.c.b16 %v4637, %v4633
        %v5042 = vpack.c.b16 %v4638, %v4634
        %v5043 = vpack.c.b16 %v4639, %v4635
        %v5044 = vpack.c.b16 %v4640, %v4636
        %v5045 = vpack.c.b16 %v4645, %v4641
        %v5046 = vpack.c.b16 %v4646, %v4642
        %v5047 = vpack.c.b16 %v4647, %v4643
        %v5048 = vpack.c.b16 %v4648, %v4644
        %v5049 = vpack.c.b16 %v4653, %v4649
        %v5050 = vpack.c.b16 %v4654, %v4650
        %v5051 = vpack.c.b16 %v4655, %v4651
        %v5052 = vpack.c.b16 %v4656, %v4652
        %v5053 = vpack.c.b16 %v4661, %v4657
        %v5054 = vpack.c.b16 %v4662, %v4658
        %v5055 = vpack.c.b16 %v4663, %v4659
        %v5056 = vpack.c.b16 %v4664, %v4660
        %v5057 = vpack.c.b16 %v4669, %v4665
        %v5058 = vpack.c.b16 %v4670, %v4666
        %v5059 = vpack.c.b16 %v4671, %v4667
        %v5060 = vpack.c.b16 %v4672, %v4668
        %v5061 = vpack.c.b16 %v4677, %v4673
        %v5062 = vpack.c.b16 %v4678, %v4674
        %v5063 = vpack.c.b16 %v4679, %v4675
        %v5064 = vpack.c.b16 %v4680, %v4676
        %v5065 = vpack.c.b16 %v4685, %v4681
        %v5066 = vpack.c.b16 %v4686, %v4682
        %v5067 = vpack.c.b16 %v4687, %v4683
        %v5068 = vpack.c.b16 %v4688, %v4684
        %v5069 = vpack.c.b16 %v4693, %v4689
        %v5070 = vpack.c.b16 %v4694, %v4690
        %v5071 = vpack.c.b16 %v4695, %v4691
        %v5072 = vpack.c.b16 %v4696, %v4692
        %v5073 = vpack.c.b16 %v4701, %v4697
        %v5074 = vpack.c.b16 %v4702, %v4698
        %v5075 = vpack.c.b16 %v4703, %v4699
        %v5076 = vpack.c.b16 %v4704, %v4700
        %v5077 = vpack.c.b16 %v4709, %v4705
        %v5078 = vpack.c.b16 %v4710, %v4706
        %v5079 = vpack.c.b16 %v4711, %v4707
        %v5080 = vpack.c.b16 %v4712, %v4708
        %v5081 = vpack.c.b16 %v4717, %v4713
        %v5082 = vpack.c.b16 %v4718, %v4714
        %v5083 = vpack.c.b16 %v4719, %v4715
        %v5084 = vpack.c.b16 %v4720, %v4716
        %v5085 = vpack.c.b16 %v4725, %v4721
        %v5086 = vpack.c.b16 %v4726, %v4722
        %v5087 = vpack.c.b16 %v4727, %v4723
        %v5088 = vpack.c.b16 %v4728, %v4724
        %v5089 = vpack.c.b16 %v4733, %v4729
        %v5090 = vpack.c.b16 %v4734, %v4730
        %v5091 = vpack.c.b16 %v4735, %v4731
        %v5092 = vpack.c.b16 %v4736, %v4732
        %v5093 = vpack.c.b16 %v4741, %v4737
        %v5094 = vpack.c.b16 %v4742, %v4738
        %v5095 = vpack.c.b16 %v4743, %v4739
        %v5096 = vpack.c.b16 %v4744, %v4740
        %v5097 = vpack.c.b16 %v4749, %v4745
        %v5098 = vpack.c.b16 %v4750, %v4746
        %v5099 = vpack.c.b16 %v4751, %v4747
        %v5100 = vpack.c.b16 %v4752, %v4748
        %v5101 = vpack.c.b16 %v4757, %v4753
        %v5102 = vpack.c.b16 %v4758, %v4754
        %v5103 = vpack.c.b16 %v4759, %v4755
        %v5104 = vpack.c.b16 %v4760, %v4756
        %v5105 = vpack.c.b16 %v4765, %v4761
        %v5106 = vpack.c.b16 %v4766, %v4762
        %v5107 = vpack.c.b16 %v4767, %v4763
        %v5108 = vpack.c.b16 %v4768, %v4764
        %v5109 = vpack.c.b16 %v4773, %v4769
        %v5110 = vpack.c.b16 %v4774, %v4770
        %v5111 = vpack.c.b16 %v4775, %v4771
        %v5112 = vpack.c.b16 %v4776, %v4772
        %v5113 = vpack.c.b16 %v4781, %v4777
        %v5114 = vpack.c.b16 %v4782, %v4778
        %v5115 = vpack.c.b16 %v4783, %v4779
        %v5116 = vpack.c.b16 %v4784, %v4780
        %v5117 = vpack.c.b16 %v4789, %v4785
        %v5118 = vpack.c.b16 %v4790, %v4786
        %v5119 = vpack.c.b16 %v4791, %v4787
        %v5120 = vpack.c.b16 %v4792, %v4788
        %v5121 = vpack.c.b16 %v4797, %v4793
        %v5122 = vpack.c.b16 %v4798, %v4794
        %v5123 = vpack.c.b16 %v4799, %v4795
        %v5124 = vpack.c.b16 %v4800, %v4796
        %v5125 = vpack.c.b16 %v4805, %v4801
        %v5126 = vpack.c.b16 %v4806, %v4802
        %v5127 = vpack.c.b16 %v4807, %v4803
        %v5128 = vpack.c.b16 %v4808, %v4804
        %v5129 = vpack.c.b16 %v4813, %v4809
        %v5130 = vpack.c.b16 %v4814, %v4810
        %v5131 = vpack.c.b16 %v4815, %v4811
        %v5132 = vpack.c.b16 %v4816, %v4812
        %v5133 = vpack.c.b16 %v4821, %v4817
        %v5134 = vpack.c.b16 %v4822, %v4818
        %v5135 = vpack.c.b16 %v4823, %v4819
        %v5136 = vpack.c.b16 %v4824, %v4820
        %v5137 = vpack.c.b16 %v4829, %v4825
        %v5138 = vpack.c.b16 %v4830, %v4826
        %v5139 = vpack.c.b16 %v4831, %v4827
        %v5140 = vpack.c.b16 %v4832, %v4828
        %v5141 = vpack.c.b16 %v4837, %v4833
        %v5142 = vpack.c.b16 %v4838, %v4834
        %v5143 = vpack.c.b16 %v4839, %v4835
        %v5144 = vpack.c.b16 %v4840, %v4836
        %v5145 = vpack.c.b16 %v4845, %v4841
        %v5146 = vpack.c.b16 %v4846, %v4842
        %v5147 = vpack.c.b16 %v4847, %v4843
        %v5148 = vpack.c.b16 %v4848, %v4844
        %v5149 = vpack.c.b16 %v4853, %v4849
        %v5150 = vpack.c.b16 %v4854, %v4850
        %v5151 = vpack.c.b16 %v4855, %v4851
        %v5152 = vpack.c.b16 %v4856, %v4852
        %v5153 = vpack.c.b16 %v4861, %v4857
        %v5154 = vpack.c.b16 %v4862, %v4858
        %v5155 = vpack.c.b16 %v4863, %v4859
        %v5156 = vpack.c.b16 %v4864, %v4860
        %v5157 = vpack.c.b16 %v4869, %v4865
        %v5158 = vpack.c.b16 %v4870, %v4866
        %v5159 = vpack.c.b16 %v4871, %v4867
        %v5160 = vpack.c.b16 %v4872, %v4868
        %v5161 = vpack.c.b16 %v4877, %v4873
        %v5162 = vpack.c.b16 %v4878, %v4874
        %v5163 = vpack.c.b16 %v4879, %v4875
        %v5164 = vpack.c.b16 %v4880, %v4876
        %v5165 = vpack.c.b16 %v4885, %v4881
        %v5166 = vpack.c.b16 %v4886, %v4882
        %v5167 = vpack.c.b16 %v4887, %v4883
        %v5168 = vpack.c.b16 %v4888, %v4884
        %v5169 = vpack.c.b16 %v4893, %v4889
        %v5170 = vpack.c.b16 %v4894, %v4890
        %v5171 = vpack.c.b16 %v4895, %v4891
        %v5172 = vpack.c.b16 %v4896, %v4892
        %v5173 = vpack.c.b16 %v4901, %v4897
        %v5174 = vpack.c.b16 %v4902, %v4898
        %v5175 = vpack.c.b16 %v4903, %v4899
        %v5176 = vpack.c.b16 %v4904, %v4900
        %v5177 = vpack.c.b16 %v4909, %v4905
        %v5178 = vpack.c.b16 %v4910, %v4906
        %v5179 = vpack.c.b16 %v4911, %v4907
        %v5180 = vpack.c.b16 %v4912, %v4908
        %v5181 = vpack.c.b16 %v4917, %v4913
        %v5182 = vpack.c.b16 %v4918, %v4914
        %v5183 = vpack.c.b16 %v4919, %v4915
        %v5184 = vpack.c.b16 %v4920, %v4916
        %v5185 = vpack.c.b16 %v4925, %v4921
        %v5186 = vpack.c.b16 %v4926, %v4922
        %v5187 = vpack.c.b16 %v4927, %v4923
        %v5188 = vpack.c.b16 %v4928, %v4924
        %v5189 = vpack.c.b16 %v4933, %v4929
        %v5190 = vpack.c.b16 %v4934, %v4930
        %v5191 = vpack.c.b16 %v4935, %v4931
        %v5192 = vpack.c.b16 %v4936, %v4932
        %5449 = vmatprep.subr.bf16.mxu0 %v4938
        %5450 = vmatpush1.bf16.msra.mxu0 %v4937
        %5451 = vmatprep.subr.bf16.mxu0 %v4942
        %5452 = vmatpush1.bf16.msra.mxu0 %v4941
        %5453 = vmatprep.subr.bf16.mxu0 %v4946
        %5454 = vmatpush1.bf16.msra.mxu0 %v4945
        %5455 = vmatprep.subr.bf16.mxu0 %v4950
        %5456 = vmatpush1.bf16.msra.mxu0 %v4949
        %5457 = vmatprep.subr.bf16.mxu0 %v4954
        %5458 = vmatpush1.bf16.msra.mxu0 %v4953
        %5459 = vmatprep.subr.bf16.mxu0 %v4958
        %5460 = vmatpush1.bf16.msra.mxu0 %v4957
        %5461 = vmatprep.subr.bf16.mxu0 %v4962
        %5462 = vmatpush1.bf16.msra.mxu0 %v4961
        %5463 = vmatprep.subr.bf16.mxu0 %v4966
        %5464 = vmatpush1.bf16.msra.mxu0 %v4965
        %5465 = vmatprep.subr.bf16.mxu0 %v4970
        %5466 = vmatpush1.bf16.msra.mxu0 %v4969
        %5467 = vmatprep.subr.bf16.mxu0 %v4974
        %5468 = vmatpush1.bf16.msra.mxu0 %v4973
        %5469 = vmatprep.subr.bf16.mxu0 %v4978
        %5470 = vmatpush1.bf16.msra.mxu0 %v4977
        %5471 = vmatprep.subr.bf16.mxu0 %v4982
        %5472 = vmatpush1.bf16.msra.mxu0 %v4981
        %5473 = vmatprep.subr.bf16.mxu0 %v4986
        %5474 = vmatpush1.bf16.msra.mxu0 %v4985
        %5475 = vmatprep.subr.bf16.mxu0 %v4990
        %5476 = vmatpush1.bf16.msra.mxu0 %v4989
        %5477 = vmatprep.subr.bf16.mxu0 %v4994
        %5478 = vmatpush1.bf16.msra.mxu0 %v4993
        %5479 = vmatprep.subr.bf16.mxu0 %v4998
        %5480 = vmatpush1.bf16.msra.mxu0 %v4997
        %5481 = vmatprep.mubr.bf16.mxu0 %v4154
        %5482 = vmatmul.mubr.bf16.gmra.mrb[0].mxu0 %v4153
        %v5483 = vpop.f32.mrb[0].mxu0
        %v5484 = vadd.f32 0.0, %v5483
        %v5485 = vpop.f32.mrb[0].mxu0
        %v5486 = vadd.f32 0.0, %v5485
        %v5487 = vpop.f32.mrb[0].mxu0
        %v5488 = vpop.f32.mrb[0].mxu0
        %5489 = vdwg.mxu0
        %5490 = vmatprep.subr.bf16.mxu0 %v5002
        %5491 = vmatpush1.bf16.msra.mxu0 %v5001
        %5492 = vmatprep.subr.bf16.mxu0 %v5006
        %5493 = vmatpush1.bf16.msra.mxu0 %v5005
        %5494 = vmatprep.subr.bf16.mxu0 %v5010
        %5495 = vmatpush1.bf16.msra.mxu0 %v5009
        %5496 = vmatprep.subr.bf16.mxu0 %v5014
        %5497 = vmatpush1.bf16.msra.mxu0 %v5013
        %5498 = vmatprep.subr.bf16.mxu0 %v5018
        %5499 = vmatpush1.bf16.msra.mxu0 %v5017
        %5500 = vmatprep.subr.bf16.mxu0 %v5022
        %5501 = vmatpush1.bf16.msra.mxu0 %v5021
        %5502 = vmatprep.subr.bf16.mxu0 %v5026
        %5503 = vmatpush1.bf16.msra.mxu0 %v5025
        %5504 = vmatprep.subr.bf16.mxu0 %v5030
        %5505 = vmatpush1.bf16.msra.mxu0 %v5029
        %5506 = vmatprep.subr.bf16.mxu0 %v5034
        %5507 = vmatpush1.bf16.msra.mxu0 %v5033
        %5508 = vmatprep.subr.bf16.mxu0 %v5038
        %5509 = vmatpush1.bf16.msra.mxu0 %v5037
        %5510 = vmatprep.subr.bf16.mxu0 %v5042
        %5511 = vmatpush1.bf16.msra.mxu0 %v5041
        %5512 = vmatprep.subr.bf16.mxu0 %v5046
        %5513 = vmatpush1.bf16.msra.mxu0 %v5045
        %5514 = vmatprep.subr.bf16.mxu0 %v5050
        %5515 = vmatpush1.bf16.msra.mxu0 %v5049
        %5516 = vmatprep.subr.bf16.mxu0 %v5054
        %5517 = vmatpush1.bf16.msra.mxu0 %v5053
        %5518 = vmatprep.subr.bf16.mxu0 %v5058
        %5519 = vmatpush1.bf16.msra.mxu0 %v5057
        %5520 = vmatprep.subr.bf16.mxu0 %v5062
        %5521 = vmatpush1.bf16.msra.mxu0 %v5061
        %5522 = vmatprep.mubr.bf16.mxu0 %v4156
        %5523 = vmatmul.mubr.bf16.gmra.mrb[0].mxu0 %v4155
        %v5524 = vpop.f32.mrb[0].mxu0
        %v5525 = vadd.f32 %v5484, %v5524
        %v5526 = vpop.f32.mrb[0].mxu0
        %v5527 = vadd.f32 %v5486, %v5526
        %v5528 = vpop.f32.mrb[0].mxu0
        %v5529 = vpop.f32.mrb[0].mxu0
        %5530 = vdwg.mxu0
        %5531 = vmatprep.subr.bf16.mxu0 %v5066
        %5532 = vmatpush1.bf16.msra.mxu0 %v5065
        %5533 = vmatprep.subr.bf16.mxu0 %v5070
        %5534 = vmatpush1.bf16.msra.mxu0 %v5069
        %5535 = vmatprep.subr.bf16.mxu0 %v5074
        %5536 = vmatpush1.bf16.msra.mxu0 %v5073
        %5537 = vmatprep.subr.bf16.mxu0 %v5078
        %5538 = vmatpush1.bf16.msra.mxu0 %v5077
        %5539 = vmatprep.subr.bf16.mxu0 %v5082
        %5540 = vmatpush1.bf16.msra.mxu0 %v5081
        %5541 = vmatprep.subr.bf16.mxu0 %v5086
        %5542 = vmatpush1.bf16.msra.mxu0 %v5085
        %5543 = vmatprep.subr.bf16.mxu0 %v5090
        %5544 = vmatpush1.bf16.msra.mxu0 %v5089
        %5545 = vmatprep.subr.bf16.mxu0 %v5094
        %5546 = vmatpush1.bf16.msra.mxu0 %v5093
        %5547 = vmatprep.subr.bf16.mxu0 %v5098
        %5548 = vmatpush1.bf16.msra.mxu0 %v5097
        %5549 = vmatprep.subr.bf16.mxu0 %v5102
        %5550 = vmatpush1.bf16.msra.mxu0 %v5101
        %5551 = vmatprep.subr.bf16.mxu0 %v5106
        %5552 = vmatpush1.bf16.msra.mxu0 %v5105
        %5553 = vmatprep.subr.bf16.mxu0 %v5110
        %5554 = vmatpush1.bf16.msra.mxu0 %v5109
        %5555 = vmatprep.subr.bf16.mxu0 %v5114
        %5556 = vmatpush1.bf16.msra.mxu0 %v5113
        %5557 = vmatprep.subr.bf16.mxu0 %v5118
        %5558 = vmatpush1.bf16.msra.mxu0 %v5117
        %5559 = vmatprep.subr.bf16.mxu0 %v5122
        %5560 = vmatpush1.bf16.msra.mxu0 %v5121
        %5561 = vmatprep.subr.bf16.mxu0 %v5126
        %5562 = vmatpush1.bf16.msra.mxu0 %v5125
        %5563 = vmatprep.mubr.bf16.mxu0 %v4158
        %5564 = vmatmul.mubr.bf16.gmra.mrb[0].mxu0 %v4157
        %v5565 = vpop.f32.mrb[0].mxu0
        %v5566 = vadd.f32 %v5525, %v5565
        %v5567 = vpop.f32.mrb[0].mxu0
        %v5568 = vadd.f32 %v5527, %v5567
        %v5569 = vpop.f32.mrb[0].mxu0
        %v5570 = vpop.f32.mrb[0].mxu0
        %5571 = vdwg.mxu0
        %5572 = vmatprep.subr.bf16.mxu0 %v5130
        %5573 = vmatpush1.bf16.msra.mxu0 %v5129
        %5574 = vmatprep.subr.bf16.mxu0 %v5134
        %5575 = vmatpush1.bf16.msra.mxu0 %v5133
        %5576 = vmatprep.subr.bf16.mxu0 %v5138
        %5577 = vmatpush1.bf16.msra.mxu0 %v5137
        %5578 = vmatprep.subr.bf16.mxu0 %v5142
        %5579 = vmatpush1.bf16.msra.mxu0 %v5141
        %5580 = vmatprep.subr.bf16.mxu0 %v5146
        %5581 = vmatpush1.bf16.msra.mxu0 %v5145
        %5582 = vmatprep.subr.bf16.mxu0 %v5150
        %5583 = vmatpush1.bf16.msra.mxu0 %v5149
        %5584 = vmatprep.subr.bf16.mxu0 %v5154
        %5585 = vmatpush1.bf16.msra.mxu0 %v5153
        %5586 = vmatprep.subr.bf16.mxu0 %v5158
        %5587 = vmatpush1.bf16.msra.mxu0 %v5157
        %5588 = vmatprep.subr.bf16.mxu0 %v5162
        %5589 = vmatpush1.bf16.msra.mxu0 %v5161
        %5590 = vmatprep.subr.bf16.mxu0 %v5166
        %5591 = vmatpush1.bf16.msra.mxu0 %v5165
        %5592 = vmatprep.subr.bf16.mxu0 %v5170
        %5593 = vmatpush1.bf16.msra.mxu0 %v5169
        %5594 = vmatprep.subr.bf16.mxu0 %v5174
        %5595 = vmatpush1.bf16.msra.mxu0 %v5173
        %5596 = vmatprep.subr.bf16.mxu0 %v5178
        %5597 = vmatpush1.bf16.msra.mxu0 %v5177
        %5598 = vmatprep.subr.bf16.mxu0 %v5182
        %5599 = vmatpush1.bf16.msra.mxu0 %v5181
        %5600 = vmatprep.subr.bf16.mxu0 %v5186
        %5601 = vmatpush1.bf16.msra.mxu0 %v5185
        %5602 = vmatprep.subr.bf16.mxu0 %v5190
        %5603 = vmatpush1.bf16.msra.mxu0 %v5189
        %5604 = vmatprep.mubr.bf16.mxu0 %v4160
        %5605 = vmatmul.mubr.bf16.gmra.mrb[0].mxu0 %v4159
        %v5606 = vpop.f32.mrb[0].mxu0
        %v5607 = vadd.f32 %v5566, %v5606
        %v5608 = vpop.f32.mrb[0].mxu0
        %v5609 = vadd.f32 %v5568, %v5608
        %v5610 = vpop.f32.mrb[0].mxu0
        %v5611 = vpop.f32.mrb[0].mxu0
        %5612 = vdwg.mxu0
        %5613 = vmatprep.subr.bf16.mxu0 %v4940
        %5614 = vmatpush1.bf16.msra.mxu0 %v4939
        %5615 = vmatprep.subr.bf16.mxu0 %v4944
        %5616 = vmatpush1.bf16.msra.mxu0 %v4943
        %5617 = vmatprep.subr.bf16.mxu0 %v4948
        %5618 = vmatpush1.bf16.msra.mxu0 %v4947
        %5619 = vmatprep.subr.bf16.mxu0 %v4952
        %5620 = vmatpush1.bf16.msra.mxu0 %v4951
        %5621 = vmatprep.subr.bf16.mxu0 %v4956
        %5622 = vmatpush1.bf16.msra.mxu0 %v4955
        %5623 = vmatprep.subr.bf16.mxu0 %v4960
        %5624 = vmatpush1.bf16.msra.mxu0 %v4959
        %5625 = vmatprep.subr.bf16.mxu0 %v4964
        %5626 = vmatpush1.bf16.msra.mxu0 %v4963
        %5627 = vmatprep.subr.bf16.mxu0 %v4968
        %5628 = vmatpush1.bf16.msra.mxu0 %v4967
        %5629 = vmatprep.subr.bf16.mxu0 %v4972
        %5630 = vmatpush1.bf16.msra.mxu0 %v4971
        %5631 = vmatprep.subr.bf16.mxu0 %v4976
        %5632 = vmatpush1.bf16.msra.mxu0 %v4975
        %5633 = vmatprep.subr.bf16.mxu0 %v4980
        %5634 = vmatpush1.bf16.msra.mxu0 %v4979
        %5635 = vmatprep.subr.bf16.mxu0 %v4984
        %5636 = vmatpush1.bf16.msra.mxu0 %v4983
        %5637 = vmatprep.subr.bf16.mxu0 %v4988
        %5638 = vmatpush1.bf16.msra.mxu0 %v4987
        %5639 = vmatprep.subr.bf16.mxu0 %v4992
        %5640 = vmatpush1.bf16.msra.mxu0 %v4991
        %5641 = vmatprep.subr.bf16.mxu0 %v4996
        %5642 = vmatpush1.bf16.msra.mxu0 %v4995
        %5643 = vmatprep.subr.bf16.mxu0 %v5000
        %5644 = vmatpush1.bf16.msra.mxu0 %v4999
        %5645 = vmatprep.mubr.bf16.mxu0 %v4154
        %5646 = vmatmul.mubr.bf16.gmra.mrb[0].mxu0 %v4153
        %v5647 = vpop.f32.mrb[0].mxu0
        %v5648 = vadd.f32 0.0, %v5647
        %v5649 = vpop.f32.mrb[0].mxu0
        %v5650 = vadd.f32 0.0, %v5649
        %v5651 = vpop.f32.mrb[0].mxu0
        %v5652 = vpop.f32.mrb[0].mxu0
        %5653 = vdwg.mxu0
        %5654 = vmatprep.subr.bf16.mxu0 %v5004
        %5655 = vmatpush1.bf16.msra.mxu0 %v5003
        %5656 = vmatprep.subr.bf16.mxu0 %v5008
        %5657 = vmatpush1.bf16.msra.mxu0 %v5007
        %5658 = vmatprep.subr.bf16.mxu0 %v5012
        %5659 = vmatpush1.bf16.msra.mxu0 %v5011
        %5660 = vmatprep.subr.bf16.mxu0 %v5016
        %5661 = vmatpush1.bf16.msra.mxu0 %v5015
        %5662 = vmatprep.subr.bf16.mxu0 %v5020
        %5663 = vmatpush1.bf16.msra.mxu0 %v5019
        %5664 = vmatprep.subr.bf16.mxu0 %v5024
        %5665 = vmatpush1.bf16.msra.mxu0 %v5023
        %5666 = vmatprep.subr.bf16.mxu0 %v5028
        %5667 = vmatpush1.bf16.msra.mxu0 %v5027
        %5668 = vmatprep.subr.bf16.mxu0 %v5032
        %5669 = vmatpush1.bf16.msra.mxu0 %v5031
        %5670 = vmatprep.subr.bf16.mxu0 %v5036
        %5671 = vmatpush1.bf16.msra.mxu0 %v5035
        %5672 = vmatprep.subr.bf16.mxu0 %v5040
        %5673 = vmatpush1.bf16.msra.mxu0 %v5039
        %5674 = vmatprep.subr.bf16.mxu0 %v5044
        %5675 = vmatpush1.bf16.msra.mxu0 %v5043
        %5676 = vmatprep.subr.bf16.mxu0 %v5048
        %5677 = vmatpush1.bf16.msra.mxu0 %v5047
        %5678 = vmatprep.subr.bf16.mxu0 %v5052
        %5679 = vmatpush1.bf16.msra.mxu0 %v5051
        %5680 = vmatprep.subr.bf16.mxu0 %v5056
        %5681 = vmatpush1.bf16.msra.mxu0 %v5055
        %5682 = vmatprep.subr.bf16.mxu0 %v5060
        %5683 = vmatpush1.bf16.msra.mxu0 %v5059
        %5684 = vmatprep.subr.bf16.mxu0 %v5064
        %5685 = vmatpush1.bf16.msra.mxu0 %v5063
        %5686 = vmatprep.mubr.bf16.mxu0 %v4156
        %5687 = vmatmul.mubr.bf16.gmra.mrb[0].mxu0 %v4155
        %v5688 = vpop.f32.mrb[0].mxu0
        %v5689 = vadd.f32 %v5648, %v5688
        %v5690 = vpop.f32.mrb[0].mxu0
        %v5691 = vadd.f32 %v5650, %v5690
        %v5692 = vpop.f32.mrb[0].mxu0
        %v5693 = vpop.f32.mrb[0].mxu0
        %5694 = vdwg.mxu0
        %5695 = vmatprep.subr.bf16.mxu0 %v5068
        %5696 = vmatpush1.bf16.msra.mxu0 %v5067
        %5697 = vmatprep.subr.bf16.mxu0 %v5072
        %5698 = vmatpush1.bf16.msra.mxu0 %v5071
        %5699 = vmatprep.subr.bf16.mxu0 %v5076
        %5700 = vmatpush1.bf16.msra.mxu0 %v5075
        %5701 = vmatprep.subr.bf16.mxu0 %v5080
        %5702 = vmatpush1.bf16.msra.mxu0 %v5079
        %5703 = vmatprep.subr.bf16.mxu0 %v5084
        %5704 = vmatpush1.bf16.msra.mxu0 %v5083
        %5705 = vmatprep.subr.bf16.mxu0 %v5088
        %5706 = vmatpush1.bf16.msra.mxu0 %v5087
        %5707 = vmatprep.subr.bf16.mxu0 %v5092
        %5708 = vmatpush1.bf16.msra.mxu0 %v5091
        %5709 = vmatprep.subr.bf16.mxu0 %v5096
        %5710 = vmatpush1.bf16.msra.mxu0 %v5095
        %5711 = vmatprep.subr.bf16.mxu0 %v5100
        %5712 = vmatpush1.bf16.msra.mxu0 %v5099
        %5713 = vmatprep.subr.bf16.mxu0 %v5104
        %5714 = vmatpush1.bf16.msra.mxu0 %v5103
        %5715 = vmatprep.subr.bf16.mxu0 %v5108
        %5716 = vmatpush1.bf16.msra.mxu0 %v5107
        %5717 = vmatprep.subr.bf16.mxu0 %v5112
        %5718 = vmatpush1.bf16.msra.mxu0 %v5111
        %5719 = vmatprep.subr.bf16.mxu0 %v5116
        %5720 = vmatpush1.bf16.msra.mxu0 %v5115
        %5721 = vmatprep.subr.bf16.mxu0 %v5120
        %5722 = vmatpush1.bf16.msra.mxu0 %v5119
        %5723 = vmatprep.subr.bf16.mxu0 %v5124
        %5724 = vmatpush1.bf16.msra.mxu0 %v5123
        %5725 = vmatprep.subr.bf16.mxu0 %v5128
        %5726 = vmatpush1.bf16.msra.mxu0 %v5127
        %5727 = vmatprep.mubr.bf16.mxu0 %v4158
        %5728 = vmatmul.mubr.bf16.gmra.mrb[0].mxu0 %v4157
        %v5729 = vpop.f32.mrb[0].mxu0
        %v5730 = vadd.f32 %v5689, %v5729
        %v5731 = vpop.f32.mrb[0].mxu0
        %v5732 = vadd.f32 %v5691, %v5731
        %v5733 = vpop.f32.mrb[0].mxu0
        %v5734 = vpop.f32.mrb[0].mxu0
        %5735 = vdwg.mxu0
        %5736 = vmatprep.subr.bf16.mxu0 %v5132
        %5737 = vmatpush1.bf16.msra.mxu0 %v5131
        %5738 = vmatprep.subr.bf16.mxu0 %v5136
        %5739 = vmatpush1.bf16.msra.mxu0 %v5135
        %5740 = vmatprep.subr.bf16.mxu0 %v5140
        %5741 = vmatpush1.bf16.msra.mxu0 %v5139
        %5742 = vmatprep.subr.bf16.mxu0 %v5144
        %5743 = vmatpush1.bf16.msra.mxu0 %v5143
        %5744 = vmatprep.subr.bf16.mxu0 %v5148
        %5745 = vmatpush1.bf16.msra.mxu0 %v5147
        %5746 = vmatprep.subr.bf16.mxu0 %v5152
        %5747 = vmatpush1.bf16.msra.mxu0 %v5151
        %5748 = vmatprep.subr.bf16.mxu0 %v5156
        %5749 = vmatpush1.bf16.msra.mxu0 %v5155
        %5750 = vmatprep.subr.bf16.mxu0 %v5160
        %5751 = vmatpush1.bf16.msra.mxu0 %v5159
        %5752 = vmatprep.subr.bf16.mxu0 %v5164
        %5753 = vmatpush1.bf16.msra.mxu0 %v5163
        %5754 = vmatprep.subr.bf16.mxu0 %v5168
        %5755 = vmatpush1.bf16.msra.mxu0 %v5167
        %5756 = vmatprep.subr.bf16.mxu0 %v5172
        %5757 = vmatpush1.bf16.msra.mxu0 %v5171
        %5758 = vmatprep.subr.bf16.mxu0 %v5176
        %5759 = vmatpush1.bf16.msra.mxu0 %v5175
        %5760 = vmatprep.subr.bf16.mxu0 %v5180
        %5761 = vmatpush1.bf16.msra.mxu0 %v5179
        %5762 = vmatprep.subr.bf16.mxu0 %v5184
        %5763 = vmatpush1.bf16.msra.mxu0 %v5183
        %5764 = vmatprep.subr.bf16.mxu0 %v5188
        %5765 = vmatpush1.bf16.msra.mxu0 %v5187
        %5766 = vmatprep.subr.bf16.mxu0 %v5192
        %5767 = vmatpush1.bf16.msra.mxu0 %v5191
        %5768 = vmatprep.mubr.bf16.mxu0 %v4160
        %5769 = vmatmul.mubr.bf16.gmra.mrb[0].mxu0 %v4159
        %v5770 = vpop.f32.mrb[0].mxu0
        %v5771 = vadd.f32 %v5730, %v5770
        %v5772 = vpop.f32.mrb[0].mxu0
        %v5773 = vadd.f32 %v5732, %v5772
        %v5774 = vpop.f32.mrb[0].mxu0
        %v5775 = vpop.f32.mrb[0].mxu0
        %5776 = vdwg.mxu0
        %v5777 = vpack.c.bf16 %v5607, %v5607
        %v5778 = vpack.c.bf16 %v5609, %v5609
        %v5779 = vpack.c.bf16 %v5771, %v5771
        %v5780 = vpack.c.bf16 %v5773, %v5773
        %v5781 = vld [vmem:[#allocation12] sm:$0xff]
        %v5782 = vld [vmem:[#allocation12 + $0x8] sm:$0xff]
        %v5783 = vld [vmem:[#allocation12 + $0x10] sm:$0xff]
        %v5784 = vld [vmem:[#allocation12 + $0x18] sm:$0xff]
        %v5785 = vld [vmem:[#allocation12 + $0x20] sm:$0xff]
        %v5786 = vld [vmem:[#allocation12 + $0x28] sm:$0xff]
        %v5787 = vld [vmem:[#allocation12 + $0x30] sm:$0xff]
        %v5788 = vld [vmem:[#allocation12 + $0x38] sm:$0xff]
        %v5789 = vld [vmem:[#allocation12 + $0x40] sm:$0xff]
        %v5790 = vld [vmem:[#allocation12 + $0x48] sm:$0xff]
        %v5791 = vld [vmem:[#allocation12 + $0x50] sm:$0xff]
        %v5792 = vld [vmem:[#allocation12 + $0x58] sm:$0xff]
        %v5793 = vld [vmem:[#allocation12 + $0x60] sm:$0xff]
        %v5794 = vld [vmem:[#allocation12 + $0x68] sm:$0xff]
        %v5795 = vld [vmem:[#allocation12 + $0x70] sm:$0xff]
        %v5796 = vld [vmem:[#allocation12 + $0x78] sm:$0xff]
        %v5797 = vld [vmem:[#allocation12 + $0x80] sm:$0xff]
        %v5798 = vld [vmem:[#allocation12 + $0x88] sm:$0xff]
        %v5799 = vld [vmem:[#allocation12 + $0x90] sm:$0xff]
        %v5800 = vld [vmem:[#allocation12 + $0x98] sm:$0xff]
        %v5801 = vld [vmem:[#allocation12 + $0xa0] sm:$0xff]
        %v5802 = vld [vmem:[#allocation12 + $0xa8] sm:$0xff]
        %v5803 = vld [vmem:[#allocation12 + $0xb0] sm:$0xff]
        %v5804 = vld [vmem:[#allocation12 + $0xb8] sm:$0xff]
        %v5805 = vld [vmem:[#allocation12 + $0xc0] sm:$0xff]
        %v5806 = vld [vmem:[#allocation12 + $0xc8] sm:$0xff]
        %v5807 = vld [vmem:[#allocation12 + $0xd0] sm:$0xff]
        %v5808 = vld [vmem:[#allocation12 + $0xd8] sm:$0xff]
        %v5809 = vld [vmem:[#allocation12 + $0xe0] sm:$0xff]
        %v5810 = vld [vmem:[#allocation12 + $0xe8] sm:$0xff]
        %v5811 = vld [vmem:[#allocation12 + $0xf0] sm:$0xff]
        %v5812 = vld [vmem:[#allocation12 + $0xf8] sm:$0xff]
        %v5813 = vld [vmem:[#allocation12 + $0x100] sm:$0xff]
        %v5814 = vld [vmem:[#allocation12 + $0x108] sm:$0xff]
        %v5815 = vld [vmem:[#allocation12 + $0x110] sm:$0xff]
        %v5816 = vld [vmem:[#allocation12 + $0x118] sm:$0xff]
        %v5817 = vld [vmem:[#allocation12 + $0x120] sm:$0xff]
        %v5818 = vld [vmem:[#allocation12 + $0x128] sm:$0xff]
        %v5819 = vld [vmem:[#allocation12 + $0x130] sm:$0xff]
        %v5820 = vld [vmem:[#allocation12 + $0x138] sm:$0xff]
        %v5821 = vld [vmem:[#allocation12 + $0x140] sm:$0xff]
        %v5822 = vld [vmem:[#allocation12 + $0x148] sm:$0xff]
        %v5823 = vld [vmem:[#allocation12 + $0x150] sm:$0xff]
        %v5824 = vld [vmem:[#allocation12 + $0x158] sm:$0xff]
        %v5825 = vld [vmem:[#allocation12 + $0x160] sm:$0xff]
        %v5826 = vld [vmem:[#allocation12 + $0x168] sm:$0xff]
        %v5827 = vld [vmem:[#allocation12 + $0x170] sm:$0xff]
        %v5828 = vld [vmem:[#allocation12 + $0x178] sm:$0xff]
        %v5829 = vld [vmem:[#allocation12 + $0x180] sm:$0xff]
        %v5830 = vld [vmem:[#allocation12 + $0x188] sm:$0xff]
        %v5831 = vld [vmem:[#allocation12 + $0x190] sm:$0xff]
        %v5832 = vld [vmem:[#allocation12 + $0x198] sm:$0xff]
        %v5833 = vld [vmem:[#allocation12 + $0x1a0] sm:$0xff]
        %v5834 = vld [vmem:[#allocation12 + $0x1a8] sm:$0xff]
        %v5835 = vld [vmem:[#allocation12 + $0x1b0] sm:$0xff]
        %v5836 = vld [vmem:[#allocation12 + $0x1b8] sm:$0xff]
        %v5837 = vld [vmem:[#allocation12 + $0x1c0] sm:$0xff]
        %v5838 = vld [vmem:[#allocation12 + $0x1c8] sm:$0xff]
        %v5839 = vld [vmem:[#allocation12 + $0x1d0] sm:$0xff]
        %v5840 = vld [vmem:[#allocation12 + $0x1d8] sm:$0xff]
        %v5841 = vld [vmem:[#allocation12 + $0x1e0] sm:$0xff]
        %v5842 = vld [vmem:[#allocation12 + $0x1e8] sm:$0xff]
        %v5843 = vld [vmem:[#allocation12 + $0x1f0] sm:$0xff]
        %v5844 = vld [vmem:[#allocation12 + $0x1f8] sm:$0xff]
        %v5845 = vld [vmem:[#allocation12 + $0x200] sm:$0xff]
        %v5846 = vld [vmem:[#allocation12 + $0x208] sm:$0xff]
        %v5847 = vld [vmem:[#allocation12 + $0x210] sm:$0xff]
        %v5848 = vld [vmem:[#allocation12 + $0x218] sm:$0xff]
        %v5849 = vld [vmem:[#allocation12 + $0x220] sm:$0xff]
        %v5850 = vld [vmem:[#allocation12 + $0x228] sm:$0xff]
        %v5851 = vld [vmem:[#allocation12 + $0x230] sm:$0xff]
        %v5852 = vld [vmem:[#allocation12 + $0x238] sm:$0xff]
        %v5853 = vld [vmem:[#allocation12 + $0x240] sm:$0xff]
        %v5854 = vld [vmem:[#allocation12 + $0x248] sm:$0xff]
        %v5855 = vld [vmem:[#allocation12 + $0x250] sm:$0xff]
        %v5856 = vld [vmem:[#allocation12 + $0x258] sm:$0xff]
        %v5857 = vld [vmem:[#allocation12 + $0x260] sm:$0xff]
        %v5858 = vld [vmem:[#allocation12 + $0x268] sm:$0xff]
        %v5859 = vld [vmem:[#allocation12 + $0x270] sm:$0xff]
        %v5860 = vld [vmem:[#allocation12 + $0x278] sm:$0xff]
        %v5861 = vld [vmem:[#allocation12 + $0x280] sm:$0xff]
        %v5862 = vld [vmem:[#allocation12 + $0x288] sm:$0xff]
        %v5863 = vld [vmem:[#allocation12 + $0x290] sm:$0xff]
        %v5864 = vld [vmem:[#allocation12 + $0x298] sm:$0xff]
        %v5865 = vld [vmem:[#allocation12 + $0x2a0] sm:$0xff]
        %v5866 = vld [vmem:[#allocation12 + $0x2a8] sm:$0xff]
        %v5867 = vld [vmem:[#allocation12 + $0x2b0] sm:$0xff]
        %v5868 = vld [vmem:[#allocation12 + $0x2b8] sm:$0xff]
        %v5869 = vld [vmem:[#allocation12 + $0x2c0] sm:$0xff]
        %v5870 = vld [vmem:[#allocation12 + $0x2c8] sm:$0xff]
        %v5871 = vld [vmem:[#allocation12 + $0x2d0] sm:$0xff]
        %v5872 = vld [vmem:[#allocation12 + $0x2d8] sm:$0xff]
        %v5873 = vld [vmem:[#allocation12 + $0x2e0] sm:$0xff]
        %v5874 = vld [vmem:[#allocation12 + $0x2e8] sm:$0xff]
        %v5875 = vld [vmem:[#allocation12 + $0x2f0] sm:$0xff]
        %v5876 = vld [vmem:[#allocation12 + $0x2f8] sm:$0xff]
        %v5877 = vld [vmem:[#allocation12 + $0x300] sm:$0xff]
        %v5878 = vld [vmem:[#allocation12 + $0x308] sm:$0xff]
        %v5879 = vld [vmem:[#allocation12 + $0x310] sm:$0xff]
        %v5880 = vld [vmem:[#allocation12 + $0x318] sm:$0xff]
        %v5881 = vld [vmem:[#allocation12 + $0x320] sm:$0xff]
        %v5882 = vld [vmem:[#allocation12 + $0x328] sm:$0xff]
        %v5883 = vld [vmem:[#allocation12 + $0x330] sm:$0xff]
        %v5884 = vld [vmem:[#allocation12 + $0x338] sm:$0xff]
        %v5885 = vld [vmem:[#allocation12 + $0x340] sm:$0xff]
        %v5886 = vld [vmem:[#allocation12 + $0x348] sm:$0xff]
        %v5887 = vld [vmem:[#allocation12 + $0x350] sm:$0xff]
        %v5888 = vld [vmem:[#allocation12 + $0x358] sm:$0xff]
        %v5889 = vld [vmem:[#allocation12 + $0x360] sm:$0xff]
        %v5890 = vld [vmem:[#allocation12 + $0x368] sm:$0xff]
        %v5891 = vld [vmem:[#allocation12 + $0x370] sm:$0xff]
        %v5892 = vld [vmem:[#allocation12 + $0x378] sm:$0xff]
        %v5893 = vld [vmem:[#allocation12 + $0x380] sm:$0xff]
        %v5894 = vld [vmem:[#allocation12 + $0x388] sm:$0xff]
        %v5895 = vld [vmem:[#allocation12 + $0x390] sm:$0xff]
        %v5896 = vld [vmem:[#allocation12 + $0x398] sm:$0xff]
        %v5897 = vld [vmem:[#allocation12 + $0x3a0] sm:$0xff]
        %v5898 = vld [vmem:[#allocation12 + $0x3a8] sm:$0xff]
        %v5899 = vld [vmem:[#allocation12 + $0x3b0] sm:$0xff]
        %v5900 = vld [vmem:[#allocation12 + $0x3b8] sm:$0xff]
        %v5901 = vld [vmem:[#allocation12 + $0x3c0] sm:$0xff]
        %v5902 = vld [vmem:[#allocation12 + $0x3c8] sm:$0xff]
        %v5903 = vld [vmem:[#allocation12 + $0x3d0] sm:$0xff]
        %v5904 = vld [vmem:[#allocation12 + $0x3d8] sm:$0xff]
        %v5905 = vld [vmem:[#allocation12 + $0x3e0] sm:$0xff]
        %v5906 = vld [vmem:[#allocation12 + $0x3e8] sm:$0xff]
        %v5907 = vld [vmem:[#allocation12 + $0x3f0] sm:$0xff]
        %v5908 = vld [vmem:[#allocation12 + $0x3f8] sm:$0xff]
        %v5909 = vld [vmem:[%s9] sm:$0xf]
        %v5911 = vlaneseq
        %v5912 = vshrl.u32 %v5911, 7
        %v5913 = vsub.s32 0, %v5912
        %v5914 = vrot.slane %v5909, %v5913
        %v5915 = vlaneseq
        %v5916 = vshrl.u32 %v5915, 7
        %v5917 = vsub.s32 1, %v5916
        %v5918 = vrot.slane %v5909, %v5917
        %v5919 = vlaneseq
        %v5920 = vshrl.u32 %v5919, 7
        %v5921 = vsub.s32 2, %v5920
        %v5922 = vrot.slane %v5909, %v5921
        %v5923 = vlaneseq
        %v5924 = vshrl.u32 %v5923, 7
        %v5925 = vsub.s32 3, %v5924
        %v5926 = vrot.slane %v5909, %v5925
        %v6059 = vunpack.c.l.b16 %v5781
        %v6060 = vunpack.c.h.b16 %v5781
        %v6061 = vunpack.c.l.b16 %v5782
        %v6062 = vunpack.c.h.b16 %v5782
        %v6063 = vunpack.c.l.b16 %v5783
        %v6064 = vunpack.c.h.b16 %v5783
        %v6065 = vunpack.c.l.b16 %v5784
        %v6066 = vunpack.c.h.b16 %v5784
        %v6067 = vunpack.c.l.b16 %v5785
        %v6068 = vunpack.c.h.b16 %v5785
        %v6069 = vunpack.c.l.b16 %v5786
        %v6070 = vunpack.c.h.b16 %v5786
        %v6071 = vunpack.c.l.b16 %v5787
        %v6072 = vunpack.c.h.b16 %v5787
        %v6073 = vunpack.c.l.b16 %v5788
        %v6074 = vunpack.c.h.b16 %v5788
        %v6075 = vunpack.c.l.b16 %v5789
        %v6076 = vunpack.c.h.b16 %v5789
        %v6077 = vunpack.c.l.b16 %v5790
        %v6078 = vunpack.c.h.b16 %v5790
        %v6079 = vunpack.c.l.b16 %v5791
        %v6080 = vunpack.c.h.b16 %v5791
        %v6081 = vunpack.c.l.b16 %v5792
        %v6082 = vunpack.c.h.b16 %v5792
        %v6083 = vunpack.c.l.b16 %v5793
        %v6084 = vunpack.c.h.b16 %v5793
        %v6085 = vunpack.c.l.b16 %v5794
        %v6086 = vunpack.c.h.b16 %v5794
        %v6087 = vunpack.c.l.b16 %v5795
        %v6088 = vunpack.c.h.b16 %v5795
        %v6089 = vunpack.c.l.b16 %v5796
        %v6090 = vunpack.c.h.b16 %v5796
        %v6091 = vunpack.c.l.b16 %v5797
        %v6092 = vunpack.c.h.b16 %v5797
        %v6093 = vunpack.c.l.b16 %v5798
        %v6094 = vunpack.c.h.b16 %v5798
        %v6095 = vunpack.c.l.b16 %v5799
        %v6096 = vunpack.c.h.b16 %v5799
        %v6097 = vunpack.c.l.b16 %v5800
        %v6098 = vunpack.c.h.b16 %v5800
        %v6099 = vunpack.c.l.b16 %v5801
        %v6100 = vunpack.c.h.b16 %v5801
        %v6101 = vunpack.c.l.b16 %v5802
        %v6102 = vunpack.c.h.b16 %v5802
        %v6103 = vunpack.c.l.b16 %v5803
        %v6104 = vunpack.c.h.b16 %v5803
        %v6105 = vunpack.c.l.b16 %v5804
        %v6106 = vunpack.c.h.b16 %v5804
        %v6107 = vunpack.c.l.b16 %v5805
        %v6108 = vunpack.c.h.b16 %v5805
        %v6109 = vunpack.c.l.b16 %v5806
        %v6110 = vunpack.c.h.b16 %v5806
        %v6111 = vunpack.c.l.b16 %v5807
        %v6112 = vunpack.c.h.b16 %v5807
        %v6113 = vunpack.c.l.b16 %v5808
        %v6114 = vunpack.c.h.b16 %v5808
        %v6115 = vunpack.c.l.b16 %v5809
        %v6116 = vunpack.c.h.b16 %v5809
        %v6117 = vunpack.c.l.b16 %v5810
        %v6118 = vunpack.c.h.b16 %v5810
        %v6119 = vunpack.c.l.b16 %v5811
        %v6120 = vunpack.c.h.b16 %v5811
        %v6121 = vunpack.c.l.b16 %v5812
        %v6122 = vunpack.c.h.b16 %v5812
        %v6123 = vunpack.c.l.b16 %v5813
        %v6124 = vunpack.c.h.b16 %v5813
        %v6125 = vunpack.c.l.b16 %v5814
        %v6126 = vunpack.c.h.b16 %v5814
        %v6127 = vunpack.c.l.b16 %v5815
        %v6128 = vunpack.c.h.b16 %v5815
        %v6129 = vunpack.c.l.b16 %v5816
        %v6130 = vunpack.c.h.b16 %v5816
        %v6131 = vunpack.c.l.b16 %v5817
        %v6132 = vunpack.c.h.b16 %v5817
        %v6133 = vunpack.c.l.b16 %v5818
        %v6134 = vunpack.c.h.b16 %v5818
        %v6135 = vunpack.c.l.b16 %v5819
        %v6136 = vunpack.c.h.b16 %v5819
        %v6137 = vunpack.c.l.b16 %v5820
        %v6138 = vunpack.c.h.b16 %v5820
        %v6139 = vunpack.c.l.b16 %v5821
        %v6140 = vunpack.c.h.b16 %v5821
        %v6141 = vunpack.c.l.b16 %v5822
        %v6142 = vunpack.c.h.b16 %v5822
        %v6143 = vunpack.c.l.b16 %v5823
        %v6144 = vunpack.c.h.b16 %v5823
        %v6145 = vunpack.c.l.b16 %v5824
        %v6146 = vunpack.c.h.b16 %v5824
        %v6147 = vunpack.c.l.b16 %v5825
        %v6148 = vunpack.c.h.b16 %v5825
        %v6149 = vunpack.c.l.b16 %v5826
        %v6150 = vunpack.c.h.b16 %v5826
        %v6151 = vunpack.c.l.b16 %v5827
        %v6152 = vunpack.c.h.b16 %v5827
        %v6153 = vunpack.c.l.b16 %v5828
        %v6154 = vunpack.c.h.b16 %v5828
        %v6155 = vunpack.c.l.b16 %v5829
        %v6156 = vunpack.c.h.b16 %v5829
        %v6157 = vunpack.c.l.b16 %v5830
        %v6158 = vunpack.c.h.b16 %v5830
        %v6159 = vunpack.c.l.b16 %v5831
        %v6160 = vunpack.c.h.b16 %v5831
        %v6161 = vunpack.c.l.b16 %v5832
        %v6162 = vunpack.c.h.b16 %v5832
        %v6163 = vunpack.c.l.b16 %v5833
        %v6164 = vunpack.c.h.b16 %v5833
        %v6165 = vunpack.c.l.b16 %v5834
        %v6166 = vunpack.c.h.b16 %v5834
        %v6167 = vunpack.c.l.b16 %v5835
        %v6168 = vunpack.c.h.b16 %v5835
        %v6169 = vunpack.c.l.b16 %v5836
        %v6170 = vunpack.c.h.b16 %v5836
        %v6171 = vunpack.c.l.b16 %v5837
        %v6172 = vunpack.c.h.b16 %v5837
        %v6173 = vunpack.c.l.b16 %v5838
        %v6174 = vunpack.c.h.b16 %v5838
        %v6175 = vunpack.c.l.b16 %v5839
        %v6176 = vunpack.c.h.b16 %v5839
        %v6177 = vunpack.c.l.b16 %v5840
        %v6178 = vunpack.c.h.b16 %v5840
        %v6179 = vunpack.c.l.b16 %v5841
        %v6180 = vunpack.c.h.b16 %v5841
        %v6181 = vunpack.c.l.b16 %v5842
        %v6182 = vunpack.c.h.b16 %v5842
        %v6183 = vunpack.c.l.b16 %v5843
        %v6184 = vunpack.c.h.b16 %v5843
        %v6185 = vunpack.c.l.b16 %v5844
        %v6186 = vunpack.c.h.b16 %v5844
        %v6187 = vunpack.c.l.b16 %v5845
        %v6188 = vunpack.c.h.b16 %v5845
        %v6189 = vunpack.c.l.b16 %v5846
        %v6190 = vunpack.c.h.b16 %v5846
        %v6191 = vunpack.c.l.b16 %v5847
        %v6192 = vunpack.c.h.b16 %v5847
        %v6193 = vunpack.c.l.b16 %v5848
        %v6194 = vunpack.c.h.b16 %v5848
        %v6195 = vunpack.c.l.b16 %v5849
        %v6196 = vunpack.c.h.b16 %v5849
        %v6197 = vunpack.c.l.b16 %v5850
        %v6198 = vunpack.c.h.b16 %v5850
        %v6199 = vunpack.c.l.b16 %v5851
        %v6200 = vunpack.c.h.b16 %v5851
        %v6201 = vunpack.c.l.b16 %v5852
        %v6202 = vunpack.c.h.b16 %v5852
        %v6203 = vunpack.c.l.b16 %v5853
        %v6204 = vunpack.c.h.b16 %v5853
        %v6205 = vunpack.c.l.b16 %v5854
        %v6206 = vunpack.c.h.b16 %v5854
        %v6207 = vunpack.c.l.b16 %v5855
        %v6208 = vunpack.c.h.b16 %v5855
        %v6209 = vunpack.c.l.b16 %v5856
        %v6210 = vunpack.c.h.b16 %v5856
        %v6211 = vunpack.c.l.b16 %v5857
        %v6212 = vunpack.c.h.b16 %v5857
        %v6213 = vunpack.c.l.b16 %v5858
        %v6214 = vunpack.c.h.b16 %v5858
        %v6215 = vunpack.c.l.b16 %v5859
        %v6216 = vunpack.c.h.b16 %v5859
        %v6217 = vunpack.c.l.b16 %v5860
        %v6218 = vunpack.c.h.b16 %v5860
        %v6219 = vunpack.c.l.b16 %v5861
        %v6220 = vunpack.c.h.b16 %v5861
        %v6221 = vunpack.c.l.b16 %v5862
        %v6222 = vunpack.c.h.b16 %v5862
        %v6223 = vunpack.c.l.b16 %v5863
        %v6224 = vunpack.c.h.b16 %v5863
        %v6225 = vunpack.c.l.b16 %v5864
        %v6226 = vunpack.c.h.b16 %v5864
        %v6227 = vunpack.c.l.b16 %v5865
        %v6228 = vunpack.c.h.b16 %v5865
        %v6229 = vunpack.c.l.b16 %v5866
        %v6230 = vunpack.c.h.b16 %v5866
        %v6231 = vunpack.c.l.b16 %v5867
        %v6232 = vunpack.c.h.b16 %v5867
        %v6233 = vunpack.c.l.b16 %v5868
        %v6234 = vunpack.c.h.b16 %v5868
        %v6235 = vunpack.c.l.b16 %v5869
        %v6236 = vunpack.c.h.b16 %v5869
        %v6237 = vunpack.c.l.b16 %v5870
        %v6238 = vunpack.c.h.b16 %v5870
        %v6239 = vunpack.c.l.b16 %v5871
        %v6240 = vunpack.c.h.b16 %v5871
        %v6241 = vunpack.c.l.b16 %v5872
        %v6242 = vunpack.c.h.b16 %v5872
        %v6243 = vunpack.c.l.b16 %v5873
        %v6244 = vunpack.c.h.b16 %v5873
        %v6245 = vunpack.c.l.b16 %v5874
        %v6246 = vunpack.c.h.b16 %v5874
        %v6247 = vunpack.c.l.b16 %v5875
        %v6248 = vunpack.c.h.b16 %v5875
        %v6249 = vunpack.c.l.b16 %v5876
        %v6250 = vunpack.c.h.b16 %v5876
        %v6251 = vunpack.c.l.b16 %v5877
        %v6252 = vunpack.c.h.b16 %v5877
        %v6253 = vunpack.c.l.b16 %v5878
        %v6254 = vunpack.c.h.b16 %v5878
        %v6255 = vunpack.c.l.b16 %v5879
        %v6256 = vunpack.c.h.b16 %v5879
        %v6257 = vunpack.c.l.b16 %v5880
        %v6258 = vunpack.c.h.b16 %v5880
        %v6259 = vunpack.c.l.b16 %v5881
        %v6260 = vunpack.c.h.b16 %v5881
        %v6261 = vunpack.c.l.b16 %v5882
        %v6262 = vunpack.c.h.b16 %v5882
        %v6263 = vunpack.c.l.b16 %v5883
        %v6264 = vunpack.c.h.b16 %v5883
        %v6265 = vunpack.c.l.b16 %v5884
        %v6266 = vunpack.c.h.b16 %v5884
        %v6267 = vunpack.c.l.b16 %v5885
        %v6268 = vunpack.c.h.b16 %v5885
        %v6269 = vunpack.c.l.b16 %v5886
        %v6270 = vunpack.c.h.b16 %v5886
        %v6271 = vunpack.c.l.b16 %v5887
        %v6272 = vunpack.c.h.b16 %v5887
        %v6273 = vunpack.c.l.b16 %v5888
        %v6274 = vunpack.c.h.b16 %v5888
        %v6275 = vunpack.c.l.b16 %v5889
        %v6276 = vunpack.c.h.b16 %v5889
        %v6277 = vunpack.c.l.b16 %v5890
        %v6278 = vunpack.c.h.b16 %v5890
        %v6279 = vunpack.c.l.b16 %v5891
        %v6280 = vunpack.c.h.b16 %v5891
        %v6281 = vunpack.c.l.b16 %v5892
        %v6282 = vunpack.c.h.b16 %v5892
        %v6283 = vunpack.c.l.b16 %v5893
        %v6284 = vunpack.c.h.b16 %v5893
        %v6285 = vunpack.c.l.b16 %v5894
        %v6286 = vunpack.c.h.b16 %v5894
        %v6287 = vunpack.c.l.b16 %v5895
        %v6288 = vunpack.c.h.b16 %v5895
        %v6289 = vunpack.c.l.b16 %v5896
        %v6290 = vunpack.c.h.b16 %v5896
        %v6291 = vunpack.c.l.b16 %v5897
        %v6292 = vunpack.c.h.b16 %v5897
        %v6293 = vunpack.c.l.b16 %v5898
        %v6294 = vunpack.c.h.b16 %v5898
        %v6295 = vunpack.c.l.b16 %v5899
        %v6296 = vunpack.c.h.b16 %v5899
        %v6297 = vunpack.c.l.b16 %v5900
        %v6298 = vunpack.c.h.b16 %v5900
        %v6299 = vunpack.c.l.b16 %v5901
        %v6300 = vunpack.c.h.b16 %v5901
        %v6301 = vunpack.c.l.b16 %v5902
        %v6302 = vunpack.c.h.b16 %v5902
        %v6303 = vunpack.c.l.b16 %v5903
        %v6304 = vunpack.c.h.b16 %v5903
        %v6305 = vunpack.c.l.b16 %v5904
        %v6306 = vunpack.c.h.b16 %v5904
        %v6307 = vunpack.c.l.b16 %v5905
        %v6308 = vunpack.c.h.b16 %v5905
        %v6309 = vunpack.c.l.b16 %v5906
        %v6310 = vunpack.c.h.b16 %v5906
        %v6311 = vunpack.c.l.b16 %v5907
        %v6312 = vunpack.c.h.b16 %v5907
        %v6313 = vunpack.c.l.b16 %v5908
        %v6314 = vunpack.c.h.b16 %v5908
        %v6315 = vpack.c.b16 %v6063, %v6059
        %v6316 = vpack.c.b16 %v6064, %v6060
        %v6317 = vpack.c.b16 %v6065, %v6061
        %v6318 = vpack.c.b16 %v6066, %v6062
        %v6319 = vpack.c.b16 %v6071, %v6067
        %v6320 = vpack.c.b16 %v6072, %v6068
        %v6321 = vpack.c.b16 %v6073, %v6069
        %v6322 = vpack.c.b16 %v6074, %v6070
        %v6323 = vpack.c.b16 %v6079, %v6075
        %v6324 = vpack.c.b16 %v6080, %v6076
        %v6325 = vpack.c.b16 %v6081, %v6077
        %v6326 = vpack.c.b16 %v6082, %v6078
        %v6327 = vpack.c.b16 %v6087, %v6083
        %v6328 = vpack.c.b16 %v6088, %v6084
        %v6329 = vpack.c.b16 %v6089, %v6085
        %v6330 = vpack.c.b16 %v6090, %v6086
        %v6331 = vpack.c.b16 %v6095, %v6091
        %v6332 = vpack.c.b16 %v6096, %v6092
        %v6333 = vpack.c.b16 %v6097, %v6093
        %v6334 = vpack.c.b16 %v6098, %v6094
        %v6335 = vpack.c.b16 %v6103, %v6099
        %v6336 = vpack.c.b16 %v6104, %v6100
        %v6337 = vpack.c.b16 %v6105, %v6101
        %v6338 = vpack.c.b16 %v6106, %v6102
        %v6339 = vpack.c.b16 %v6111, %v6107
        %v6340 = vpack.c.b16 %v6112, %v6108
        %v6341 = vpack.c.b16 %v6113, %v6109
        %v6342 = vpack.c.b16 %v6114, %v6110
        %v6343 = vpack.c.b16 %v6119, %v6115
        %v6344 = vpack.c.b16 %v6120, %v6116
        %v6345 = vpack.c.b16 %v6121, %v6117
        %v6346 = vpack.c.b16 %v6122, %v6118
        %v6347 = vpack.c.b16 %v6127, %v6123
        %v6348 = vpack.c.b16 %v6128, %v6124
        %v6349 = vpack.c.b16 %v6129, %v6125
        %v6350 = vpack.c.b16 %v6130, %v6126
        %v6351 = vpack.c.b16 %v6135, %v6131
        %v6352 = vpack.c.b16 %v6136, %v6132
        %v6353 = vpack.c.b16 %v6137, %v6133
        %v6354 = vpack.c.b16 %v6138, %v6134
        %v6355 = vpack.c.b16 %v6143, %v6139
        %v6356 = vpack.c.b16 %v6144, %v6140
        %v6357 = vpack.c.b16 %v6145, %v6141
        %v6358 = vpack.c.b16 %v6146, %v6142
        %v6359 = vpack.c.b16 %v6151, %v6147
        %v6360 = vpack.c.b16 %v6152, %v6148
        %v6361 = vpack.c.b16 %v6153, %v6149
        %v6362 = vpack.c.b16 %v6154, %v6150
        %v6363 = vpack.c.b16 %v6159, %v6155
        %v6364 = vpack.c.b16 %v6160, %v6156
        %v6365 = vpack.c.b16 %v6161, %v6157
        %v6366 = vpack.c.b16 %v6162, %v6158
        %v6367 = vpack.c.b16 %v6167, %v6163
        %v6368 = vpack.c.b16 %v6168, %v6164
        %v6369 = vpack.c.b16 %v6169, %v6165
        %v6370 = vpack.c.b16 %v6170, %v6166
        %v6371 = vpack.c.b16 %v6175, %v6171
        %v6372 = vpack.c.b16 %v6176, %v6172
        %v6373 = vpack.c.b16 %v6177, %v6173
        %v6374 = vpack.c.b16 %v6178, %v6174
        %v6375 = vpack.c.b16 %v6183, %v6179
        %v6376 = vpack.c.b16 %v6184, %v6180
        %v6377 = vpack.c.b16 %v6185, %v6181
        %v6378 = vpack.c.b16 %v6186, %v6182
        %v6379 = vpack.c.b16 %v6191, %v6187
        %v6380 = vpack.c.b16 %v6192, %v6188
        %v6381 = vpack.c.b16 %v6193, %v6189
        %v6382 = vpack.c.b16 %v6194, %v6190
        %v6383 = vpack.c.b16 %v6199, %v6195
        %v6384 = vpack.c.b16 %v6200, %v6196
        %v6385 = vpack.c.b16 %v6201, %v6197
        %v6386 = vpack.c.b16 %v6202, %v6198
        %v6387 = vpack.c.b16 %v6207, %v6203
        %v6388 = vpack.c.b16 %v6208, %v6204
        %v6389 = vpack.c.b16 %v6209, %v6205
        %v6390 = vpack.c.b16 %v6210, %v6206
        %v6391 = vpack.c.b16 %v6215, %v6211
        %v6392 = vpack.c.b16 %v6216, %v6212
        %v6393 = vpack.c.b16 %v6217, %v6213
        %v6394 = vpack.c.b16 %v6218, %v6214
        %v6395 = vpack.c.b16 %v6223, %v6219
        %v6396 = vpack.c.b16 %v6224, %v6220
        %v6397 = vpack.c.b16 %v6225, %v6221
        %v6398 = vpack.c.b16 %v6226, %v6222
        %v6399 = vpack.c.b16 %v6231, %v6227
        %v6400 = vpack.c.b16 %v6232, %v6228
        %v6401 = vpack.c.b16 %v6233, %v6229
        %v6402 = vpack.c.b16 %v6234, %v6230
        %v6403 = vpack.c.b16 %v6239, %v6235
        %v6404 = vpack.c.b16 %v6240, %v6236
        %v6405 = vpack.c.b16 %v6241, %v6237
        %v6406 = vpack.c.b16 %v6242, %v6238
        %v6407 = vpack.c.b16 %v6247, %v6243
        %v6408 = vpack.c.b16 %v6248, %v6244
        %v6409 = vpack.c.b16 %v6249, %v6245
        %v6410 = vpack.c.b16 %v6250, %v6246
        %v6411 = vpack.c.b16 %v6255, %v6251
        %v6412 = vpack.c.b16 %v6256, %v6252
        %v6413 = vpack.c.b16 %v6257, %v6253
        %v6414 = vpack.c.b16 %v6258, %v6254
        %v6415 = vpack.c.b16 %v6263, %v6259
        %v6416 = vpack.c.b16 %v6264, %v6260
        %v6417 = vpack.c.b16 %v6265, %v6261
        %v6418 = vpack.c.b16 %v6266, %v6262
        %v6419 = vpack.c.b16 %v6271, %v6267
        %v6420 = vpack.c.b16 %v6272, %v6268
        %v6421 = vpack.c.b16 %v6273, %v6269
        %v6422 = vpack.c.b16 %v6274, %v6270
        %v6423 = vpack.c.b16 %v6279, %v6275
        %v6424 = vpack.c.b16 %v6280, %v6276
        %v6425 = vpack.c.b16 %v6281, %v6277
        %v6426 = vpack.c.b16 %v6282, %v6278
        %v6427 = vpack.c.b16 %v6287, %v6283
        %v6428 = vpack.c.b16 %v6288, %v6284
        %v6429 = vpack.c.b16 %v6289, %v6285
        %v6430 = vpack.c.b16 %v6290, %v6286
        %v6431 = vpack.c.b16 %v6295, %v6291
        %v6432 = vpack.c.b16 %v6296, %v6292
        %v6433 = vpack.c.b16 %v6297, %v6293
        %v6434 = vpack.c.b16 %v6298, %v6294
        %v6435 = vpack.c.b16 %v6303, %v6299
        %v6436 = vpack.c.b16 %v6304, %v6300
        %v6437 = vpack.c.b16 %v6305, %v6301
        %v6438 = vpack.c.b16 %v6306, %v6302
        %v6439 = vpack.c.b16 %v6311, %v6307
        %v6440 = vpack.c.b16 %v6312, %v6308
        %v6441 = vpack.c.b16 %v6313, %v6309
        %v6442 = vpack.c.b16 %v6314, %v6310
        %6571 = vmatprep.subr.bf16.mxu0 %v6316
        %6572 = vmatpush1.bf16.msra.mxu0 %v6315
        %6573 = vmatprep.subr.bf16.mxu0 %v6320
        %6574 = vmatpush1.bf16.msra.mxu0 %v6319
        %6575 = vmatprep.subr.bf16.mxu0 %v6324
        %6576 = vmatpush1.bf16.msra.mxu0 %v6323
        %6577 = vmatprep.subr.bf16.mxu0 %v6328
        %6578 = vmatpush1.bf16.msra.mxu0 %v6327
        %6579 = vmatprep.subr.bf16.mxu0 %v6332
        %6580 = vmatpush1.bf16.msra.mxu0 %v6331
        %6581 = vmatprep.subr.bf16.mxu0 %v6336
        %6582 = vmatpush1.bf16.msra.mxu0 %v6335
        %6583 = vmatprep.subr.bf16.mxu0 %v6340
        %6584 = vmatpush1.bf16.msra.mxu0 %v6339
        %6585 = vmatprep.subr.bf16.mxu0 %v6344
        %6586 = vmatpush1.bf16.msra.mxu0 %v6343
        %6587 = vmatprep.subr.bf16.mxu0 %v6348
        %6588 = vmatpush1.bf16.msra.mxu0 %v6347
        %6589 = vmatprep.subr.bf16.mxu0 %v6352
        %6590 = vmatpush1.bf16.msra.mxu0 %v6351
        %6591 = vmatprep.subr.bf16.mxu0 %v6356
        %6592 = vmatpush1.bf16.msra.mxu0 %v6355
        %6593 = vmatprep.subr.bf16.mxu0 %v6360
        %6594 = vmatpush1.bf16.msra.mxu0 %v6359
        %6595 = vmatprep.subr.bf16.mxu0 %v6364
        %6596 = vmatpush1.bf16.msra.mxu0 %v6363
        %6597 = vmatprep.subr.bf16.mxu0 %v6368
        %6598 = vmatpush1.bf16.msra.mxu0 %v6367
        %6599 = vmatprep.subr.bf16.mxu0 %v6372
        %6600 = vmatpush1.bf16.msra.mxu0 %v6371
        %6601 = vmatprep.subr.bf16.mxu0 %v6376
        %6602 = vmatpush1.bf16.msra.mxu0 %v6375
        %6603 = vmatprep.mubr.bf16.mxu0 %v5778
        %6604 = vmatmul.mubr.bf16.gmra.mrb[0].mxu0 %v5777
        %v6605 = vpop.f32.mrb[0].mxu0
        %v6606 = vadd.f32 %v5914, %v6605
        %v6607 = vpop.f32.mrb[0].mxu0
        %v6608 = vadd.f32 %v5918, %v6607
        %v6609 = vpop.f32.mrb[0].mxu0
        %v6610 = vpop.f32.mrb[0].mxu0
        %6611 = vdwg.mxu0
        %6612 = vmatprep.subr.bf16.mxu0 %v6380
        %6613 = vmatpush1.bf16.msra.mxu0 %v6379
        %6614 = vmatprep.subr.bf16.mxu0 %v6384
        %6615 = vmatpush1.bf16.msra.mxu0 %v6383
        %6616 = vmatprep.subr.bf16.mxu0 %v6388
        %6617 = vmatpush1.bf16.msra.mxu0 %v6387
        %6618 = vmatprep.subr.bf16.mxu0 %v6392
        %6619 = vmatpush1.bf16.msra.mxu0 %v6391
        %6620 = vmatprep.subr.bf16.mxu0 %v6396
        %6621 = vmatpush1.bf16.msra.mxu0 %v6395
        %6622 = vmatprep.subr.bf16.mxu0 %v6400
        %6623 = vmatpush1.bf16.msra.mxu0 %v6399
        %6624 = vmatprep.subr.bf16.mxu0 %v6404
        %6625 = vmatpush1.bf16.msra.mxu0 %v6403
        %6626 = vmatprep.subr.bf16.mxu0 %v6408
        %6627 = vmatpush1.bf16.msra.mxu0 %v6407
        %6628 = vmatprep.subr.bf16.mxu0 %v6412
        %6629 = vmatpush1.bf16.msra.mxu0 %v6411
        %6630 = vmatprep.subr.bf16.mxu0 %v6416
        %6631 = vmatpush1.bf16.msra.mxu0 %v6415
        %6632 = vmatprep.subr.bf16.mxu0 %v6420
        %6633 = vmatpush1.bf16.msra.mxu0 %v6419
        %6634 = vmatprep.subr.bf16.mxu0 %v6424
        %6635 = vmatpush1.bf16.msra.mxu0 %v6423
        %6636 = vmatprep.subr.bf16.mxu0 %v6428
        %6637 = vmatpush1.bf16.msra.mxu0 %v6427
        %6638 = vmatprep.subr.bf16.mxu0 %v6432
        %6639 = vmatpush1.bf16.msra.mxu0 %v6431
        %6640 = vmatprep.subr.bf16.mxu0 %v6436
        %6641 = vmatpush1.bf16.msra.mxu0 %v6435
        %6642 = vmatprep.subr.bf16.mxu0 %v6440
        %6643 = vmatpush1.bf16.msra.mxu0 %v6439
        %6644 = vmatprep.mubr.bf16.mxu0 %v5780
        %6645 = vmatmul.mubr.bf16.gmra.mrb[0].mxu0 %v5779
        %v6646 = vpop.f32.mrb[0].mxu0
        %v6647 = vadd.f32 %v6606, %v6646
        %v6648 = vpop.f32.mrb[0].mxu0
        %v6649 = vadd.f32 %v6608, %v6648
        %v6650 = vpop.f32.mrb[0].mxu0
        %v6651 = vpop.f32.mrb[0].mxu0
        %6652 = vdwg.mxu0
        %6653 = vmatprep.subr.bf16.mxu0 %v6318
        %6654 = vmatpush1.bf16.msra.mxu0 %v6317
        %6655 = vmatprep.subr.bf16.mxu0 %v6322
        %6656 = vmatpush1.bf16.msra.mxu0 %v6321
        %6657 = vmatprep.subr.bf16.mxu0 %v6326
        %6658 = vmatpush1.bf16.msra.mxu0 %v6325
        %6659 = vmatprep.subr.bf16.mxu0 %v6330
        %6660 = vmatpush1.bf16.msra.mxu0 %v6329
        %6661 = vmatprep.subr.bf16.mxu0 %v6334
        %6662 = vmatpush1.bf16.msra.mxu0 %v6333
        %6663 = vmatprep.subr.bf16.mxu0 %v6338
        %6664 = vmatpush1.bf16.msra.mxu0 %v6337
        %6665 = vmatprep.subr.bf16.mxu0 %v6342
        %6666 = vmatpush1.bf16.msra.mxu0 %v6341
        %6667 = vmatprep.subr.bf16.mxu0 %v6346
        %6668 = vmatpush1.bf16.msra.mxu0 %v6345
        %6669 = vmatprep.subr.bf16.mxu0 %v6350
        %6670 = vmatpush1.bf16.msra.mxu0 %v6349
        %6671 = vmatprep.subr.bf16.mxu0 %v6354
        %6672 = vmatpush1.bf16.msra.mxu0 %v6353
        %6673 = vmatprep.subr.bf16.mxu0 %v6358
        %6674 = vmatpush1.bf16.msra.mxu0 %v6357
        %6675 = vmatprep.subr.bf16.mxu0 %v6362
        %6676 = vmatpush1.bf16.msra.mxu0 %v6361
        %6677 = vmatprep.subr.bf16.mxu0 %v6366
        %6678 = vmatpush1.bf16.msra.mxu0 %v6365
        %6679 = vmatprep.subr.bf16.mxu0 %v6370
        %6680 = vmatpush1.bf16.msra.mxu0 %v6369
        %6681 = vmatprep.subr.bf16.mxu0 %v6374
        %6682 = vmatpush1.bf16.msra.mxu0 %v6373
        %6683 = vmatprep.subr.bf16.mxu0 %v6378
        %6684 = vmatpush1.bf16.msra.mxu0 %v6377
        %6685 = vmatprep.mubr.bf16.mxu0 %v5778
        %6686 = vmatmul.mubr.bf16.gmra.mrb[0].mxu0 %v5777
        %v6687 = vpop.f32.mrb[0].mxu0
        %v6688 = vadd.f32 %v5922, %v6687
        %v6689 = vpop.f32.mrb[0].mxu0
        %v6690 = vadd.f32 %v5926, %v6689
        %v6691 = vpop.f32.mrb[0].mxu0
        %v6692 = vpop.f32.mrb[0].mxu0
        %6693 = vdwg.mxu0
        %6694 = vmatprep.subr.bf16.mxu0 %v6382
        %6695 = vmatpush1.bf16.msra.mxu0 %v6381
        %6696 = vmatprep.subr.bf16.mxu0 %v6386
        %6697 = vmatpush1.bf16.msra.mxu0 %v6385
        %6698 = vmatprep.subr.bf16.mxu0 %v6390
        %6699 = vmatpush1.bf16.msra.mxu0 %v6389
        %6700 = vmatprep.subr.bf16.mxu0 %v6394
        %6701 = vmatpush1.bf16.msra.mxu0 %v6393
        %6702 = vmatprep.subr.bf16.mxu0 %v6398
        %6703 = vmatpush1.bf16.msra.mxu0 %v6397
        %6704 = vmatprep.subr.bf16.mxu0 %v6402
        %6705 = vmatpush1.bf16.msra.mxu0 %v6401
        %6706 = vmatprep.subr.bf16.mxu0 %v6406
        %6707 = vmatpush1.bf16.msra.mxu0 %v6405
        %6708 = vmatprep.subr.bf16.mxu0 %v6410
        %6709 = vmatpush1.bf16.msra.mxu0 %v6409
        %6710 = vmatprep.subr.bf16.mxu0 %v6414
        %6711 = vmatpush1.bf16.msra.mxu0 %v6413
        %6712 = vmatprep.subr.bf16.mxu0 %v6418
        %6713 = vmatpush1.bf16.msra.mxu0 %v6417
        %6714 = vmatprep.subr.bf16.mxu0 %v6422
        %6715 = vmatpush1.bf16.msra.mxu0 %v6421
        %6716 = vmatprep.subr.bf16.mxu0 %v6426
        %6717 = vmatpush1.bf16.msra.mxu0 %v6425
        %6718 = vmatprep.subr.bf16.mxu0 %v6430
        %6719 = vmatpush1.bf16.msra.mxu0 %v6429
        %6720 = vmatprep.subr.bf16.mxu0 %v6434
        %6721 = vmatpush1.bf16.msra.mxu0 %v6433
        %6722 = vmatprep.subr.bf16.mxu0 %v6438
        %6723 = vmatpush1.bf16.msra.mxu0 %v6437
        %6724 = vmatprep.subr.bf16.mxu0 %v6442
        %6725 = vmatpush1.bf16.msra.mxu0 %v6441
        %6726 = vmatprep.mubr.bf16.mxu0 %v5780
        %6727 = vmatmul.mubr.bf16.gmra.mrb[0].mxu0 %v5779
        %v6728 = vpop.f32.mrb[0].mxu0
        %v6729 = vadd.f32 %v6688, %v6728
        %v6730 = vpop.f32.mrb[0].mxu0
        %v6731 = vadd.f32 %v6690, %v6730
        %v6732 = vpop.f32.mrb[0].mxu0
        %v6733 = vpop.f32.mrb[0].mxu0
        %6734 = vdwg.mxu0
        %v6735 = vmax.f32 %v6647, 0.0
        %v6736 = vmax.f32 %v6649, 0.0
        %v6737 = vmax.f32 %v6729, 0.0
        %v6738 = vmax.f32 %v6731, 0.0
        %v6739 = vpack.c.bf16 %v3834, %v3834
        %v6740 = vpack.c.bf16 %v3836, %v3836
        %v6741 = vpack.c.bf16 %v3875, %v3875
        %v6742 = vpack.c.bf16 %v3877, %v3877
        %v6743 = vld [vmem:[#allocation14] sm:$0xff]
        %v6744 = vld [vmem:[#allocation14 + $0x8] sm:$0xff]
        %v6745 = vld [vmem:[#allocation14 + $0x10] sm:$0xff]
        %v6746 = vld [vmem:[#allocation14 + $0x18] sm:$0xff]
        %v6747 = vld [vmem:[#allocation14 + $0x20] sm:$0xff]
        %v6748 = vld [vmem:[#allocation14 + $0x28] sm:$0xff]
        %v6749 = vld [vmem:[#allocation14 + $0x30] sm:$0xff]
        %v6750 = vld [vmem:[#allocation14 + $0x38] sm:$0xff]
        %v6751 = vld [vmem:[#allocation14 + $0x40] sm:$0xff]
        %v6752 = vld [vmem:[#allocation14 + $0x48] sm:$0xff]
        %v6753 = vld [vmem:[#allocation14 + $0x50] sm:$0xff]
        %v6754 = vld [vmem:[#allocation14 + $0x58] sm:$0xff]
        %v6755 = vld [vmem:[#allocation14 + $0x60] sm:$0xff]
        %v6756 = vld [vmem:[#allocation14 + $0x68] sm:$0xff]
        %v6757 = vld [vmem:[#allocation14 + $0x70] sm:$0xff]
        %v6758 = vld [vmem:[#allocation14 + $0x78] sm:$0xff]
        %v6759 = vld [vmem:[#allocation14 + $0x80] sm:$0xff]
        %v6760 = vld [vmem:[#allocation14 + $0x88] sm:$0xff]
        %v6761 = vld [vmem:[#allocation14 + $0x90] sm:$0xff]
        %v6762 = vld [vmem:[#allocation14 + $0x98] sm:$0xff]
        %v6763 = vld [vmem:[#allocation14 + $0xa0] sm:$0xff]
        %v6764 = vld [vmem:[#allocation14 + $0xa8] sm:$0xff]
        %v6765 = vld [vmem:[#allocation14 + $0xb0] sm:$0xff]
        %v6766 = vld [vmem:[#allocation14 + $0xb8] sm:$0xff]
        %v6767 = vld [vmem:[#allocation14 + $0xc0] sm:$0xff]
        %v6768 = vld [vmem:[#allocation14 + $0xc8] sm:$0xff]
        %v6769 = vld [vmem:[#allocation14 + $0xd0] sm:$0xff]
        %v6770 = vld [vmem:[#allocation14 + $0xd8] sm:$0xff]
        %v6771 = vld [vmem:[#allocation14 + $0xe0] sm:$0xff]
        %v6772 = vld [vmem:[#allocation14 + $0xe8] sm:$0xff]
        %v6773 = vld [vmem:[#allocation14 + $0xf0] sm:$0xff]
        %v6774 = vld [vmem:[#allocation14 + $0xf8] sm:$0xff]
        %v6775 = vld [vmem:[#allocation14 + $0x100] sm:$0xff]
        %v6776 = vld [vmem:[#allocation14 + $0x108] sm:$0xff]
        %v6777 = vld [vmem:[#allocation14 + $0x110] sm:$0xff]
        %v6778 = vld [vmem:[#allocation14 + $0x118] sm:$0xff]
        %v6779 = vld [vmem:[#allocation14 + $0x120] sm:$0xff]
        %v6780 = vld [vmem:[#allocation14 + $0x128] sm:$0xff]
        %v6781 = vld [vmem:[#allocation14 + $0x130] sm:$0xff]
        %v6782 = vld [vmem:[#allocation14 + $0x138] sm:$0xff]
        %v6783 = vld [vmem:[#allocation14 + $0x140] sm:$0xff]
        %v6784 = vld [vmem:[#allocation14 + $0x148] sm:$0xff]
        %v6785 = vld [vmem:[#allocation14 + $0x150] sm:$0xff]
        %v6786 = vld [vmem:[#allocation14 + $0x158] sm:$0xff]
        %v6787 = vld [vmem:[#allocation14 + $0x160] sm:$0xff]
        %v6788 = vld [vmem:[#allocation14 + $0x168] sm:$0xff]
        %v6789 = vld [vmem:[#allocation14 + $0x170] sm:$0xff]
        %v6790 = vld [vmem:[#allocation14 + $0x178] sm:$0xff]
        %v6791 = vld [vmem:[#allocation14 + $0x180] sm:$0xff]
        %v6792 = vld [vmem:[#allocation14 + $0x188] sm:$0xff]
        %v6793 = vld [vmem:[#allocation14 + $0x190] sm:$0xff]
        %v6794 = vld [vmem:[#allocation14 + $0x198] sm:$0xff]
        %v6795 = vld [vmem:[#allocation14 + $0x1a0] sm:$0xff]
        %v6796 = vld [vmem:[#allocation14 + $0x1a8] sm:$0xff]
        %v6797 = vld [vmem:[#allocation14 + $0x1b0] sm:$0xff]
        %v6798 = vld [vmem:[#allocation14 + $0x1b8] sm:$0xff]
        %v6799 = vld [vmem:[#allocation14 + $0x1c0] sm:$0xff]
        %v6800 = vld [vmem:[#allocation14 + $0x1c8] sm:$0xff]
        %v6801 = vld [vmem:[#allocation14 + $0x1d0] sm:$0xff]
        %v6802 = vld [vmem:[#allocation14 + $0x1d8] sm:$0xff]
        %v6803 = vld [vmem:[#allocation14 + $0x1e0] sm:$0xff]
        %v6804 = vld [vmem:[#allocation14 + $0x1e8] sm:$0xff]
        %v6805 = vld [vmem:[#allocation14 + $0x1f0] sm:$0xff]
        %v6806 = vld [vmem:[#allocation14 + $0x1f8] sm:$0xff]
        %v6807 = vld [vmem:[#allocation14 + $0x200] sm:$0xff]
        %v6808 = vld [vmem:[#allocation14 + $0x208] sm:$0xff]
        %v6809 = vld [vmem:[#allocation14 + $0x210] sm:$0xff]
        %v6810 = vld [vmem:[#allocation14 + $0x218] sm:$0xff]
        %v6811 = vld [vmem:[#allocation14 + $0x220] sm:$0xff]
        %v6812 = vld [vmem:[#allocation14 + $0x228] sm:$0xff]
        %v6813 = vld [vmem:[#allocation14 + $0x230] sm:$0xff]
        %v6814 = vld [vmem:[#allocation14 + $0x238] sm:$0xff]
        %v6815 = vld [vmem:[#allocation14 + $0x240] sm:$0xff]
        %v6816 = vld [vmem:[#allocation14 + $0x248] sm:$0xff]
        %v6817 = vld [vmem:[#allocation14 + $0x250] sm:$0xff]
        %v6818 = vld [vmem:[#allocation14 + $0x258] sm:$0xff]
        %v6819 = vld [vmem:[#allocation14 + $0x260] sm:$0xff]
        %v6820 = vld [vmem:[#allocation14 + $0x268] sm:$0xff]
        %v6821 = vld [vmem:[#allocation14 + $0x270] sm:$0xff]
        %v6822 = vld [vmem:[#allocation14 + $0x278] sm:$0xff]
        %v6823 = vld [vmem:[#allocation14 + $0x280] sm:$0xff]
        %v6824 = vld [vmem:[#allocation14 + $0x288] sm:$0xff]
        %v6825 = vld [vmem:[#allocation14 + $0x290] sm:$0xff]
        %v6826 = vld [vmem:[#allocation14 + $0x298] sm:$0xff]
        %v6827 = vld [vmem:[#allocation14 + $0x2a0] sm:$0xff]
        %v6828 = vld [vmem:[#allocation14 + $0x2a8] sm:$0xff]
        %v6829 = vld [vmem:[#allocation14 + $0x2b0] sm:$0xff]
        %v6830 = vld [vmem:[#allocation14 + $0x2b8] sm:$0xff]
        %v6831 = vld [vmem:[#allocation14 + $0x2c0] sm:$0xff]
        %v6832 = vld [vmem:[#allocation14 + $0x2c8] sm:$0xff]
        %v6833 = vld [vmem:[#allocation14 + $0x2d0] sm:$0xff]
        %v6834 = vld [vmem:[#allocation14 + $0x2d8] sm:$0xff]
        %v6835 = vld [vmem:[#allocation14 + $0x2e0] sm:$0xff]
        %v6836 = vld [vmem:[#allocation14 + $0x2e8] sm:$0xff]
        %v6837 = vld [vmem:[#allocation14 + $0x2f0] sm:$0xff]
        %v6838 = vld [vmem:[#allocation14 + $0x2f8] sm:$0xff]
        %v6839 = vld [vmem:[#allocation14 + $0x300] sm:$0xff]
        %v6840 = vld [vmem:[#allocation14 + $0x308] sm:$0xff]
        %v6841 = vld [vmem:[#allocation14 + $0x310] sm:$0xff]
        %v6842 = vld [vmem:[#allocation14 + $0x318] sm:$0xff]
        %v6843 = vld [vmem:[#allocation14 + $0x320] sm:$0xff]
        %v6844 = vld [vmem:[#allocation14 + $0x328] sm:$0xff]
        %v6845 = vld [vmem:[#allocation14 + $0x330] sm:$0xff]
        %v6846 = vld [vmem:[#allocation14 + $0x338] sm:$0xff]
        %v6847 = vld [vmem:[#allocation14 + $0x340] sm:$0xff]
        %v6848 = vld [vmem:[#allocation14 + $0x348] sm:$0xff]
        %v6849 = vld [vmem:[#allocation14 + $0x350] sm:$0xff]
        %v6850 = vld [vmem:[#allocation14 + $0x358] sm:$0xff]
        %v6851 = vld [vmem:[#allocation14 + $0x360] sm:$0xff]
        %v6852 = vld [vmem:[#allocation14 + $0x368] sm:$0xff]
        %v6853 = vld [vmem:[#allocation14 + $0x370] sm:$0xff]
        %v6854 = vld [vmem:[#allocation14 + $0x378] sm:$0xff]
        %v6855 = vld [vmem:[#allocation14 + $0x380] sm:$0xff]
        %v6856 = vld [vmem:[#allocation14 + $0x388] sm:$0xff]
        %v6857 = vld [vmem:[#allocation14 + $0x390] sm:$0xff]
        %v6858 = vld [vmem:[#allocation14 + $0x398] sm:$0xff]
        %v6859 = vld [vmem:[#allocation14 + $0x3a0] sm:$0xff]
        %v6860 = vld [vmem:[#allocation14 + $0x3a8] sm:$0xff]
        %v6861 = vld [vmem:[#allocation14 + $0x3b0] sm:$0xff]
        %v6862 = vld [vmem:[#allocation14 + $0x3b8] sm:$0xff]
        %v6863 = vld [vmem:[#allocation14 + $0x3c0] sm:$0xff]
        %v6864 = vld [vmem:[#allocation14 + $0x3c8] sm:$0xff]
        %v6865 = vld [vmem:[#allocation14 + $0x3d0] sm:$0xff]
        %v6866 = vld [vmem:[#allocation14 + $0x3d8] sm:$0xff]
        %v6867 = vld [vmem:[#allocation14 + $0x3e0] sm:$0xff]
        %v6868 = vld [vmem:[#allocation14 + $0x3e8] sm:$0xff]
        %v6869 = vld [vmem:[#allocation14 + $0x3f0] sm:$0xff]
        %v6870 = vld [vmem:[#allocation14 + $0x3f8] sm:$0xff]
        %v6871 = vpack.c.bf16 %v6735, %v6735
        %v6872 = vpack.c.bf16 %v6736, %v6736
        %v6873 = vpack.c.bf16 %v6737, %v6737
        %v6874 = vpack.c.bf16 %v6738, %v6738
        %v6875 = vld [vmem:[#allocation15] sm:$0xff]
        %v6876 = vld [vmem:[#allocation15 + $0x8] sm:$0xff]
        %v6877 = vld [vmem:[#allocation15 + $0x10] sm:$0xff]
        %v6878 = vld [vmem:[#allocation15 + $0x18] sm:$0xff]
        %v6879 = vld [vmem:[#allocation15 + $0x20] sm:$0xff]
        %v6880 = vld [vmem:[#allocation15 + $0x28] sm:$0xff]
        %v6881 = vld [vmem:[#allocation15 + $0x30] sm:$0xff]
        %v6882 = vld [vmem:[#allocation15 + $0x38] sm:$0xff]
        %v6883 = vld [vmem:[#allocation15 + $0x40] sm:$0xff]
        %v6884 = vld [vmem:[#allocation15 + $0x48] sm:$0xff]
        %v6885 = vld [vmem:[#allocation15 + $0x50] sm:$0xff]
        %v6886 = vld [vmem:[#allocation15 + $0x58] sm:$0xff]
        %v6887 = vld [vmem:[#allocation15 + $0x60] sm:$0xff]
        %v6888 = vld [vmem:[#allocation15 + $0x68] sm:$0xff]
        %v6889 = vld [vmem:[#allocation15 + $0x70] sm:$0xff]
        %v6890 = vld [vmem:[#allocation15 + $0x78] sm:$0xff]
        %v6891 = vld [vmem:[#allocation15 + $0x80] sm:$0xff]
        %v6892 = vld [vmem:[#allocation15 + $0x88] sm:$0xff]
        %v6893 = vld [vmem:[#allocation15 + $0x90] sm:$0xff]
        %v6894 = vld [vmem:[#allocation15 + $0x98] sm:$0xff]
        %v6895 = vld [vmem:[#allocation15 + $0xa0] sm:$0xff]
        %v6896 = vld [vmem:[#allocation15 + $0xa8] sm:$0xff]
        %v6897 = vld [vmem:[#allocation15 + $0xb0] sm:$0xff]
        %v6898 = vld [vmem:[#allocation15 + $0xb8] sm:$0xff]
        %v6899 = vld [vmem:[#allocation15 + $0xc0] sm:$0xff]
        %v6900 = vld [vmem:[#allocation15 + $0xc8] sm:$0xff]
        %v6901 = vld [vmem:[#allocation15 + $0xd0] sm:$0xff]
        %v6902 = vld [vmem:[#allocation15 + $0xd8] sm:$0xff]
        %v6903 = vld [vmem:[#allocation15 + $0xe0] sm:$0xff]
        %v6904 = vld [vmem:[#allocation15 + $0xe8] sm:$0xff]
        %v6905 = vld [vmem:[#allocation15 + $0xf0] sm:$0xff]
        %v6906 = vld [vmem:[#allocation15 + $0xf8] sm:$0xff]
        %v6907 = vld [vmem:[#allocation15 + $0x100] sm:$0xff]
        %v6908 = vld [vmem:[#allocation15 + $0x108] sm:$0xff]
        %v6909 = vld [vmem:[#allocation15 + $0x110] sm:$0xff]
        %v6910 = vld [vmem:[#allocation15 + $0x118] sm:$0xff]
        %v6911 = vld [vmem:[#allocation15 + $0x120] sm:$0xff]
        %v6912 = vld [vmem:[#allocation15 + $0x128] sm:$0xff]
        %v6913 = vld [vmem:[#allocation15 + $0x130] sm:$0xff]
        %v6914 = vld [vmem:[#allocation15 + $0x138] sm:$0xff]
        %v6915 = vld [vmem:[#allocation15 + $0x140] sm:$0xff]
        %v6916 = vld [vmem:[#allocation15 + $0x148] sm:$0xff]
        %v6917 = vld [vmem:[#allocation15 + $0x150] sm:$0xff]
        %v6918 = vld [vmem:[#allocation15 + $0x158] sm:$0xff]
        %v6919 = vld [vmem:[#allocation15 + $0x160] sm:$0xff]
        %v6920 = vld [vmem:[#allocation15 + $0x168] sm:$0xff]
        %v6921 = vld [vmem:[#allocation15 + $0x170] sm:$0xff]
        %v6922 = vld [vmem:[#allocation15 + $0x178] sm:$0xff]
        %v6923 = vld [vmem:[#allocation15 + $0x180] sm:$0xff]
        %v6924 = vld [vmem:[#allocation15 + $0x188] sm:$0xff]
        %v6925 = vld [vmem:[#allocation15 + $0x190] sm:$0xff]
        %v6926 = vld [vmem:[#allocation15 + $0x198] sm:$0xff]
        %v6927 = vld [vmem:[#allocation15 + $0x1a0] sm:$0xff]
        %v6928 = vld [vmem:[#allocation15 + $0x1a8] sm:$0xff]
        %v6929 = vld [vmem:[#allocation15 + $0x1b0] sm:$0xff]
        %v6930 = vld [vmem:[#allocation15 + $0x1b8] sm:$0xff]
        %v6931 = vld [vmem:[#allocation15 + $0x1c0] sm:$0xff]
        %v6932 = vld [vmem:[#allocation15 + $0x1c8] sm:$0xff]
        %v6933 = vld [vmem:[#allocation15 + $0x1d0] sm:$0xff]
        %v6934 = vld [vmem:[#allocation15 + $0x1d8] sm:$0xff]
        %v6935 = vld [vmem:[#allocation15 + $0x1e0] sm:$0xff]
        %v6936 = vld [vmem:[#allocation15 + $0x1e8] sm:$0xff]
        %v6937 = vld [vmem:[#allocation15 + $0x1f0] sm:$0xff]
        %v6938 = vld [vmem:[#allocation15 + $0x1f8] sm:$0xff]
        %v6939 = vld [vmem:[#allocation15 + $0x200] sm:$0xff]
        %v6940 = vld [vmem:[#allocation15 + $0x208] sm:$0xff]
        %v6941 = vld [vmem:[#allocation15 + $0x210] sm:$0xff]
        %v6942 = vld [vmem:[#allocation15 + $0x218] sm:$0xff]
        %v6943 = vld [vmem:[#allocation15 + $0x220] sm:$0xff]
        %v6944 = vld [vmem:[#allocation15 + $0x228] sm:$0xff]
        %v6945 = vld [vmem:[#allocation15 + $0x230] sm:$0xff]
        %v6946 = vld [vmem:[#allocation15 + $0x238] sm:$0xff]
        %v6947 = vld [vmem:[#allocation15 + $0x240] sm:$0xff]
        %v6948 = vld [vmem:[#allocation15 + $0x248] sm:$0xff]
        %v6949 = vld [vmem:[#allocation15 + $0x250] sm:$0xff]
        %v6950 = vld [vmem:[#allocation15 + $0x258] sm:$0xff]
        %v6951 = vld [vmem:[#allocation15 + $0x260] sm:$0xff]
        %v6952 = vld [vmem:[#allocation15 + $0x268] sm:$0xff]
        %v6953 = vld [vmem:[#allocation15 + $0x270] sm:$0xff]
        %v6954 = vld [vmem:[#allocation15 + $0x278] sm:$0xff]
        %v6955 = vld [vmem:[#allocation15 + $0x280] sm:$0xff]
        %v6956 = vld [vmem:[#allocation15 + $0x288] sm:$0xff]
        %v6957 = vld [vmem:[#allocation15 + $0x290] sm:$0xff]
        %v6958 = vld [vmem:[#allocation15 + $0x298] sm:$0xff]
        %v6959 = vld [vmem:[#allocation15 + $0x2a0] sm:$0xff]
        %v6960 = vld [vmem:[#allocation15 + $0x2a8] sm:$0xff]
        %v6961 = vld [vmem:[#allocation15 + $0x2b0] sm:$0xff]
        %v6962 = vld [vmem:[#allocation15 + $0x2b8] sm:$0xff]
        %v6963 = vld [vmem:[#allocation15 + $0x2c0] sm:$0xff]
        %v6964 = vld [vmem:[#allocation15 + $0x2c8] sm:$0xff]
        %v6965 = vld [vmem:[#allocation15 + $0x2d0] sm:$0xff]
        %v6966 = vld [vmem:[#allocation15 + $0x2d8] sm:$0xff]
        %v6967 = vld [vmem:[#allocation15 + $0x2e0] sm:$0xff]
        %v6968 = vld [vmem:[#allocation15 + $0x2e8] sm:$0xff]
        %v6969 = vld [vmem:[#allocation15 + $0x2f0] sm:$0xff]
        %v6970 = vld [vmem:[#allocation15 + $0x2f8] sm:$0xff]
        %v6971 = vld [vmem:[#allocation15 + $0x300] sm:$0xff]
        %v6972 = vld [vmem:[#allocation15 + $0x308] sm:$0xff]
        %v6973 = vld [vmem:[#allocation15 + $0x310] sm:$0xff]
        %v6974 = vld [vmem:[#allocation15 + $0x318] sm:$0xff]
        %v6975 = vld [vmem:[#allocation15 + $0x320] sm:$0xff]
        %v6976 = vld [vmem:[#allocation15 + $0x328] sm:$0xff]
        %v6977 = vld [vmem:[#allocation15 + $0x330] sm:$0xff]
        %v6978 = vld [vmem:[#allocation15 + $0x338] sm:$0xff]
        %v6979 = vld [vmem:[#allocation15 + $0x340] sm:$0xff]
        %v6980 = vld [vmem:[#allocation15 + $0x348] sm:$0xff]
        %v6981 = vld [vmem:[#allocation15 + $0x350] sm:$0xff]
        %v6982 = vld [vmem:[#allocation15 + $0x358] sm:$0xff]
        %v6983 = vld [vmem:[#allocation15 + $0x360] sm:$0xff]
        %v6984 = vld [vmem:[#allocation15 + $0x368] sm:$0xff]
        %v6985 = vld [vmem:[#allocation15 + $0x370] sm:$0xff]
        %v6986 = vld [vmem:[#allocation15 + $0x378] sm:$0xff]
        %v6987 = vld [vmem:[#allocation15 + $0x380] sm:$0xff]
        %v6988 = vld [vmem:[#allocation15 + $0x388] sm:$0xff]
        %v6989 = vld [vmem:[#allocation15 + $0x390] sm:$0xff]
        %v6990 = vld [vmem:[#allocation15 + $0x398] sm:$0xff]
        %v6991 = vld [vmem:[#allocation15 + $0x3a0] sm:$0xff]
        %v6992 = vld [vmem:[#allocation15 + $0x3a8] sm:$0xff]
        %v6993 = vld [vmem:[#allocation15 + $0x3b0] sm:$0xff]
        %v6994 = vld [vmem:[#allocation15 + $0x3b8] sm:$0xff]
        %v6995 = vld [vmem:[#allocation15 + $0x3c0] sm:$0xff]
        %v6996 = vld [vmem:[#allocation15 + $0x3c8] sm:$0xff]
        %v6997 = vld [vmem:[#allocation15 + $0x3d0] sm:$0xff]
        %v6998 = vld [vmem:[#allocation15 + $0x3d8] sm:$0xff]
        %v6999 = vld [vmem:[#allocation15 + $0x3e0] sm:$0xff]
        %v7000 = vld [vmem:[#allocation15 + $0x3e8] sm:$0xff]
        %v7001 = vld [vmem:[#allocation15 + $0x3f0] sm:$0xff]
        %v7002 = vld [vmem:[#allocation15 + $0x3f8] sm:$0xff]
        %v7131 = vunpack.c.l.b16 %v6875
        %v7132 = vunpack.c.h.b16 %v6875
        %v7133 = vunpack.c.l.b16 %v6876
        %v7134 = vunpack.c.h.b16 %v6876
        %v7135 = vunpack.c.l.b16 %v6877
        %v7136 = vunpack.c.h.b16 %v6877
        %v7137 = vunpack.c.l.b16 %v6878
        %v7138 = vunpack.c.h.b16 %v6878
        %v7139 = vunpack.c.l.b16 %v6879
        %v7140 = vunpack.c.h.b16 %v6879
        %v7141 = vunpack.c.l.b16 %v6880
        %v7142 = vunpack.c.h.b16 %v6880
        %v7143 = vunpack.c.l.b16 %v6881
        %v7144 = vunpack.c.h.b16 %v6881
        %v7145 = vunpack.c.l.b16 %v6882
        %v7146 = vunpack.c.h.b16 %v6882
        %v7147 = vunpack.c.l.b16 %v6883
        %v7148 = vunpack.c.h.b16 %v6883
        %v7149 = vunpack.c.l.b16 %v6884
        %v7150 = vunpack.c.h.b16 %v6884
        %v7151 = vunpack.c.l.b16 %v6885
        %v7152 = vunpack.c.h.b16 %v6885
        %v7153 = vunpack.c.l.b16 %v6886
        %v7154 = vunpack.c.h.b16 %v6886
        %v7155 = vunpack.c.l.b16 %v6887
        %v7156 = vunpack.c.h.b16 %v6887
        %v7157 = vunpack.c.l.b16 %v6888
        %v7158 = vunpack.c.h.b16 %v6888
        %v7159 = vunpack.c.l.b16 %v6889
        %v7160 = vunpack.c.h.b16 %v6889
        %v7161 = vunpack.c.l.b16 %v6890
        %v7162 = vunpack.c.h.b16 %v6890
        %v7163 = vunpack.c.l.b16 %v6891
        %v7164 = vunpack.c.h.b16 %v6891
        %v7165 = vunpack.c.l.b16 %v6892
        %v7166 = vunpack.c.h.b16 %v6892
        %v7167 = vunpack.c.l.b16 %v6893
        %v7168 = vunpack.c.h.b16 %v6893
        %v7169 = vunpack.c.l.b16 %v6894
        %v7170 = vunpack.c.h.b16 %v6894
        %v7171 = vunpack.c.l.b16 %v6895
        %v7172 = vunpack.c.h.b16 %v6895
        %v7173 = vunpack.c.l.b16 %v6896
        %v7174 = vunpack.c.h.b16 %v6896
        %v7175 = vunpack.c.l.b16 %v6897
        %v7176 = vunpack.c.h.b16 %v6897
        %v7177 = vunpack.c.l.b16 %v6898
        %v7178 = vunpack.c.h.b16 %v6898
        %v7179 = vunpack.c.l.b16 %v6899
        %v7180 = vunpack.c.h.b16 %v6899
        %v7181 = vunpack.c.l.b16 %v6900
        %v7182 = vunpack.c.h.b16 %v6900
        %v7183 = vunpack.c.l.b16 %v6901
        %v7184 = vunpack.c.h.b16 %v6901
        %v7185 = vunpack.c.l.b16 %v6902
        %v7186 = vunpack.c.h.b16 %v6902
        %v7187 = vunpack.c.l.b16 %v6903
        %v7188 = vunpack.c.h.b16 %v6903
        %v7189 = vunpack.c.l.b16 %v6904
        %v7190 = vunpack.c.h.b16 %v6904
        %v7191 = vunpack.c.l.b16 %v6905
        %v7192 = vunpack.c.h.b16 %v6905
        %v7193 = vunpack.c.l.b16 %v6906
        %v7194 = vunpack.c.h.b16 %v6906
        %v7195 = vunpack.c.l.b16 %v6907
        %v7196 = vunpack.c.h.b16 %v6907
        %v7197 = vunpack.c.l.b16 %v6908
        %v7198 = vunpack.c.h.b16 %v6908
        %v7199 = vunpack.c.l.b16 %v6909
        %v7200 = vunpack.c.h.b16 %v6909
        %v7201 = vunpack.c.l.b16 %v6910
        %v7202 = vunpack.c.h.b16 %v6910
        %v7203 = vunpack.c.l.b16 %v6911
        %v7204 = vunpack.c.h.b16 %v6911
        %v7205 = vunpack.c.l.b16 %v6912
        %v7206 = vunpack.c.h.b16 %v6912
        %v7207 = vunpack.c.l.b16 %v6913
        %v7208 = vunpack.c.h.b16 %v6913
        %v7209 = vunpack.c.l.b16 %v6914
        %v7210 = vunpack.c.h.b16 %v6914
        %v7211 = vunpack.c.l.b16 %v6915
        %v7212 = vunpack.c.h.b16 %v6915
        %v7213 = vunpack.c.l.b16 %v6916
        %v7214 = vunpack.c.h.b16 %v6916
        %v7215 = vunpack.c.l.b16 %v6917
        %v7216 = vunpack.c.h.b16 %v6917
        %v7217 = vunpack.c.l.b16 %v6918
        %v7218 = vunpack.c.h.b16 %v6918
        %v7219 = vunpack.c.l.b16 %v6919
        %v7220 = vunpack.c.h.b16 %v6919
        %v7221 = vunpack.c.l.b16 %v6920
        %v7222 = vunpack.c.h.b16 %v6920
        %v7223 = vunpack.c.l.b16 %v6921
        %v7224 = vunpack.c.h.b16 %v6921
        %v7225 = vunpack.c.l.b16 %v6922
        %v7226 = vunpack.c.h.b16 %v6922
        %v7227 = vunpack.c.l.b16 %v6923
        %v7228 = vunpack.c.h.b16 %v6923
        %v7229 = vunpack.c.l.b16 %v6924
        %v7230 = vunpack.c.h.b16 %v6924
        %v7231 = vunpack.c.l.b16 %v6925
        %v7232 = vunpack.c.h.b16 %v6925
        %v7233 = vunpack.c.l.b16 %v6926
        %v7234 = vunpack.c.h.b16 %v6926
        %v7235 = vunpack.c.l.b16 %v6927
        %v7236 = vunpack.c.h.b16 %v6927
        %v7237 = vunpack.c.l.b16 %v6928
        %v7238 = vunpack.c.h.b16 %v6928
        %v7239 = vunpack.c.l.b16 %v6929
        %v7240 = vunpack.c.h.b16 %v6929
        %v7241 = vunpack.c.l.b16 %v6930
        %v7242 = vunpack.c.h.b16 %v6930
        %v7243 = vunpack.c.l.b16 %v6931
        %v7244 = vunpack.c.h.b16 %v6931
        %v7245 = vunpack.c.l.b16 %v6932
        %v7246 = vunpack.c.h.b16 %v6932
        %v7247 = vunpack.c.l.b16 %v6933
        %v7248 = vunpack.c.h.b16 %v6933
        %v7249 = vunpack.c.l.b16 %v6934
        %v7250 = vunpack.c.h.b16 %v6934
        %v7251 = vunpack.c.l.b16 %v6935
        %v7252 = vunpack.c.h.b16 %v6935
        %v7253 = vunpack.c.l.b16 %v6936
        %v7254 = vunpack.c.h.b16 %v6936
        %v7255 = vunpack.c.l.b16 %v6937
        %v7256 = vunpack.c.h.b16 %v6937
        %v7257 = vunpack.c.l.b16 %v6938
        %v7258 = vunpack.c.h.b16 %v6938
        %v7259 = vunpack.c.l.b16 %v6939
        %v7260 = vunpack.c.h.b16 %v6939
        %v7261 = vunpack.c.l.b16 %v6940
        %v7262 = vunpack.c.h.b16 %v6940
        %v7263 = vunpack.c.l.b16 %v6941
        %v7264 = vunpack.c.h.b16 %v6941
        %v7265 = vunpack.c.l.b16 %v6942
        %v7266 = vunpack.c.h.b16 %v6942
        %v7267 = vunpack.c.l.b16 %v6943
        %v7268 = vunpack.c.h.b16 %v6943
        %v7269 = vunpack.c.l.b16 %v6944
        %v7270 = vunpack.c.h.b16 %v6944
        %v7271 = vunpack.c.l.b16 %v6945
        %v7272 = vunpack.c.h.b16 %v6945
        %v7273 = vunpack.c.l.b16 %v6946
        %v7274 = vunpack.c.h.b16 %v6946
        %v7275 = vunpack.c.l.b16 %v6947
        %v7276 = vunpack.c.h.b16 %v6947
        %v7277 = vunpack.c.l.b16 %v6948
        %v7278 = vunpack.c.h.b16 %v6948
        %v7279 = vunpack.c.l.b16 %v6949
        %v7280 = vunpack.c.h.b16 %v6949
        %v7281 = vunpack.c.l.b16 %v6950
        %v7282 = vunpack.c.h.b16 %v6950
        %v7283 = vunpack.c.l.b16 %v6951
        %v7284 = vunpack.c.h.b16 %v6951
        %v7285 = vunpack.c.l.b16 %v6952
        %v7286 = vunpack.c.h.b16 %v6952
        %v7287 = vunpack.c.l.b16 %v6953
        %v7288 = vunpack.c.h.b16 %v6953
        %v7289 = vunpack.c.l.b16 %v6954
        %v7290 = vunpack.c.h.b16 %v6954
        %v7291 = vunpack.c.l.b16 %v6955
        %v7292 = vunpack.c.h.b16 %v6955
        %v7293 = vunpack.c.l.b16 %v6956
        %v7294 = vunpack.c.h.b16 %v6956
        %v7295 = vunpack.c.l.b16 %v6957
        %v7296 = vunpack.c.h.b16 %v6957
        %v7297 = vunpack.c.l.b16 %v6958
        %v7298 = vunpack.c.h.b16 %v6958
        %v7299 = vunpack.c.l.b16 %v6959
        %v7300 = vunpack.c.h.b16 %v6959
        %v7301 = vunpack.c.l.b16 %v6960
        %v7302 = vunpack.c.h.b16 %v6960
        %v7303 = vunpack.c.l.b16 %v6961
        %v7304 = vunpack.c.h.b16 %v6961
        %v7305 = vunpack.c.l.b16 %v6962
        %v7306 = vunpack.c.h.b16 %v6962
        %v7307 = vunpack.c.l.b16 %v6963
        %v7308 = vunpack.c.h.b16 %v6963
        %v7309 = vunpack.c.l.b16 %v6964
        %v7310 = vunpack.c.h.b16 %v6964
        %v7311 = vunpack.c.l.b16 %v6965
        %v7312 = vunpack.c.h.b16 %v6965
        %v7313 = vunpack.c.l.b16 %v6966
        %v7314 = vunpack.c.h.b16 %v6966
        %v7315 = vunpack.c.l.b16 %v6967
        %v7316 = vunpack.c.h.b16 %v6967
        %v7317 = vunpack.c.l.b16 %v6968
        %v7318 = vunpack.c.h.b16 %v6968
        %v7319 = vunpack.c.l.b16 %v6969
        %v7320 = vunpack.c.h.b16 %v6969
        %v7321 = vunpack.c.l.b16 %v6970
        %v7322 = vunpack.c.h.b16 %v6970
        %v7323 = vunpack.c.l.b16 %v6971
        %v7324 = vunpack.c.h.b16 %v6971
        %v7325 = vunpack.c.l.b16 %v6972
        %v7326 = vunpack.c.h.b16 %v6972
        %v7327 = vunpack.c.l.b16 %v6973
        %v7328 = vunpack.c.h.b16 %v6973
        %v7329 = vunpack.c.l.b16 %v6974
        %v7330 = vunpack.c.h.b16 %v6974
        %v7331 = vunpack.c.l.b16 %v6975
        %v7332 = vunpack.c.h.b16 %v6975
        %v7333 = vunpack.c.l.b16 %v6976
        %v7334 = vunpack.c.h.b16 %v6976
        %v7335 = vunpack.c.l.b16 %v6977
        %v7336 = vunpack.c.h.b16 %v6977
        %v7337 = vunpack.c.l.b16 %v6978
        %v7338 = vunpack.c.h.b16 %v6978
        %v7339 = vunpack.c.l.b16 %v6979
        %v7340 = vunpack.c.h.b16 %v6979
        %v7341 = vunpack.c.l.b16 %v6980
        %v7342 = vunpack.c.h.b16 %v6980
        %v7343 = vunpack.c.l.b16 %v6981
        %v7344 = vunpack.c.h.b16 %v6981
        %v7345 = vunpack.c.l.b16 %v6982
        %v7346 = vunpack.c.h.b16 %v6982
        %v7347 = vunpack.c.l.b16 %v6983
        %v7348 = vunpack.c.h.b16 %v6983
        %v7349 = vunpack.c.l.b16 %v6984
        %v7350 = vunpack.c.h.b16 %v6984
        %v7351 = vunpack.c.l.b16 %v6985
        %v7352 = vunpack.c.h.b16 %v6985
        %v7353 = vunpack.c.l.b16 %v6986
        %v7354 = vunpack.c.h.b16 %v6986
        %v7355 = vunpack.c.l.b16 %v6987
        %v7356 = vunpack.c.h.b16 %v6987
        %v7357 = vunpack.c.l.b16 %v6988
        %v7358 = vunpack.c.h.b16 %v6988
        %v7359 = vunpack.c.l.b16 %v6989
        %v7360 = vunpack.c.h.b16 %v6989
        %v7361 = vunpack.c.l.b16 %v6990
        %v7362 = vunpack.c.h.b16 %v6990
        %v7363 = vunpack.c.l.b16 %v6991
        %v7364 = vunpack.c.h.b16 %v6991
        %v7365 = vunpack.c.l.b16 %v6992
        %v7366 = vunpack.c.h.b16 %v6992
        %v7367 = vunpack.c.l.b16 %v6993
        %v7368 = vunpack.c.h.b16 %v6993
        %v7369 = vunpack.c.l.b16 %v6994
        %v7370 = vunpack.c.h.b16 %v6994
        %v7371 = vunpack.c.l.b16 %v6995
        %v7372 = vunpack.c.h.b16 %v6995
        %v7373 = vunpack.c.l.b16 %v6996
        %v7374 = vunpack.c.h.b16 %v6996
        %v7375 = vunpack.c.l.b16 %v6997
        %v7376 = vunpack.c.h.b16 %v6997
        %v7377 = vunpack.c.l.b16 %v6998
        %v7378 = vunpack.c.h.b16 %v6998
        %v7379 = vunpack.c.l.b16 %v6999
        %v7380 = vunpack.c.h.b16 %v6999
        %v7381 = vunpack.c.l.b16 %v7000
        %v7382 = vunpack.c.h.b16 %v7000
        %v7383 = vunpack.c.l.b16 %v7001
        %v7384 = vunpack.c.h.b16 %v7001
        %v7385 = vunpack.c.l.b16 %v7002
        %v7386 = vunpack.c.h.b16 %v7002
        %v7387 = vpack.c.b16 %v7135, %v7131
        %v7388 = vpack.c.b16 %v7136, %v7132
        %v7389 = vpack.c.b16 %v7137, %v7133
        %v7390 = vpack.c.b16 %v7138, %v7134
        %v7391 = vpack.c.b16 %v7143, %v7139
        %v7392 = vpack.c.b16 %v7144, %v7140
        %v7393 = vpack.c.b16 %v7145, %v7141
        %v7394 = vpack.c.b16 %v7146, %v7142
        %v7395 = vpack.c.b16 %v7151, %v7147
        %v7396 = vpack.c.b16 %v7152, %v7148
        %v7397 = vpack.c.b16 %v7153, %v7149
        %v7398 = vpack.c.b16 %v7154, %v7150
        %v7399 = vpack.c.b16 %v7159, %v7155
        %v7400 = vpack.c.b16 %v7160, %v7156
        %v7401 = vpack.c.b16 %v7161, %v7157
        %v7402 = vpack.c.b16 %v7162, %v7158
        %v7403 = vpack.c.b16 %v7167, %v7163
        %v7404 = vpack.c.b16 %v7168, %v7164
        %v7405 = vpack.c.b16 %v7169, %v7165
        %v7406 = vpack.c.b16 %v7170, %v7166
        %v7407 = vpack.c.b16 %v7175, %v7171
        %v7408 = vpack.c.b16 %v7176, %v7172
        %v7409 = vpack.c.b16 %v7177, %v7173
        %v7410 = vpack.c.b16 %v7178, %v7174
        %v7411 = vpack.c.b16 %v7183, %v7179
        %v7412 = vpack.c.b16 %v7184, %v7180
        %v7413 = vpack.c.b16 %v7185, %v7181
        %v7414 = vpack.c.b16 %v7186, %v7182
        %v7415 = vpack.c.b16 %v7191, %v7187
        %v7416 = vpack.c.b16 %v7192, %v7188
        %v7417 = vpack.c.b16 %v7193, %v7189
        %v7418 = vpack.c.b16 %v7194, %v7190
        %v7419 = vpack.c.b16 %v7199, %v7195
        %v7420 = vpack.c.b16 %v7200, %v7196
        %v7421 = vpack.c.b16 %v7201, %v7197
        %v7422 = vpack.c.b16 %v7202, %v7198
        %v7423 = vpack.c.b16 %v7207, %v7203
        %v7424 = vpack.c.b16 %v7208, %v7204
        %v7425 = vpack.c.b16 %v7209, %v7205
        %v7426 = vpack.c.b16 %v7210, %v7206
        %v7427 = vpack.c.b16 %v7215, %v7211
        %v7428 = vpack.c.b16 %v7216, %v7212
        %v7429 = vpack.c.b16 %v7217, %v7213
        %v7430 = vpack.c.b16 %v7218, %v7214
        %v7431 = vpack.c.b16 %v7223, %v7219
        %v7432 = vpack.c.b16 %v7224, %v7220
        %v7433 = vpack.c.b16 %v7225, %v7221
        %v7434 = vpack.c.b16 %v7226, %v7222
        %v7435 = vpack.c.b16 %v7231, %v7227
        %v7436 = vpack.c.b16 %v7232, %v7228
        %v7437 = vpack.c.b16 %v7233, %v7229
        %v7438 = vpack.c.b16 %v7234, %v7230
        %v7439 = vpack.c.b16 %v7239, %v7235
        %v7440 = vpack.c.b16 %v7240, %v7236
        %v7441 = vpack.c.b16 %v7241, %v7237
        %v7442 = vpack.c.b16 %v7242, %v7238
        %v7443 = vpack.c.b16 %v7247, %v7243
        %v7444 = vpack.c.b16 %v7248, %v7244
        %v7445 = vpack.c.b16 %v7249, %v7245
        %v7446 = vpack.c.b16 %v7250, %v7246
        %v7447 = vpack.c.b16 %v7255, %v7251
        %v7448 = vpack.c.b16 %v7256, %v7252
        %v7449 = vpack.c.b16 %v7257, %v7253
        %v7450 = vpack.c.b16 %v7258, %v7254
        %v7451 = vpack.c.b16 %v7263, %v7259
        %v7452 = vpack.c.b16 %v7264, %v7260
        %v7453 = vpack.c.b16 %v7265, %v7261
        %v7454 = vpack.c.b16 %v7266, %v7262
        %v7455 = vpack.c.b16 %v7271, %v7267
        %v7456 = vpack.c.b16 %v7272, %v7268
        %v7457 = vpack.c.b16 %v7273, %v7269
        %v7458 = vpack.c.b16 %v7274, %v7270
        %v7459 = vpack.c.b16 %v7279, %v7275
        %v7460 = vpack.c.b16 %v7280, %v7276
        %v7461 = vpack.c.b16 %v7281, %v7277
        %v7462 = vpack.c.b16 %v7282, %v7278
        %v7463 = vpack.c.b16 %v7287, %v7283
        %v7464 = vpack.c.b16 %v7288, %v7284
        %v7465 = vpack.c.b16 %v7289, %v7285
        %v7466 = vpack.c.b16 %v7290, %v7286
        %v7467 = vpack.c.b16 %v7295, %v7291
        %v7468 = vpack.c.b16 %v7296, %v7292
        %v7469 = vpack.c.b16 %v7297, %v7293
        %v7470 = vpack.c.b16 %v7298, %v7294
        %v7471 = vpack.c.b16 %v7303, %v7299
        %v7472 = vpack.c.b16 %v7304, %v7300
        %v7473 = vpack.c.b16 %v7305, %v7301
        %v7474 = vpack.c.b16 %v7306, %v7302
        %v7475 = vpack.c.b16 %v7311, %v7307
        %v7476 = vpack.c.b16 %v7312, %v7308
        %v7477 = vpack.c.b16 %v7313, %v7309
        %v7478 = vpack.c.b16 %v7314, %v7310
        %v7479 = vpack.c.b16 %v7319, %v7315
        %v7480 = vpack.c.b16 %v7320, %v7316
        %v7481 = vpack.c.b16 %v7321, %v7317
        %v7482 = vpack.c.b16 %v7322, %v7318
        %v7483 = vpack.c.b16 %v7327, %v7323
        %v7484 = vpack.c.b16 %v7328, %v7324
        %v7485 = vpack.c.b16 %v7329, %v7325
        %v7486 = vpack.c.b16 %v7330, %v7326
        %v7487 = vpack.c.b16 %v7335, %v7331
        %v7488 = vpack.c.b16 %v7336, %v7332
        %v7489 = vpack.c.b16 %v7337, %v7333
        %v7490 = vpack.c.b16 %v7338, %v7334
        %v7491 = vpack.c.b16 %v7343, %v7339
        %v7492 = vpack.c.b16 %v7344, %v7340
        %v7493 = vpack.c.b16 %v7345, %v7341
        %v7494 = vpack.c.b16 %v7346, %v7342
        %v7495 = vpack.c.b16 %v7351, %v7347
        %v7496 = vpack.c.b16 %v7352, %v7348
        %v7497 = vpack.c.b16 %v7353, %v7349
        %v7498 = vpack.c.b16 %v7354, %v7350
        %v7499 = vpack.c.b16 %v7359, %v7355
        %v7500 = vpack.c.b16 %v7360, %v7356
        %v7501 = vpack.c.b16 %v7361, %v7357
        %v7502 = vpack.c.b16 %v7362, %v7358
        %v7503 = vpack.c.b16 %v7367, %v7363
        %v7504 = vpack.c.b16 %v7368, %v7364
        %v7505 = vpack.c.b16 %v7369, %v7365
        %v7506 = vpack.c.b16 %v7370, %v7366
        %v7507 = vpack.c.b16 %v7375, %v7371
        %v7508 = vpack.c.b16 %v7376, %v7372
        %v7509 = vpack.c.b16 %v7377, %v7373
        %v7510 = vpack.c.b16 %v7378, %v7374
        %v7511 = vpack.c.b16 %v7383, %v7379
        %v7512 = vpack.c.b16 %v7384, %v7380
        %v7513 = vpack.c.b16 %v7385, %v7381
        %v7514 = vpack.c.b16 %v7386, %v7382
        %7643 = vmatprep.subr.bf16.mxu0 %v7388
        %7644 = vmatpush1.bf16.msra.mxu0 %v7387
        %7645 = vmatprep.subr.bf16.mxu0 %v7392
        %7646 = vmatpush1.bf16.msra.mxu0 %v7391
        %7647 = vmatprep.subr.bf16.mxu0 %v7396
        %7648 = vmatpush1.bf16.msra.mxu0 %v7395
        %7649 = vmatprep.subr.bf16.mxu0 %v7400
        %7650 = vmatpush1.bf16.msra.mxu0 %v7399
        %7651 = vmatprep.subr.bf16.mxu0 %v7404
        %7652 = vmatpush1.bf16.msra.mxu0 %v7403
        %7653 = vmatprep.subr.bf16.mxu0 %v7408
        %7654 = vmatpush1.bf16.msra.mxu0 %v7407
        %7655 = vmatprep.subr.bf16.mxu0 %v7412
        %7656 = vmatpush1.bf16.msra.mxu0 %v7411
        %7657 = vmatprep.subr.bf16.mxu0 %v7416
        %7658 = vmatpush1.bf16.msra.mxu0 %v7415
        %7659 = vmatprep.subr.bf16.mxu0 %v7420
        %7660 = vmatpush1.bf16.msra.mxu0 %v7419
        %7661 = vmatprep.subr.bf16.mxu0 %v7424
        %7662 = vmatpush1.bf16.msra.mxu0 %v7423
        %7663 = vmatprep.subr.bf16.mxu0 %v7428
        %7664 = vmatpush1.bf16.msra.mxu0 %v7427
        %7665 = vmatprep.subr.bf16.mxu0 %v7432
        %7666 = vmatpush1.bf16.msra.mxu0 %v7431
        %7667 = vmatprep.subr.bf16.mxu0 %v7436
        %7668 = vmatpush1.bf16.msra.mxu0 %v7435
        %7669 = vmatprep.subr.bf16.mxu0 %v7440
        %7670 = vmatpush1.bf16.msra.mxu0 %v7439
        %7671 = vmatprep.subr.bf16.mxu0 %v7444
        %7672 = vmatpush1.bf16.msra.mxu0 %v7443
        %7673 = vmatprep.subr.bf16.mxu0 %v7448
        %7674 = vmatpush1.bf16.msra.mxu0 %v7447
        %7675 = vmatprep.mubr.bf16.mxu0 %v6872
        %7676 = vmatmul.mubr.bf16.gmra.mrb[0].mxu0 %v6871
        %v7677 = vpop.f32.mrb[0].mxu0
        %v7678 = vadd.f32 0.0, %v7677
        %v7679 = vpop.f32.mrb[0].mxu0
        %v7680 = vadd.f32 0.0, %v7679
        %v7681 = vpop.f32.mrb[0].mxu0
        %v7682 = vpop.f32.mrb[0].mxu0
        %7683 = vdwg.mxu0
        %7684 = vmatprep.subr.bf16.mxu0 %v7452
        %7685 = vmatpush1.bf16.msra.mxu0 %v7451
        %7686 = vmatprep.subr.bf16.mxu0 %v7456
        %7687 = vmatpush1.bf16.msra.mxu0 %v7455
        %7688 = vmatprep.subr.bf16.mxu0 %v7460
        %7689 = vmatpush1.bf16.msra.mxu0 %v7459
        %7690 = vmatprep.subr.bf16.mxu0 %v7464
        %7691 = vmatpush1.bf16.msra.mxu0 %v7463
        %7692 = vmatprep.subr.bf16.mxu0 %v7468
        %7693 = vmatpush1.bf16.msra.mxu0 %v7467
        %7694 = vmatprep.subr.bf16.mxu0 %v7472
        %7695 = vmatpush1.bf16.msra.mxu0 %v7471
        %7696 = vmatprep.subr.bf16.mxu0 %v7476
        %7697 = vmatpush1.bf16.msra.mxu0 %v7475
        %7698 = vmatprep.subr.bf16.mxu0 %v7480
        %7699 = vmatpush1.bf16.msra.mxu0 %v7479
        %7700 = vmatprep.subr.bf16.mxu0 %v7484
        %7701 = vmatpush1.bf16.msra.mxu0 %v7483
        %7702 = vmatprep.subr.bf16.mxu0 %v7488
        %7703 = vmatpush1.bf16.msra.mxu0 %v7487
        %7704 = vmatprep.subr.bf16.mxu0 %v7492
        %7705 = vmatpush1.bf16.msra.mxu0 %v7491
        %7706 = vmatprep.subr.bf16.mxu0 %v7496
        %7707 = vmatpush1.bf16.msra.mxu0 %v7495
        %7708 = vmatprep.subr.bf16.mxu0 %v7500
        %7709 = vmatpush1.bf16.msra.mxu0 %v7499
        %7710 = vmatprep.subr.bf16.mxu0 %v7504
        %7711 = vmatpush1.bf16.msra.mxu0 %v7503
        %7712 = vmatprep.subr.bf16.mxu0 %v7508
        %7713 = vmatpush1.bf16.msra.mxu0 %v7507
        %7714 = vmatprep.subr.bf16.mxu0 %v7512
        %7715 = vmatpush1.bf16.msra.mxu0 %v7511
        %7716 = vmatprep.mubr.bf16.mxu0 %v6874
        %7717 = vmatmul.mubr.bf16.gmra.mrb[0].mxu0 %v6873
        %v7718 = vpop.f32.mrb[0].mxu0
        %v7719 = vadd.f32 %v7678, %v7718
        %v7720 = vpop.f32.mrb[0].mxu0
        %v7721 = vadd.f32 %v7680, %v7720
        %v7722 = vpop.f32.mrb[0].mxu0
        %v7723 = vpop.f32.mrb[0].mxu0
        %7724 = vdwg.mxu0
        %7725 = vmatprep.subr.bf16.mxu0 %v7390
        %7726 = vmatpush1.bf16.msra.mxu0 %v7389
        %7727 = vmatprep.subr.bf16.mxu0 %v7394
        %7728 = vmatpush1.bf16.msra.mxu0 %v7393
        %7729 = vmatprep.subr.bf16.mxu0 %v7398
        %7730 = vmatpush1.bf16.msra.mxu0 %v7397
        %7731 = vmatprep.subr.bf16.mxu0 %v7402
        %7732 = vmatpush1.bf16.msra.mxu0 %v7401
        %7733 = vmatprep.subr.bf16.mxu0 %v7406
        %7734 = vmatpush1.bf16.msra.mxu0 %v7405
        %7735 = vmatprep.subr.bf16.mxu0 %v7410
        %7736 = vmatpush1.bf16.msra.mxu0 %v7409
        %7737 = vmatprep.subr.bf16.mxu0 %v7414
        %7738 = vmatpush1.bf16.msra.mxu0 %v7413
        %7739 = vmatprep.subr.bf16.mxu0 %v7418
        %7740 = vmatpush1.bf16.msra.mxu0 %v7417
        %7741 = vmatprep.subr.bf16.mxu0 %v7422
        %7742 = vmatpush1.bf16.msra.mxu0 %v7421
        %7743 = vmatprep.subr.bf16.mxu0 %v7426
        %7744 = vmatpush1.bf16.msra.mxu0 %v7425
        %7745 = vmatprep.subr.bf16.mxu0 %v7430
        %7746 = vmatpush1.bf16.msra.mxu0 %v7429
        %7747 = vmatprep.subr.bf16.mxu0 %v7434
        %7748 = vmatpush1.bf16.msra.mxu0 %v7433
        %7749 = vmatprep.subr.bf16.mxu0 %v7438
        %7750 = vmatpush1.bf16.msra.mxu0 %v7437
        %7751 = vmatprep.subr.bf16.mxu0 %v7442
        %7752 = vmatpush1.bf16.msra.mxu0 %v7441
        %7753 = vmatprep.subr.bf16.mxu0 %v7446
        %7754 = vmatpush1.bf16.msra.mxu0 %v7445
        %7755 = vmatprep.subr.bf16.mxu0 %v7450
        %7756 = vmatpush1.bf16.msra.mxu0 %v7449
        %7757 = vmatprep.mubr.bf16.mxu0 %v6872
        %7758 = vmatmul.mubr.bf16.gmra.mrb[0].mxu0 %v6871
        %v7759 = vpop.f32.mrb[0].mxu0
        %v7760 = vadd.f32 0.0, %v7759
        %v7761 = vpop.f32.mrb[0].mxu0
        %v7762 = vadd.f32 0.0, %v7761
        %v7763 = vpop.f32.mrb[0].mxu0
        %v7764 = vpop.f32.mrb[0].mxu0
        %7765 = vdwg.mxu0
        %7766 = vmatprep.subr.bf16.mxu0 %v7454
        %7767 = vmatpush1.bf16.msra.mxu0 %v7453
        %7768 = vmatprep.subr.bf16.mxu0 %v7458
        %7769 = vmatpush1.bf16.msra.mxu0 %v7457
        %7770 = vmatprep.subr.bf16.mxu0 %v7462
        %7771 = vmatpush1.bf16.msra.mxu0 %v7461
        %7772 = vmatprep.subr.bf16.mxu0 %v7466
        %7773 = vmatpush1.bf16.msra.mxu0 %v7465
        %7774 = vmatprep.subr.bf16.mxu0 %v7470
        %7775 = vmatpush1.bf16.msra.mxu0 %v7469
        %7776 = vmatprep.subr.bf16.mxu0 %v7474
        %7777 = vmatpush1.bf16.msra.mxu0 %v7473
        %7778 = vmatprep.subr.bf16.mxu0 %v7478
        %7779 = vmatpush1.bf16.msra.mxu0 %v7477
        %7780 = vmatprep.subr.bf16.mxu0 %v7482
        %7781 = vmatpush1.bf16.msra.mxu0 %v7481
        %7782 = vmatprep.subr.bf16.mxu0 %v7486
        %7783 = vmatpush1.bf16.msra.mxu0 %v7485
        %7784 = vmatprep.subr.bf16.mxu0 %v7490
        %7785 = vmatpush1.bf16.msra.mxu0 %v7489
        %7786 = vmatprep.subr.bf16.mxu0 %v7494
        %7787 = vmatpush1.bf16.msra.mxu0 %v7493
        %7788 = vmatprep.subr.bf16.mxu0 %v7498
        %7789 = vmatpush1.bf16.msra.mxu0 %v7497
        %7790 = vmatprep.subr.bf16.mxu0 %v7502
        %7791 = vmatpush1.bf16.msra.mxu0 %v7501
        %7792 = vmatprep.subr.bf16.mxu0 %v7506
        %7793 = vmatpush1.bf16.msra.mxu0 %v7505
        %7794 = vmatprep.subr.bf16.mxu0 %v7510
        %7795 = vmatpush1.bf16.msra.mxu0 %v7509
        %7796 = vmatprep.subr.bf16.mxu0 %v7514
        %7797 = vmatpush1.bf16.msra.mxu0 %v7513
        %7798 = vmatprep.mubr.bf16.mxu0 %v6874
        %7799 = vmatmul.mubr.bf16.gmra.mrb[0].mxu0 %v6873
        %v7800 = vpop.f32.mrb[0].mxu0
        %v7801 = vadd.f32 %v7760, %v7800
        %v7802 = vpop.f32.mrb[0].mxu0
        %v7803 = vadd.f32 %v7762, %v7802
        %v7804 = vpop.f32.mrb[0].mxu0
        %v7805 = vpop.f32.mrb[0].mxu0
        %7806 = vdwg.mxu0
        %v7935 = vunpack.c.l.b16 %v6743
        %v7936 = vunpack.c.h.b16 %v6743
        %v7937 = vunpack.c.l.b16 %v6744
        %v7938 = vunpack.c.h.b16 %v6744
        %v7939 = vunpack.c.l.b16 %v6745
        %v7940 = vunpack.c.h.b16 %v6745
        %v7941 = vunpack.c.l.b16 %v6746
        %v7942 = vunpack.c.h.b16 %v6746
        %v7943 = vunpack.c.l.b16 %v6747
        %v7944 = vunpack.c.h.b16 %v6747
        %v7945 = vunpack.c.l.b16 %v6748
        %v7946 = vunpack.c.h.b16 %v6748
        %v7947 = vunpack.c.l.b16 %v6749
        %v7948 = vunpack.c.h.b16 %v6749
        %v7949 = vunpack.c.l.b16 %v6750
        %v7950 = vunpack.c.h.b16 %v6750
        %v7951 = vunpack.c.l.b16 %v6751
        %v7952 = vunpack.c.h.b16 %v6751
        %v7953 = vunpack.c.l.b16 %v6752
        %v7954 = vunpack.c.h.b16 %v6752
        %v7955 = vunpack.c.l.b16 %v6753
        %v7956 = vunpack.c.h.b16 %v6753
        %v7957 = vunpack.c.l.b16 %v6754
        %v7958 = vunpack.c.h.b16 %v6754
        %v7959 = vunpack.c.l.b16 %v6755
        %v7960 = vunpack.c.h.b16 %v6755
        %v7961 = vunpack.c.l.b16 %v6756
        %v7962 = vunpack.c.h.b16 %v6756
        %v7963 = vunpack.c.l.b16 %v6757
        %v7964 = vunpack.c.h.b16 %v6757
        %v7965 = vunpack.c.l.b16 %v6758
        %v7966 = vunpack.c.h.b16 %v6758
        %v7967 = vunpack.c.l.b16 %v6759
        %v7968 = vunpack.c.h.b16 %v6759
        %v7969 = vunpack.c.l.b16 %v6760
        %v7970 = vunpack.c.h.b16 %v6760
        %v7971 = vunpack.c.l.b16 %v6761
        %v7972 = vunpack.c.h.b16 %v6761
        %v7973 = vunpack.c.l.b16 %v6762
        %v7974 = vunpack.c.h.b16 %v6762
        %v7975 = vunpack.c.l.b16 %v6763
        %v7976 = vunpack.c.h.b16 %v6763
        %v7977 = vunpack.c.l.b16 %v6764
        %v7978 = vunpack.c.h.b16 %v6764
        %v7979 = vunpack.c.l.b16 %v6765
        %v7980 = vunpack.c.h.b16 %v6765
        %v7981 = vunpack.c.l.b16 %v6766
        %v7982 = vunpack.c.h.b16 %v6766
        %v7983 = vunpack.c.l.b16 %v6767
        %v7984 = vunpack.c.h.b16 %v6767
        %v7985 = vunpack.c.l.b16 %v6768
        %v7986 = vunpack.c.h.b16 %v6768
        %v7987 = vunpack.c.l.b16 %v6769
        %v7988 = vunpack.c.h.b16 %v6769
        %v7989 = vunpack.c.l.b16 %v6770
        %v7990 = vunpack.c.h.b16 %v6770
        %v7991 = vunpack.c.l.b16 %v6771
        %v7992 = vunpack.c.h.b16 %v6771
        %v7993 = vunpack.c.l.b16 %v6772
        %v7994 = vunpack.c.h.b16 %v6772
        %v7995 = vunpack.c.l.b16 %v6773
        %v7996 = vunpack.c.h.b16 %v6773
        %v7997 = vunpack.c.l.b16 %v6774
        %v7998 = vunpack.c.h.b16 %v6774
        %v7999 = vunpack.c.l.b16 %v6775
        %v8000 = vunpack.c.h.b16 %v6775
        %v8001 = vunpack.c.l.b16 %v6776
        %v8002 = vunpack.c.h.b16 %v6776
        %v8003 = vunpack.c.l.b16 %v6777
        %v8004 = vunpack.c.h.b16 %v6777
        %v8005 = vunpack.c.l.b16 %v6778
        %v8006 = vunpack.c.h.b16 %v6778
        %v8007 = vunpack.c.l.b16 %v6779
        %v8008 = vunpack.c.h.b16 %v6779
        %v8009 = vunpack.c.l.b16 %v6780
        %v8010 = vunpack.c.h.b16 %v6780
        %v8011 = vunpack.c.l.b16 %v6781
        %v8012 = vunpack.c.h.b16 %v6781
        %v8013 = vunpack.c.l.b16 %v6782
        %v8014 = vunpack.c.h.b16 %v6782
        %v8015 = vunpack.c.l.b16 %v6783
        %v8016 = vunpack.c.h.b16 %v6783
        %v8017 = vunpack.c.l.b16 %v6784
        %v8018 = vunpack.c.h.b16 %v6784
        %v8019 = vunpack.c.l.b16 %v6785
        %v8020 = vunpack.c.h.b16 %v6785
        %v8021 = vunpack.c.l.b16 %v6786
        %v8022 = vunpack.c.h.b16 %v6786
        %v8023 = vunpack.c.l.b16 %v6787
        %v8024 = vunpack.c.h.b16 %v6787
        %v8025 = vunpack.c.l.b16 %v6788
        %v8026 = vunpack.c.h.b16 %v6788
        %v8027 = vunpack.c.l.b16 %v6789
        %v8028 = vunpack.c.h.b16 %v6789
        %v8029 = vunpack.c.l.b16 %v6790
        %v8030 = vunpack.c.h.b16 %v6790
        %v8031 = vunpack.c.l.b16 %v6791
        %v8032 = vunpack.c.h.b16 %v6791
        %v8033 = vunpack.c.l.b16 %v6792
        %v8034 = vunpack.c.h.b16 %v6792
        %v8035 = vunpack.c.l.b16 %v6793
        %v8036 = vunpack.c.h.b16 %v6793
        %v8037 = vunpack.c.l.b16 %v6794
        %v8038 = vunpack.c.h.b16 %v6794
        %v8039 = vunpack.c.l.b16 %v6795
        %v8040 = vunpack.c.h.b16 %v6795
        %v8041 = vunpack.c.l.b16 %v6796
        %v8042 = vunpack.c.h.b16 %v6796
        %v8043 = vunpack.c.l.b16 %v6797
        %v8044 = vunpack.c.h.b16 %v6797
        %v8045 = vunpack.c.l.b16 %v6798
        %v8046 = vunpack.c.h.b16 %v6798
        %v8047 = vunpack.c.l.b16 %v6799
        %v8048 = vunpack.c.h.b16 %v6799
        %v8049 = vunpack.c.l.b16 %v6800
        %v8050 = vunpack.c.h.b16 %v6800
        %v8051 = vunpack.c.l.b16 %v6801
        %v8052 = vunpack.c.h.b16 %v6801
        %v8053 = vunpack.c.l.b16 %v6802
        %v8054 = vunpack.c.h.b16 %v6802
        %v8055 = vunpack.c.l.b16 %v6803
        %v8056 = vunpack.c.h.b16 %v6803
        %v8057 = vunpack.c.l.b16 %v6804
        %v8058 = vunpack.c.h.b16 %v6804
        %v8059 = vunpack.c.l.b16 %v6805
        %v8060 = vunpack.c.h.b16 %v6805
        %v8061 = vunpack.c.l.b16 %v6806
        %v8062 = vunpack.c.h.b16 %v6806
        %v8063 = vunpack.c.l.b16 %v6807
        %v8064 = vunpack.c.h.b16 %v6807
        %v8065 = vunpack.c.l.b16 %v6808
        %v8066 = vunpack.c.h.b16 %v6808
        %v8067 = vunpack.c.l.b16 %v6809
        %v8068 = vunpack.c.h.b16 %v6809
        %v8069 = vunpack.c.l.b16 %v6810
        %v8070 = vunpack.c.h.b16 %v6810
        %v8071 = vunpack.c.l.b16 %v6811
        %v8072 = vunpack.c.h.b16 %v6811
        %v8073 = vunpack.c.l.b16 %v6812
        %v8074 = vunpack.c.h.b16 %v6812
        %v8075 = vunpack.c.l.b16 %v6813
        %v8076 = vunpack.c.h.b16 %v6813
        %v8077 = vunpack.c.l.b16 %v6814
        %v8078 = vunpack.c.h.b16 %v6814
        %v8079 = vunpack.c.l.b16 %v6815
        %v8080 = vunpack.c.h.b16 %v6815
        %v8081 = vunpack.c.l.b16 %v6816
        %v8082 = vunpack.c.h.b16 %v6816
        %v8083 = vunpack.c.l.b16 %v6817
        %v8084 = vunpack.c.h.b16 %v6817
        %v8085 = vunpack.c.l.b16 %v6818
        %v8086 = vunpack.c.h.b16 %v6818
        %v8087 = vunpack.c.l.b16 %v6819
        %v8088 = vunpack.c.h.b16 %v6819
        %v8089 = vunpack.c.l.b16 %v6820
        %v8090 = vunpack.c.h.b16 %v6820
        %v8091 = vunpack.c.l.b16 %v6821
        %v8092 = vunpack.c.h.b16 %v6821
        %v8093 = vunpack.c.l.b16 %v6822
        %v8094 = vunpack.c.h.b16 %v6822
        %v8095 = vunpack.c.l.b16 %v6823
        %v8096 = vunpack.c.h.b16 %v6823
        %v8097 = vunpack.c.l.b16 %v6824
        %v8098 = vunpack.c.h.b16 %v6824
        %v8099 = vunpack.c.l.b16 %v6825
        %v8100 = vunpack.c.h.b16 %v6825
        %v8101 = vunpack.c.l.b16 %v6826
        %v8102 = vunpack.c.h.b16 %v6826
        %v8103 = vunpack.c.l.b16 %v6827
        %v8104 = vunpack.c.h.b16 %v6827
        %v8105 = vunpack.c.l.b16 %v6828
        %v8106 = vunpack.c.h.b16 %v6828
        %v8107 = vunpack.c.l.b16 %v6829
        %v8108 = vunpack.c.h.b16 %v6829
        %v8109 = vunpack.c.l.b16 %v6830
        %v8110 = vunpack.c.h.b16 %v6830
        %v8111 = vunpack.c.l.b16 %v6831
        %v8112 = vunpack.c.h.b16 %v6831
        %v8113 = vunpack.c.l.b16 %v6832
        %v8114 = vunpack.c.h.b16 %v6832
        %v8115 = vunpack.c.l.b16 %v6833
        %v8116 = vunpack.c.h.b16 %v6833
        %v8117 = vunpack.c.l.b16 %v6834
        %v8118 = vunpack.c.h.b16 %v6834
        %v8119 = vunpack.c.l.b16 %v6835
        %v8120 = vunpack.c.h.b16 %v6835
        %v8121 = vunpack.c.l.b16 %v6836
        %v8122 = vunpack.c.h.b16 %v6836
        %v8123 = vunpack.c.l.b16 %v6837
        %v8124 = vunpack.c.h.b16 %v6837
        %v8125 = vunpack.c.l.b16 %v6838
        %v8126 = vunpack.c.h.b16 %v6838
        %v8127 = vunpack.c.l.b16 %v6839
        %v8128 = vunpack.c.h.b16 %v6839
        %v8129 = vunpack.c.l.b16 %v6840
        %v8130 = vunpack.c.h.b16 %v6840
        %v8131 = vunpack.c.l.b16 %v6841
        %v8132 = vunpack.c.h.b16 %v6841
        %v8133 = vunpack.c.l.b16 %v6842
        %v8134 = vunpack.c.h.b16 %v6842
        %v8135 = vunpack.c.l.b16 %v6843
        %v8136 = vunpack.c.h.b16 %v6843
        %v8137 = vunpack.c.l.b16 %v6844
        %v8138 = vunpack.c.h.b16 %v6844
        %v8139 = vunpack.c.l.b16 %v6845
        %v8140 = vunpack.c.h.b16 %v6845
        %v8141 = vunpack.c.l.b16 %v6846
        %v8142 = vunpack.c.h.b16 %v6846
        %v8143 = vunpack.c.l.b16 %v6847
        %v8144 = vunpack.c.h.b16 %v6847
        %v8145 = vunpack.c.l.b16 %v6848
        %v8146 = vunpack.c.h.b16 %v6848
        %v8147 = vunpack.c.l.b16 %v6849
        %v8148 = vunpack.c.h.b16 %v6849
        %v8149 = vunpack.c.l.b16 %v6850
        %v8150 = vunpack.c.h.b16 %v6850
        %v8151 = vunpack.c.l.b16 %v6851
        %v8152 = vunpack.c.h.b16 %v6851
        %v8153 = vunpack.c.l.b16 %v6852
        %v8154 = vunpack.c.h.b16 %v6852
        %v8155 = vunpack.c.l.b16 %v6853
        %v8156 = vunpack.c.h.b16 %v6853
        %v8157 = vunpack.c.l.b16 %v6854
        %v8158 = vunpack.c.h.b16 %v6854
        %v8159 = vunpack.c.l.b16 %v6855
        %v8160 = vunpack.c.h.b16 %v6855
        %v8161 = vunpack.c.l.b16 %v6856
        %v8162 = vunpack.c.h.b16 %v6856
        %v8163 = vunpack.c.l.b16 %v6857
        %v8164 = vunpack.c.h.b16 %v6857
        %v8165 = vunpack.c.l.b16 %v6858
        %v8166 = vunpack.c.h.b16 %v6858
        %v8167 = vunpack.c.l.b16 %v6859
        %v8168 = vunpack.c.h.b16 %v6859
        %v8169 = vunpack.c.l.b16 %v6860
        %v8170 = vunpack.c.h.b16 %v6860
        %v8171 = vunpack.c.l.b16 %v6861
        %v8172 = vunpack.c.h.b16 %v6861
        %v8173 = vunpack.c.l.b16 %v6862
        %v8174 = vunpack.c.h.b16 %v6862
        %v8175 = vunpack.c.l.b16 %v6863
        %v8176 = vunpack.c.h.b16 %v6863
        %v8177 = vunpack.c.l.b16 %v6864
        %v8178 = vunpack.c.h.b16 %v6864
        %v8179 = vunpack.c.l.b16 %v6865
        %v8180 = vunpack.c.h.b16 %v6865
        %v8181 = vunpack.c.l.b16 %v6866
        %v8182 = vunpack.c.h.b16 %v6866
        %v8183 = vunpack.c.l.b16 %v6867
        %v8184 = vunpack.c.h.b16 %v6867
        %v8185 = vunpack.c.l.b16 %v6868
        %v8186 = vunpack.c.h.b16 %v6868
        %v8187 = vunpack.c.l.b16 %v6869
        %v8188 = vunpack.c.h.b16 %v6869
        %v8189 = vunpack.c.l.b16 %v6870
        %v8190 = vunpack.c.h.b16 %v6870
        %v8191 = vpack.c.b16 %v7939, %v7935
        %v8192 = vpack.c.b16 %v7940, %v7936
        %v8193 = vpack.c.b16 %v7941, %v7937
        %v8194 = vpack.c.b16 %v7942, %v7938
        %v8195 = vpack.c.b16 %v7947, %v7943
        %v8196 = vpack.c.b16 %v7948, %v7944
        %v8197 = vpack.c.b16 %v7949, %v7945
        %v8198 = vpack.c.b16 %v7950, %v7946
        %v8199 = vpack.c.b16 %v7955, %v7951
        %v8200 = vpack.c.b16 %v7956, %v7952
        %v8201 = vpack.c.b16 %v7957, %v7953
        %v8202 = vpack.c.b16 %v7958, %v7954
        %v8203 = vpack.c.b16 %v7963, %v7959
        %v8204 = vpack.c.b16 %v7964, %v7960
        %v8205 = vpack.c.b16 %v7965, %v7961
        %v8206 = vpack.c.b16 %v7966, %v7962
        %v8207 = vpack.c.b16 %v7971, %v7967
        %v8208 = vpack.c.b16 %v7972, %v7968
        %v8209 = vpack.c.b16 %v7973, %v7969
        %v8210 = vpack.c.b16 %v7974, %v7970
        %v8211 = vpack.c.b16 %v7979, %v7975
        %v8212 = vpack.c.b16 %v7980, %v7976
        %v8213 = vpack.c.b16 %v7981, %v7977
        %v8214 = vpack.c.b16 %v7982, %v7978
        %v8215 = vpack.c.b16 %v7987, %v7983
        %v8216 = vpack.c.b16 %v7988, %v7984
        %v8217 = vpack.c.b16 %v7989, %v7985
        %v8218 = vpack.c.b16 %v7990, %v7986
        %v8219 = vpack.c.b16 %v7995, %v7991
        %v8220 = vpack.c.b16 %v7996, %v7992
        %v8221 = vpack.c.b16 %v7997, %v7993
        %v8222 = vpack.c.b16 %v7998, %v7994
        %v8223 = vpack.c.b16 %v8003, %v7999
        %v8224 = vpack.c.b16 %v8004, %v8000
        %v8225 = vpack.c.b16 %v8005, %v8001
        %v8226 = vpack.c.b16 %v8006, %v8002
        %v8227 = vpack.c.b16 %v8011, %v8007
        %v8228 = vpack.c.b16 %v8012, %v8008
        %v8229 = vpack.c.b16 %v8013, %v8009
        %v8230 = vpack.c.b16 %v8014, %v8010
        %v8231 = vpack.c.b16 %v8019, %v8015
        %v8232 = vpack.c.b16 %v8020, %v8016
        %v8233 = vpack.c.b16 %v8021, %v8017
        %v8234 = vpack.c.b16 %v8022, %v8018
        %v8235 = vpack.c.b16 %v8027, %v8023
        %v8236 = vpack.c.b16 %v8028, %v8024
        %v8237 = vpack.c.b16 %v8029, %v8025
        %v8238 = vpack.c.b16 %v8030, %v8026
        %v8239 = vpack.c.b16 %v8035, %v8031
        %v8240 = vpack.c.b16 %v8036, %v8032
        %v8241 = vpack.c.b16 %v8037, %v8033
        %v8242 = vpack.c.b16 %v8038, %v8034
        %v8243 = vpack.c.b16 %v8043, %v8039
        %v8244 = vpack.c.b16 %v8044, %v8040
        %v8245 = vpack.c.b16 %v8045, %v8041
        %v8246 = vpack.c.b16 %v8046, %v8042
        %v8247 = vpack.c.b16 %v8051, %v8047
        %v8248 = vpack.c.b16 %v8052, %v8048
        %v8249 = vpack.c.b16 %v8053, %v8049
        %v8250 = vpack.c.b16 %v8054, %v8050
        %v8251 = vpack.c.b16 %v8059, %v8055
        %v8252 = vpack.c.b16 %v8060, %v8056
        %v8253 = vpack.c.b16 %v8061, %v8057
        %v8254 = vpack.c.b16 %v8062, %v8058
        %v8255 = vpack.c.b16 %v8067, %v8063
        %v8256 = vpack.c.b16 %v8068, %v8064
        %v8257 = vpack.c.b16 %v8069, %v8065
        %v8258 = vpack.c.b16 %v8070, %v8066
        %v8259 = vpack.c.b16 %v8075, %v8071
        %v8260 = vpack.c.b16 %v8076, %v8072
        %v8261 = vpack.c.b16 %v8077, %v8073
        %v8262 = vpack.c.b16 %v8078, %v8074
        %v8263 = vpack.c.b16 %v8083, %v8079
        %v8264 = vpack.c.b16 %v8084, %v8080
        %v8265 = vpack.c.b16 %v8085, %v8081
        %v8266 = vpack.c.b16 %v8086, %v8082
        %v8267 = vpack.c.b16 %v8091, %v8087
        %v8268 = vpack.c.b16 %v8092, %v8088
        %v8269 = vpack.c.b16 %v8093, %v8089
        %v8270 = vpack.c.b16 %v8094, %v8090
        %v8271 = vpack.c.b16 %v8099, %v8095
        %v8272 = vpack.c.b16 %v8100, %v8096
        %v8273 = vpack.c.b16 %v8101, %v8097
        %v8274 = vpack.c.b16 %v8102, %v8098
        %v8275 = vpack.c.b16 %v8107, %v8103
        %v8276 = vpack.c.b16 %v8108, %v8104
        %v8277 = vpack.c.b16 %v8109, %v8105
        %v8278 = vpack.c.b16 %v8110, %v8106
        %v8279 = vpack.c.b16 %v8115, %v8111
        %v8280 = vpack.c.b16 %v8116, %v8112
        %v8281 = vpack.c.b16 %v8117, %v8113
        %v8282 = vpack.c.b16 %v8118, %v8114
        %v8283 = vpack.c.b16 %v8123, %v8119
        %v8284 = vpack.c.b16 %v8124, %v8120
        %v8285 = vpack.c.b16 %v8125, %v8121
        %v8286 = vpack.c.b16 %v8126, %v8122
        %v8287 = vpack.c.b16 %v8131, %v8127
        %v8288 = vpack.c.b16 %v8132, %v8128
        %v8289 = vpack.c.b16 %v8133, %v8129
        %v8290 = vpack.c.b16 %v8134, %v8130
        %v8291 = vpack.c.b16 %v8139, %v8135
        %v8292 = vpack.c.b16 %v8140, %v8136
        %v8293 = vpack.c.b16 %v8141, %v8137
        %v8294 = vpack.c.b16 %v8142, %v8138
        %v8295 = vpack.c.b16 %v8147, %v8143
        %v8296 = vpack.c.b16 %v8148, %v8144
        %v8297 = vpack.c.b16 %v8149, %v8145
        %v8298 = vpack.c.b16 %v8150, %v8146
        %v8299 = vpack.c.b16 %v8155, %v8151
        %v8300 = vpack.c.b16 %v8156, %v8152
        %v8301 = vpack.c.b16 %v8157, %v8153
        %v8302 = vpack.c.b16 %v8158, %v8154
        %v8303 = vpack.c.b16 %v8163, %v8159
        %v8304 = vpack.c.b16 %v8164, %v8160
        %v8305 = vpack.c.b16 %v8165, %v8161
        %v8306 = vpack.c.b16 %v8166, %v8162
        %v8307 = vpack.c.b16 %v8171, %v8167
        %v8308 = vpack.c.b16 %v8172, %v8168
        %v8309 = vpack.c.b16 %v8173, %v8169
        %v8310 = vpack.c.b16 %v8174, %v8170
        %v8311 = vpack.c.b16 %v8179, %v8175
        %v8312 = vpack.c.b16 %v8180, %v8176
        %v8313 = vpack.c.b16 %v8181, %v8177
        %v8314 = vpack.c.b16 %v8182, %v8178
        %v8315 = vpack.c.b16 %v8187, %v8183
        %v8316 = vpack.c.b16 %v8188, %v8184
        %v8317 = vpack.c.b16 %v8189, %v8185
        %v8318 = vpack.c.b16 %v8190, %v8186
        %8447 = vmatprep.subr.bf16.mxu0 %v8192
        %8448 = vmatpush1.bf16.msra.mxu0 %v8191
        %8449 = vmatprep.subr.bf16.mxu0 %v8196
        %8450 = vmatpush1.bf16.msra.mxu0 %v8195
        %8451 = vmatprep.subr.bf16.mxu0 %v8200
        %8452 = vmatpush1.bf16.msra.mxu0 %v8199
        %8453 = vmatprep.subr.bf16.mxu0 %v8204
        %8454 = vmatpush1.bf16.msra.mxu0 %v8203
        %8455 = vmatprep.subr.bf16.mxu0 %v8208
        %8456 = vmatpush1.bf16.msra.mxu0 %v8207
        %8457 = vmatprep.subr.bf16.mxu0 %v8212
        %8458 = vmatpush1.bf16.msra.mxu0 %v8211
        %8459 = vmatprep.subr.bf16.mxu0 %v8216
        %8460 = vmatpush1.bf16.msra.mxu0 %v8215
        %8461 = vmatprep.subr.bf16.mxu0 %v8220
        %8462 = vmatpush1.bf16.msra.mxu0 %v8219
        %8463 = vmatprep.subr.bf16.mxu0 %v8224
        %8464 = vmatpush1.bf16.msra.mxu0 %v8223
        %8465 = vmatprep.subr.bf16.mxu0 %v8228
        %8466 = vmatpush1.bf16.msra.mxu0 %v8227
        %8467 = vmatprep.subr.bf16.mxu0 %v8232
        %8468 = vmatpush1.bf16.msra.mxu0 %v8231
        %8469 = vmatprep.subr.bf16.mxu0 %v8236
        %8470 = vmatpush1.bf16.msra.mxu0 %v8235
        %8471 = vmatprep.subr.bf16.mxu0 %v8240
        %8472 = vmatpush1.bf16.msra.mxu0 %v8239
        %8473 = vmatprep.subr.bf16.mxu0 %v8244
        %8474 = vmatpush1.bf16.msra.mxu0 %v8243
        %8475 = vmatprep.subr.bf16.mxu0 %v8248
        %8476 = vmatpush1.bf16.msra.mxu0 %v8247
        %8477 = vmatprep.subr.bf16.mxu0 %v8252
        %8478 = vmatpush1.bf16.msra.mxu0 %v8251
        %8479 = vmatprep.mubr.bf16.mxu0 %v6740
        %8480 = vmatmul.mubr.bf16.gmra.mrb[0].mxu0 %v6739
        %v8481 = vpop.f32.mrb[0].mxu0
        %v8482 = vadd.f32 %v7719, %v8481
        %v8483 = vpop.f32.mrb[0].mxu0
        %v8484 = vadd.f32 %v7721, %v8483
        %v8485 = vpop.f32.mrb[0].mxu0
        %v8486 = vpop.f32.mrb[0].mxu0
        %8487 = vdwg.mxu0
        %8488 = vmatprep.subr.bf16.mxu0 %v8256
        %8489 = vmatpush1.bf16.msra.mxu0 %v8255
        %8490 = vmatprep.subr.bf16.mxu0 %v8260
        %8491 = vmatpush1.bf16.msra.mxu0 %v8259
        %8492 = vmatprep.subr.bf16.mxu0 %v8264
        %8493 = vmatpush1.bf16.msra.mxu0 %v8263
        %8494 = vmatprep.subr.bf16.mxu0 %v8268
        %8495 = vmatpush1.bf16.msra.mxu0 %v8267
        %8496 = vmatprep.subr.bf16.mxu0 %v8272
        %8497 = vmatpush1.bf16.msra.mxu0 %v8271
        %8498 = vmatprep.subr.bf16.mxu0 %v8276
        %8499 = vmatpush1.bf16.msra.mxu0 %v8275
        %8500 = vmatprep.subr.bf16.mxu0 %v8280
        %8501 = vmatpush1.bf16.msra.mxu0 %v8279
        %8502 = vmatprep.subr.bf16.mxu0 %v8284
        %8503 = vmatpush1.bf16.msra.mxu0 %v8283
        %8504 = vmatprep.subr.bf16.mxu0 %v8288
        %8505 = vmatpush1.bf16.msra.mxu0 %v8287
        %8506 = vmatprep.subr.bf16.mxu0 %v8292
        %8507 = vmatpush1.bf16.msra.mxu0 %v8291
        %8508 = vmatprep.subr.bf16.mxu0 %v8296
        %8509 = vmatpush1.bf16.msra.mxu0 %v8295
        %8510 = vmatprep.subr.bf16.mxu0 %v8300
        %8511 = vmatpush1.bf16.msra.mxu0 %v8299
        %8512 = vmatprep.subr.bf16.mxu0 %v8304
        %8513 = vmatpush1.bf16.msra.mxu0 %v8303
        %8514 = vmatprep.subr.bf16.mxu0 %v8308
        %8515 = vmatpush1.bf16.msra.mxu0 %v8307
        %8516 = vmatprep.subr.bf16.mxu0 %v8312
        %8517 = vmatpush1.bf16.msra.mxu0 %v8311
        %8518 = vmatprep.subr.bf16.mxu0 %v8316
        %8519 = vmatpush1.bf16.msra.mxu0 %v8315
        %8520 = vmatprep.mubr.bf16.mxu0 %v6742
        %8521 = vmatmul.mubr.bf16.gmra.mrb[0].mxu0 %v6741
        %v8522 = vpop.f32.mrb[0].mxu0
        %v8523 = vadd.f32 %v8482, %v8522
        %v8524 = vpop.f32.mrb[0].mxu0
        %v8525 = vadd.f32 %v8484, %v8524
        %v8526 = vpop.f32.mrb[0].mxu0
        %v8527 = vpop.f32.mrb[0].mxu0
        %8528 = vdwg.mxu0
        %8529 = vmatprep.subr.bf16.mxu0 %v8194
        %8530 = vmatpush1.bf16.msra.mxu0 %v8193
        %8531 = vmatprep.subr.bf16.mxu0 %v8198
        %8532 = vmatpush1.bf16.msra.mxu0 %v8197
        %8533 = vmatprep.subr.bf16.mxu0 %v8202
        %8534 = vmatpush1.bf16.msra.mxu0 %v8201
        %8535 = vmatprep.subr.bf16.mxu0 %v8206
        %8536 = vmatpush1.bf16.msra.mxu0 %v8205
        %8537 = vmatprep.subr.bf16.mxu0 %v8210
        %8538 = vmatpush1.bf16.msra.mxu0 %v8209
        %8539 = vmatprep.subr.bf16.mxu0 %v8214
        %8540 = vmatpush1.bf16.msra.mxu0 %v8213
        %8541 = vmatprep.subr.bf16.mxu0 %v8218
        %8542 = vmatpush1.bf16.msra.mxu0 %v8217
        %8543 = vmatprep.subr.bf16.mxu0 %v8222
        %8544 = vmatpush1.bf16.msra.mxu0 %v8221
        %8545 = vmatprep.subr.bf16.mxu0 %v8226
        %8546 = vmatpush1.bf16.msra.mxu0 %v8225
        %8547 = vmatprep.subr.bf16.mxu0 %v8230
        %8548 = vmatpush1.bf16.msra.mxu0 %v8229
        %8549 = vmatprep.subr.bf16.mxu0 %v8234
        %8550 = vmatpush1.bf16.msra.mxu0 %v8233
        %8551 = vmatprep.subr.bf16.mxu0 %v8238
        %8552 = vmatpush1.bf16.msra.mxu0 %v8237
        %8553 = vmatprep.subr.bf16.mxu0 %v8242
        %8554 = vmatpush1.bf16.msra.mxu0 %v8241
        %8555 = vmatprep.subr.bf16.mxu0 %v8246
        %8556 = vmatpush1.bf16.msra.mxu0 %v8245
        %8557 = vmatprep.subr.bf16.mxu0 %v8250
        %8558 = vmatpush1.bf16.msra.mxu0 %v8249
        %8559 = vmatprep.subr.bf16.mxu0 %v8254
        %8560 = vmatpush1.bf16.msra.mxu0 %v8253
        %8561 = vmatprep.mubr.bf16.mxu0 %v6740
        %8562 = vmatmul.mubr.bf16.gmra.mrb[0].mxu0 %v6739
        %v8563 = vpop.f32.mrb[0].mxu0
        %v8564 = vadd.f32 %v7801, %v8563
        %v8565 = vpop.f32.mrb[0].mxu0
        %v8566 = vadd.f32 %v7803, %v8565
        %v8567 = vpop.f32.mrb[0].mxu0
        %v8568 = vpop.f32.mrb[0].mxu0
        %8569 = vdwg.mxu0
        %8570 = vmatprep.subr.bf16.mxu0 %v8258
        %8571 = vmatpush1.bf16.msra.mxu0 %v8257
        %8572 = vmatprep.subr.bf16.mxu0 %v8262
        %8573 = vmatpush1.bf16.msra.mxu0 %v8261
        %8574 = vmatprep.subr.bf16.mxu0 %v8266
        %8575 = vmatpush1.bf16.msra.mxu0 %v8265
        %8576 = vmatprep.subr.bf16.mxu0 %v8270
        %8577 = vmatpush1.bf16.msra.mxu0 %v8269
        %8578 = vmatprep.subr.bf16.mxu0 %v8274
        %8579 = vmatpush1.bf16.msra.mxu0 %v8273
        %8580 = vmatprep.subr.bf16.mxu0 %v8278
        %8581 = vmatpush1.bf16.msra.mxu0 %v8277
        %8582 = vmatprep.subr.bf16.mxu0 %v8282
        %8583 = vmatpush1.bf16.msra.mxu0 %v8281
        %8584 = vmatprep.subr.bf16.mxu0 %v8286
        %8585 = vmatpush1.bf16.msra.mxu0 %v8285
        %8586 = vmatprep.subr.bf16.mxu0 %v8290
        %8587 = vmatpush1.bf16.msra.mxu0 %v8289
        %8588 = vmatprep.subr.bf16.mxu0 %v8294
        %8589 = vmatpush1.bf16.msra.mxu0 %v8293
        %8590 = vmatprep.subr.bf16.mxu0 %v8298
        %8591 = vmatpush1.bf16.msra.mxu0 %v8297
        %8592 = vmatprep.subr.bf16.mxu0 %v8302
        %8593 = vmatpush1.bf16.msra.mxu0 %v8301
        %8594 = vmatprep.subr.bf16.mxu0 %v8306
        %8595 = vmatpush1.bf16.msra.mxu0 %v8305
        %8596 = vmatprep.subr.bf16.mxu0 %v8310
        %8597 = vmatpush1.bf16.msra.mxu0 %v8309
        %8598 = vmatprep.subr.bf16.mxu0 %v8314
        %8599 = vmatpush1.bf16.msra.mxu0 %v8313
        %8600 = vmatprep.subr.bf16.mxu0 %v8318
        %8601 = vmatpush1.bf16.msra.mxu0 %v8317
        %8602 = vmatprep.mubr.bf16.mxu0 %v6742
        %8603 = vmatmul.mubr.bf16.gmra.mrb[0].mxu0 %v6741
        %v8604 = vpop.f32.mrb[0].mxu0
        %v8605 = vadd.f32 %v8564, %v8604
        %v8606 = vpop.f32.mrb[0].mxu0
        %v8607 = vadd.f32 %v8566, %v8606
        %v8608 = vpop.f32.mrb[0].mxu0
        %v8609 = vpop.f32.mrb[0].mxu0
        %8610 = vdwg.mxu0
        %v8611 = vld [vmem:[%s12] sm:$0xf]
        %v8613 = vlaneseq
        %v8614 = vshrl.u32 %v8613, 7
        %v8615 = vsub.s32 0, %v8614
        %v8616 = vrot.slane %v8611, %v8615
        %v8617 = vlaneseq
        %v8618 = vshrl.u32 %v8617, 7
        %v8619 = vsub.s32 1, %v8618
        %v8620 = vrot.slane %v8611, %v8619
        %v8621 = vlaneseq
        %v8622 = vshrl.u32 %v8621, 7
        %v8623 = vsub.s32 2, %v8622
        %v8624 = vrot.slane %v8611, %v8623
        %v8625 = vlaneseq
        %v8626 = vshrl.u32 %v8625, 7
        %v8627 = vsub.s32 3, %v8626
        %v8628 = vrot.slane %v8611, %v8627
        %v8633 = vadd.f32 %v8523, %v8616
        %v8634 = vadd.f32 %v8525, %v8620
        %v8635 = vadd.f32 %v8605, %v8624
        %v8636 = vadd.f32 %v8607, %v8628
        %v8637 = vmax.f32 %v8633, 0.0
        %v8638 = vmax.f32 %v8634, 0.0
        %v8639 = vmax.f32 %v8635, 0.0
        %v8640 = vmax.f32 %v8636, 0.0
        %v8641 = vpack.c.bf16 %v8637, %v8637
        %v8642 = vpack.c.bf16 %v8638, %v8638
        %v8643 = vpack.c.bf16 %v8639, %v8639
        %v8644 = vpack.c.bf16 %v8640, %v8640
        %v8645 = vld [vmem:[#allocation17] sm:$0xff]
        %v8646 = vld [vmem:[#allocation17 + $0x8] sm:$0xff]
        %v8647 = vld [vmem:[#allocation17 + $0x10] sm:$0xf]
        %v8648 = vld [vmem:[#allocation17 + $0x14] sm:$0xff]
        %v8649 = vld [vmem:[#allocation17 + $0x1c] sm:$0xff]
        %v8650 = vld [vmem:[#allocation17 + $0x24] sm:$0xf]
        %v8651 = vld [vmem:[#allocation17 + $0x28] sm:$0xff]
        %v8652 = vld [vmem:[#allocation17 + $0x30] sm:$0xff]
        %v8653 = vld [vmem:[#allocation17 + $0x38] sm:$0xf]
        %v8654 = vld [vmem:[#allocation17 + $0x3c] sm:$0xff]
        %v8655 = vld [vmem:[#allocation17 + $0x44] sm:$0xff]
        %v8656 = vld [vmem:[#allocation17 + $0x4c] sm:$0xf]
        %v8657 = vld [vmem:[#allocation17 + $0x50] sm:$0xff]
        %v8658 = vld [vmem:[#allocation17 + $0x58] sm:$0xff]
        %v8659 = vld [vmem:[#allocation17 + $0x60] sm:$0xf]
        %v8660 = vld [vmem:[#allocation17 + $0x64] sm:$0xff]
        %v8661 = vld [vmem:[#allocation17 + $0x6c] sm:$0xff]
        %v8662 = vld [vmem:[#allocation17 + $0x74] sm:$0xf]
        %v8663 = vld [vmem:[#allocation17 + $0x78] sm:$0xff]
        %v8664 = vld [vmem:[#allocation17 + $0x80] sm:$0xff]
        %v8665 = vld [vmem:[#allocation17 + $0x88] sm:$0xf]
        %v8666 = vld [vmem:[#allocation17 + $0x8c] sm:$0xff]
        %v8667 = vld [vmem:[#allocation17 + $0x94] sm:$0xff]
        %v8668 = vld [vmem:[#allocation17 + $0x9c] sm:$0xf]
        %v8669 = vld [vmem:[#allocation17 + $0xa0] sm:$0xff]
        %v8670 = vld [vmem:[#allocation17 + $0xa8] sm:$0xff]
        %v8671 = vld [vmem:[#allocation17 + $0xb0] sm:$0xf]
        %v8672 = vld [vmem:[#allocation17 + $0xb4] sm:$0xff]
        %v8673 = vld [vmem:[#allocation17 + $0xbc] sm:$0xff]
        %v8674 = vld [vmem:[#allocation17 + $0xc4] sm:$0xf]
        %v8675 = vld [vmem:[#allocation17 + $0xc8] sm:$0xff]
        %v8676 = vld [vmem:[#allocation17 + $0xd0] sm:$0xff]
        %v8677 = vld [vmem:[#allocation17 + $0xd8] sm:$0xf]
        %v8678 = vld [vmem:[#allocation17 + $0xdc] sm:$0xff]
        %v8679 = vld [vmem:[#allocation17 + $0xe4] sm:$0xff]
        %v8680 = vld [vmem:[#allocation17 + $0xec] sm:$0xf]
        %v8681 = vld [vmem:[#allocation17 + $0xf0] sm:$0xff]
        %v8682 = vld [vmem:[#allocation17 + $0xf8] sm:$0xff]
        %v8683 = vld [vmem:[#allocation17 + $0x100] sm:$0xf]
        %v8684 = vld [vmem:[#allocation17 + $0x104] sm:$0xff]
        %v8685 = vld [vmem:[#allocation17 + $0x10c] sm:$0xff]
        %v8686 = vld [vmem:[#allocation17 + $0x114] sm:$0xf]
        %v8687 = vld [vmem:[#allocation17 + $0x118] sm:$0xff]
        %v8688 = vld [vmem:[#allocation17 + $0x120] sm:$0xff]
        %v8689 = vld [vmem:[#allocation17 + $0x128] sm:$0xf]
        %v8690 = vld [vmem:[#allocation17 + $0x12c] sm:$0xff]
        %v8691 = vld [vmem:[#allocation17 + $0x134] sm:$0xff]
        %v8692 = vld [vmem:[#allocation17 + $0x13c] sm:$0xf]
        %v8693 = vld [vmem:[#allocation17 + $0x140] sm:$0xff]
        %v8694 = vld [vmem:[#allocation17 + $0x148] sm:$0xff]
        %v8695 = vld [vmem:[#allocation17 + $0x150] sm:$0xf]
        %v8696 = vld [vmem:[#allocation17 + $0x154] sm:$0xff]
        %v8697 = vld [vmem:[#allocation17 + $0x15c] sm:$0xff]
        %v8698 = vld [vmem:[#allocation17 + $0x164] sm:$0xf]
        %v8699 = vld [vmem:[#allocation17 + $0x168] sm:$0xff]
        %v8700 = vld [vmem:[#allocation17 + $0x170] sm:$0xff]
        %v8701 = vld [vmem:[#allocation17 + $0x178] sm:$0xf]
        %v8702 = vld [vmem:[#allocation17 + $0x17c] sm:$0xff]
        %v8703 = vld [vmem:[#allocation17 + $0x184] sm:$0xff]
        %v8704 = vld [vmem:[#allocation17 + $0x18c] sm:$0xf]
        %v8705 = vld [vmem:[#allocation17 + $0x190] sm:$0xff]
        %v8706 = vld [vmem:[#allocation17 + $0x198] sm:$0xff]
        %v8707 = vld [vmem:[#allocation17 + $0x1a0] sm:$0xf]
        %v8708 = vld [vmem:[#allocation17 + $0x1a4] sm:$0xff]
        %v8709 = vld [vmem:[#allocation17 + $0x1ac] sm:$0xff]
        %v8710 = vld [vmem:[#allocation17 + $0x1b4] sm:$0xf]
        %v8711 = vld [vmem:[#allocation17 + $0x1b8] sm:$0xff]
        %v8712 = vld [vmem:[#allocation17 + $0x1c0] sm:$0xff]
        %v8713 = vld [vmem:[#allocation17 + $0x1c8] sm:$0xf]
        %v8714 = vld [vmem:[#allocation17 + $0x1cc] sm:$0xff]
        %v8715 = vld [vmem:[#allocation17 + $0x1d4] sm:$0xff]
        %v8716 = vld [vmem:[#allocation17 + $0x1dc] sm:$0xf]
        %v8717 = vld [vmem:[#allocation17 + $0x1e0] sm:$0xff]
        %v8718 = vld [vmem:[#allocation17 + $0x1e8] sm:$0xff]
        %v8719 = vld [vmem:[#allocation17 + $0x1f0] sm:$0xf]
        %v8720 = vld [vmem:[#allocation17 + $0x1f4] sm:$0xff]
        %v8721 = vld [vmem:[#allocation17 + $0x1fc] sm:$0xff]
        %v8722 = vld [vmem:[#allocation17 + $0x204] sm:$0xf]
        %v8723 = vld [vmem:[#allocation17 + $0x208] sm:$0xff]
        %v8724 = vld [vmem:[#allocation17 + $0x210] sm:$0xff]
        %v8725 = vld [vmem:[#allocation17 + $0x218] sm:$0xf]
        %v8726 = vld [vmem:[#allocation17 + $0x21c] sm:$0xff]
        %v8727 = vld [vmem:[#allocation17 + $0x224] sm:$0xff]
        %v8728 = vld [vmem:[#allocation17 + $0x22c] sm:$0xf]
        %v8729 = vld [vmem:[#allocation17 + $0x230] sm:$0xff]
        %v8730 = vld [vmem:[#allocation17 + $0x238] sm:$0xff]
        %v8731 = vld [vmem:[#allocation17 + $0x240] sm:$0xf]
        %v8732 = vld [vmem:[#allocation17 + $0x244] sm:$0xff]
        %v8733 = vld [vmem:[#allocation17 + $0x24c] sm:$0xff]
        %v8734 = vld [vmem:[#allocation17 + $0x254] sm:$0xf]
        %v8735 = vld [vmem:[#allocation17 + $0x258] sm:$0xff]
        %v8736 = vld [vmem:[#allocation17 + $0x260] sm:$0xff]
        %v8737 = vld [vmem:[#allocation17 + $0x268] sm:$0xf]
        %v8738 = vld [vmem:[#allocation17 + $0x26c] sm:$0xff]
        %v8739 = vld [vmem:[#allocation17 + $0x274] sm:$0xff]
        %v8740 = vld [vmem:[#allocation17 + $0x27c] sm:$0xf]
        %v8741 = vld [vmem:[#allocation17 + $0x280] sm:$0xff]
        %v8742 = vld [vmem:[#allocation17 + $0x288] sm:$0xff]
        %v8743 = vld [vmem:[#allocation17 + $0x290] sm:$0xf]
        %v8744 = vld [vmem:[#allocation17 + $0x294] sm:$0xff]
        %v8745 = vld [vmem:[#allocation17 + $0x29c] sm:$0xff]
        %v8746 = vld [vmem:[#allocation17 + $0x2a4] sm:$0xf]
        %v8747 = vld [vmem:[#allocation17 + $0x2a8] sm:$0xff]
        %v8748 = vld [vmem:[#allocation17 + $0x2b0] sm:$0xff]
        %v8749 = vld [vmem:[#allocation17 + $0x2b8] sm:$0xf]
        %v8750 = vld [vmem:[#allocation17 + $0x2bc] sm:$0xff]
        %v8751 = vld [vmem:[#allocation17 + $0x2c4] sm:$0xff]
        %v8752 = vld [vmem:[#allocation17 + $0x2cc] sm:$0xf]
        %v8753 = vld [vmem:[#allocation17 + $0x2d0] sm:$0xff]
        %v8754 = vld [vmem:[#allocation17 + $0x2d8] sm:$0xff]
        %v8755 = vld [vmem:[#allocation17 + $0x2e0] sm:$0xf]
        %v8756 = vld [vmem:[#allocation17 + $0x2e4] sm:$0xff]
        %v8757 = vld [vmem:[#allocation17 + $0x2ec] sm:$0xff]
        %v8758 = vld [vmem:[#allocation17 + $0x2f4] sm:$0xf]
        %v8759 = vld [vmem:[#allocation17 + $0x2f8] sm:$0xff]
        %v8760 = vld [vmem:[#allocation17 + $0x300] sm:$0xff]
        %v8761 = vld [vmem:[#allocation17 + $0x308] sm:$0xf]
        %v8762 = vld [vmem:[#allocation17 + $0x30c] sm:$0xff]
        %v8763 = vld [vmem:[#allocation17 + $0x314] sm:$0xff]
        %v8764 = vld [vmem:[#allocation17 + $0x31c] sm:$0xf]
        %v8765 = vld [vmem:[#allocation17 + $0x320] sm:$0xff]
        %v8766 = vld [vmem:[#allocation17 + $0x328] sm:$0xff]
        %v8767 = vld [vmem:[#allocation17 + $0x330] sm:$0xf]
        %v8768 = vld [vmem:[#allocation17 + $0x334] sm:$0xff]
        %v8769 = vld [vmem:[#allocation17 + $0x33c] sm:$0xff]
        %v8770 = vld [vmem:[#allocation17 + $0x344] sm:$0xf]
        %v8771 = vld [vmem:[#allocation17 + $0x348] sm:$0xff]
        %v8772 = vld [vmem:[#allocation17 + $0x350] sm:$0xff]
        %v8773 = vld [vmem:[#allocation17 + $0x358] sm:$0xf]
        %v8774 = vld [vmem:[#allocation17 + $0x35c] sm:$0xff]
        %v8775 = vld [vmem:[#allocation17 + $0x364] sm:$0xff]
        %v8776 = vld [vmem:[#allocation17 + $0x36c] sm:$0xf]
        %v8777 = vld [vmem:[#allocation17 + $0x370] sm:$0xff]
        %v8778 = vld [vmem:[#allocation17 + $0x378] sm:$0xff]
        %v8779 = vld [vmem:[#allocation17 + $0x380] sm:$0xf]
        %v8780 = vld [vmem:[#allocation17 + $0x384] sm:$0xff]
        %v8781 = vld [vmem:[#allocation17 + $0x38c] sm:$0xff]
        %v8782 = vld [vmem:[#allocation17 + $0x394] sm:$0xf]
        %v8783 = vld [vmem:[#allocation17 + $0x398] sm:$0xff]
        %v8784 = vld [vmem:[#allocation17 + $0x3a0] sm:$0xff]
        %v8785 = vld [vmem:[#allocation17 + $0x3a8] sm:$0xf]
        %v8786 = vld [vmem:[#allocation17 + $0x3ac] sm:$0xff]
        %v8787 = vld [vmem:[#allocation17 + $0x3b4] sm:$0xff]
        %v8788 = vld [vmem:[#allocation17 + $0x3bc] sm:$0xf]
        %v8789 = vld [vmem:[#allocation17 + $0x3c0] sm:$0xff]
        %v8790 = vld [vmem:[#allocation17 + $0x3c8] sm:$0xff]
        %v8791 = vld [vmem:[#allocation17 + $0x3d0] sm:$0xf]
        %v8792 = vld [vmem:[#allocation17 + $0x3d4] sm:$0xff]
        %v8793 = vld [vmem:[#allocation17 + $0x3dc] sm:$0xff]
        %v8794 = vld [vmem:[#allocation17 + $0x3e4] sm:$0xf]
        %v8795 = vld [vmem:[#allocation17 + $0x3e8] sm:$0xff]
        %v8796 = vld [vmem:[#allocation17 + $0x3f0] sm:$0xff]
        %v8797 = vld [vmem:[#allocation17 + $0x3f8] sm:$0xf]
        %v8798 = vld [vmem:[#allocation17 + $0x3fc] sm:$0xff]
        %v8799 = vld [vmem:[#allocation17 + $0x404] sm:$0xff]
        %v8800 = vld [vmem:[#allocation17 + $0x40c] sm:$0xf]
        %v8801 = vld [vmem:[#allocation17 + $0x410] sm:$0xff]
        %v8802 = vld [vmem:[#allocation17 + $0x418] sm:$0xff]
        %v8803 = vld [vmem:[#allocation17 + $0x420] sm:$0xf]
        %v8804 = vld [vmem:[#allocation17 + $0x424] sm:$0xff]
        %v8805 = vld [vmem:[#allocation17 + $0x42c] sm:$0xff]
        %v8806 = vld [vmem:[#allocation17 + $0x434] sm:$0xf]
        %v8807 = vld [vmem:[#allocation17 + $0x438] sm:$0xff]
        %v8808 = vld [vmem:[#allocation17 + $0x440] sm:$0xff]
        %v8809 = vld [vmem:[#allocation17 + $0x448] sm:$0xf]
        %v8810 = vld [vmem:[#allocation17 + $0x44c] sm:$0xff]
        %v8811 = vld [vmem:[#allocation17 + $0x454] sm:$0xff]
        %v8812 = vld [vmem:[#allocation17 + $0x45c] sm:$0xf]
        %v8813 = vld [vmem:[#allocation17 + $0x460] sm:$0xff]
        %v8814 = vld [vmem:[#allocation17 + $0x468] sm:$0xff]
        %v8815 = vld [vmem:[#allocation17 + $0x470] sm:$0xf]
        %v8816 = vld [vmem:[#allocation17 + $0x474] sm:$0xff]
        %v8817 = vld [vmem:[#allocation17 + $0x47c] sm:$0xff]
        %v8818 = vld [vmem:[#allocation17 + $0x484] sm:$0xf]
        %v8819 = vld [vmem:[#allocation17 + $0x488] sm:$0xff]
        %v8820 = vld [vmem:[#allocation17 + $0x490] sm:$0xff]
        %v8821 = vld [vmem:[#allocation17 + $0x498] sm:$0xf]
        %v8822 = vld [vmem:[#allocation17 + $0x49c] sm:$0xff]
        %v8823 = vld [vmem:[#allocation17 + $0x4a4] sm:$0xff]
        %v8824 = vld [vmem:[#allocation17 + $0x4ac] sm:$0xf]
        %v8825 = vld [vmem:[#allocation17 + $0x4b0] sm:$0xff]
        %v8826 = vld [vmem:[#allocation17 + $0x4b8] sm:$0xff]
        %v8827 = vld [vmem:[#allocation17 + $0x4c0] sm:$0xf]
        %v8828 = vld [vmem:[#allocation17 + $0x4c4] sm:$0xff]
        %v8829 = vld [vmem:[#allocation17 + $0x4cc] sm:$0xff]
        %v8830 = vld [vmem:[#allocation17 + $0x4d4] sm:$0xf]
        %v8831 = vld [vmem:[#allocation17 + $0x4d8] sm:$0xff]
        %v8832 = vld [vmem:[#allocation17 + $0x4e0] sm:$0xff]
        %v8833 = vld [vmem:[#allocation17 + $0x4e8] sm:$0xf]
        %v8834 = vld [vmem:[#allocation17 + $0x4ec] sm:$0xff]
        %v8835 = vld [vmem:[#allocation17 + $0x4f4] sm:$0xff]
        %v8836 = vld [vmem:[#allocation17 + $0x4fc] sm:$0xf]
        %v8837 = vld [vmem:[%s14] sm:$0x1f]
        %v8839 = vlaneseq
        %v8840 = vshrl.u32 %v8839, 7
        %v8841 = vsub.s32 0, %v8840
        %v8842 = vrot.slane %v8837, %v8841
        %v8843 = vlaneseq
        %v8844 = vshrl.u32 %v8843, 7
        %v8845 = vsub.s32 1, %v8844
        %v8846 = vrot.slane %v8837, %v8845
        %v8847 = vlaneseq
        %v8848 = vshrl.u32 %v8847, 7
        %v8849 = vsub.s32 2, %v8848
        %v8850 = vrot.slane %v8837, %v8849
        %v8851 = vlaneseq
        %v8852 = vshrl.u32 %v8851, 7
        %v8853 = vsub.s32 3, %v8852
        %v8854 = vrot.slane %v8837, %v8853
        %v8855 = vlaneseq
        %v8856 = vshrl.u32 %v8855, 7
        %v8857 = vsub.s32 4, %v8856
        %v8858 = vrot.slane %v8837, %v8857
        %v9056 = vunpack.c.l.b16 %v8645
        %v9057 = vunpack.c.h.b16 %v8645
        %v9058 = vunpack.c.l.b16 %v8646
        %v9059 = vunpack.c.h.b16 %v8646
        %v9060 = vunpack.c.l.b16 %v8647
        %v9061 = vunpack.c.l.b16 %v8648
        %v9062 = vunpack.c.h.b16 %v8648
        %v9063 = vunpack.c.l.b16 %v8649
        %v9064 = vunpack.c.h.b16 %v8649
        %v9065 = vunpack.c.l.b16 %v8650
        %v9066 = vunpack.c.l.b16 %v8651
        %v9067 = vunpack.c.h.b16 %v8651
        %v9068 = vunpack.c.l.b16 %v8652
        %v9069 = vunpack.c.h.b16 %v8652
        %v9070 = vunpack.c.l.b16 %v8653
        %v9071 = vunpack.c.l.b16 %v8654
        %v9072 = vunpack.c.h.b16 %v8654
        %v9073 = vunpack.c.l.b16 %v8655
        %v9074 = vunpack.c.h.b16 %v8655
        %v9075 = vunpack.c.l.b16 %v8656
        %v9076 = vunpack.c.l.b16 %v8657
        %v9077 = vunpack.c.h.b16 %v8657
        %v9078 = vunpack.c.l.b16 %v8658
        %v9079 = vunpack.c.h.b16 %v8658
        %v9080 = vunpack.c.l.b16 %v8659
        %v9081 = vunpack.c.l.b16 %v8660
        %v9082 = vunpack.c.h.b16 %v8660
        %v9083 = vunpack.c.l.b16 %v8661
        %v9084 = vunpack.c.h.b16 %v8661
        %v9085 = vunpack.c.l.b16 %v8662
        %v9086 = vunpack.c.l.b16 %v8663
        %v9087 = vunpack.c.h.b16 %v8663
        %v9088 = vunpack.c.l.b16 %v8664
        %v9089 = vunpack.c.h.b16 %v8664
        %v9090 = vunpack.c.l.b16 %v8665
        %v9091 = vunpack.c.l.b16 %v8666
        %v9092 = vunpack.c.h.b16 %v8666
        %v9093 = vunpack.c.l.b16 %v8667
        %v9094 = vunpack.c.h.b16 %v8667
        %v9095 = vunpack.c.l.b16 %v8668
        %v9096 = vunpack.c.l.b16 %v8669
        %v9097 = vunpack.c.h.b16 %v8669
        %v9098 = vunpack.c.l.b16 %v8670
        %v9099 = vunpack.c.h.b16 %v8670
        %v9100 = vunpack.c.l.b16 %v8671
        %v9101 = vunpack.c.l.b16 %v8672
        %v9102 = vunpack.c.h.b16 %v8672
        %v9103 = vunpack.c.l.b16 %v8673
        %v9104 = vunpack.c.h.b16 %v8673
        %v9105 = vunpack.c.l.b16 %v8674
        %v9106 = vunpack.c.l.b16 %v8675
        %v9107 = vunpack.c.h.b16 %v8675
        %v9108 = vunpack.c.l.b16 %v8676
        %v9109 = vunpack.c.h.b16 %v8676
        %v9110 = vunpack.c.l.b16 %v8677
        %v9111 = vunpack.c.l.b16 %v8678
        %v9112 = vunpack.c.h.b16 %v8678
        %v9113 = vunpack.c.l.b16 %v8679
        %v9114 = vunpack.c.h.b16 %v8679
        %v9115 = vunpack.c.l.b16 %v8680
        %v9116 = vunpack.c.l.b16 %v8681
        %v9117 = vunpack.c.h.b16 %v8681
        %v9118 = vunpack.c.l.b16 %v8682
        %v9119 = vunpack.c.h.b16 %v8682
        %v9120 = vunpack.c.l.b16 %v8683
        %v9121 = vunpack.c.l.b16 %v8684
        %v9122 = vunpack.c.h.b16 %v8684
        %v9123 = vunpack.c.l.b16 %v8685
        %v9124 = vunpack.c.h.b16 %v8685
        %v9125 = vunpack.c.l.b16 %v8686
        %v9126 = vunpack.c.l.b16 %v8687
        %v9127 = vunpack.c.h.b16 %v8687
        %v9128 = vunpack.c.l.b16 %v8688
        %v9129 = vunpack.c.h.b16 %v8688
        %v9130 = vunpack.c.l.b16 %v8689
        %v9131 = vunpack.c.l.b16 %v8690
        %v9132 = vunpack.c.h.b16 %v8690
        %v9133 = vunpack.c.l.b16 %v8691
        %v9134 = vunpack.c.h.b16 %v8691
        %v9135 = vunpack.c.l.b16 %v8692
        %v9136 = vunpack.c.l.b16 %v8693
        %v9137 = vunpack.c.h.b16 %v8693
        %v9138 = vunpack.c.l.b16 %v8694
        %v9139 = vunpack.c.h.b16 %v8694
        %v9140 = vunpack.c.l.b16 %v8695
        %v9141 = vunpack.c.l.b16 %v8696
        %v9142 = vunpack.c.h.b16 %v8696
        %v9143 = vunpack.c.l.b16 %v8697
        %v9144 = vunpack.c.h.b16 %v8697
        %v9145 = vunpack.c.l.b16 %v8698
        %v9146 = vunpack.c.l.b16 %v8699
        %v9147 = vunpack.c.h.b16 %v8699
        %v9148 = vunpack.c.l.b16 %v8700
        %v9149 = vunpack.c.h.b16 %v8700
        %v9150 = vunpack.c.l.b16 %v8701
        %v9151 = vunpack.c.l.b16 %v8702
        %v9152 = vunpack.c.h.b16 %v8702
        %v9153 = vunpack.c.l.b16 %v8703
        %v9154 = vunpack.c.h.b16 %v8703
        %v9155 = vunpack.c.l.b16 %v8704
        %v9156 = vunpack.c.l.b16 %v8705
        %v9157 = vunpack.c.h.b16 %v8705
        %v9158 = vunpack.c.l.b16 %v8706
        %v9159 = vunpack.c.h.b16 %v8706
        %v9160 = vunpack.c.l.b16 %v8707
        %v9161 = vunpack.c.l.b16 %v8708
        %v9162 = vunpack.c.h.b16 %v8708
        %v9163 = vunpack.c.l.b16 %v8709
        %v9164 = vunpack.c.h.b16 %v8709
        %v9165 = vunpack.c.l.b16 %v8710
        %v9166 = vunpack.c.l.b16 %v8711
        %v9167 = vunpack.c.h.b16 %v8711
        %v9168 = vunpack.c.l.b16 %v8712
        %v9169 = vunpack.c.h.b16 %v8712
        %v9170 = vunpack.c.l.b16 %v8713
        %v9171 = vunpack.c.l.b16 %v8714
        %v9172 = vunpack.c.h.b16 %v8714
        %v9173 = vunpack.c.l.b16 %v8715
        %v9174 = vunpack.c.h.b16 %v8715
        %v9175 = vunpack.c.l.b16 %v8716
        %v9176 = vunpack.c.l.b16 %v8717
        %v9177 = vunpack.c.h.b16 %v8717
        %v9178 = vunpack.c.l.b16 %v8718
        %v9179 = vunpack.c.h.b16 %v8718
        %v9180 = vunpack.c.l.b16 %v8719
        %v9181 = vunpack.c.l.b16 %v8720
        %v9182 = vunpack.c.h.b16 %v8720
        %v9183 = vunpack.c.l.b16 %v8721
        %v9184 = vunpack.c.h.b16 %v8721
        %v9185 = vunpack.c.l.b16 %v8722
        %v9186 = vunpack.c.l.b16 %v8723
        %v9187 = vunpack.c.h.b16 %v8723
        %v9188 = vunpack.c.l.b16 %v8724
        %v9189 = vunpack.c.h.b16 %v8724
        %v9190 = vunpack.c.l.b16 %v8725
        %v9191 = vunpack.c.l.b16 %v8726
        %v9192 = vunpack.c.h.b16 %v8726
        %v9193 = vunpack.c.l.b16 %v8727
        %v9194 = vunpack.c.h.b16 %v8727
        %v9195 = vunpack.c.l.b16 %v8728
        %v9196 = vunpack.c.l.b16 %v8729
        %v9197 = vunpack.c.h.b16 %v8729
        %v9198 = vunpack.c.l.b16 %v8730
        %v9199 = vunpack.c.h.b16 %v8730
        %v9200 = vunpack.c.l.b16 %v8731
        %v9201 = vunpack.c.l.b16 %v8732
        %v9202 = vunpack.c.h.b16 %v8732
        %v9203 = vunpack.c.l.b16 %v8733
        %v9204 = vunpack.c.h.b16 %v8733
        %v9205 = vunpack.c.l.b16 %v8734
        %v9206 = vunpack.c.l.b16 %v8735
        %v9207 = vunpack.c.h.b16 %v8735
        %v9208 = vunpack.c.l.b16 %v8736
        %v9209 = vunpack.c.h.b16 %v8736
        %v9210 = vunpack.c.l.b16 %v8737
        %v9211 = vunpack.c.l.b16 %v8738
        %v9212 = vunpack.c.h.b16 %v8738
        %v9213 = vunpack.c.l.b16 %v8739
        %v9214 = vunpack.c.h.b16 %v8739
        %v9215 = vunpack.c.l.b16 %v8740
        %v9216 = vunpack.c.l.b16 %v8741
        %v9217 = vunpack.c.h.b16 %v8741
        %v9218 = vunpack.c.l.b16 %v8742
        %v9219 = vunpack.c.h.b16 %v8742
        %v9220 = vunpack.c.l.b16 %v8743
        %v9221 = vunpack.c.l.b16 %v8744
        %v9222 = vunpack.c.h.b16 %v8744
        %v9223 = vunpack.c.l.b16 %v8745
        %v9224 = vunpack.c.h.b16 %v8745
        %v9225 = vunpack.c.l.b16 %v8746
        %v9226 = vunpack.c.l.b16 %v8747
        %v9227 = vunpack.c.h.b16 %v8747
        %v9228 = vunpack.c.l.b16 %v8748
        %v9229 = vunpack.c.h.b16 %v8748
        %v9230 = vunpack.c.l.b16 %v8749
        %v9231 = vunpack.c.l.b16 %v8750
        %v9232 = vunpack.c.h.b16 %v8750
        %v9233 = vunpack.c.l.b16 %v8751
        %v9234 = vunpack.c.h.b16 %v8751
        %v9235 = vunpack.c.l.b16 %v8752
        %v9236 = vunpack.c.l.b16 %v8753
        %v9237 = vunpack.c.h.b16 %v8753
        %v9238 = vunpack.c.l.b16 %v8754
        %v9239 = vunpack.c.h.b16 %v8754
        %v9240 = vunpack.c.l.b16 %v8755
        %v9241 = vunpack.c.l.b16 %v8756
        %v9242 = vunpack.c.h.b16 %v8756
        %v9243 = vunpack.c.l.b16 %v8757
        %v9244 = vunpack.c.h.b16 %v8757
        %v9245 = vunpack.c.l.b16 %v8758
        %v9246 = vunpack.c.l.b16 %v8759
        %v9247 = vunpack.c.h.b16 %v8759
        %v9248 = vunpack.c.l.b16 %v8760
        %v9249 = vunpack.c.h.b16 %v8760
        %v9250 = vunpack.c.l.b16 %v8761
        %v9251 = vunpack.c.l.b16 %v8762
        %v9252 = vunpack.c.h.b16 %v8762
        %v9253 = vunpack.c.l.b16 %v8763
        %v9254 = vunpack.c.h.b16 %v8763
        %v9255 = vunpack.c.l.b16 %v8764
        %v9256 = vunpack.c.l.b16 %v8765
        %v9257 = vunpack.c.h.b16 %v8765
        %v9258 = vunpack.c.l.b16 %v8766
        %v9259 = vunpack.c.h.b16 %v8766
        %v9260 = vunpack.c.l.b16 %v8767
        %v9261 = vunpack.c.l.b16 %v8768
        %v9262 = vunpack.c.h.b16 %v8768
        %v9263 = vunpack.c.l.b16 %v8769
        %v9264 = vunpack.c.h.b16 %v8769
        %v9265 = vunpack.c.l.b16 %v8770
        %v9266 = vunpack.c.l.b16 %v8771
        %v9267 = vunpack.c.h.b16 %v8771
        %v9268 = vunpack.c.l.b16 %v8772
        %v9269 = vunpack.c.h.b16 %v8772
        %v9270 = vunpack.c.l.b16 %v8773
        %v9271 = vunpack.c.l.b16 %v8774
        %v9272 = vunpack.c.h.b16 %v8774
        %v9273 = vunpack.c.l.b16 %v8775
        %v9274 = vunpack.c.h.b16 %v8775
        %v9275 = vunpack.c.l.b16 %v8776
        %v9276 = vunpack.c.l.b16 %v8777
        %v9277 = vunpack.c.h.b16 %v8777
        %v9278 = vunpack.c.l.b16 %v8778
        %v9279 = vunpack.c.h.b16 %v8778
        %v9280 = vunpack.c.l.b16 %v8779
        %v9281 = vunpack.c.l.b16 %v8780
        %v9282 = vunpack.c.h.b16 %v8780
        %v9283 = vunpack.c.l.b16 %v8781
        %v9284 = vunpack.c.h.b16 %v8781
        %v9285 = vunpack.c.l.b16 %v8782
        %v9286 = vunpack.c.l.b16 %v8783
        %v9287 = vunpack.c.h.b16 %v8783
        %v9288 = vunpack.c.l.b16 %v8784
        %v9289 = vunpack.c.h.b16 %v8784
        %v9290 = vunpack.c.l.b16 %v8785
        %v9291 = vunpack.c.l.b16 %v8786
        %v9292 = vunpack.c.h.b16 %v8786
        %v9293 = vunpack.c.l.b16 %v8787
        %v9294 = vunpack.c.h.b16 %v8787
        %v9295 = vunpack.c.l.b16 %v8788
        %v9296 = vunpack.c.l.b16 %v8789
        %v9297 = vunpack.c.h.b16 %v8789
        %v9298 = vunpack.c.l.b16 %v8790
        %v9299 = vunpack.c.h.b16 %v8790
        %v9300 = vunpack.c.l.b16 %v8791
        %v9301 = vunpack.c.l.b16 %v8792
        %v9302 = vunpack.c.h.b16 %v8792
        %v9303 = vunpack.c.l.b16 %v8793
        %v9304 = vunpack.c.h.b16 %v8793
        %v9305 = vunpack.c.l.b16 %v8794
        %v9306 = vunpack.c.l.b16 %v8795
        %v9307 = vunpack.c.h.b16 %v8795
        %v9308 = vunpack.c.l.b16 %v8796
        %v9309 = vunpack.c.h.b16 %v8796
        %v9310 = vunpack.c.l.b16 %v8797
        %v9311 = vunpack.c.l.b16 %v8798
        %v9312 = vunpack.c.h.b16 %v8798
        %v9313 = vunpack.c.l.b16 %v8799
        %v9314 = vunpack.c.h.b16 %v8799
        %v9315 = vunpack.c.l.b16 %v8800
        %v9316 = vunpack.c.l.b16 %v8801
        %v9317 = vunpack.c.h.b16 %v8801
        %v9318 = vunpack.c.l.b16 %v8802
        %v9319 = vunpack.c.h.b16 %v8802
        %v9320 = vunpack.c.l.b16 %v8803
        %v9321 = vunpack.c.l.b16 %v8804
        %v9322 = vunpack.c.h.b16 %v8804
        %v9323 = vunpack.c.l.b16 %v8805
        %v9324 = vunpack.c.h.b16 %v8805
        %v9325 = vunpack.c.l.b16 %v8806
        %v9326 = vunpack.c.l.b16 %v8807
        %v9327 = vunpack.c.h.b16 %v8807
        %v9328 = vunpack.c.l.b16 %v8808
        %v9329 = vunpack.c.h.b16 %v8808
        %v9330 = vunpack.c.l.b16 %v8809
        %v9331 = vunpack.c.l.b16 %v8810
        %v9332 = vunpack.c.h.b16 %v8810
        %v9333 = vunpack.c.l.b16 %v8811
        %v9334 = vunpack.c.h.b16 %v8811
        %v9335 = vunpack.c.l.b16 %v8812
        %v9336 = vunpack.c.l.b16 %v8813
        %v9337 = vunpack.c.h.b16 %v8813
        %v9338 = vunpack.c.l.b16 %v8814
        %v9339 = vunpack.c.h.b16 %v8814
        %v9340 = vunpack.c.l.b16 %v8815
        %v9341 = vunpack.c.l.b16 %v8816
        %v9342 = vunpack.c.h.b16 %v8816
        %v9343 = vunpack.c.l.b16 %v8817
        %v9344 = vunpack.c.h.b16 %v8817
        %v9345 = vunpack.c.l.b16 %v8818
        %v9346 = vunpack.c.l.b16 %v8819
        %v9347 = vunpack.c.h.b16 %v8819
        %v9348 = vunpack.c.l.b16 %v8820
        %v9349 = vunpack.c.h.b16 %v8820
        %v9350 = vunpack.c.l.b16 %v8821
        %v9351 = vunpack.c.l.b16 %v8822
        %v9352 = vunpack.c.h.b16 %v8822
        %v9353 = vunpack.c.l.b16 %v8823
        %v9354 = vunpack.c.h.b16 %v8823
        %v9355 = vunpack.c.l.b16 %v8824
        %v9356 = vunpack.c.l.b16 %v8825
        %v9357 = vunpack.c.h.b16 %v8825
        %v9358 = vunpack.c.l.b16 %v8826
        %v9359 = vunpack.c.h.b16 %v8826
        %v9360 = vunpack.c.l.b16 %v8827
        %v9361 = vunpack.c.l.b16 %v8828
        %v9362 = vunpack.c.h.b16 %v8828
        %v9363 = vunpack.c.l.b16 %v8829
        %v9364 = vunpack.c.h.b16 %v8829
        %v9365 = vunpack.c.l.b16 %v8830
        %v9366 = vunpack.c.l.b16 %v8831
        %v9367 = vunpack.c.h.b16 %v8831
        %v9368 = vunpack.c.l.b16 %v8832
        %v9369 = vunpack.c.h.b16 %v8832
        %v9370 = vunpack.c.l.b16 %v8833
        %v9371 = vunpack.c.l.b16 %v8834
        %v9372 = vunpack.c.h.b16 %v8834
        %v9373 = vunpack.c.l.b16 %v8835
        %v9374 = vunpack.c.h.b16 %v8835
        %v9375 = vunpack.c.l.b16 %v8836
        %v9376 = vpack.c.b16 %v9061, %v9056
        %v9377 = vpack.c.b16 %v9062, %v9057
        %v9378 = vpack.c.b16 %v9063, %v9058
        %v9379 = vpack.c.b16 %v9064, %v9059
        %v9380 = vpack.c.b16 %v9065, %v9060
        %v9381 = vpack.c.b16 %v9071, %v9066
        %v9382 = vpack.c.b16 %v9072, %v9067
        %v9383 = vpack.c.b16 %v9073, %v9068
        %v9384 = vpack.c.b16 %v9074, %v9069
        %v9385 = vpack.c.b16 %v9075, %v9070
        %v9386 = vpack.c.b16 %v9081, %v9076
        %v9387 = vpack.c.b16 %v9082, %v9077
        %v9388 = vpack.c.b16 %v9083, %v9078
        %v9389 = vpack.c.b16 %v9084, %v9079
        %v9390 = vpack.c.b16 %v9085, %v9080
        %v9391 = vpack.c.b16 %v9091, %v9086
        %v9392 = vpack.c.b16 %v9092, %v9087
        %v9393 = vpack.c.b16 %v9093, %v9088
        %v9394 = vpack.c.b16 %v9094, %v9089
        %v9395 = vpack.c.b16 %v9095, %v9090
        %v9396 = vpack.c.b16 %v9101, %v9096
        %v9397 = vpack.c.b16 %v9102, %v9097
        %v9398 = vpack.c.b16 %v9103, %v9098
        %v9399 = vpack.c.b16 %v9104, %v9099
        %v9400 = vpack.c.b16 %v9105, %v9100
        %v9401 = vpack.c.b16 %v9111, %v9106
        %v9402 = vpack.c.b16 %v9112, %v9107
        %v9403 = vpack.c.b16 %v9113, %v9108
        %v9404 = vpack.c.b16 %v9114, %v9109
        %v9405 = vpack.c.b16 %v9115, %v9110
        %v9406 = vpack.c.b16 %v9121, %v9116
        %v9407 = vpack.c.b16 %v9122, %v9117
        %v9408 = vpack.c.b16 %v9123, %v9118
        %v9409 = vpack.c.b16 %v9124, %v9119
        %v9410 = vpack.c.b16 %v9125, %v9120
        %v9411 = vpack.c.b16 %v9131, %v9126
        %v9412 = vpack.c.b16 %v9132, %v9127
        %v9413 = vpack.c.b16 %v9133, %v9128
        %v9414 = vpack.c.b16 %v9134, %v9129
        %v9415 = vpack.c.b16 %v9135, %v9130
        %v9416 = vpack.c.b16 %v9141, %v9136
        %v9417 = vpack.c.b16 %v9142, %v9137
        %v9418 = vpack.c.b16 %v9143, %v9138
        %v9419 = vpack.c.b16 %v9144, %v9139
        %v9420 = vpack.c.b16 %v9145, %v9140
        %v9421 = vpack.c.b16 %v9151, %v9146
        %v9422 = vpack.c.b16 %v9152, %v9147
        %v9423 = vpack.c.b16 %v9153, %v9148
        %v9424 = vpack.c.b16 %v9154, %v9149
        %v9425 = vpack.c.b16 %v9155, %v9150
        %v9426 = vpack.c.b16 %v9161, %v9156
        %v9427 = vpack.c.b16 %v9162, %v9157
        %v9428 = vpack.c.b16 %v9163, %v9158
        %v9429 = vpack.c.b16 %v9164, %v9159
        %v9430 = vpack.c.b16 %v9165, %v9160
        %v9431 = vpack.c.b16 %v9171, %v9166
        %v9432 = vpack.c.b16 %v9172, %v9167
        %v9433 = vpack.c.b16 %v9173, %v9168
        %v9434 = vpack.c.b16 %v9174, %v9169
        %v9435 = vpack.c.b16 %v9175, %v9170
        %v9436 = vpack.c.b16 %v9181, %v9176
        %v9437 = vpack.c.b16 %v9182, %v9177
        %v9438 = vpack.c.b16 %v9183, %v9178
        %v9439 = vpack.c.b16 %v9184, %v9179
        %v9440 = vpack.c.b16 %v9185, %v9180
        %v9441 = vpack.c.b16 %v9191, %v9186
        %v9442 = vpack.c.b16 %v9192, %v9187
        %v9443 = vpack.c.b16 %v9193, %v9188
        %v9444 = vpack.c.b16 %v9194, %v9189
        %v9445 = vpack.c.b16 %v9195, %v9190
        %v9446 = vpack.c.b16 %v9201, %v9196
        %v9447 = vpack.c.b16 %v9202, %v9197
        %v9448 = vpack.c.b16 %v9203, %v9198
        %v9449 = vpack.c.b16 %v9204, %v9199
        %v9450 = vpack.c.b16 %v9205, %v9200
        %v9451 = vpack.c.b16 %v9211, %v9206
        %v9452 = vpack.c.b16 %v9212, %v9207
        %v9453 = vpack.c.b16 %v9213, %v9208
        %v9454 = vpack.c.b16 %v9214, %v9209
        %v9455 = vpack.c.b16 %v9215, %v9210
        %v9456 = vpack.c.b16 %v9221, %v9216
        %v9457 = vpack.c.b16 %v9222, %v9217
        %v9458 = vpack.c.b16 %v9223, %v9218
        %v9459 = vpack.c.b16 %v9224, %v9219
        %v9460 = vpack.c.b16 %v9225, %v9220
        %v9461 = vpack.c.b16 %v9231, %v9226
        %v9462 = vpack.c.b16 %v9232, %v9227
        %v9463 = vpack.c.b16 %v9233, %v9228
        %v9464 = vpack.c.b16 %v9234, %v9229
        %v9465 = vpack.c.b16 %v9235, %v9230
        %v9466 = vpack.c.b16 %v9241, %v9236
        %v9467 = vpack.c.b16 %v9242, %v9237
        %v9468 = vpack.c.b16 %v9243, %v9238
        %v9469 = vpack.c.b16 %v9244, %v9239
        %v9470 = vpack.c.b16 %v9245, %v9240
        %v9471 = vpack.c.b16 %v9251, %v9246
        %v9472 = vpack.c.b16 %v9252, %v9247
        %v9473 = vpack.c.b16 %v9253, %v9248
        %v9474 = vpack.c.b16 %v9254, %v9249
        %v9475 = vpack.c.b16 %v9255, %v9250
        %v9476 = vpack.c.b16 %v9261, %v9256
        %v9477 = vpack.c.b16 %v9262, %v9257
        %v9478 = vpack.c.b16 %v9263, %v9258
        %v9479 = vpack.c.b16 %v9264, %v9259
        %v9480 = vpack.c.b16 %v9265, %v9260
        %v9481 = vpack.c.b16 %v9271, %v9266
        %v9482 = vpack.c.b16 %v9272, %v9267
        %v9483 = vpack.c.b16 %v9273, %v9268
        %v9484 = vpack.c.b16 %v9274, %v9269
        %v9485 = vpack.c.b16 %v9275, %v9270
        %v9486 = vpack.c.b16 %v9281, %v9276
        %v9487 = vpack.c.b16 %v9282, %v9277
        %v9488 = vpack.c.b16 %v9283, %v9278
        %v9489 = vpack.c.b16 %v9284, %v9279
        %v9490 = vpack.c.b16 %v9285, %v9280
        %v9491 = vpack.c.b16 %v9291, %v9286
        %v9492 = vpack.c.b16 %v9292, %v9287
        %v9493 = vpack.c.b16 %v9293, %v9288
        %v9494 = vpack.c.b16 %v9294, %v9289
        %v9495 = vpack.c.b16 %v9295, %v9290
        %v9496 = vpack.c.b16 %v9301, %v9296
        %v9497 = vpack.c.b16 %v9302, %v9297
        %v9498 = vpack.c.b16 %v9303, %v9298
        %v9499 = vpack.c.b16 %v9304, %v9299
        %v9500 = vpack.c.b16 %v9305, %v9300
        %v9501 = vpack.c.b16 %v9311, %v9306
        %v9502 = vpack.c.b16 %v9312, %v9307
        %v9503 = vpack.c.b16 %v9313, %v9308
        %v9504 = vpack.c.b16 %v9314, %v9309
        %v9505 = vpack.c.b16 %v9315, %v9310
        %v9506 = vpack.c.b16 %v9321, %v9316
        %v9507 = vpack.c.b16 %v9322, %v9317
        %v9508 = vpack.c.b16 %v9323, %v9318
        %v9509 = vpack.c.b16 %v9324, %v9319
        %v9510 = vpack.c.b16 %v9325, %v9320
        %v9511 = vpack.c.b16 %v9331, %v9326
        %v9512 = vpack.c.b16 %v9332, %v9327
        %v9513 = vpack.c.b16 %v9333, %v9328
        %v9514 = vpack.c.b16 %v9334, %v9329
        %v9515 = vpack.c.b16 %v9335, %v9330
        %v9516 = vpack.c.b16 %v9341, %v9336
        %v9517 = vpack.c.b16 %v9342, %v9337
        %v9518 = vpack.c.b16 %v9343, %v9338
        %v9519 = vpack.c.b16 %v9344, %v9339
        %v9520 = vpack.c.b16 %v9345, %v9340
        %v9521 = vpack.c.b16 %v9351, %v9346
        %v9522 = vpack.c.b16 %v9352, %v9347
        %v9523 = vpack.c.b16 %v9353, %v9348
        %v9524 = vpack.c.b16 %v9354, %v9349
        %v9525 = vpack.c.b16 %v9355, %v9350
        %v9526 = vpack.c.b16 %v9361, %v9356
        %v9527 = vpack.c.b16 %v9362, %v9357
        %v9528 = vpack.c.b16 %v9363, %v9358
        %v9529 = vpack.c.b16 %v9364, %v9359
        %v9530 = vpack.c.b16 %v9365, %v9360
        %v9531 = vpack.c.b16 %v9371, %v9366
        %v9532 = vpack.c.b16 %v9372, %v9367
        %v9533 = vpack.c.b16 %v9373, %v9368
        %v9534 = vpack.c.b16 %v9374, %v9369
        %v9535 = vpack.c.b16 %v9375, %v9370
        %9696 = vmatprep.subr.bf16.mxu0 %v9377
        %9697 = vmatpush1.bf16.msra.mxu0 %v9376
        %9698 = vmatprep.subr.bf16.mxu0 %v9382
        %9699 = vmatpush1.bf16.msra.mxu0 %v9381
        %9700 = vmatprep.subr.bf16.mxu0 %v9387
        %9701 = vmatpush1.bf16.msra.mxu0 %v9386
        %9702 = vmatprep.subr.bf16.mxu0 %v9392
        %9703 = vmatpush1.bf16.msra.mxu0 %v9391
        %9704 = vmatprep.subr.bf16.mxu0 %v9397
        %9705 = vmatpush1.bf16.msra.mxu0 %v9396
        %9706 = vmatprep.subr.bf16.mxu0 %v9402
        %9707 = vmatpush1.bf16.msra.mxu0 %v9401
        %9708 = vmatprep.subr.bf16.mxu0 %v9407
        %9709 = vmatpush1.bf16.msra.mxu0 %v9406
        %9710 = vmatprep.subr.bf16.mxu0 %v9412
        %9711 = vmatpush1.bf16.msra.mxu0 %v9411
        %9712 = vmatprep.subr.bf16.mxu0 %v9417
        %9713 = vmatpush1.bf16.msra.mxu0 %v9416
        %9714 = vmatprep.subr.bf16.mxu0 %v9422
        %9715 = vmatpush1.bf16.msra.mxu0 %v9421
        %9716 = vmatprep.subr.bf16.mxu0 %v9427
        %9717 = vmatpush1.bf16.msra.mxu0 %v9426
        %9718 = vmatprep.subr.bf16.mxu0 %v9432
        %9719 = vmatpush1.bf16.msra.mxu0 %v9431
        %9720 = vmatprep.subr.bf16.mxu0 %v9437
        %9721 = vmatpush1.bf16.msra.mxu0 %v9436
        %9722 = vmatprep.subr.bf16.mxu0 %v9442
        %9723 = vmatpush1.bf16.msra.mxu0 %v9441
        %9724 = vmatprep.subr.bf16.mxu0 %v9447
        %9725 = vmatpush1.bf16.msra.mxu0 %v9446
        %9726 = vmatprep.subr.bf16.mxu0 %v9452
        %9727 = vmatpush1.bf16.msra.mxu0 %v9451
        %9728 = vmatprep.mubr.bf16.mxu0 %v8642
        %9729 = vmatmul.mubr.bf16.gmra.mrb[0].mxu0 %v8641
        %v9730 = vpop.f32.mrb[0].mxu0
        %v9731 = vadd.f32 %v8842, %v9730
        %v9732 = vpop.f32.mrb[0].mxu0
        %v9733 = vadd.f32 %v8846, %v9732
        %v9734 = vpop.f32.mrb[0].mxu0
        %v9735 = vpop.f32.mrb[0].mxu0
        %9736 = vdwg.mxu0
        %9737 = vmatprep.subr.bf16.mxu0 %v9457
        %9738 = vmatpush1.bf16.msra.mxu0 %v9456
        %9739 = vmatprep.subr.bf16.mxu0 %v9462
        %9740 = vmatpush1.bf16.msra.mxu0 %v9461
        %9741 = vmatprep.subr.bf16.mxu0 %v9467
        %9742 = vmatpush1.bf16.msra.mxu0 %v9466
        %9743 = vmatprep.subr.bf16.mxu0 %v9472
        %9744 = vmatpush1.bf16.msra.mxu0 %v9471
        %9745 = vmatprep.subr.bf16.mxu0 %v9477
        %9746 = vmatpush1.bf16.msra.mxu0 %v9476
        %9747 = vmatprep.subr.bf16.mxu0 %v9482
        %9748 = vmatpush1.bf16.msra.mxu0 %v9481
        %9749 = vmatprep.subr.bf16.mxu0 %v9487
        %9750 = vmatpush1.bf16.msra.mxu0 %v9486
        %9751 = vmatprep.subr.bf16.mxu0 %v9492
        %9752 = vmatpush1.bf16.msra.mxu0 %v9491
        %9753 = vmatprep.subr.bf16.mxu0 %v9497
        %9754 = vmatpush1.bf16.msra.mxu0 %v9496
        %9755 = vmatprep.subr.bf16.mxu0 %v9502
        %9756 = vmatpush1.bf16.msra.mxu0 %v9501
        %9757 = vmatprep.subr.bf16.mxu0 %v9507
        %9758 = vmatpush1.bf16.msra.mxu0 %v9506
        %9759 = vmatprep.subr.bf16.mxu0 %v9512
        %9760 = vmatpush1.bf16.msra.mxu0 %v9511
        %9761 = vmatprep.subr.bf16.mxu0 %v9517
        %9762 = vmatpush1.bf16.msra.mxu0 %v9516
        %9763 = vmatprep.subr.bf16.mxu0 %v9522
        %9764 = vmatpush1.bf16.msra.mxu0 %v9521
        %9765 = vmatprep.subr.bf16.mxu0 %v9527
        %9766 = vmatpush1.bf16.msra.mxu0 %v9526
        %9767 = vmatprep.subr.bf16.mxu0 %v9532
        %9768 = vmatpush1.bf16.msra.mxu0 %v9531
        %9769 = vmatprep.mubr.bf16.mxu0 %v8644
        %9770 = vmatmul.mubr.bf16.gmra.mrb[0].mxu0 %v8643
        %v9771 = vpop.f32.mrb[0].mxu0
        %v9772 = vadd.f32 %v9731, %v9771
        %v9773 = vpop.f32.mrb[0].mxu0
        %v9774 = vadd.f32 %v9733, %v9773
        %v9775 = vpop.f32.mrb[0].mxu0
        %v9776 = vpop.f32.mrb[0].mxu0
        %9777 = vdwg.mxu0
        %9778 = vmatprep.subr.bf16.mxu0 %v9379
        %9779 = vmatpush1.bf16.msra.mxu0 %v9378
        %9780 = vmatprep.subr.bf16.mxu0 %v9384
        %9781 = vmatpush1.bf16.msra.mxu0 %v9383
        %9782 = vmatprep.subr.bf16.mxu0 %v9389
        %9783 = vmatpush1.bf16.msra.mxu0 %v9388
        %9784 = vmatprep.subr.bf16.mxu0 %v9394
        %9785 = vmatpush1.bf16.msra.mxu0 %v9393
        %9786 = vmatprep.subr.bf16.mxu0 %v9399
        %9787 = vmatpush1.bf16.msra.mxu0 %v9398
        %9788 = vmatprep.subr.bf16.mxu0 %v9404
        %9789 = vmatpush1.bf16.msra.mxu0 %v9403
        %9790 = vmatprep.subr.bf16.mxu0 %v9409
        %9791 = vmatpush1.bf16.msra.mxu0 %v9408
        %9792 = vmatprep.subr.bf16.mxu0 %v9414
        %9793 = vmatpush1.bf16.msra.mxu0 %v9413
        %9794 = vmatprep.subr.bf16.mxu0 %v9419
        %9795 = vmatpush1.bf16.msra.mxu0 %v9418
        %9796 = vmatprep.subr.bf16.mxu0 %v9424
        %9797 = vmatpush1.bf16.msra.mxu0 %v9423
        %9798 = vmatprep.subr.bf16.mxu0 %v9429
        %9799 = vmatpush1.bf16.msra.mxu0 %v9428
        %9800 = vmatprep.subr.bf16.mxu0 %v9434
        %9801 = vmatpush1.bf16.msra.mxu0 %v9433
        %9802 = vmatprep.subr.bf16.mxu0 %v9439
        %9803 = vmatpush1.bf16.msra.mxu0 %v9438
        %9804 = vmatprep.subr.bf16.mxu0 %v9444
        %9805 = vmatpush1.bf16.msra.mxu0 %v9443
        %9806 = vmatprep.subr.bf16.mxu0 %v9449
        %9807 = vmatpush1.bf16.msra.mxu0 %v9448
        %9808 = vmatprep.subr.bf16.mxu0 %v9454
        %9809 = vmatpush1.bf16.msra.mxu0 %v9453
        %9810 = vmatprep.mubr.bf16.mxu0 %v8642
        %9811 = vmatmul.mubr.bf16.gmra.mrb[0].mxu0 %v8641
        %v9812 = vpop.f32.mrb[0].mxu0
        %v9813 = vadd.f32 %v8850, %v9812
        %v9814 = vpop.f32.mrb[0].mxu0
        %v9815 = vadd.f32 %v8854, %v9814
        %v9816 = vpop.f32.mrb[0].mxu0
        %v9817 = vpop.f32.mrb[0].mxu0
        %9818 = vdwg.mxu0
        %9819 = vmatprep.subr.bf16.mxu0 %v9459
        %9820 = vmatpush1.bf16.msra.mxu0 %v9458
        %9821 = vmatprep.subr.bf16.mxu0 %v9464
        %9822 = vmatpush1.bf16.msra.mxu0 %v9463
        %9823 = vmatprep.subr.bf16.mxu0 %v9469
        %9824 = vmatpush1.bf16.msra.mxu0 %v9468
        %9825 = vmatprep.subr.bf16.mxu0 %v9474
        %9826 = vmatpush1.bf16.msra.mxu0 %v9473
        %9827 = vmatprep.subr.bf16.mxu0 %v9479
        %9828 = vmatpush1.bf16.msra.mxu0 %v9478
        %9829 = vmatprep.subr.bf16.mxu0 %v9484
        %9830 = vmatpush1.bf16.msra.mxu0 %v9483
        %9831 = vmatprep.subr.bf16.mxu0 %v9489
        %9832 = vmatpush1.bf16.msra.mxu0 %v9488
        %9833 = vmatprep.subr.bf16.mxu0 %v9494
        %9834 = vmatpush1.bf16.msra.mxu0 %v9493
        %9835 = vmatprep.subr.bf16.mxu0 %v9499
        %9836 = vmatpush1.bf16.msra.mxu0 %v9498
        %9837 = vmatprep.subr.bf16.mxu0 %v9504
        %9838 = vmatpush1.bf16.msra.mxu0 %v9503
        %9839 = vmatprep.subr.bf16.mxu0 %v9509
        %9840 = vmatpush1.bf16.msra.mxu0 %v9508
        %9841 = vmatprep.subr.bf16.mxu0 %v9514
        %9842 = vmatpush1.bf16.msra.mxu0 %v9513
        %9843 = vmatprep.subr.bf16.mxu0 %v9519
        %9844 = vmatpush1.bf16.msra.mxu0 %v9518
        %9845 = vmatprep.subr.bf16.mxu0 %v9524
        %9846 = vmatpush1.bf16.msra.mxu0 %v9523
        %9847 = vmatprep.subr.bf16.mxu0 %v9529
        %9848 = vmatpush1.bf16.msra.mxu0 %v9528
        %9849 = vmatprep.subr.bf16.mxu0 %v9534
        %9850 = vmatpush1.bf16.msra.mxu0 %v9533
        %9851 = vmatprep.mubr.bf16.mxu0 %v8644
        %9852 = vmatmul.mubr.bf16.gmra.mrb[0].mxu0 %v8643
        %v9853 = vpop.f32.mrb[0].mxu0
        %v9854 = vadd.f32 %v9813, %v9853
        %v9855 = vpop.f32.mrb[0].mxu0
        %v9856 = vadd.f32 %v9815, %v9855
        %v9857 = vpop.f32.mrb[0].mxu0
        %v9858 = vpop.f32.mrb[0].mxu0
        %9859 = vdwg.mxu0
        %9860 = vmatprep.subr.bf16.mxu0 0
        %9861 = vmatpush1.bf16.msra.mxu0 %v9380
        %9862 = vmatprep.subr.bf16.mxu0 0
        %9863 = vmatpush1.bf16.msra.mxu0 %v9385
        %9864 = vmatprep.subr.bf16.mxu0 0
        %9865 = vmatpush1.bf16.msra.mxu0 %v9390
        %9866 = vmatprep.subr.bf16.mxu0 0
        %9867 = vmatpush1.bf16.msra.mxu0 %v9395
        %9868 = vmatprep.subr.bf16.mxu0 0
        %9869 = vmatpush1.bf16.msra.mxu0 %v9400
        %9870 = vmatprep.subr.bf16.mxu0 0
        %9871 = vmatpush1.bf16.msra.mxu0 %v9405
        %9872 = vmatprep.subr.bf16.mxu0 0
        %9873 = vmatpush1.bf16.msra.mxu0 %v9410
        %9874 = vmatprep.subr.bf16.mxu0 0
        %9875 = vmatpush1.bf16.msra.mxu0 %v9415
        %9876 = vmatprep.subr.bf16.mxu0 0
        %9877 = vmatpush1.bf16.msra.mxu0 %v9420
        %9878 = vmatprep.subr.bf16.mxu0 0
        %9879 = vmatpush1.bf16.msra.mxu0 %v9425
        %9880 = vmatprep.subr.bf16.mxu0 0
        %9881 = vmatpush1.bf16.msra.mxu0 %v9430
        %9882 = vmatprep.subr.bf16.mxu0 0
        %9883 = vmatpush1.bf16.msra.mxu0 %v9435
        %9884 = vmatprep.subr.bf16.mxu0 0
        %9885 = vmatpush1.bf16.msra.mxu0 %v9440
        %9886 = vmatprep.subr.bf16.mxu0 0
        %9887 = vmatpush1.bf16.msra.mxu0 %v9445
        %9888 = vmatprep.subr.bf16.mxu0 0
        %9889 = vmatpush1.bf16.msra.mxu0 %v9450
        %9890 = vmatprep.subr.bf16.mxu0 0
        %9891 = vmatpush1.bf16.msra.mxu0 %v9455
        %9892 = vmatprep.mubr.bf16.mxu0 %v8642
        %9893 = vmatmul.mubr.bf16.gmra.mrb[0].mxu0 %v8641
        %v9894 = vpop.f32.mrb[0].mxu0
        %v9895 = vadd.f32 %v8858, %v9894
        %v9896 = vpop.f32.mrb[0].mxu0
        %v9897 = vpop.f32.mrb[0].mxu0
        %v9898 = vpop.f32.mrb[0].mxu0
        %9899 = vdwg.mxu0
        %9900 = vmatprep.subr.bf16.mxu0 0
        %9901 = vmatpush1.bf16.msra.mxu0 %v9460
        %9902 = vmatprep.subr.bf16.mxu0 0
        %9903 = vmatpush1.bf16.msra.mxu0 %v9465
        %9904 = vmatprep.subr.bf16.mxu0 0
        %9905 = vmatpush1.bf16.msra.mxu0 %v9470
        %9906 = vmatprep.subr.bf16.mxu0 0
        %9907 = vmatpush1.bf16.msra.mxu0 %v9475
        %9908 = vmatprep.subr.bf16.mxu0 0
        %9909 = vmatpush1.bf16.msra.mxu0 %v9480
        %9910 = vmatprep.subr.bf16.mxu0 0
        %9911 = vmatpush1.bf16.msra.mxu0 %v9485
        %9912 = vmatprep.subr.bf16.mxu0 0
        %9913 = vmatpush1.bf16.msra.mxu0 %v9490
        %9914 = vmatprep.subr.bf16.mxu0 0
        %9915 = vmatpush1.bf16.msra.mxu0 %v9495
        %9916 = vmatprep.subr.bf16.mxu0 0
        %9917 = vmatpush1.bf16.msra.mxu0 %v9500
        %9918 = vmatprep.subr.bf16.mxu0 0
        %9919 = vmatpush1.bf16.msra.mxu0 %v9505
        %9920 = vmatprep.subr.bf16.mxu0 0
        %9921 = vmatpush1.bf16.msra.mxu0 %v9510
        %9922 = vmatprep.subr.bf16.mxu0 0
        %9923 = vmatpush1.bf16.msra.mxu0 %v9515
        %9924 = vmatprep.subr.bf16.mxu0 0
        %9925 = vmatpush1.bf16.msra.mxu0 %v9520
        %9926 = vmatprep.subr.bf16.mxu0 0
        %9927 = vmatpush1.bf16.msra.mxu0 %v9525
        %9928 = vmatprep.subr.bf16.mxu0 0
        %9929 = vmatpush1.bf16.msra.mxu0 %v9530
        %9930 = vmatprep.subr.bf16.mxu0 0
        %9931 = vmatpush1.bf16.msra.mxu0 %v9535
        %9932 = vmatprep.mubr.bf16.mxu0 %v8644
        %9933 = vmatmul.mubr.bf16.gmra.mrb[0].mxu0 %v8643
        %v9934 = vpop.f32.mrb[0].mxu0
        %v9935 = vadd.f32 %v9895, %v9934
        %v9936 = vpop.f32.mrb[0].mxu0
        %v9937 = vpop.f32.mrb[0].mxu0
        %v9938 = vpop.f32.mrb[0].mxu0
        %9939 = vdwg.mxu0
        %9940 = vst [vmem:[%s661] sm:$0xff] %v9772
        %9941 = vst [vmem:[%s661 + $0x8] sm:$0xff] %v9774
        %9942 = vst [vmem:[%s661 + $0x10] sm:$0xff] %v9854
        %9943 = vst [vmem:[%s661 + $0x18] sm:$0xff] %v9856
        %9944 = vst [vmem:[%s661 + $0x20] sm:$0xff] %v9935
        %s9945 = sand.u32 %s369, 1
        %s9946 = scalar_lea.sflag [#allocation4], %s9945
        %s9947 = sand.u32 %s369, 1
        %s9948 = smul.addr %s9947, 40
        %s9949 = scalar_lea.vmem [#allocation18], %s9948
        // Predicated region
        $region121: #{tpu_custom_call.1} parent=79 // pred_check
          %p9950 = pneg %p379
        $region122: #{tpu_custom_call.1} parent=79 // pred_check_branch
          %9952 = sbr.rel (%p9950) target = $region124
        $region123: #{tpu_custom_call.1} parent=79 // pred_region
          %s9954 = ssub.s32 640, 640
          %9955 = vsyncadd %s9946, %s9954
          %s9956 = smul.addr %s36, 5
          %s9957 = smul.addr %s9956, 128
          %s9958 = scalar_lea.hbm %s15, %s9957
          %s9960 = sshll.u32 %s9949, 4
          %s9961 = int_to_ptr.vmem [resolvable:$true] %s9960
          %9963 = dma.vmem_to_hbm [thread:$0]  %s9961, 640, %s9958, %s9946
        $region124: #{tpu_custom_call.1} parent=79 // pred_fallthru
          _
      $region80: #{tpu_custom_call.1} parent=5 // pred_fallthru
        _
      %p9964 = scmp.le.s32.totalorder 2, %s31
      // Predicated region
      $region125: #{tpu_custom_call.1} parent=5 // pred_check
        %p9965 = pneg %p9964
      $region126: #{tpu_custom_call.1} parent=5 // pred_check_branch
        %9967 = sbr.rel (%p9965) target = $region128
      $region127: #{tpu_custom_call.1} parent=5 // pred_region
        %s9968 = ssub.s32 %s31, 2
        // Predicated region
        $region129: #{tpu_custom_call.1} parent=127 // pred_check
          %p9969 = pneg %p385
        $region130: #{tpu_custom_call.1} parent=127 // pred_check_branch
          %9971 = sbr.rel (%p9969) target = $region132
        $region131: #{tpu_custom_call.1} parent=127 // pred_region
          %s9972 = sand.u32 %s370, 1
          %s9973 = scalar_lea.sflag [#allocation4], %s9972
          %s9974 = sand.u32 %s370, 1
          %s9975 = smul.addr %s9974, 40
          %s9976 = scalar_lea.vmem [#allocation18], %s9975
          %9977 = dma.done %s9973, 640
        $region132: #{tpu_custom_call.1} parent=127 // pred_fallthru
          _
      $region128: #{tpu_custom_call.1} parent=5 // pred_fallthru
        _
    $region6: #{tpu_custom_call.1} parent=1 // loop_footer
      %s35 = sadd.s32 1, %s31
    $region7: #{tpu_custom_call.1} parent=1 // loop_footer_branch
      %30 = sbr.rel target = $region3
    $region8: #{tpu_custom_call.1} parent=1 // loop_exit
      _
    %9978 = vsyncpa [#allocation3], 1
    %s9979 = scalar_lea.sflag [#allocation3], 1
    %9980 = vsyncpa %s9979, 1
    %9981 = vsyncpa [#allocation6], 1
    %9982 = vsyncpa [#allocation10], 1
    %9983 = vsyncpa [#allocation13], 1
    %9984 = vsyncpa [#allocation16], 1
    %9985 = vsyncpa [#allocation4], 1
    %s9986 = scalar_lea.sflag [#allocation4], 1
    %9987 = vsyncpa %s9986, 1

</llo_original>
